<compile_context>
chip_gen: v6e
topology: v6e:2x2x1
jax: 0.10.0
libtpu: 0.0.40
codegen_flags: <defaults>
</compile_context>

<pallas_src>
import jax
import jax.numpy as jnp
from jax.experimental import pallas as pl
from jax.experimental.pallas import tpu as pltpu


# ----------------------------------------------------------------------------
# Fused Pallas kernel: conv1 -> pool -> conv2 -> pool -> fc1 -> classifier head
# ----------------------------------------------------------------------------
def _clasificador_kernel(x_ref, w1_ref, b1_ref, w2_ref, b2_ref,
                         fc1w_ref, fc1b_ref, clsw_ref, clsb_ref, o_ref):
    TB = o_ref.shape[0]              # batch tile (multiple of 16)

    # ---- conv1: ONE fused bf16 matmul over the 4 pooling phases -------------
    # x rows = (h*13 + w)*TB + b ; 16 cols = 4x4 phase/tap window (q*4 + r).
    # w1 lanes = [phase0 | phase1 | phase2 | phase3], 16 out-channels each.
    cp = jnp.dot(x_ref[...], w1_ref[...],
                 preferred_element_type=jnp.float32)            # (169*TB, 64)
    m = jnp.maximum(cp[:, :32], cp[:, 32:])                     # 2x2 max-pool
    m = jnp.maximum(m[:, :16], m[:, 16:])                       # over phases
    p1 = jnp.maximum(m + b1_ref[...], 0.0).astype(jnp.bfloat16)  # (169*TB, 16)

    # ---- conv2: single K-packed (im2col) matmul over the 9 taps -------------
    # "Wrapped rows" trick: tap (dy,dx) is a contiguous, sublane-aligned slab;
    # garbage columns (w2 in {11,12}) are never read by the pooling below.
    L = 141 * TB
    im2col = jnp.concatenate(
        [p1[(dy * 13 + dx) * TB:(dy * 13 + dx) * TB + L, :]
         for dy in range(3) for dx in range(3)], axis=1)        # (141*TB, 144)
    acc2 = jnp.dot(im2col, w2_ref[...],
                   preferred_element_type=jnp.float32)          # (141*TB, 32)
    a2 = jnp.maximum(acc2 + b2_ref[...], 0.0).astype(jnp.bfloat16)

    # ---- 2x2 max-pool + flatten to (TB, 800) (weights pre-permuted to match
    #      PyTorch's (C,H,W) flatten order) ----------------------------------
    wins = []
    for s in range(25):
        ph, pw = s // 5, s % 5
        win = None
        for i in range(2):
            for j in range(2):
                row = ((2 * ph + i) * 13 + (2 * pw + j)) * TB
                v = a2[row:row + TB, :]                         # (TB, 32)
                win = v if win is None else jnp.maximum(win, v)
        wins.append(win)
    pooled = jnp.concatenate(wins, axis=1)                      # (TB, 800) bf16

    # ---- fc1: Linear(800, n) + ReLU, one K=800 matmul -----------------------
    h1 = jnp.maximum(
        jnp.dot(pooled, fc1w_ref[...], preferred_element_type=jnp.float32)
        + fc1b_ref[...], 0.0)                                   # (TB, n)

    # ---- head: Linear(n, 10) + ReLU, logits zero-padded to 128 lanes --------
    logits = jnp.dot(h1.astype(jnp.bfloat16), clsw_ref[...],
                     preferred_element_type=jnp.float32)        # (TB, 128)
    o_ref[...] = jnp.maximum(logits + clsb_ref[...], 0.0)


def _pick_batch_tile(b):
    # Largest tile (capped at 256: peak VMEM stays well under 48 MiB, so it is
    # safe even on v7x's 64 MiB/TC) that still leaves >= 2 grid steps so both
    # v7x TensorCores get work; tiny batches fall back to one 16-row tile.
    for tb in (256, 128, 64, 32):
        if b >= 2 * tb:
            return tb
    return 16


# ----------------------------------------------------------------------------
# Parameters (deterministic, PyTorch-default-style uniform init)
# ----------------------------------------------------------------------------
def init_params(key, n=512):
    ks = jax.random.split(key, 8)

    def u(k, shape, fan_in):
        lim = 1.0 / jnp.sqrt(jnp.float32(fan_in))
        return jax.random.uniform(k, shape, jnp.float32, -lim, lim)

    return {
        # encoder (copied from autoencoder): Conv2d(1,16,3), Conv2d(16,32,3),
        # Linear(32*5*5, n)
        "conv1_w": u(ks[0], (3, 3, 1, 16), 1 * 9),
        "conv1_b": u(ks[1], (16,), 1 * 9),
        "conv2_w": u(ks[2], (3, 3, 16, 32), 16 * 9),
        "conv2_b": u(ks[3], (32,), 16 * 9),
        "fc1_w": u(ks[4], (32 * 5 * 5, n), 32 * 5 * 5),
        "fc1_b": u(ks[5], (n,), 32 * 5 * 5),
        # clasificador head: Linear(n, 10)
        "cls_w": u(ks[6], (n, 10), n),
        "cls_b": u(ks[7], (10,), n),
    }


# ----------------------------------------------------------------------------
# Forward pass (matches clasificador.forward = encoder -> clasificador head)
# ----------------------------------------------------------------------------
@jax.jit
def clasificador_forward(params, x_nchw):
    # x_nchw: (B, 1, 28, 28) float32 — same convention as the PyTorch module.
    B = x_nchw.shape[0]
    n = params["fc1_w"].shape[1]
    TB = _pick_batch_tile(B)
    Bp = ((B + TB - 1) // TB) * TB
    nb = Bp // TB

    # --- input prep (tiny XLA glue on HBM): 4x4 phase/tap expansion, bf16 ----
    # xt[b, h*13+w, q*4+r] = x[b, 0, 2h+q, 2w+r]   (q,r in 0..3, h,w in 0..12)
    xb = x_nchw[:, 0, :, :].astype(jnp.float32)                 # (B, 28, 28)
    xb = jnp.pad(xb, ((0, Bp - B), (0, 0), (0, 0)))
    taps = [xb[:, q:q + 25:2, r:r + 25:2] for q in range(4) for r in range(4)]
    xt = jnp.stack(taps, axis=-1).reshape(Bp, 169, 16)
    # group by batch tile so the kernel sees a ready-made 2-D (169*TB, 16) block
    xt = (xt.reshape(nb, TB, 169, 16)
            .transpose(0, 2, 1, 3)
            .reshape(nb, 169 * TB, 16)
            .astype(jnp.bfloat16))

    # --- weight prep (constant-shaped XLA glue, weights stay VMEM-resident) --
    w1 = params["conv1_w"][:, :, 0, :]                          # (3, 3, 16)
    # 4 pooling phases lane-concatenated: (16 taps, 4*16 out) bf16
    w1cat = jnp.concatenate(
        [jnp.pad(w1, ((i, 1 - i), (j, 1 - j), (0, 0))).reshape(16, 16)
         for i in range(2) for j in range(2)], axis=1).astype(jnp.bfloat16)
    b1 = params["conv1_b"].reshape(1, 16)
    # 9 taps K-packed: rows = (dy*3+dx)*16 + c_in
    w2cat = params["conv2_w"].reshape(144, 32).astype(jnp.bfloat16)
    b2 = params["conv2_b"].reshape(1, 32)
    # fc1 rows re-ordered from PyTorch's (C,H,W) flatten to per-pixel blocks.
    fc1w = (params["fc1_w"].reshape(32, 5, 5, n)
            .transpose(1, 2, 0, 3)
            .reshape(800, n)
            .astype(jnp.bfloat16))
    fc1b = params["fc1_b"].reshape(1, n)
    clsw = jnp.zeros((n, 128), jnp.bfloat16).at[:, :10].set(
        params["cls_w"].astype(jnp.bfloat16))
    clsb = jnp.zeros((1, 128), jnp.float32).at[:, :10].set(
        params["cls_b"].reshape(1, 10))

    out = pl.pallas_call(
        _clasificador_kernel,
        out_shape=jax.ShapeDtypeStruct((Bp, 128), jnp.float32),
        grid=(nb,),
        in_specs=[
            pl.BlockSpec((None, 169 * TB, 16), lambda i: (i, 0, 0)),  # x tile
            pl.BlockSpec((16, 64), lambda i: (0, 0)),    # conv1 (4 phases fused)
            pl.BlockSpec((1, 16), lambda i: (0, 0)),     # conv1 bias
            pl.BlockSpec((144, 32), lambda i: (0, 0)),   # conv2 (9 taps K-packed)
            pl.BlockSpec((1, 32), lambda i: (0, 0)),     # conv2 bias
            pl.BlockSpec((800, n), lambda i: (0, 0)),    # fc1 (flatten order)
            pl.BlockSpec((1, n), lambda i: (0, 0)),      # fc1 bias
            pl.BlockSpec((n, 128), lambda i: (0, 0)),    # head (lane-padded)
            pl.BlockSpec((1, 128), lambda i: (0, 0)),    # head bias
        ],
        out_specs=pl.BlockSpec((TB, 128), lambda i: (i, 0)),
        compiler_params=pltpu.CompilerParams(
            dimension_semantics=("parallel",),      # shard batch tiles over TCs
            vmem_limit_bytes=48 * 1024 * 1024,      # safe on v5e/v6e/v7x
        ),
    )(xt, w1cat, b1, w2cat, b2, fc1w, fc1b, clsw, clsb)

    # drop batch padding and the 118 zero-padded logit lanes
    return out[:B, :10]


if __name__ == "__main__":
    key = jax.random.PRNGKey(0)
    pkey, xkey = jax.random.split(key)
    params = init_params(pkey, n=512)
    # Input implied by Linear(32*5*5, n): 28x28 single-channel images.
    x = jax.random.normal(xkey, (2, 1, 28, 28), jnp.float32)
    out = clasificador_forward(params, x)
    out = jax.block_until_ready(out)
    assert out.shape == (2, 10)
    assert bool(jnp.all(jnp.isfinite(out)))
    print("KERNEL_OK")
</pallas_src>

<mosaic_0001>
module attributes {stable_mosaic.version = 11 : i64} {
  func.func @_clasificador_kernel(%arg0: i32, %arg1: memref<1x2704x16xbf16, #tpu.memory_space<vmem>>, %arg2: memref<16x64xbf16, #tpu.memory_space<vmem>>, %arg3: memref<1x16xf32, #tpu.memory_space<vmem>>, %arg4: memref<144x32xbf16, #tpu.memory_space<vmem>>, %arg5: memref<1x32xf32, #tpu.memory_space<vmem>>, %arg6: memref<800x512xbf16, #tpu.memory_space<vmem>>, %arg7: memref<1x512xf32, #tpu.memory_space<vmem>>, %arg8: memref<512x128xbf16, #tpu.memory_space<vmem>>, %arg9: memref<1x128xf32, #tpu.memory_space<vmem>>, %arg10: memref<16x128xf32, #tpu.memory_space<vmem>>) attributes {dimension_semantics = [#tpu.dimension_semantics<parallel>], iteration_bounds = array<i64: 1>, scalar_prefetch = 0 : i64, scratch_operands = 0 : i64, tpu.core_type = #tpu.core_type<tc>, window_params = [{transform_indices = @transform_0, window_bounds = array<i64: 1, 2704, 16>}, {pipeline_mode = #tpu.pipeline_mode<synchronous>, transform_indices = @transform_1, window_bounds = array<i64: 16, 64>}, {pipeline_mode = #tpu.pipeline_mode<synchronous>, transform_indices = @transform_2, window_bounds = array<i64: 1, 16>}, {pipeline_mode = #tpu.pipeline_mode<synchronous>, transform_indices = @transform_3, window_bounds = array<i64: 144, 32>}, {pipeline_mode = #tpu.pipeline_mode<synchronous>, transform_indices = @transform_4, window_bounds = array<i64: 1, 32>}, {pipeline_mode = #tpu.pipeline_mode<synchronous>, transform_indices = @transform_5, window_bounds = array<i64: 800, 512>}, {pipeline_mode = #tpu.pipeline_mode<synchronous>, transform_indices = @transform_6, window_bounds = array<i64: 1, 512>}, {pipeline_mode = #tpu.pipeline_mode<synchronous>, transform_indices = @transform_7, window_bounds = array<i64: 512, 128>}, {pipeline_mode = #tpu.pipeline_mode<synchronous>, transform_indices = @transform_8, window_bounds = array<i64: 1, 128>}, {transform_indices = @transform_9, window_bounds = array<i64: 16, 128>}]} {
    %c0 = arith.constant 0 : index
    %c0_0 = arith.constant 0 : index
    %c0_1 = arith.constant 0 : index
    %0 = vector.load %arg1[%c0, %c0_0, %c0_1] : memref<1x2704x16xbf16, #tpu.memory_space<vmem>>, vector<1x2704x16xbf16>
    %1 = vector.shape_cast %0 : vector<1x2704x16xbf16> to vector<2704x16xbf16>
    %c0_2 = arith.constant 0 : index
    %c0_3 = arith.constant 0 : index
    %2 = vector.load %arg2[%c0_2, %c0_3] : memref<16x64xbf16, #tpu.memory_space<vmem>>, vector<16x64xbf16>
    %cst = arith.constant dense<0.000000e+00> : vector<2704x64xf32>
    %3 = tpu.matmul %1, %2, %cst {dimension_numbers = #tpu.dot_dimension_numbers<[1], [0], [0], [1], [0, 0, 1, 1], [], []>} : vector<2704x16xbf16>, vector<16x64xbf16>, vector<2704x64xf32> -> vector<2704x64xf32>
    %4 = vector.extract_strided_slice %3 {offsets = [0, 0], sizes = [2704, 32], strides = [1, 1]} : vector<2704x64xf32> to vector<2704x32xf32>
    %5 = vector.extract_strided_slice %3 {offsets = [0, 32], sizes = [2704, 32], strides = [1, 1]} : vector<2704x64xf32> to vector<2704x32xf32>
    %6 = arith.maximumf %4, %5 : vector<2704x32xf32>
    %7 = vector.extract_strided_slice %6 {offsets = [0, 0], sizes = [2704, 16], strides = [1, 1]} : vector<2704x32xf32> to vector<2704x16xf32>
    %8 = vector.extract_strided_slice %6 {offsets = [0, 16], sizes = [2704, 16], strides = [1, 1]} : vector<2704x32xf32> to vector<2704x16xf32>
    %9 = arith.maximumf %7, %8 : vector<2704x16xf32>
    %c0_4 = arith.constant 0 : index
    %c0_5 = arith.constant 0 : index
    %10 = vector.load %arg3[%c0_4, %c0_5] : memref<1x16xf32, #tpu.memory_space<vmem>>, vector<1x16xf32>
    %11 = vector.broadcast %10 : vector<1x16xf32> to vector<2704x16xf32>
    %12 = arith.addf %9, %11 : vector<2704x16xf32>
    %cst_6 = arith.constant 0.000000e+00 : f32
    %13 = vector.broadcast %cst_6 : f32 to vector<2704x16xf32>
    %14 = arith.maximumf %12, %13 : vector<2704x16xf32>
    %15 = arith.truncf %14 : vector<2704x16xf32> to vector<2704x16xbf16>
    %16 = vector.extract_strided_slice %15 {offsets = [0, 0], sizes = [2256, 16], strides = [1, 1]} : vector<2704x16xbf16> to vector<2256x16xbf16>
    %17 = vector.extract_strided_slice %15 {offsets = [16, 0], sizes = [2256, 16], strides = [1, 1]} : vector<2704x16xbf16> to vector<2256x16xbf16>
    %18 = vector.extract_strided_slice %15 {offsets = [32, 0], sizes = [2256, 16], strides = [1, 1]} : vector<2704x16xbf16> to vector<2256x16xbf16>
    %19 = vector.extract_strided_slice %15 {offsets = [208, 0], sizes = [2256, 16], strides = [1, 1]} : vector<2704x16xbf16> to vector<2256x16xbf16>
    %20 = vector.extract_strided_slice %15 {offsets = [224, 0], sizes = [2256, 16], strides = [1, 1]} : vector<2704x16xbf16> to vector<2256x16xbf16>
    %21 = vector.extract_strided_slice %15 {offsets = [240, 0], sizes = [2256, 16], strides = [1, 1]} : vector<2704x16xbf16> to vector<2256x16xbf16>
    %22 = vector.extract_strided_slice %15 {offsets = [416, 0], sizes = [2256, 16], strides = [1, 1]} : vector<2704x16xbf16> to vector<2256x16xbf16>
    %23 = vector.extract_strided_slice %15 {offsets = [432, 0], sizes = [2256, 16], strides = [1, 1]} : vector<2704x16xbf16> to vector<2256x16xbf16>
    %24 = vector.extract_strided_slice %15 {offsets = [448, 0], sizes = [2256, 16], strides = [1, 1]} : vector<2704x16xbf16> to vector<2256x16xbf16>
    %25 = tpu.concatenate %16, %17, %18, %19, %20, %21, %22, %23, %24 in 1 : vector<2256x16xbf16>, vector<2256x16xbf16>, vector<2256x16xbf16>, vector<2256x16xbf16>, vector<2256x16xbf16>, vector<2256x16xbf16>, vector<2256x16xbf16>, vector<2256x16xbf16>, vector<2256x16xbf16> -> vector<2256x144xbf16>
    %c0_7 = arith.constant 0 : index
    %c0_8 = arith.constant 0 : index
    %26 = vector.load %arg4[%c0_7, %c0_8] : memref<144x32xbf16, #tpu.memory_space<vmem>>, vector<144x32xbf16>
    %cst_9 = arith.constant dense<0.000000e+00> : vector<2256x32xf32>
    %27 = tpu.matmul %25, %26, %cst_9 {dimension_numbers = #tpu.dot_dimension_numbers<[1], [0], [0], [1], [0, 0, 1, 1], [], []>} : vector<2256x144xbf16>, vector<144x32xbf16>, vector<2256x32xf32> -> vector<2256x32xf32>
    %c0_10 = arith.constant 0 : index
    %c0_11 = arith.constant 0 : index
    %28 = vector.load %arg5[%c0_10, %c0_11] : memref<1x32xf32, #tpu.memory_space<vmem>>, vector<1x32xf32>
    %29 = vector.broadcast %28 : vector<1x32xf32> to vector<2256x32xf32>
    %30 = arith.addf %27, %29 : vector<2256x32xf32>
    %cst_12 = arith.constant 0.000000e+00 : f32
    %31 = vector.broadcast %cst_12 : f32 to vector<2256x32xf32>
    %32 = arith.maximumf %30, %31 : vector<2256x32xf32>
    %33 = arith.truncf %32 : vector<2256x32xf32> to vector<2256x32xbf16>
    %34 = vector.extract_strided_slice %33 {offsets = [0, 0], sizes = [16, 32], strides = [1, 1]} : vector<2256x32xbf16> to vector<16x32xbf16>
    %35 = vector.extract_strided_slice %33 {offsets = [16, 0], sizes = [16, 32], strides = [1, 1]} : vector<2256x32xbf16> to vector<16x32xbf16>
    %36 = arith.maximumf %34, %35 : vector<16x32xbf16>
    %37 = vector.extract_strided_slice %33 {offsets = [208, 0], sizes = [16, 32], strides = [1, 1]} : vector<2256x32xbf16> to vector<16x32xbf16>
    %38 = arith.maximumf %36, %37 : vector<16x32xbf16>
    %39 = vector.extract_strided_slice %33 {offsets = [224, 0], sizes = [16, 32], strides = [1, 1]} : vector<2256x32xbf16> to vector<16x32xbf16>
    %40 = arith.maximumf %38, %39 : vector<16x32xbf16>
    %41 = vector.extract_strided_slice %33 {offsets = [32, 0], sizes = [16, 32], strides = [1, 1]} : vector<2256x32xbf16> to vector<16x32xbf16>
    %42 = vector.extract_strided_slice %33 {offsets = [48, 0], sizes = [16, 32], strides = [1, 1]} : vector<2256x32xbf16> to vector<16x32xbf16>
    %43 = arith.maximumf %41, %42 : vector<16x32xbf16>
    %44 = vector.extract_strided_slice %33 {offsets = [240, 0], sizes = [16, 32], strides = [1, 1]} : vector<2256x32xbf16> to vector<16x32xbf16>
    %45 = arith.maximumf %43, %44 : vector<16x32xbf16>
    %46 = vector.extract_strided_slice %33 {offsets = [256, 0], sizes = [16, 32], strides = [1, 1]} : vector<2256x32xbf16> to vector<16x32xbf16>
    %47 = arith.maximumf %45, %46 : vector<16x32xbf16>
    %48 = vector.extract_strided_slice %33 {offsets = [64, 0], sizes = [16, 32], strides = [1, 1]} : vector<2256x32xbf16> to vector<16x32xbf16>
    %49 = vector.extract_strided_slice %33 {offsets = [80, 0], sizes = [16, 32], strides = [1, 1]} : vector<2256x32xbf16> to vector<16x32xbf16>
    %50 = arith.maximumf %48, %49 : vector<16x32xbf16>
    %51 = vector.extract_strided_slice %33 {offsets = [272, 0], sizes = [16, 32], strides = [1, 1]} : vector<2256x32xbf16> to vector<16x32xbf16>
    %52 = arith.maximumf %50, %51 : vector<16x32xbf16>
    %53 = vector.extract_strided_slice %33 {offsets = [288, 0], sizes = [16, 32], strides = [1, 1]} : vector<2256x32xbf16> to vector<16x32xbf16>
    %54 = arith.maximumf %52, %53 : vector<16x32xbf16>
    %55 = vector.extract_strided_slice %33 {offsets = [96, 0], sizes = [16, 32], strides = [1, 1]} : vector<2256x32xbf16> to vector<16x32xbf16>
    %56 = vector.extract_strided_slice %33 {offsets = [112, 0], sizes = [16, 32], strides = [1, 1]} : vector<2256x32xbf16> to vector<16x32xbf16>
    %57 = arith.maximumf %55, %56 : vector<16x32xbf16>
    %58 = vector.extract_strided_slice %33 {offsets = [304, 0], sizes = [16, 32], strides = [1, 1]} : vector<2256x32xbf16> to vector<16x32xbf16>
    %59 = arith.maximumf %57, %58 : vector<16x32xbf16>
    %60 = vector.extract_strided_slice %33 {offsets = [320, 0], sizes = [16, 32], strides = [1, 1]} : vector<2256x32xbf16> to vector<16x32xbf16>
    %61 = arith.maximumf %59, %60 : vector<16x32xbf16>
    %62 = vector.extract_strided_slice %33 {offsets = [128, 0], sizes = [16, 32], strides = [1, 1]} : vector<2256x32xbf16> to vector<16x32xbf16>
    %63 = vector.extract_strided_slice %33 {offsets = [144, 0], sizes = [16, 32], strides = [1, 1]} : vector<2256x32xbf16> to vector<16x32xbf16>
    %64 = arith.maximumf %62, %63 : vector<16x32xbf16>
    %65 = vector.extract_strided_slice %33 {offsets = [336, 0], sizes = [16, 32], strides = [1, 1]} : vector<2256x32xbf16> to vector<16x32xbf16>
    %66 = arith.maximumf %64, %65 : vector<16x32xbf16>
    %67 = vector.extract_strided_slice %33 {offsets = [352, 0], sizes = [16, 32], strides = [1, 1]} : vector<2256x32xbf16> to vector<16x32xbf16>
    %68 = arith.maximumf %66, %67 : vector<16x32xbf16>
    %69 = vector.extract_strided_slice %33 {offsets = [416, 0], sizes = [16, 32], strides = [1, 1]} : vector<2256x32xbf16> to vector<16x32xbf16>
    %70 = vector.extract_strided_slice %33 {offsets = [432, 0], sizes = [16, 32], strides = [1, 1]} : vector<2256x32xbf16> to vector<16x32xbf16>
    %71 = arith.maximumf %69, %70 : vector<16x32xbf16>
    %72 = vector.extract_strided_slice %33 {offsets = [624, 0], sizes = [16, 32], strides = [1, 1]} : vector<2256x32xbf16> to vector<16x32xbf16>
    %73 = arith.maximumf %71, %72 : vector<16x32xbf16>
    %74 = vector.extract_strided_slice %33 {offsets = [640, 0], sizes = [16, 32], strides = [1, 1]} : vector<2256x32xbf16> to vector<16x32xbf16>
    %75 = arith.maximumf %73, %74 : vector<16x32xbf16>
    %76 = vector.extract_strided_slice %33 {offsets = [448, 0], sizes = [16, 32], strides = [1, 1]} : vector<2256x32xbf16> to vector<16x32xbf16>
    %77 = vector.extract_strided_slice %33 {offsets = [464, 0], sizes = [16, 32], strides = [1, 1]} : vector<2256x32xbf16> to vector<16x32xbf16>
    %78 = arith.maximumf %76, %77 : vector<16x32xbf16>
    %79 = vector.extract_strided_slice %33 {offsets = [656, 0], sizes = [16, 32], strides = [1, 1]} : vector<2256x32xbf16> to vector<16x32xbf16>
    %80 = arith.maximumf %78, %79 : vector<16x32xbf16>
    %81 = vector.extract_strided_slice %33 {offsets = [672, 0], sizes = [16, 32], strides = [1, 1]} : vector<2256x32xbf16> to vector<16x32xbf16>
    %82 = arith.maximumf %80, %81 : vector<16x32xbf16>
    %83 = vector.extract_strided_slice %33 {offsets = [480, 0], sizes = [16, 32], strides = [1, 1]} : vector<2256x32xbf16> to vector<16x32xbf16>
    %84 = vector.extract_strided_slice %33 {offsets = [496, 0], sizes = [16, 32], strides = [1, 1]} : vector<2256x32xbf16> to vector<16x32xbf16>
    %85 = arith.maximumf %83, %84 : vector<16x32xbf16>
    %86 = vector.extract_strided_slice %33 {offsets = [688, 0], sizes = [16, 32], strides = [1, 1]} : vector<2256x32xbf16> to vector<16x32xbf16>
    %87 = arith.maximumf %85, %86 : vector<16x32xbf16>
    %88 = vector.extract_strided_slice %33 {offsets = [704, 0], sizes = [16, 32], strides = [1, 1]} : vector<2256x32xbf16> to vector<16x32xbf16>
    %89 = arith.maximumf %87, %88 : vector<16x32xbf16>
    %90 = vector.extract_strided_slice %33 {offsets = [512, 0], sizes = [16, 32], strides = [1, 1]} : vector<2256x32xbf16> to vector<16x32xbf16>
    %91 = vector.extract_strided_slice %33 {offsets = [528, 0], sizes = [16, 32], strides = [1, 1]} : vector<2256x32xbf16> to vector<16x32xbf16>
    %92 = arith.maximumf %90, %91 : vector<16x32xbf16>
    %93 = vector.extract_strided_slice %33 {offsets = [720, 0], sizes = [16, 32], strides = [1, 1]} : vector<2256x32xbf16> to vector<16x32xbf16>
    %94 = arith.maximumf %92, %93 : vector<16x32xbf16>
    %95 = vector.extract_strided_slice %33 {offsets = [736, 0], sizes = [16, 32], strides = [1, 1]} : vector<2256x32xbf16> to vector<16x32xbf16>
    %96 = arith.maximumf %94, %95 : vector<16x32xbf16>
    %97 = vector.extract_strided_slice %33 {offsets = [544, 0], sizes = [16, 32], strides = [1, 1]} : vector<2256x32xbf16> to vector<16x32xbf16>
    %98 = vector.extract_strided_slice %33 {offsets = [560, 0], sizes = [16, 32], strides = [1, 1]} : vector<2256x32xbf16> to vector<16x32xbf16>
    %99 = arith.maximumf %97, %98 : vector<16x32xbf16>
    %100 = vector.extract_strided_slice %33 {offsets = [752, 0], sizes = [16, 32], strides = [1, 1]} : vector<2256x32xbf16> to vector<16x32xbf16>
    %101 = arith.maximumf %99, %100 : vector<16x32xbf16>
    %102 = vector.extract_strided_slice %33 {offsets = [768, 0], sizes = [16, 32], strides = [1, 1]} : vector<2256x32xbf16> to vector<16x32xbf16>
    %103 = arith.maximumf %101, %102 : vector<16x32xbf16>
    %104 = vector.extract_strided_slice %33 {offsets = [832, 0], sizes = [16, 32], strides = [1, 1]} : vector<2256x32xbf16> to vector<16x32xbf16>
    %105 = vector.extract_strided_slice %33 {offsets = [848, 0], sizes = [16, 32], strides = [1, 1]} : vector<2256x32xbf16> to vector<16x32xbf16>
    %106 = arith.maximumf %104, %105 : vector<16x32xbf16>
    %107 = vector.extract_strided_slice %33 {offsets = [1040, 0], sizes = [16, 32], strides = [1, 1]} : vector<2256x32xbf16> to vector<16x32xbf16>
    %108 = arith.maximumf %106, %107 : vector<16x32xbf16>
    %109 = vector.extract_strided_slice %33 {offsets = [1056, 0], sizes = [16, 32], strides = [1, 1]} : vector<2256x32xbf16> to vector<16x32xbf16>
    %110 = arith.maximumf %108, %109 : vector<16x32xbf16>
    %111 = vector.extract_strided_slice %33 {offsets = [864, 0], sizes = [16, 32], strides = [1, 1]} : vector<2256x32xbf16> to vector<16x32xbf16>
    %112 = vector.extract_strided_slice %33 {offsets = [880, 0], sizes = [16, 32], strides = [1, 1]} : vector<2256x32xbf16> to vector<16x32xbf16>
    %113 = arith.maximumf %111, %112 : vector<16x32xbf16>
    %114 = vector.extract_strided_slice %33 {offsets = [1072, 0], sizes = [16, 32], strides = [1, 1]} : vector<2256x32xbf16> to vector<16x32xbf16>
    %115 = arith.maximumf %113, %114 : vector<16x32xbf16>
    %116 = vector.extract_strided_slice %33 {offsets = [1088, 0], sizes = [16, 32], strides = [1, 1]} : vector<2256x32xbf16> to vector<16x32xbf16>
    %117 = arith.maximumf %115, %116 : vector<16x32xbf16>
    %118 = vector.extract_strided_slice %33 {offsets = [896, 0], sizes = [16, 32], strides = [1, 1]} : vector<2256x32xbf16> to vector<16x32xbf16>
    %119 = vector.extract_strided_slice %33 {offsets = [912, 0], sizes = [16, 32], strides = [1, 1]} : vector<2256x32xbf16> to vector<16x32xbf16>
    %120 = arith.maximumf %118, %119 : vector<16x32xbf16>
    %121 = vector.extract_strided_slice %33 {offsets = [1104, 0], sizes = [16, 32], strides = [1, 1]} : vector<2256x32xbf16> to vector<16x32xbf16>
    %122 = arith.maximumf %120, %121 : vector<16x32xbf16>
    %123 = vector.extract_strided_slice %33 {offsets = [1120, 0], sizes = [16, 32], strides = [1, 1]} : vector<2256x32xbf16> to vector<16x32xbf16>
    %124 = arith.maximumf %122, %123 : vector<16x32xbf16>
    %125 = vector.extract_strided_slice %33 {offsets = [928, 0], sizes = [16, 32], strides = [1, 1]} : vector<2256x32xbf16> to vector<16x32xbf16>
    %126 = vector.extract_strided_slice %33 {offsets = [944, 0], sizes = [16, 32], strides = [1, 1]} : vector<2256x32xbf16> to vector<16x32xbf16>
    %127 = arith.maximumf %125, %126 : vector<16x32xbf16>
    %128 = vector.extract_strided_slice %33 {offsets = [1136, 0], sizes = [16, 32], strides = [1, 1]} : vector<2256x32xbf16> to vector<16x32xbf16>
    %129 = arith.maximumf %127, %128 : vector<16x32xbf16>
    %130 = vector.extract_strided_slice %33 {offsets = [1152, 0], sizes = [16, 32], strides = [1, 1]} : vector<2256x32xbf16> to vector<16x32xbf16>
    %131 = arith.maximumf %129, %130 : vector<16x32xbf16>
    %132 = vector.extract_strided_slice %33 {offsets = [960, 0], sizes = [16, 32], strides = [1, 1]} : vector<2256x32xbf16> to vector<16x32xbf16>
    %133 = vector.extract_strided_slice %33 {offsets = [976, 0], sizes = [16, 32], strides = [1, 1]} : vector<2256x32xbf16> to vector<16x32xbf16>
    %134 = arith.maximumf %132, %133 : vector<16x32xbf16>
    %135 = vector.extract_strided_slice %33 {offsets = [1168, 0], sizes = [16, 32], strides = [1, 1]} : vector<2256x32xbf16> to vector<16x32xbf16>
    %136 = arith.maximumf %134, %135 : vector<16x32xbf16>
    %137 = vector.extract_strided_slice %33 {offsets = [1184, 0], sizes = [16, 32], strides = [1, 1]} : vector<2256x32xbf16> to vector<16x32xbf16>
    %138 = arith.maximumf %136, %137 : vector<16x32xbf16>
    %139 = vector.extract_strided_slice %33 {offsets = [1248, 0], sizes = [16, 32], strides = [1, 1]} : vector<2256x32xbf16> to vector<16x32xbf16>
    %140 = vector.extract_strided_slice %33 {offsets = [1264, 0], sizes = [16, 32], strides = [1, 1]} : vector<2256x32xbf16> to vector<16x32xbf16>
    %141 = arith.maximumf %139, %140 : vector<16x32xbf16>
    %142 = vector.extract_strided_slice %33 {offsets = [1456, 0], sizes = [16, 32], strides = [1, 1]} : vector<2256x32xbf16> to vector<16x32xbf16>
    %143 = arith.maximumf %141, %142 : vector<16x32xbf16>
    %144 = vector.extract_strided_slice %33 {offsets = [1472, 0], sizes = [16, 32], strides = [1, 1]} : vector<2256x32xbf16> to vector<16x32xbf16>
    %145 = arith.maximumf %143, %144 : vector<16x32xbf16>
    %146 = vector.extract_strided_slice %33 {offsets = [1280, 0], sizes = [16, 32], strides = [1, 1]} : vector<2256x32xbf16> to vector<16x32xbf16>
    %147 = vector.extract_strided_slice %33 {offsets = [1296, 0], sizes = [16, 32], strides = [1, 1]} : vector<2256x32xbf16> to vector<16x32xbf16>
    %148 = arith.maximumf %146, %147 : vector<16x32xbf16>
    %149 = vector.extract_strided_slice %33 {offsets = [1488, 0], sizes = [16, 32], strides = [1, 1]} : vector<2256x32xbf16> to vector<16x32xbf16>
    %150 = arith.maximumf %148, %149 : vector<16x32xbf16>
    %151 = vector.extract_strided_slice %33 {offsets = [1504, 0], sizes = [16, 32], strides = [1, 1]} : vector<2256x32xbf16> to vector<16x32xbf16>
    %152 = arith.maximumf %150, %151 : vector<16x32xbf16>
    %153 = vector.extract_strided_slice %33 {offsets = [1312, 0], sizes = [16, 32], strides = [1, 1]} : vector<2256x32xbf16> to vector<16x32xbf16>
    %154 = vector.extract_strided_slice %33 {offsets = [1328, 0], sizes = [16, 32], strides = [1, 1]} : vector<2256x32xbf16> to vector<16x32xbf16>
    %155 = arith.maximumf %153, %154 : vector<16x32xbf16>
    %156 = vector.extract_strided_slice %33 {offsets = [1520, 0], sizes = [16, 32], strides = [1, 1]} : vector<2256x32xbf16> to vector<16x32xbf16>
    %157 = arith.maximumf %155, %156 : vector<16x32xbf16>
    %158 = vector.extract_strided_slice %33 {offsets = [1536, 0], sizes = [16, 32], strides = [1, 1]} : vector<2256x32xbf16> to vector<16x32xbf16>
    %159 = arith.maximumf %157, %158 : vector<16x32xbf16>
    %160 = vector.extract_strided_slice %33 {offsets = [1344, 0], sizes = [16, 32], strides = [1, 1]} : vector<2256x32xbf16> to vector<16x32xbf16>
    %161 = vector.extract_strided_slice %33 {offsets = [1360, 0], sizes = [16, 32], strides = [1, 1]} : vector<2256x32xbf16> to vector<16x32xbf16>
    %162 = arith.maximumf %160, %161 : vector<16x32xbf16>
    %163 = vector.extract_strided_slice %33 {offsets = [1552, 0], sizes = [16, 32], strides = [1, 1]} : vector<2256x32xbf16> to vector<16x32xbf16>
    %164 = arith.maximumf %162, %163 : vector<16x32xbf16>
    %165 = vector.extract_strided_slice %33 {offsets = [1568, 0], sizes = [16, 32], strides = [1, 1]} : vector<2256x32xbf16> to vector<16x32xbf16>
    %166 = arith.maximumf %164, %165 : vector<16x32xbf16>
    %167 = vector.extract_strided_slice %33 {offsets = [1376, 0], sizes = [16, 32], strides = [1, 1]} : vector<2256x32xbf16> to vector<16x32xbf16>
    %168 = vector.extract_strided_slice %33 {offsets = [1392, 0], sizes = [16, 32], strides = [1, 1]} : vector<2256x32xbf16> to vector<16x32xbf16>
    %169 = arith.maximumf %167, %168 : vector<16x32xbf16>
    %170 = vector.extract_strided_slice %33 {offsets = [1584, 0], sizes = [16, 32], strides = [1, 1]} : vector<2256x32xbf16> to vector<16x32xbf16>
    %171 = arith.maximumf %169, %170 : vector<16x32xbf16>
    %172 = vector.extract_strided_slice %33 {offsets = [1600, 0], sizes = [16, 32], strides = [1, 1]} : vector<2256x32xbf16> to vector<16x32xbf16>
    %173 = arith.maximumf %171, %172 : vector<16x32xbf16>
    %174 = vector.extract_strided_slice %33 {offsets = [1664, 0], sizes = [16, 32], strides = [1, 1]} : vector<2256x32xbf16> to vector<16x32xbf16>
    %175 = vector.extract_strided_slice %33 {offsets = [1680, 0], sizes = [16, 32], strides = [1, 1]} : vector<2256x32xbf16> to vector<16x32xbf16>
    %176 = arith.maximumf %174, %175 : vector<16x32xbf16>
    %177 = vector.extract_strided_slice %33 {offsets = [1872, 0], sizes = [16, 32], strides = [1, 1]} : vector<2256x32xbf16> to vector<16x32xbf16>
    %178 = arith.maximumf %176, %177 : vector<16x32xbf16>
    %179 = vector.extract_strided_slice %33 {offsets = [1888, 0], sizes = [16, 32], strides = [1, 1]} : vector<2256x32xbf16> to vector<16x32xbf16>
    %180 = arith.maximumf %178, %179 : vector<16x32xbf16>
    %181 = vector.extract_strided_slice %33 {offsets = [1696, 0], sizes = [16, 32], strides = [1, 1]} : vector<2256x32xbf16> to vector<16x32xbf16>
    %182 = vector.extract_strided_slice %33 {offsets = [1712, 0], sizes = [16, 32], strides = [1, 1]} : vector<2256x32xbf16> to vector<16x32xbf16>
    %183 = arith.maximumf %181, %182 : vector<16x32xbf16>
    %184 = vector.extract_strided_slice %33 {offsets = [1904, 0], sizes = [16, 32], strides = [1, 1]} : vector<2256x32xbf16> to vector<16x32xbf16>
    %185 = arith.maximumf %183, %184 : vector<16x32xbf16>
    %186 = vector.extract_strided_slice %33 {offsets = [1920, 0], sizes = [16, 32], strides = [1, 1]} : vector<2256x32xbf16> to vector<16x32xbf16>
    %187 = arith.maximumf %185, %186 : vector<16x32xbf16>
    %188 = vector.extract_strided_slice %33 {offsets = [1728, 0], sizes = [16, 32], strides = [1, 1]} : vector<2256x32xbf16> to vector<16x32xbf16>
    %189 = vector.extract_strided_slice %33 {offsets = [1744, 0], sizes = [16, 32], strides = [1, 1]} : vector<2256x32xbf16> to vector<16x32xbf16>
    %190 = arith.maximumf %188, %189 : vector<16x32xbf16>
    %191 = vector.extract_strided_slice %33 {offsets = [1936, 0], sizes = [16, 32], strides = [1, 1]} : vector<2256x32xbf16> to vector<16x32xbf16>
    %192 = arith.maximumf %190, %191 : vector<16x32xbf16>
    %193 = vector.extract_strided_slice %33 {offsets = [1952, 0], sizes = [16, 32], strides = [1, 1]} : vector<2256x32xbf16> to vector<16x32xbf16>
    %194 = arith.maximumf %192, %193 : vector<16x32xbf16>
    %195 = vector.extract_strided_slice %33 {offsets = [1760, 0], sizes = [16, 32], strides = [1, 1]} : vector<2256x32xbf16> to vector<16x32xbf16>
    %196 = vector.extract_strided_slice %33 {offsets = [1776, 0], sizes = [16, 32], strides = [1, 1]} : vector<2256x32xbf16> to vector<16x32xbf16>
    %197 = arith.maximumf %195, %196 : vector<16x32xbf16>
    %198 = vector.extract_strided_slice %33 {offsets = [1968, 0], sizes = [16, 32], strides = [1, 1]} : vector<2256x32xbf16> to vector<16x32xbf16>
    %199 = arith.maximumf %197, %198 : vector<16x32xbf16>
    %200 = vector.extract_strided_slice %33 {offsets = [1984, 0], sizes = [16, 32], strides = [1, 1]} : vector<2256x32xbf16> to vector<16x32xbf16>
    %201 = arith.maximumf %199, %200 : vector<16x32xbf16>
    %202 = vector.extract_strided_slice %33 {offsets = [1792, 0], sizes = [16, 32], strides = [1, 1]} : vector<2256x32xbf16> to vector<16x32xbf16>
    %203 = vector.extract_strided_slice %33 {offsets = [1808, 0], sizes = [16, 32], strides = [1, 1]} : vector<2256x32xbf16> to vector<16x32xbf16>
    %204 = arith.maximumf %202, %203 : vector<16x32xbf16>
    %205 = vector.extract_strided_slice %33 {offsets = [2000, 0], sizes = [16, 32], strides = [1, 1]} : vector<2256x32xbf16> to vector<16x32xbf16>
    %206 = arith.maximumf %204, %205 : vector<16x32xbf16>
    %207 = vector.extract_strided_slice %33 {offsets = [2016, 0], sizes = [16, 32], strides = [1, 1]} : vector<2256x32xbf16> to vector<16x32xbf16>
    %208 = arith.maximumf %206, %207 : vector<16x32xbf16>
    %209 = tpu.concatenate %40, %47, %54, %61, %68, %75, %82, %89, %96, %103, %110, %117, %124, %131, %138, %145 in 1 : vector<16x32xbf16>, vector<16x32xbf16>, vector<16x32xbf16>, vector<16x32xbf16>, vector<16x32xbf16>, vector<16x32xbf16>, vector<16x32xbf16>, vector<16x32xbf16>, vector<16x32xbf16>, vector<16x32xbf16>, vector<16x32xbf16>, vector<16x32xbf16>, vector<16x32xbf16>, vector<16x32xbf16>, vector<16x32xbf16>, vector<16x32xbf16> -> vector<16x512xbf16>
    %210 = tpu.concatenate %152, %159, %166, %173, %180, %187, %194, %201, %208 in 1 : vector<16x32xbf16>, vector<16x32xbf16>, vector<16x32xbf16>, vector<16x32xbf16>, vector<16x32xbf16>, vector<16x32xbf16>, vector<16x32xbf16>, vector<16x32xbf16>, vector<16x32xbf16> -> vector<16x288xbf16>
    %211 = tpu.concatenate %209, %210 in 1 : vector<16x512xbf16>, vector<16x288xbf16> -> vector<16x800xbf16>
    %c0_13 = arith.constant 0 : index
    %c0_14 = arith.constant 0 : index
    %212 = vector.load %arg6[%c0_13, %c0_14] : memref<800x512xbf16, #tpu.memory_space<vmem>>, vector<800x512xbf16>
    %cst_15 = arith.constant dense<0.000000e+00> : vector<16x512xf32>
    %213 = tpu.matmul %211, %212, %cst_15 {dimension_numbers = #tpu.dot_dimension_numbers<[1], [0], [0], [1], [0, 0, 1, 1], [], []>} : vector<16x800xbf16>, vector<800x512xbf16>, vector<16x512xf32> -> vector<16x512xf32>
    %c0_16 = arith.constant 0 : index
    %c0_17 = arith.constant 0 : index
    %214 = vector.load %arg7[%c0_16, %c0_17] : memref<1x512xf32, #tpu.memory_space<vmem>>, vector<1x512xf32>
    %215 = vector.broadcast %214 : vector<1x512xf32> to vector<16x512xf32>
    %216 = arith.addf %213, %215 : vector<16x512xf32>
    %cst_18 = arith.constant 0.000000e+00 : f32
    %217 = vector.broadcast %cst_18 : f32 to vector<16x512xf32>
    %218 = arith.maximumf %216, %217 : vector<16x512xf32>
    %219 = arith.truncf %218 : vector<16x512xf32> to vector<16x512xbf16>
    %c0_19 = arith.constant 0 : index
    %c0_20 = arith.constant 0 : index
    %220 = vector.load %arg8[%c0_19, %c0_20] : memref<512x128xbf16, #tpu.memory_space<vmem>>, vector<512x128xbf16>
    %cst_21 = arith.constant dense<0.000000e+00> : vector<16x128xf32>
    %221 = tpu.matmul %219, %220, %cst_21 {dimension_numbers = #tpu.dot_dimension_numbers<[1], [0], [0], [1], [0, 0, 1, 1], [], []>} : vector<16x512xbf16>, vector<512x128xbf16>, vector<16x128xf32> -> vector<16x128xf32>
    %c0_22 = arith.constant 0 : index
    %c0_23 = arith.constant 0 : index
    %222 = vector.load %arg9[%c0_22, %c0_23] : memref<1x128xf32, #tpu.memory_space<vmem>>, vector<1x128xf32>
    %223 = vector.broadcast %222 : vector<1x128xf32> to vector<16x128xf32>
    %224 = arith.addf %221, %223 : vector<16x128xf32>
    %cst_24 = arith.constant 0.000000e+00 : f32
    %225 = vector.broadcast %cst_24 : f32 to vector<16x128xf32>
    %226 = arith.maximumf %224, %225 : vector<16x128xf32>
    %c0_25 = arith.constant 0 : index
    %c0_26 = arith.constant 0 : index
    %227 = vector.load %arg10[%c0_25, %c0_26] : memref<16x128xf32, #tpu.memory_space<vmem>>, vector<16x128xf32>
    tpu.vector_store %arg10[%c0_25, %c0_26], %226 {strides = array<i32>} : memref<16x128xf32, #tpu.memory_space<vmem>>, vector<16x128xf32>,
    return
  }
  func.func @transform_0(%arg0: i32) -> (i32, i32, i32) {
    %c0_i32 = arith.constant 0 : i32
    %c0_i32_0 = arith.constant 0 : i32
    %c0_i32_1 = arith.constant 0 : i32
    return %arg0, %c0_i32, %c0_i32_0 : i32, i32, i32
  }
  func.func @transform_1(%arg0: i32) -> (i32, i32) {
    %c0_i32 = arith.constant 0 : i32
    %c0_i32_0 = arith.constant 0 : i32
    %c0_i32_1 = arith.constant 0 : i32
    return %c0_i32, %c0_i32_0 : i32, i32
  }
  func.func @transform_2(%arg0: i32) -> (i32, i32) {
    %c0_i32 = arith.constant 0 : i32
    %c0_i32_0 = arith.constant 0 : i32
    %c0_i32_1 = arith.constant 0 : i32
    return %c0_i32, %c0_i32_0 : i32, i32
  }
  func.func @transform_3(%arg0: i32) -> (i32, i32) {
    %c0_i32 = arith.constant 0 : i32
    %c0_i32_0 = arith.constant 0 : i32
    %c0_i32_1 = arith.constant 0 : i32
    return %c0_i32, %c0_i32_0 : i32, i32
  }
  func.func @transform_4(%arg0: i32) -> (i32, i32) {
    %c0_i32 = arith.constant 0 : i32
    %c0_i32_0 = arith.constant 0 : i32
    %c0_i32_1 = arith.constant 0 : i32
    return %c0_i32, %c0_i32_0 : i32, i32
  }
  func.func @transform_5(%arg0: i32) -> (i32, i32) {
    %c0_i32 = arith.constant 0 : i32
    %c0_i32_0 = arith.constant 0 : i32
    %c0_i32_1 = arith.constant 0 : i32
    return %c0_i32, %c0_i32_0 : i32, i32
  }
  func.func @transform_6(%arg0: i32) -> (i32, i32) {
    %c0_i32 = arith.constant 0 : i32
    %c0_i32_0 = arith.constant 0 : i32
    %c0_i32_1 = arith.constant 0 : i32
    return %c0_i32, %c0_i32_0 : i32, i32
  }
  func.func @transform_7(%arg0: i32) -> (i32, i32) {
    %c0_i32 = arith.constant 0 : i32
    %c0_i32_0 = arith.constant 0 : i32
    %c0_i32_1 = arith.constant 0 : i32
    return %c0_i32, %c0_i32_0 : i32, i32
  }
  func.func @transform_8(%arg0: i32) -> (i32, i32) {
    %c0_i32 = arith.constant 0 : i32
    %c0_i32_0 = arith.constant 0 : i32
    %c0_i32_1 = arith.constant 0 : i32
    return %c0_i32, %c0_i32_0 : i32, i32
  }
  func.func @transform_9(%arg0: i32) -> (i32, i32) {
    %c0_i32 = arith.constant 0 : i32
    %c0_i32_0 = arith.constant 0 : i32
    return %arg0, %c0_i32 : i32, i32
  }
}

</mosaic_0001>

<llo_original>
// kernel: clasificador_forward.1
$region0: #{clasificador_forward.1}
  #allocation0 [shape = 'u32[]', space=smem, size = 0x4, offset = 0x4, fixed_abs, tag = 'smem constant byte address 0x4 - core index']
  #allocation1 [shape = 'u32[144,128]{1,0:T(1,128)}', space=vmem, size = 0x12000, scoped, tag = 'internal scratch']
  %s0 = inlined_call_operand.vmem [shape: bf16[1,2704,16], index: 0, kind: input, shape index: {}]
  %s1 = inlined_call_operand.vmem [shape: bf16[16,64], index: 1, kind: input, shape index: {}]
  %s2 = inlined_call_operand.vmem [shape: f32[1,16], index: 2, kind: input, shape index: {}]
  %s3 = inlined_call_operand.vmem [shape: bf16[144,32], index: 3, kind: input, shape index: {}]
  %s4 = inlined_call_operand.vmem [shape: f32[1,32], index: 4, kind: input, shape index: {}]
  %s5 = inlined_call_operand.vmem [shape: bf16[800,512], index: 5, kind: input, shape index: {}]
  %s6 = inlined_call_operand.vmem [shape: f32[1,512], index: 6, kind: input, shape index: {}]
  %s7 = inlined_call_operand.vmem [shape: bf16[512,128], index: 7, kind: input, shape index: {}]
  %s8 = inlined_call_operand.vmem [shape: f32[1,128], index: 8, kind: input, shape index: {}]
  %s9 = inlined_call_operand.vmem [shape: f32[16,128], index: 9, kind: output, shape index: {}]
  %s10 = sld [smem:[#allocation0]]
  $region46: #{clasificador_forward.1} parent=0
    _
  %s12 = ssub.s32 1, %s10
  %s13 = scalar_select 0, %s12, %s10
  // Predicated region
  $region2: #{clasificador_forward.1} parent=0 // pred_check
    _
  $region3: #{clasificador_forward.1} parent=0 // pred_check_branch
    %15 = sbr.rel (0) target = $region5
  $region4: #{clasificador_forward.1} parent=0 // pred_region
    _
  $region5: #{clasificador_forward.1} parent=0 // pred_fallthru
    _
  // Predicated region
  $region6: #{clasificador_forward.1} parent=0 // pred_check
    _
  $region7: #{clasificador_forward.1} parent=0 // pred_check_branch
    %17 = sbr.rel (0) target = $region9
  $region8: #{clasificador_forward.1} parent=0 // pred_region
    _
  $region9: #{clasificador_forward.1} parent=0 // pred_fallthru
    _
  // Predicated region
  $region10: #{clasificador_forward.1} parent=0 // pred_check
    _
  $region11: #{clasificador_forward.1} parent=0 // pred_check_branch
    %19 = sbr.rel (0) target = $region13
  $region12: #{clasificador_forward.1} parent=0 // pred_region
    _
  $region13: #{clasificador_forward.1} parent=0 // pred_fallthru
    _
  // Predicated region
  $region14: #{clasificador_forward.1} parent=0 // pred_check
    _
  $region15: #{clasificador_forward.1} parent=0 // pred_check_branch
    %21 = sbr.rel (0) target = $region17
  $region16: #{clasificador_forward.1} parent=0 // pred_region
    _
  $region17: #{clasificador_forward.1} parent=0 // pred_fallthru
    _
  // Predicated region
  $region18: #{clasificador_forward.1} parent=0 // pred_check
    _
  $region19: #{clasificador_forward.1} parent=0 // pred_check_branch
    %23 = sbr.rel (0) target = $region21
  $region20: #{clasificador_forward.1} parent=0 // pred_region
    _
  $region21: #{clasificador_forward.1} parent=0 // pred_fallthru
    _
  // Predicated region
  $region22: #{clasificador_forward.1} parent=0 // pred_check
    _
  $region23: #{clasificador_forward.1} parent=0 // pred_check_branch
    %25 = sbr.rel (0) target = $region25
  $region24: #{clasificador_forward.1} parent=0 // pred_region
    _
  $region25: #{clasificador_forward.1} parent=0 // pred_fallthru
    _
  // Predicated region
  $region26: #{clasificador_forward.1} parent=0 // pred_check
    _
  $region27: #{clasificador_forward.1} parent=0 // pred_check_branch
    %27 = sbr.rel (0) target = $region29
  $region28: #{clasificador_forward.1} parent=0 // pred_region
    _
  $region29: #{clasificador_forward.1} parent=0 // pred_fallthru
    _
  // Predicated region
  $region30: #{clasificador_forward.1} parent=0 // pred_check
    _
  $region31: #{clasificador_forward.1} parent=0 // pred_check_branch
    %29 = sbr.rel (0) target = $region33
  $region32: #{clasificador_forward.1} parent=0 // pred_region
    _
  $region33: #{clasificador_forward.1} parent=0 // pred_fallthru
    _
  // Predicated region
  $region34: #{clasificador_forward.1} parent=0 // pred_check
    _
  $region35: #{clasificador_forward.1} parent=0 // pred_check_branch
    %31 = sbr.rel (0) target = $region37
  $region36: #{clasificador_forward.1} parent=0 // pred_region
    _
  $region37: #{clasificador_forward.1} parent=0 // pred_fallthru
    _
  %v33 = vld [vmem:[%s0] sm:$0xf]
  %v34 = vld [vmem:[%s0 + $0x4] sm:$0xf]
  %v35 = vld [vmem:[%s0 + $0x8] sm:$0xf]
  %v36 = vld [vmem:[%s0 + $0xc] sm:$0xf]
  %v37 = vld [vmem:[%s0 + $0x10] sm:$0xf]
  %v38 = vld [vmem:[%s0 + $0x14] sm:$0xf]
  %v39 = vld [vmem:[%s0 + $0x18] sm:$0xf]
  %v40 = vld [vmem:[%s0 + $0x1c] sm:$0xf]
  %v41 = vld [vmem:[%s0 + $0x20] sm:$0xf]
  %v42 = vld [vmem:[%s0 + $0x24] sm:$0xf]
  %v43 = vld [vmem:[%s0 + $0x28] sm:$0xf]
  %v44 = vld [vmem:[%s0 + $0x2c] sm:$0xf]
  %v45 = vld [vmem:[%s0 + $0x30] sm:$0xf]
  %v46 = vld [vmem:[%s0 + $0x34] sm:$0xf]
  %v47 = vld [vmem:[%s0 + $0x38] sm:$0xf]
  %v48 = vld [vmem:[%s0 + $0x3c] sm:$0xf]
  %v49 = vld [vmem:[%s0 + $0x40] sm:$0xf]
  %v50 = vld [vmem:[%s0 + $0x44] sm:$0xf]
  %v51 = vld [vmem:[%s0 + $0x48] sm:$0xf]
  %v52 = vld [vmem:[%s0 + $0x4c] sm:$0xf]
  %v53 = vld [vmem:[%s0 + $0x50] sm:$0xf]
  %v54 = vld [vmem:[%s0 + $0x54] sm:$0xf]
  %v55 = vld [vmem:[%s0 + $0x58] sm:$0xf]
  %v56 = vld [vmem:[%s0 + $0x5c] sm:$0xf]
  %v57 = vld [vmem:[%s0 + $0x60] sm:$0xf]
  %v58 = vld [vmem:[%s0 + $0x64] sm:$0xf]
  %v59 = vld [vmem:[%s0 + $0x68] sm:$0xf]
  %v60 = vld [vmem:[%s0 + $0x6c] sm:$0xf]
  %v61 = vld [vmem:[%s0 + $0x70] sm:$0xf]
  %v62 = vld [vmem:[%s0 + $0x74] sm:$0xf]
  %v63 = vld [vmem:[%s0 + $0x78] sm:$0xf]
  %v64 = vld [vmem:[%s0 + $0x7c] sm:$0xf]
  %v65 = vld [vmem:[%s0 + $0x80] sm:$0xf]
  %v66 = vld [vmem:[%s0 + $0x84] sm:$0xf]
  %v67 = vld [vmem:[%s0 + $0x88] sm:$0xf]
  %v68 = vld [vmem:[%s0 + $0x8c] sm:$0xf]
  %v69 = vld [vmem:[%s0 + $0x90] sm:$0xf]
  %v70 = vld [vmem:[%s0 + $0x94] sm:$0xf]
  %v71 = vld [vmem:[%s0 + $0x98] sm:$0xf]
  %v72 = vld [vmem:[%s0 + $0x9c] sm:$0xf]
  %v73 = vld [vmem:[%s0 + $0xa0] sm:$0xf]
  %v74 = vld [vmem:[%s0 + $0xa4] sm:$0xf]
  %v75 = vld [vmem:[%s0 + $0xa8] sm:$0xf]
  %v76 = vld [vmem:[%s0 + $0xac] sm:$0xf]
  %v77 = vld [vmem:[%s0 + $0xb0] sm:$0xf]
  %v78 = vld [vmem:[%s0 + $0xb4] sm:$0xf]
  %v79 = vld [vmem:[%s0 + $0xb8] sm:$0xf]
  %v80 = vld [vmem:[%s0 + $0xbc] sm:$0xf]
  %v81 = vld [vmem:[%s0 + $0xc0] sm:$0xf]
  %v82 = vld [vmem:[%s0 + $0xc4] sm:$0xf]
  %v83 = vld [vmem:[%s0 + $0xc8] sm:$0xf]
  %v84 = vld [vmem:[%s0 + $0xcc] sm:$0xf]
  %v85 = vld [vmem:[%s0 + $0xd0] sm:$0xf]
  %v86 = vld [vmem:[%s0 + $0xd4] sm:$0xf]
  %v87 = vld [vmem:[%s0 + $0xd8] sm:$0xf]
  %v88 = vld [vmem:[%s0 + $0xdc] sm:$0xf]
  %v89 = vld [vmem:[%s0 + $0xe0] sm:$0xf]
  %v90 = vld [vmem:[%s0 + $0xe4] sm:$0xf]
  %v91 = vld [vmem:[%s0 + $0xe8] sm:$0xf]
  %v92 = vld [vmem:[%s0 + $0xec] sm:$0xf]
  %v93 = vld [vmem:[%s0 + $0xf0] sm:$0xf]
  %v94 = vld [vmem:[%s0 + $0xf4] sm:$0xf]
  %v95 = vld [vmem:[%s0 + $0xf8] sm:$0xf]
  %v96 = vld [vmem:[%s0 + $0xfc] sm:$0xf]
  %v97 = vld [vmem:[%s0 + $0x100] sm:$0xf]
  %v98 = vld [vmem:[%s0 + $0x104] sm:$0xf]
  %v99 = vld [vmem:[%s0 + $0x108] sm:$0xf]
  %v100 = vld [vmem:[%s0 + $0x10c] sm:$0xf]
  %v101 = vld [vmem:[%s0 + $0x110] sm:$0xf]
  %v102 = vld [vmem:[%s0 + $0x114] sm:$0xf]
  %v103 = vld [vmem:[%s0 + $0x118] sm:$0xf]
  %v104 = vld [vmem:[%s0 + $0x11c] sm:$0xf]
  %v105 = vld [vmem:[%s0 + $0x120] sm:$0xf]
  %v106 = vld [vmem:[%s0 + $0x124] sm:$0xf]
  %v107 = vld [vmem:[%s0 + $0x128] sm:$0xf]
  %v108 = vld [vmem:[%s0 + $0x12c] sm:$0xf]
  %v109 = vld [vmem:[%s0 + $0x130] sm:$0xf]
  %v110 = vld [vmem:[%s0 + $0x134] sm:$0xf]
  %v111 = vld [vmem:[%s0 + $0x138] sm:$0xf]
  %v112 = vld [vmem:[%s0 + $0x13c] sm:$0xf]
  %v113 = vld [vmem:[%s0 + $0x140] sm:$0xf]
  %v114 = vld [vmem:[%s0 + $0x144] sm:$0xf]
  %v115 = vld [vmem:[%s0 + $0x148] sm:$0xf]
  %v116 = vld [vmem:[%s0 + $0x14c] sm:$0xf]
  %v117 = vld [vmem:[%s0 + $0x150] sm:$0xf]
  %v118 = vld [vmem:[%s0 + $0x154] sm:$0xf]
  %v119 = vld [vmem:[%s0 + $0x158] sm:$0xf]
  %v120 = vld [vmem:[%s0 + $0x15c] sm:$0xf]
  %v121 = vld [vmem:[%s0 + $0x160] sm:$0xf]
  %v122 = vld [vmem:[%s0 + $0x164] sm:$0xf]
  %v123 = vld [vmem:[%s0 + $0x168] sm:$0xf]
  %v124 = vld [vmem:[%s0 + $0x16c] sm:$0xf]
  %v125 = vld [vmem:[%s0 + $0x170] sm:$0xf]
  %v126 = vld [vmem:[%s0 + $0x174] sm:$0xf]
  %v127 = vld [vmem:[%s0 + $0x178] sm:$0xf]
  %v128 = vld [vmem:[%s0 + $0x17c] sm:$0xf]
  %v129 = vld [vmem:[%s0 + $0x180] sm:$0xf]
  %v130 = vld [vmem:[%s0 + $0x184] sm:$0xf]
  %v131 = vld [vmem:[%s0 + $0x188] sm:$0xf]
  %v132 = vld [vmem:[%s0 + $0x18c] sm:$0xf]
  %v133 = vld [vmem:[%s0 + $0x190] sm:$0xf]
  %v134 = vld [vmem:[%s0 + $0x194] sm:$0xf]
  %v135 = vld [vmem:[%s0 + $0x198] sm:$0xf]
  %v136 = vld [vmem:[%s0 + $0x19c] sm:$0xf]
  %v137 = vld [vmem:[%s0 + $0x1a0] sm:$0xf]
  %v138 = vld [vmem:[%s0 + $0x1a4] sm:$0xf]
  %v139 = vld [vmem:[%s0 + $0x1a8] sm:$0xf]
  %v140 = vld [vmem:[%s0 + $0x1ac] sm:$0xf]
  %v141 = vld [vmem:[%s0 + $0x1b0] sm:$0xf]
  %v142 = vld [vmem:[%s0 + $0x1b4] sm:$0xf]
  %v143 = vld [vmem:[%s0 + $0x1b8] sm:$0xf]
  %v144 = vld [vmem:[%s0 + $0x1bc] sm:$0xf]
  %v145 = vld [vmem:[%s0 + $0x1c0] sm:$0xf]
  %v146 = vld [vmem:[%s0 + $0x1c4] sm:$0xf]
  %v147 = vld [vmem:[%s0 + $0x1c8] sm:$0xf]
  %v148 = vld [vmem:[%s0 + $0x1cc] sm:$0xf]
  %v149 = vld [vmem:[%s0 + $0x1d0] sm:$0xf]
  %v150 = vld [vmem:[%s0 + $0x1d4] sm:$0xf]
  %v151 = vld [vmem:[%s0 + $0x1d8] sm:$0xf]
  %v152 = vld [vmem:[%s0 + $0x1dc] sm:$0xf]
  %v153 = vld [vmem:[%s0 + $0x1e0] sm:$0xf]
  %v154 = vld [vmem:[%s0 + $0x1e4] sm:$0xf]
  %v155 = vld [vmem:[%s0 + $0x1e8] sm:$0xf]
  %v156 = vld [vmem:[%s0 + $0x1ec] sm:$0xf]
  %v157 = vld [vmem:[%s0 + $0x1f0] sm:$0xf]
  %v158 = vld [vmem:[%s0 + $0x1f4] sm:$0xf]
  %v159 = vld [vmem:[%s0 + $0x1f8] sm:$0xf]
  %v160 = vld [vmem:[%s0 + $0x1fc] sm:$0xf]
  %v161 = vld [vmem:[%s0 + $0x200] sm:$0xf]
  %v162 = vld [vmem:[%s0 + $0x204] sm:$0xf]
  %v163 = vld [vmem:[%s0 + $0x208] sm:$0xf]
  %v164 = vld [vmem:[%s0 + $0x20c] sm:$0xf]
  %v165 = vld [vmem:[%s0 + $0x210] sm:$0xf]
  %v166 = vld [vmem:[%s0 + $0x214] sm:$0xf]
  %v167 = vld [vmem:[%s0 + $0x218] sm:$0xf]
  %v168 = vld [vmem:[%s0 + $0x21c] sm:$0xf]
  %v169 = vld [vmem:[%s0 + $0x220] sm:$0xf]
  %v170 = vld [vmem:[%s0 + $0x224] sm:$0xf]
  %v171 = vld [vmem:[%s0 + $0x228] sm:$0xf]
  %v172 = vld [vmem:[%s0 + $0x22c] sm:$0xf]
  %v173 = vld [vmem:[%s0 + $0x230] sm:$0xf]
  %v174 = vld [vmem:[%s0 + $0x234] sm:$0xf]
  %v175 = vld [vmem:[%s0 + $0x238] sm:$0xf]
  %v176 = vld [vmem:[%s0 + $0x23c] sm:$0xf]
  %v177 = vld [vmem:[%s0 + $0x240] sm:$0xf]
  %v178 = vld [vmem:[%s0 + $0x244] sm:$0xf]
  %v179 = vld [vmem:[%s0 + $0x248] sm:$0xf]
  %v180 = vld [vmem:[%s0 + $0x24c] sm:$0xf]
  %v181 = vld [vmem:[%s0 + $0x250] sm:$0xf]
  %v182 = vld [vmem:[%s0 + $0x254] sm:$0xf]
  %v183 = vld [vmem:[%s0 + $0x258] sm:$0xf]
  %v184 = vld [vmem:[%s0 + $0x25c] sm:$0xf]
  %v185 = vld [vmem:[%s0 + $0x260] sm:$0xf]
  %v186 = vld [vmem:[%s0 + $0x264] sm:$0xf]
  %v187 = vld [vmem:[%s0 + $0x268] sm:$0xf]
  %v188 = vld [vmem:[%s0 + $0x26c] sm:$0xf]
  %v189 = vld [vmem:[%s0 + $0x270] sm:$0xf]
  %v190 = vld [vmem:[%s0 + $0x274] sm:$0xf]
  %v191 = vld [vmem:[%s0 + $0x278] sm:$0xf]
  %v192 = vld [vmem:[%s0 + $0x27c] sm:$0xf]
  %v193 = vld [vmem:[%s0 + $0x280] sm:$0xf]
  %v194 = vld [vmem:[%s0 + $0x284] sm:$0xf]
  %v195 = vld [vmem:[%s0 + $0x288] sm:$0xf]
  %v196 = vld [vmem:[%s0 + $0x28c] sm:$0xf]
  %v197 = vld [vmem:[%s0 + $0x290] sm:$0xf]
  %v198 = vld [vmem:[%s0 + $0x294] sm:$0xf]
  %v199 = vld [vmem:[%s0 + $0x298] sm:$0xf]
  %v200 = vld [vmem:[%s0 + $0x29c] sm:$0xf]
  %v201 = vld [vmem:[%s0 + $0x2a0] sm:$0xf]
  %v202 = vld [vmem:[%s0 + $0x2a4] sm:$0xf]
  %v203 = vld [vmem:[%s0 + $0x2a8] sm:$0xf]
  %v204 = vld [vmem:[%s0 + $0x2ac] sm:$0xf]
  %v205 = vld [vmem:[%s0 + $0x2b0] sm:$0xf]
  %v206 = vld [vmem:[%s0 + $0x2b4] sm:$0xf]
  %v207 = vld [vmem:[%s0 + $0x2b8] sm:$0xf]
  %v208 = vld [vmem:[%s0 + $0x2bc] sm:$0xf]
  %v209 = vld [vmem:[%s0 + $0x2c0] sm:$0xf]
  %v210 = vld [vmem:[%s0 + $0x2c4] sm:$0xf]
  %v211 = vld [vmem:[%s0 + $0x2c8] sm:$0xf]
  %v212 = vld [vmem:[%s0 + $0x2cc] sm:$0xf]
  %v213 = vld [vmem:[%s0 + $0x2d0] sm:$0xf]
  %v214 = vld [vmem:[%s0 + $0x2d4] sm:$0xf]
  %v215 = vld [vmem:[%s0 + $0x2d8] sm:$0xf]
  %v216 = vld [vmem:[%s0 + $0x2dc] sm:$0xf]
  %v217 = vld [vmem:[%s0 + $0x2e0] sm:$0xf]
  %v218 = vld [vmem:[%s0 + $0x2e4] sm:$0xf]
  %v219 = vld [vmem:[%s0 + $0x2e8] sm:$0xf]
  %v220 = vld [vmem:[%s0 + $0x2ec] sm:$0xf]
  %v221 = vld [vmem:[%s0 + $0x2f0] sm:$0xf]
  %v222 = vld [vmem:[%s0 + $0x2f4] sm:$0xf]
  %v223 = vld [vmem:[%s0 + $0x2f8] sm:$0xf]
  %v224 = vld [vmem:[%s0 + $0x2fc] sm:$0xf]
  %v225 = vld [vmem:[%s0 + $0x300] sm:$0xf]
  %v226 = vld [vmem:[%s0 + $0x304] sm:$0xf]
  %v227 = vld [vmem:[%s0 + $0x308] sm:$0xf]
  %v228 = vld [vmem:[%s0 + $0x30c] sm:$0xf]
  %v229 = vld [vmem:[%s0 + $0x310] sm:$0xf]
  %v230 = vld [vmem:[%s0 + $0x314] sm:$0xf]
  %v231 = vld [vmem:[%s0 + $0x318] sm:$0xf]
  %v232 = vld [vmem:[%s0 + $0x31c] sm:$0xf]
  %v233 = vld [vmem:[%s0 + $0x320] sm:$0xf]
  %v234 = vld [vmem:[%s0 + $0x324] sm:$0xf]
  %v235 = vld [vmem:[%s0 + $0x328] sm:$0xf]
  %v236 = vld [vmem:[%s0 + $0x32c] sm:$0xf]
  %v237 = vld [vmem:[%s0 + $0x330] sm:$0xf]
  %v238 = vld [vmem:[%s0 + $0x334] sm:$0xf]
  %v239 = vld [vmem:[%s0 + $0x338] sm:$0xf]
  %v240 = vld [vmem:[%s0 + $0x33c] sm:$0xf]
  %v241 = vld [vmem:[%s0 + $0x340] sm:$0xf]
  %v242 = vld [vmem:[%s0 + $0x344] sm:$0xf]
  %v243 = vld [vmem:[%s0 + $0x348] sm:$0xf]
  %v244 = vld [vmem:[%s0 + $0x34c] sm:$0xf]
  %v245 = vld [vmem:[%s0 + $0x350] sm:$0xf]
  %v246 = vld [vmem:[%s0 + $0x354] sm:$0xf]
  %v247 = vld [vmem:[%s0 + $0x358] sm:$0xf]
  %v248 = vld [vmem:[%s0 + $0x35c] sm:$0xf]
  %v249 = vld [vmem:[%s0 + $0x360] sm:$0xf]
  %v250 = vld [vmem:[%s0 + $0x364] sm:$0xf]
  %v251 = vld [vmem:[%s0 + $0x368] sm:$0xf]
  %v252 = vld [vmem:[%s0 + $0x36c] sm:$0xf]
  %v253 = vld [vmem:[%s0 + $0x370] sm:$0xf]
  %v254 = vld [vmem:[%s0 + $0x374] sm:$0xf]
  %v255 = vld [vmem:[%s0 + $0x378] sm:$0xf]
  %v256 = vld [vmem:[%s0 + $0x37c] sm:$0xf]
  %v257 = vld [vmem:[%s0 + $0x380] sm:$0xf]
  %v258 = vld [vmem:[%s0 + $0x384] sm:$0xf]
  %v259 = vld [vmem:[%s0 + $0x388] sm:$0xf]
  %v260 = vld [vmem:[%s0 + $0x38c] sm:$0xf]
  %v261 = vld [vmem:[%s0 + $0x390] sm:$0xf]
  %v262 = vld [vmem:[%s0 + $0x394] sm:$0xf]
  %v263 = vld [vmem:[%s0 + $0x398] sm:$0xf]
  %v264 = vld [vmem:[%s0 + $0x39c] sm:$0xf]
  %v265 = vld [vmem:[%s0 + $0x3a0] sm:$0xf]
  %v266 = vld [vmem:[%s0 + $0x3a4] sm:$0xf]
  %v267 = vld [vmem:[%s0 + $0x3a8] sm:$0xf]
  %v268 = vld [vmem:[%s0 + $0x3ac] sm:$0xf]
  %v269 = vld [vmem:[%s0 + $0x3b0] sm:$0xf]
  %v270 = vld [vmem:[%s0 + $0x3b4] sm:$0xf]
  %v271 = vld [vmem:[%s0 + $0x3b8] sm:$0xf]
  %v272 = vld [vmem:[%s0 + $0x3bc] sm:$0xf]
  %v273 = vld [vmem:[%s0 + $0x3c0] sm:$0xf]
  %v274 = vld [vmem:[%s0 + $0x3c4] sm:$0xf]
  %v275 = vld [vmem:[%s0 + $0x3c8] sm:$0xf]
  %v276 = vld [vmem:[%s0 + $0x3cc] sm:$0xf]
  %v277 = vld [vmem:[%s0 + $0x3d0] sm:$0xf]
  %v278 = vld [vmem:[%s0 + $0x3d4] sm:$0xf]
  %v279 = vld [vmem:[%s0 + $0x3d8] sm:$0xf]
  %v280 = vld [vmem:[%s0 + $0x3dc] sm:$0xf]
  %v281 = vld [vmem:[%s0 + $0x3e0] sm:$0xf]
  %v282 = vld [vmem:[%s0 + $0x3e4] sm:$0xf]
  %v283 = vld [vmem:[%s0 + $0x3e8] sm:$0xf]
  %v284 = vld [vmem:[%s0 + $0x3ec] sm:$0xf]
  %v285 = vld [vmem:[%s0 + $0x3f0] sm:$0xf]
  %v286 = vld [vmem:[%s0 + $0x3f4] sm:$0xf]
  %v287 = vld [vmem:[%s0 + $0x3f8] sm:$0xf]
  %v288 = vld [vmem:[%s0 + $0x3fc] sm:$0xf]
  %v289 = vld [vmem:[%s0 + $0x400] sm:$0xf]
  %v290 = vld [vmem:[%s0 + $0x404] sm:$0xf]
  %v291 = vld [vmem:[%s0 + $0x408] sm:$0xf]
  %v292 = vld [vmem:[%s0 + $0x40c] sm:$0xf]
  %v293 = vld [vmem:[%s0 + $0x410] sm:$0xf]
  %v294 = vld [vmem:[%s0 + $0x414] sm:$0xf]
  %v295 = vld [vmem:[%s0 + $0x418] sm:$0xf]
  %v296 = vld [vmem:[%s0 + $0x41c] sm:$0xf]
  %v297 = vld [vmem:[%s0 + $0x420] sm:$0xf]
  %v298 = vld [vmem:[%s0 + $0x424] sm:$0xf]
  %v299 = vld [vmem:[%s0 + $0x428] sm:$0xf]
  %v300 = vld [vmem:[%s0 + $0x42c] sm:$0xf]
  %v301 = vld [vmem:[%s0 + $0x430] sm:$0xf]
  %v302 = vld [vmem:[%s0 + $0x434] sm:$0xf]
  %v303 = vld [vmem:[%s0 + $0x438] sm:$0xf]
  %v304 = vld [vmem:[%s0 + $0x43c] sm:$0xf]
  %v305 = vld [vmem:[%s0 + $0x440] sm:$0xf]
  %v306 = vld [vmem:[%s0 + $0x444] sm:$0xf]
  %v307 = vld [vmem:[%s0 + $0x448] sm:$0xf]
  %v308 = vld [vmem:[%s0 + $0x44c] sm:$0xf]
  %v309 = vld [vmem:[%s0 + $0x450] sm:$0xf]
  %v310 = vld [vmem:[%s0 + $0x454] sm:$0xf]
  %v311 = vld [vmem:[%s0 + $0x458] sm:$0xf]
  %v312 = vld [vmem:[%s0 + $0x45c] sm:$0xf]
  %v313 = vld [vmem:[%s0 + $0x460] sm:$0xf]
  %v314 = vld [vmem:[%s0 + $0x464] sm:$0xf]
  %v315 = vld [vmem:[%s0 + $0x468] sm:$0xf]
  %v316 = vld [vmem:[%s0 + $0x46c] sm:$0xf]
  %v317 = vld [vmem:[%s0 + $0x470] sm:$0xf]
  %v318 = vld [vmem:[%s0 + $0x474] sm:$0xf]
  %v319 = vld [vmem:[%s0 + $0x478] sm:$0xf]
  %v320 = vld [vmem:[%s0 + $0x47c] sm:$0xf]
  %v321 = vld [vmem:[%s0 + $0x480] sm:$0xf]
  %v322 = vld [vmem:[%s0 + $0x484] sm:$0xf]
  %v323 = vld [vmem:[%s0 + $0x488] sm:$0xf]
  %v324 = vld [vmem:[%s0 + $0x48c] sm:$0xf]
  %v325 = vld [vmem:[%s0 + $0x490] sm:$0xf]
  %v326 = vld [vmem:[%s0 + $0x494] sm:$0xf]
  %v327 = vld [vmem:[%s0 + $0x498] sm:$0xf]
  %v328 = vld [vmem:[%s0 + $0x49c] sm:$0xf]
  %v329 = vld [vmem:[%s0 + $0x4a0] sm:$0xf]
  %v330 = vld [vmem:[%s0 + $0x4a4] sm:$0xf]
  %v331 = vld [vmem:[%s0 + $0x4a8] sm:$0xf]
  %v332 = vld [vmem:[%s0 + $0x4ac] sm:$0xf]
  %v333 = vld [vmem:[%s0 + $0x4b0] sm:$0xf]
  %v334 = vld [vmem:[%s0 + $0x4b4] sm:$0xf]
  %v335 = vld [vmem:[%s0 + $0x4b8] sm:$0xf]
  %v336 = vld [vmem:[%s0 + $0x4bc] sm:$0xf]
  %v337 = vld [vmem:[%s0 + $0x4c0] sm:$0xf]
  %v338 = vld [vmem:[%s0 + $0x4c4] sm:$0xf]
  %v339 = vld [vmem:[%s0 + $0x4c8] sm:$0xf]
  %v340 = vld [vmem:[%s0 + $0x4cc] sm:$0xf]
  %v341 = vld [vmem:[%s0 + $0x4d0] sm:$0xf]
  %v342 = vld [vmem:[%s0 + $0x4d4] sm:$0xf]
  %v343 = vld [vmem:[%s0 + $0x4d8] sm:$0xf]
  %v344 = vld [vmem:[%s0 + $0x4dc] sm:$0xf]
  %v345 = vld [vmem:[%s0 + $0x4e0] sm:$0xf]
  %v346 = vld [vmem:[%s0 + $0x4e4] sm:$0xf]
  %v347 = vld [vmem:[%s0 + $0x4e8] sm:$0xf]
  %v348 = vld [vmem:[%s0 + $0x4ec] sm:$0xf]
  %v349 = vld [vmem:[%s0 + $0x4f0] sm:$0xf]
  %v350 = vld [vmem:[%s0 + $0x4f4] sm:$0xf]
  %v351 = vld [vmem:[%s0 + $0x4f8] sm:$0xf]
  %v352 = vld [vmem:[%s0 + $0x4fc] sm:$0xf]
  %v353 = vld [vmem:[%s0 + $0x500] sm:$0xf]
  %v354 = vld [vmem:[%s0 + $0x504] sm:$0xf]
  %v355 = vld [vmem:[%s0 + $0x508] sm:$0xf]
  %v356 = vld [vmem:[%s0 + $0x50c] sm:$0xf]
  %v357 = vld [vmem:[%s0 + $0x510] sm:$0xf]
  %v358 = vld [vmem:[%s0 + $0x514] sm:$0xf]
  %v359 = vld [vmem:[%s0 + $0x518] sm:$0xf]
  %v360 = vld [vmem:[%s0 + $0x51c] sm:$0xf]
  %v361 = vld [vmem:[%s0 + $0x520] sm:$0xf]
  %v362 = vld [vmem:[%s0 + $0x524] sm:$0xf]
  %v363 = vld [vmem:[%s0 + $0x528] sm:$0xf]
  %v364 = vld [vmem:[%s0 + $0x52c] sm:$0xf]
  %v365 = vld [vmem:[%s0 + $0x530] sm:$0xf]
  %v366 = vld [vmem:[%s0 + $0x534] sm:$0xf]
  %v367 = vld [vmem:[%s0 + $0x538] sm:$0xf]
  %v368 = vld [vmem:[%s0 + $0x53c] sm:$0xf]
  %v369 = vld [vmem:[%s0 + $0x540] sm:$0xf]
  %v370 = vld [vmem:[%s0 + $0x544] sm:$0xf]
  %v371 = vld [vmem:[%s1] sm:$0xf]
  %v372 = vld [vmem:[%s1 + $0x4] sm:$0xf]
  %v711 = vunpack.c.l.b16 %v33
  %v712 = vunpack.c.l.b16 %v34
  %v713 = vunpack.c.l.b16 %v35
  %v714 = vunpack.c.l.b16 %v36
  %v715 = vunpack.c.l.b16 %v37
  %v716 = vunpack.c.l.b16 %v38
  %v717 = vunpack.c.l.b16 %v39
  %v718 = vunpack.c.l.b16 %v40
  %v719 = vunpack.c.l.b16 %v41
  %v720 = vunpack.c.l.b16 %v42
  %v721 = vunpack.c.l.b16 %v43
  %v722 = vunpack.c.l.b16 %v44
  %v723 = vunpack.c.l.b16 %v45
  %v724 = vunpack.c.l.b16 %v46
  %v725 = vunpack.c.l.b16 %v47
  %v726 = vunpack.c.l.b16 %v48
  %v727 = vunpack.c.l.b16 %v49
  %v728 = vunpack.c.l.b16 %v50
  %v729 = vunpack.c.l.b16 %v51
  %v730 = vunpack.c.l.b16 %v52
  %v731 = vunpack.c.l.b16 %v53
  %v732 = vunpack.c.l.b16 %v54
  %v733 = vunpack.c.l.b16 %v55
  %v734 = vunpack.c.l.b16 %v56
  %v735 = vunpack.c.l.b16 %v57
  %v736 = vunpack.c.l.b16 %v58
  %v737 = vunpack.c.l.b16 %v59
  %v738 = vunpack.c.l.b16 %v60
  %v739 = vunpack.c.l.b16 %v61
  %v740 = vunpack.c.l.b16 %v62
  %v741 = vunpack.c.l.b16 %v63
  %v742 = vunpack.c.l.b16 %v64
  %v743 = vunpack.c.l.b16 %v65
  %v744 = vunpack.c.l.b16 %v66
  %v745 = vunpack.c.l.b16 %v67
  %v746 = vunpack.c.l.b16 %v68
  %v747 = vunpack.c.l.b16 %v69
  %v748 = vunpack.c.l.b16 %v70
  %v749 = vunpack.c.l.b16 %v71
  %v750 = vunpack.c.l.b16 %v72
  %v751 = vunpack.c.l.b16 %v73
  %v752 = vunpack.c.l.b16 %v74
  %v753 = vunpack.c.l.b16 %v75
  %v754 = vunpack.c.l.b16 %v76
  %v755 = vunpack.c.l.b16 %v77
  %v756 = vunpack.c.l.b16 %v78
  %v757 = vunpack.c.l.b16 %v79
  %v758 = vunpack.c.l.b16 %v80
  %v759 = vunpack.c.l.b16 %v81
  %v760 = vunpack.c.l.b16 %v82
  %v761 = vunpack.c.l.b16 %v83
  %v762 = vunpack.c.l.b16 %v84
  %v763 = vunpack.c.l.b16 %v85
  %v764 = vunpack.c.l.b16 %v86
  %v765 = vunpack.c.l.b16 %v87
  %v766 = vunpack.c.l.b16 %v88
  %v767 = vunpack.c.l.b16 %v89
  %v768 = vunpack.c.l.b16 %v90
  %v769 = vunpack.c.l.b16 %v91
  %v770 = vunpack.c.l.b16 %v92
  %v771 = vunpack.c.l.b16 %v93
  %v772 = vunpack.c.l.b16 %v94
  %v773 = vunpack.c.l.b16 %v95
  %v774 = vunpack.c.l.b16 %v96
  %v775 = vunpack.c.l.b16 %v97
  %v776 = vunpack.c.l.b16 %v98
  %v777 = vunpack.c.l.b16 %v99
  %v778 = vunpack.c.l.b16 %v100
  %v779 = vunpack.c.l.b16 %v101
  %v780 = vunpack.c.l.b16 %v102
  %v781 = vunpack.c.l.b16 %v103
  %v782 = vunpack.c.l.b16 %v104
  %v783 = vunpack.c.l.b16 %v105
  %v784 = vunpack.c.l.b16 %v106
  %v785 = vunpack.c.l.b16 %v107
  %v786 = vunpack.c.l.b16 %v108
  %v787 = vunpack.c.l.b16 %v109
  %v788 = vunpack.c.l.b16 %v110
  %v789 = vunpack.c.l.b16 %v111
  %v790 = vunpack.c.l.b16 %v112
  %v791 = vunpack.c.l.b16 %v113
  %v792 = vunpack.c.l.b16 %v114
  %v793 = vunpack.c.l.b16 %v115
  %v794 = vunpack.c.l.b16 %v116
  %v795 = vunpack.c.l.b16 %v117
  %v796 = vunpack.c.l.b16 %v118
  %v797 = vunpack.c.l.b16 %v119
  %v798 = vunpack.c.l.b16 %v120
  %v799 = vunpack.c.l.b16 %v121
  %v800 = vunpack.c.l.b16 %v122
  %v801 = vunpack.c.l.b16 %v123
  %v802 = vunpack.c.l.b16 %v124
  %v803 = vunpack.c.l.b16 %v125
  %v804 = vunpack.c.l.b16 %v126
  %v805 = vunpack.c.l.b16 %v127
  %v806 = vunpack.c.l.b16 %v128
  %v807 = vunpack.c.l.b16 %v129
  %v808 = vunpack.c.l.b16 %v130
  %v809 = vunpack.c.l.b16 %v131
  %v810 = vunpack.c.l.b16 %v132
  %v811 = vunpack.c.l.b16 %v133
  %v812 = vunpack.c.l.b16 %v134
  %v813 = vunpack.c.l.b16 %v135
  %v814 = vunpack.c.l.b16 %v136
  %v815 = vunpack.c.l.b16 %v137
  %v816 = vunpack.c.l.b16 %v138
  %v817 = vunpack.c.l.b16 %v139
  %v818 = vunpack.c.l.b16 %v140
  %v819 = vunpack.c.l.b16 %v141
  %v820 = vunpack.c.l.b16 %v142
  %v821 = vunpack.c.l.b16 %v143
  %v822 = vunpack.c.l.b16 %v144
  %v823 = vunpack.c.l.b16 %v145
  %v824 = vunpack.c.l.b16 %v146
  %v825 = vunpack.c.l.b16 %v147
  %v826 = vunpack.c.l.b16 %v148
  %v827 = vunpack.c.l.b16 %v149
  %v828 = vunpack.c.l.b16 %v150
  %v829 = vunpack.c.l.b16 %v151
  %v830 = vunpack.c.l.b16 %v152
  %v831 = vunpack.c.l.b16 %v153
  %v832 = vunpack.c.l.b16 %v154
  %v833 = vunpack.c.l.b16 %v155
  %v834 = vunpack.c.l.b16 %v156
  %v835 = vunpack.c.l.b16 %v157
  %v836 = vunpack.c.l.b16 %v158
  %v837 = vunpack.c.l.b16 %v159
  %v838 = vunpack.c.l.b16 %v160
  %v839 = vunpack.c.l.b16 %v161
  %v840 = vunpack.c.l.b16 %v162
  %v841 = vunpack.c.l.b16 %v163
  %v842 = vunpack.c.l.b16 %v164
  %v843 = vunpack.c.l.b16 %v165
  %v844 = vunpack.c.l.b16 %v166
  %v845 = vunpack.c.l.b16 %v167
  %v846 = vunpack.c.l.b16 %v168
  %v847 = vunpack.c.l.b16 %v169
  %v848 = vunpack.c.l.b16 %v170
  %v849 = vunpack.c.l.b16 %v171
  %v850 = vunpack.c.l.b16 %v172
  %v851 = vunpack.c.l.b16 %v173
  %v852 = vunpack.c.l.b16 %v174
  %v853 = vunpack.c.l.b16 %v175
  %v854 = vunpack.c.l.b16 %v176
  %v855 = vunpack.c.l.b16 %v177
  %v856 = vunpack.c.l.b16 %v178
  %v857 = vunpack.c.l.b16 %v179
  %v858 = vunpack.c.l.b16 %v180
  %v859 = vunpack.c.l.b16 %v181
  %v860 = vunpack.c.l.b16 %v182
  %v861 = vunpack.c.l.b16 %v183
  %v862 = vunpack.c.l.b16 %v184
  %v863 = vunpack.c.l.b16 %v185
  %v864 = vunpack.c.l.b16 %v186
  %v865 = vunpack.c.l.b16 %v187
  %v866 = vunpack.c.l.b16 %v188
  %v867 = vunpack.c.l.b16 %v189
  %v868 = vunpack.c.l.b16 %v190
  %v869 = vunpack.c.l.b16 %v191
  %v870 = vunpack.c.l.b16 %v192
  %v871 = vunpack.c.l.b16 %v193
  %v872 = vunpack.c.l.b16 %v194
  %v873 = vunpack.c.l.b16 %v195
  %v874 = vunpack.c.l.b16 %v196
  %v875 = vunpack.c.l.b16 %v197
  %v876 = vunpack.c.l.b16 %v198
  %v877 = vunpack.c.l.b16 %v199
  %v878 = vunpack.c.l.b16 %v200
  %v879 = vunpack.c.l.b16 %v201
  %v880 = vunpack.c.l.b16 %v202
  %v881 = vunpack.c.l.b16 %v203
  %v882 = vunpack.c.l.b16 %v204
  %v883 = vunpack.c.l.b16 %v205
  %v884 = vunpack.c.l.b16 %v206
  %v885 = vunpack.c.l.b16 %v207
  %v886 = vunpack.c.l.b16 %v208
  %v887 = vunpack.c.l.b16 %v209
  %v888 = vunpack.c.l.b16 %v210
  %v889 = vunpack.c.l.b16 %v211
  %v890 = vunpack.c.l.b16 %v212
  %v891 = vunpack.c.l.b16 %v213
  %v892 = vunpack.c.l.b16 %v214
  %v893 = vunpack.c.l.b16 %v215
  %v894 = vunpack.c.l.b16 %v216
  %v895 = vunpack.c.l.b16 %v217
  %v896 = vunpack.c.l.b16 %v218
  %v897 = vunpack.c.l.b16 %v219
  %v898 = vunpack.c.l.b16 %v220
  %v899 = vunpack.c.l.b16 %v221
  %v900 = vunpack.c.l.b16 %v222
  %v901 = vunpack.c.l.b16 %v223
  %v902 = vunpack.c.l.b16 %v224
  %v903 = vunpack.c.l.b16 %v225
  %v904 = vunpack.c.l.b16 %v226
  %v905 = vunpack.c.l.b16 %v227
  %v906 = vunpack.c.l.b16 %v228
  %v907 = vunpack.c.l.b16 %v229
  %v908 = vunpack.c.l.b16 %v230
  %v909 = vunpack.c.l.b16 %v231
  %v910 = vunpack.c.l.b16 %v232
  %v911 = vunpack.c.l.b16 %v233
  %v912 = vunpack.c.l.b16 %v234
  %v913 = vunpack.c.l.b16 %v235
  %v914 = vunpack.c.l.b16 %v236
  %v915 = vunpack.c.l.b16 %v237
  %v916 = vunpack.c.l.b16 %v238
  %v917 = vunpack.c.l.b16 %v239
  %v918 = vunpack.c.l.b16 %v240
  %v919 = vunpack.c.l.b16 %v241
  %v920 = vunpack.c.l.b16 %v242
  %v921 = vunpack.c.l.b16 %v243
  %v922 = vunpack.c.l.b16 %v244
  %v923 = vunpack.c.l.b16 %v245
  %v924 = vunpack.c.l.b16 %v246
  %v925 = vunpack.c.l.b16 %v247
  %v926 = vunpack.c.l.b16 %v248
  %v927 = vunpack.c.l.b16 %v249
  %v928 = vunpack.c.l.b16 %v250
  %v929 = vunpack.c.l.b16 %v251
  %v930 = vunpack.c.l.b16 %v252
  %v931 = vunpack.c.l.b16 %v253
  %v932 = vunpack.c.l.b16 %v254
  %v933 = vunpack.c.l.b16 %v255
  %v934 = vunpack.c.l.b16 %v256
  %v935 = vunpack.c.l.b16 %v257
  %v936 = vunpack.c.l.b16 %v258
  %v937 = vunpack.c.l.b16 %v259
  %v938 = vunpack.c.l.b16 %v260
  %v939 = vunpack.c.l.b16 %v261
  %v940 = vunpack.c.l.b16 %v262
  %v941 = vunpack.c.l.b16 %v263
  %v942 = vunpack.c.l.b16 %v264
  %v943 = vunpack.c.l.b16 %v265
  %v944 = vunpack.c.l.b16 %v266
  %v945 = vunpack.c.l.b16 %v267
  %v946 = vunpack.c.l.b16 %v268
  %v947 = vunpack.c.l.b16 %v269
  %v948 = vunpack.c.l.b16 %v270
  %v949 = vunpack.c.l.b16 %v271
  %v950 = vunpack.c.l.b16 %v272
  %v951 = vunpack.c.l.b16 %v273
  %v952 = vunpack.c.l.b16 %v274
  %v953 = vunpack.c.l.b16 %v275
  %v954 = vunpack.c.l.b16 %v276
  %v955 = vunpack.c.l.b16 %v277
  %v956 = vunpack.c.l.b16 %v278
  %v957 = vunpack.c.l.b16 %v279
  %v958 = vunpack.c.l.b16 %v280
  %v959 = vunpack.c.l.b16 %v281
  %v960 = vunpack.c.l.b16 %v282
  %v961 = vunpack.c.l.b16 %v283
  %v962 = vunpack.c.l.b16 %v284
  %v963 = vunpack.c.l.b16 %v285
  %v964 = vunpack.c.l.b16 %v286
  %v965 = vunpack.c.l.b16 %v287
  %v966 = vunpack.c.l.b16 %v288
  %v967 = vunpack.c.l.b16 %v289
  %v968 = vunpack.c.l.b16 %v290
  %v969 = vunpack.c.l.b16 %v291
  %v970 = vunpack.c.l.b16 %v292
  %v971 = vunpack.c.l.b16 %v293
  %v972 = vunpack.c.l.b16 %v294
  %v973 = vunpack.c.l.b16 %v295
  %v974 = vunpack.c.l.b16 %v296
  %v975 = vunpack.c.l.b16 %v297
  %v976 = vunpack.c.l.b16 %v298
  %v977 = vunpack.c.l.b16 %v299
  %v978 = vunpack.c.l.b16 %v300
  %v979 = vunpack.c.l.b16 %v301
  %v980 = vunpack.c.l.b16 %v302
  %v981 = vunpack.c.l.b16 %v303
  %v982 = vunpack.c.l.b16 %v304
  %v983 = vunpack.c.l.b16 %v305
  %v984 = vunpack.c.l.b16 %v306
  %v985 = vunpack.c.l.b16 %v307
  %v986 = vunpack.c.l.b16 %v308
  %v987 = vunpack.c.l.b16 %v309
  %v988 = vunpack.c.l.b16 %v310
  %v989 = vunpack.c.l.b16 %v311
  %v990 = vunpack.c.l.b16 %v312
  %v991 = vunpack.c.l.b16 %v313
  %v992 = vunpack.c.l.b16 %v314
  %v993 = vunpack.c.l.b16 %v315
  %v994 = vunpack.c.l.b16 %v316
  %v995 = vunpack.c.l.b16 %v317
  %v996 = vunpack.c.l.b16 %v318
  %v997 = vunpack.c.l.b16 %v319
  %v998 = vunpack.c.l.b16 %v320
  %v999 = vunpack.c.l.b16 %v321
  %v1000 = vunpack.c.l.b16 %v322
  %v1001 = vunpack.c.l.b16 %v323
  %v1002 = vunpack.c.l.b16 %v324
  %v1003 = vunpack.c.l.b16 %v325
  %v1004 = vunpack.c.l.b16 %v326
  %v1005 = vunpack.c.l.b16 %v327
  %v1006 = vunpack.c.l.b16 %v328
  %v1007 = vunpack.c.l.b16 %v329
  %v1008 = vunpack.c.l.b16 %v330
  %v1009 = vunpack.c.l.b16 %v331
  %v1010 = vunpack.c.l.b16 %v332
  %v1011 = vunpack.c.l.b16 %v333
  %v1012 = vunpack.c.l.b16 %v334
  %v1013 = vunpack.c.l.b16 %v335
  %v1014 = vunpack.c.l.b16 %v336
  %v1015 = vunpack.c.l.b16 %v337
  %v1016 = vunpack.c.l.b16 %v338
  %v1017 = vunpack.c.l.b16 %v339
  %v1018 = vunpack.c.l.b16 %v340
  %v1019 = vunpack.c.l.b16 %v341
  %v1020 = vunpack.c.l.b16 %v342
  %v1021 = vunpack.c.l.b16 %v343
  %v1022 = vunpack.c.l.b16 %v344
  %v1023 = vunpack.c.l.b16 %v345
  %v1024 = vunpack.c.l.b16 %v346
  %v1025 = vunpack.c.l.b16 %v347
  %v1026 = vunpack.c.l.b16 %v348
  %v1027 = vunpack.c.l.b16 %v349
  %v1028 = vunpack.c.l.b16 %v350
  %v1029 = vunpack.c.l.b16 %v351
  %v1030 = vunpack.c.l.b16 %v352
  %v1031 = vunpack.c.l.b16 %v353
  %v1032 = vunpack.c.l.b16 %v354
  %v1033 = vunpack.c.l.b16 %v355
  %v1034 = vunpack.c.l.b16 %v356
  %v1035 = vunpack.c.l.b16 %v357
  %v1036 = vunpack.c.l.b16 %v358
  %v1037 = vunpack.c.l.b16 %v359
  %v1038 = vunpack.c.l.b16 %v360
  %v1039 = vunpack.c.l.b16 %v361
  %v1040 = vunpack.c.l.b16 %v362
  %v1041 = vunpack.c.l.b16 %v363
  %v1042 = vunpack.c.l.b16 %v364
  %v1043 = vunpack.c.l.b16 %v365
  %v1044 = vunpack.c.l.b16 %v366
  %v1045 = vunpack.c.l.b16 %v367
  %v1046 = vunpack.c.l.b16 %v368
  %v1047 = vunpack.c.l.b16 %v369
  %v1048 = vunpack.c.l.b16 %v370
  %v1049 = vpack.c.b16 %v712, %v711
  %v1050 = vpack.c.b16 %v714, %v713
  %v1051 = vpack.c.b16 %v716, %v715
  %v1052 = vpack.c.b16 %v718, %v717
  %v1053 = vpack.c.b16 %v720, %v719
  %v1054 = vpack.c.b16 %v722, %v721
  %v1055 = vpack.c.b16 %v724, %v723
  %v1056 = vpack.c.b16 %v726, %v725
  %v1057 = vpack.c.b16 %v728, %v727
  %v1058 = vpack.c.b16 %v730, %v729
  %v1059 = vpack.c.b16 %v732, %v731
  %v1060 = vpack.c.b16 %v734, %v733
  %v1061 = vpack.c.b16 %v736, %v735
  %v1062 = vpack.c.b16 %v738, %v737
  %v1063 = vpack.c.b16 %v740, %v739
  %v1064 = vpack.c.b16 %v742, %v741
  %v1065 = vpack.c.b16 %v744, %v743
  %v1066 = vpack.c.b16 %v746, %v745
  %v1067 = vpack.c.b16 %v748, %v747
  %v1068 = vpack.c.b16 %v750, %v749
  %v1069 = vpack.c.b16 %v752, %v751
  %v1070 = vpack.c.b16 %v754, %v753
  %v1071 = vpack.c.b16 %v756, %v755
  %v1072 = vpack.c.b16 %v758, %v757
  %v1073 = vpack.c.b16 %v760, %v759
  %v1074 = vpack.c.b16 %v762, %v761
  %v1075 = vpack.c.b16 %v764, %v763
  %v1076 = vpack.c.b16 %v766, %v765
  %v1077 = vpack.c.b16 %v768, %v767
  %v1078 = vpack.c.b16 %v770, %v769
  %v1079 = vpack.c.b16 %v772, %v771
  %v1080 = vpack.c.b16 %v774, %v773
  %v1081 = vpack.c.b16 %v776, %v775
  %v1082 = vpack.c.b16 %v778, %v777
  %v1083 = vpack.c.b16 %v780, %v779
  %v1084 = vpack.c.b16 %v782, %v781
  %v1085 = vpack.c.b16 %v784, %v783
  %v1086 = vpack.c.b16 %v786, %v785
  %v1087 = vpack.c.b16 %v788, %v787
  %v1088 = vpack.c.b16 %v790, %v789
  %v1089 = vpack.c.b16 %v792, %v791
  %v1090 = vpack.c.b16 %v794, %v793
  %v1091 = vpack.c.b16 %v796, %v795
  %v1092 = vpack.c.b16 %v798, %v797
  %v1093 = vpack.c.b16 %v800, %v799
  %v1094 = vpack.c.b16 %v802, %v801
  %v1095 = vpack.c.b16 %v804, %v803
  %v1096 = vpack.c.b16 %v806, %v805
  %v1097 = vpack.c.b16 %v808, %v807
  %v1098 = vpack.c.b16 %v810, %v809
  %v1099 = vpack.c.b16 %v812, %v811
  %v1100 = vpack.c.b16 %v814, %v813
  %v1101 = vpack.c.b16 %v816, %v815
  %v1102 = vpack.c.b16 %v818, %v817
  %v1103 = vpack.c.b16 %v820, %v819
  %v1104 = vpack.c.b16 %v822, %v821
  %v1105 = vpack.c.b16 %v824, %v823
  %v1106 = vpack.c.b16 %v826, %v825
  %v1107 = vpack.c.b16 %v828, %v827
  %v1108 = vpack.c.b16 %v830, %v829
  %v1109 = vpack.c.b16 %v832, %v831
  %v1110 = vpack.c.b16 %v834, %v833
  %v1111 = vpack.c.b16 %v836, %v835
  %v1112 = vpack.c.b16 %v838, %v837
  %v1113 = vpack.c.b16 %v840, %v839
  %v1114 = vpack.c.b16 %v842, %v841
  %v1115 = vpack.c.b16 %v844, %v843
  %v1116 = vpack.c.b16 %v846, %v845
  %v1117 = vpack.c.b16 %v848, %v847
  %v1118 = vpack.c.b16 %v850, %v849
  %v1119 = vpack.c.b16 %v852, %v851
  %v1120 = vpack.c.b16 %v854, %v853
  %v1121 = vpack.c.b16 %v856, %v855
  %v1122 = vpack.c.b16 %v858, %v857
  %v1123 = vpack.c.b16 %v860, %v859
  %v1124 = vpack.c.b16 %v862, %v861
  %v1125 = vpack.c.b16 %v864, %v863
  %v1126 = vpack.c.b16 %v866, %v865
  %v1127 = vpack.c.b16 %v868, %v867
  %v1128 = vpack.c.b16 %v870, %v869
  %v1129 = vpack.c.b16 %v872, %v871
  %v1130 = vpack.c.b16 %v874, %v873
  %v1131 = vpack.c.b16 %v876, %v875
  %v1132 = vpack.c.b16 %v878, %v877
  %v1133 = vpack.c.b16 %v880, %v879
  %v1134 = vpack.c.b16 %v882, %v881
  %v1135 = vpack.c.b16 %v884, %v883
  %v1136 = vpack.c.b16 %v886, %v885
  %v1137 = vpack.c.b16 %v888, %v887
  %v1138 = vpack.c.b16 %v890, %v889
  %v1139 = vpack.c.b16 %v892, %v891
  %v1140 = vpack.c.b16 %v894, %v893
  %v1141 = vpack.c.b16 %v896, %v895
  %v1142 = vpack.c.b16 %v898, %v897
  %v1143 = vpack.c.b16 %v900, %v899
  %v1144 = vpack.c.b16 %v902, %v901
  %v1145 = vpack.c.b16 %v904, %v903
  %v1146 = vpack.c.b16 %v906, %v905
  %v1147 = vpack.c.b16 %v908, %v907
  %v1148 = vpack.c.b16 %v910, %v909
  %v1149 = vpack.c.b16 %v912, %v911
  %v1150 = vpack.c.b16 %v914, %v913
  %v1151 = vpack.c.b16 %v916, %v915
  %v1152 = vpack.c.b16 %v918, %v917
  %v1153 = vpack.c.b16 %v920, %v919
  %v1154 = vpack.c.b16 %v922, %v921
  %v1155 = vpack.c.b16 %v924, %v923
  %v1156 = vpack.c.b16 %v926, %v925
  %v1157 = vpack.c.b16 %v928, %v927
  %v1158 = vpack.c.b16 %v930, %v929
  %v1159 = vpack.c.b16 %v932, %v931
  %v1160 = vpack.c.b16 %v934, %v933
  %v1161 = vpack.c.b16 %v936, %v935
  %v1162 = vpack.c.b16 %v938, %v937
  %v1163 = vpack.c.b16 %v940, %v939
  %v1164 = vpack.c.b16 %v942, %v941
  %v1165 = vpack.c.b16 %v944, %v943
  %v1166 = vpack.c.b16 %v946, %v945
  %v1167 = vpack.c.b16 %v948, %v947
  %v1168 = vpack.c.b16 %v950, %v949
  %v1169 = vpack.c.b16 %v952, %v951
  %v1170 = vpack.c.b16 %v954, %v953
  %v1171 = vpack.c.b16 %v956, %v955
  %v1172 = vpack.c.b16 %v958, %v957
  %v1173 = vpack.c.b16 %v960, %v959
  %v1174 = vpack.c.b16 %v962, %v961
  %v1175 = vpack.c.b16 %v964, %v963
  %v1176 = vpack.c.b16 %v966, %v965
  %v1177 = vpack.c.b16 %v968, %v967
  %v1178 = vpack.c.b16 %v970, %v969
  %v1179 = vpack.c.b16 %v972, %v971
  %v1180 = vpack.c.b16 %v974, %v973
  %v1181 = vpack.c.b16 %v976, %v975
  %v1182 = vpack.c.b16 %v978, %v977
  %v1183 = vpack.c.b16 %v980, %v979
  %v1184 = vpack.c.b16 %v982, %v981
  %v1185 = vpack.c.b16 %v984, %v983
  %v1186 = vpack.c.b16 %v986, %v985
  %v1187 = vpack.c.b16 %v988, %v987
  %v1188 = vpack.c.b16 %v990, %v989
  %v1189 = vpack.c.b16 %v992, %v991
  %v1190 = vpack.c.b16 %v994, %v993
  %v1191 = vpack.c.b16 %v996, %v995
  %v1192 = vpack.c.b16 %v998, %v997
  %v1193 = vpack.c.b16 %v1000, %v999
  %v1194 = vpack.c.b16 %v1002, %v1001
  %v1195 = vpack.c.b16 %v1004, %v1003
  %v1196 = vpack.c.b16 %v1006, %v1005
  %v1197 = vpack.c.b16 %v1008, %v1007
  %v1198 = vpack.c.b16 %v1010, %v1009
  %v1199 = vpack.c.b16 %v1012, %v1011
  %v1200 = vpack.c.b16 %v1014, %v1013
  %v1201 = vpack.c.b16 %v1016, %v1015
  %v1202 = vpack.c.b16 %v1018, %v1017
  %v1203 = vpack.c.b16 %v1020, %v1019
  %v1204 = vpack.c.b16 %v1022, %v1021
  %v1205 = vpack.c.b16 %v1024, %v1023
  %v1206 = vpack.c.b16 %v1026, %v1025
  %v1207 = vpack.c.b16 %v1028, %v1027
  %v1208 = vpack.c.b16 %v1030, %v1029
  %v1209 = vpack.c.b16 %v1032, %v1031
  %v1210 = vpack.c.b16 %v1034, %v1033
  %v1211 = vpack.c.b16 %v1036, %v1035
  %v1212 = vpack.c.b16 %v1038, %v1037
  %v1213 = vpack.c.b16 %v1040, %v1039
  %v1214 = vpack.c.b16 %v1042, %v1041
  %v1215 = vpack.c.b16 %v1044, %v1043
  %v1216 = vpack.c.b16 %v1046, %v1045
  %v1217 = vpack.c.b16 %v1048, %v1047
  %v1220 = vunpack.c.l.b16 %v371
  %v1221 = vunpack.c.l.b16 %v372
  %v1222 = vpack.c.b16 %v1221, %v1220
  %vm1224 = vcmask 130048
  %v1226 = vsel %vm1224, %v1049, 0
  %v1229 = vsel %vm1224, %v1050, 0
  %v1232 = vsel %vm1224, %v1051, 0
  %v1235 = vsel %vm1224, %v1052, 0
  %v1238 = vsel %vm1224, %v1053, 0
  %v1241 = vsel %vm1224, %v1054, 0
  %v1244 = vsel %vm1224, %v1055, 0
  %v1247 = vsel %vm1224, %v1056, 0
  %v1250 = vsel %vm1224, %v1057, 0
  %v1253 = vsel %vm1224, %v1058, 0
  %v1256 = vsel %vm1224, %v1059, 0
  %v1259 = vsel %vm1224, %v1060, 0
  %v1262 = vsel %vm1224, %v1061, 0
  %v1265 = vsel %vm1224, %v1062, 0
  %v1268 = vsel %vm1224, %v1063, 0
  %v1271 = vsel %vm1224, %v1064, 0
  %v1274 = vsel %vm1224, %v1065, 0
  %v1277 = vsel %vm1224, %v1066, 0
  %v1280 = vsel %vm1224, %v1067, 0
  %v1283 = vsel %vm1224, %v1068, 0
  %v1286 = vsel %vm1224, %v1069, 0
  %v1289 = vsel %vm1224, %v1070, 0
  %v1292 = vsel %vm1224, %v1071, 0
  %v1295 = vsel %vm1224, %v1072, 0
  %v1298 = vsel %vm1224, %v1073, 0
  %v1301 = vsel %vm1224, %v1074, 0
  %v1304 = vsel %vm1224, %v1075, 0
  %v1307 = vsel %vm1224, %v1076, 0
  %v1310 = vsel %vm1224, %v1077, 0
  %v1313 = vsel %vm1224, %v1078, 0
  %v1316 = vsel %vm1224, %v1079, 0
  %v1319 = vsel %vm1224, %v1080, 0
  %v1322 = vsel %vm1224, %v1081, 0
  %v1325 = vsel %vm1224, %v1082, 0
  %v1328 = vsel %vm1224, %v1083, 0
  %v1331 = vsel %vm1224, %v1084, 0
  %v1334 = vsel %vm1224, %v1085, 0
  %v1337 = vsel %vm1224, %v1086, 0
  %v1340 = vsel %vm1224, %v1087, 0
  %v1343 = vsel %vm1224, %v1088, 0
  %v1346 = vsel %vm1224, %v1089, 0
  %v1349 = vsel %vm1224, %v1090, 0
  %v1352 = vsel %vm1224, %v1091, 0
  %v1355 = vsel %vm1224, %v1092, 0
  %v1358 = vsel %vm1224, %v1093, 0
  %v1361 = vsel %vm1224, %v1094, 0
  %v1364 = vsel %vm1224, %v1095, 0
  %v1367 = vsel %vm1224, %v1096, 0
  %v1370 = vsel %vm1224, %v1097, 0
  %v1373 = vsel %vm1224, %v1098, 0
  %v1376 = vsel %vm1224, %v1099, 0
  %v1379 = vsel %vm1224, %v1100, 0
  %v1382 = vsel %vm1224, %v1101, 0
  %v1385 = vsel %vm1224, %v1102, 0
  %v1388 = vsel %vm1224, %v1103, 0
  %v1391 = vsel %vm1224, %v1104, 0
  %v1394 = vsel %vm1224, %v1105, 0
  %v1397 = vsel %vm1224, %v1106, 0
  %v1400 = vsel %vm1224, %v1107, 0
  %v1403 = vsel %vm1224, %v1108, 0
  %v1406 = vsel %vm1224, %v1109, 0
  %v1409 = vsel %vm1224, %v1110, 0
  %v1412 = vsel %vm1224, %v1111, 0
  %v1415 = vsel %vm1224, %v1112, 0
  %v1418 = vsel %vm1224, %v1113, 0
  %v1421 = vsel %vm1224, %v1114, 0
  %v1424 = vsel %vm1224, %v1115, 0
  %v1427 = vsel %vm1224, %v1116, 0
  %v1430 = vsel %vm1224, %v1117, 0
  %v1433 = vsel %vm1224, %v1118, 0
  %v1436 = vsel %vm1224, %v1119, 0
  %v1439 = vsel %vm1224, %v1120, 0
  %v1442 = vsel %vm1224, %v1121, 0
  %v1445 = vsel %vm1224, %v1122, 0
  %v1448 = vsel %vm1224, %v1123, 0
  %v1451 = vsel %vm1224, %v1124, 0
  %v1454 = vsel %vm1224, %v1125, 0
  %v1457 = vsel %vm1224, %v1126, 0
  %v1460 = vsel %vm1224, %v1127, 0
  %v1463 = vsel %vm1224, %v1128, 0
  %v1466 = vsel %vm1224, %v1129, 0
  %v1469 = vsel %vm1224, %v1130, 0
  %v1472 = vsel %vm1224, %v1131, 0
  %v1475 = vsel %vm1224, %v1132, 0
  %v1478 = vsel %vm1224, %v1133, 0
  %v1481 = vsel %vm1224, %v1134, 0
  %v1484 = vsel %vm1224, %v1135, 0
  %v1487 = vsel %vm1224, %v1136, 0
  %v1490 = vsel %vm1224, %v1137, 0
  %v1493 = vsel %vm1224, %v1138, 0
  %v1496 = vsel %vm1224, %v1139, 0
  %v1499 = vsel %vm1224, %v1140, 0
  %v1502 = vsel %vm1224, %v1141, 0
  %v1505 = vsel %vm1224, %v1142, 0
  %v1508 = vsel %vm1224, %v1143, 0
  %v1511 = vsel %vm1224, %v1144, 0
  %v1514 = vsel %vm1224, %v1145, 0
  %v1517 = vsel %vm1224, %v1146, 0
  %v1520 = vsel %vm1224, %v1147, 0
  %v1523 = vsel %vm1224, %v1148, 0
  %v1526 = vsel %vm1224, %v1149, 0
  %v1529 = vsel %vm1224, %v1150, 0
  %v1532 = vsel %vm1224, %v1151, 0
  %v1535 = vsel %vm1224, %v1152, 0
  %v1538 = vsel %vm1224, %v1153, 0
  %v1541 = vsel %vm1224, %v1154, 0
  %v1544 = vsel %vm1224, %v1155, 0
  %v1547 = vsel %vm1224, %v1156, 0
  %v1550 = vsel %vm1224, %v1157, 0
  %v1553 = vsel %vm1224, %v1158, 0
  %v1556 = vsel %vm1224, %v1159, 0
  %v1559 = vsel %vm1224, %v1160, 0
  %v1562 = vsel %vm1224, %v1161, 0
  %v1565 = vsel %vm1224, %v1162, 0
  %v1568 = vsel %vm1224, %v1163, 0
  %v1571 = vsel %vm1224, %v1164, 0
  %v1574 = vsel %vm1224, %v1165, 0
  %v1577 = vsel %vm1224, %v1166, 0
  %v1580 = vsel %vm1224, %v1167, 0
  %v1583 = vsel %vm1224, %v1168, 0
  %v1586 = vsel %vm1224, %v1169, 0
  %v1589 = vsel %vm1224, %v1170, 0
  %v1592 = vsel %vm1224, %v1171, 0
  %v1595 = vsel %vm1224, %v1172, 0
  %v1598 = vsel %vm1224, %v1173, 0
  %v1601 = vsel %vm1224, %v1174, 0
  %v1604 = vsel %vm1224, %v1175, 0
  %v1607 = vsel %vm1224, %v1176, 0
  %v1610 = vsel %vm1224, %v1177, 0
  %v1613 = vsel %vm1224, %v1178, 0
  %v1616 = vsel %vm1224, %v1179, 0
  %v1619 = vsel %vm1224, %v1180, 0
  %v1622 = vsel %vm1224, %v1181, 0
  %v1625 = vsel %vm1224, %v1182, 0
  %v1628 = vsel %vm1224, %v1183, 0
  %v1631 = vsel %vm1224, %v1184, 0
  %v1634 = vsel %vm1224, %v1185, 0
  %v1637 = vsel %vm1224, %v1186, 0
  %v1640 = vsel %vm1224, %v1187, 0
  %v1643 = vsel %vm1224, %v1188, 0
  %v1646 = vsel %vm1224, %v1189, 0
  %v1649 = vsel %vm1224, %v1190, 0
  %v1652 = vsel %vm1224, %v1191, 0
  %v1655 = vsel %vm1224, %v1192, 0
  %v1658 = vsel %vm1224, %v1193, 0
  %v1661 = vsel %vm1224, %v1194, 0
  %v1664 = vsel %vm1224, %v1195, 0
  %v1667 = vsel %vm1224, %v1196, 0
  %v1670 = vsel %vm1224, %v1197, 0
  %v1673 = vsel %vm1224, %v1198, 0
  %v1676 = vsel %vm1224, %v1199, 0
  %v1679 = vsel %vm1224, %v1200, 0
  %v1682 = vsel %vm1224, %v1201, 0
  %v1685 = vsel %vm1224, %v1202, 0
  %v1688 = vsel %vm1224, %v1203, 0
  %v1691 = vsel %vm1224, %v1204, 0
  %v1694 = vsel %vm1224, %v1205, 0
  %v1697 = vsel %vm1224, %v1206, 0
  %v1700 = vsel %vm1224, %v1207, 0
  %v1703 = vsel %vm1224, %v1208, 0
  %v1706 = vsel %vm1224, %v1209, 0
  %v1709 = vsel %vm1224, %v1210, 0
  %v1712 = vsel %vm1224, %v1211, 0
  %v1715 = vsel %vm1224, %v1212, 0
  %v1718 = vsel %vm1224, %v1213, 0
  %v1721 = vsel %vm1224, %v1214, 0
  %v1724 = vsel %vm1224, %v1215, 0
  %v1727 = vsel %vm1224, %v1216, 0
  %v1730 = vsel %vm1224, %v1217, 0
  %1732 = vmatprep.subr.bf16.mxu0 0
  %1733 = vmatpush1.bf16.msra.mxu0 0
  %1734 = vmatprep.subr.bf16.mxu0 0
  %1735 = vmatpush1.bf16.msra.mxu0 0
  %1736 = vmatprep.subr.bf16.mxu0 0
  %1737 = vmatpush1.bf16.msra.mxu0 0
  %1738 = vmatprep.subr.bf16.mxu0 0
  %1739 = vmatpush1.bf16.msra.mxu0 0
  %1740 = vmatprep.subr.bf16.mxu0 0
  %1741 = vmatpush1.bf16.msra.mxu0 0
  %1742 = vmatprep.subr.bf16.mxu0 0
  %1743 = vmatpush1.bf16.msra.mxu0 0
  %1744 = vmatprep.subr.bf16.mxu0 0
  %1745 = vmatpush1.bf16.msra.mxu0 0
  %1746 = vmatprep.subr.bf16.mxu0 0
  %1747 = vmatpush1.bf16.msra.mxu0 %v1222
  %1748 = vmatprep.subr.bf16.mxu0 0
  %1749 = vmatpush2.bf16.msra.mxu0 0
  %1750 = vmatprep.subr.bf16.mxu0 0
  %1751 = vmatpush2.bf16.msra.mxu0 0
  %1752 = vmatprep.subr.bf16.mxu0 0
  %1753 = vmatpush2.bf16.msra.mxu0 0
  %1754 = vmatprep.subr.bf16.mxu0 0
  %1755 = vmatpush2.bf16.msra.mxu0 0
  %1756 = vmatprep.subr.bf16.mxu0 0
  %1757 = vmatpush2.bf16.msra.mxu0 0
  %1758 = vmatprep.subr.bf16.mxu0 0
  %1759 = vmatpush2.bf16.msra.mxu0 0
  %1760 = vmatprep.subr.bf16.mxu0 0
  %1761 = vmatpush2.bf16.msra.mxu0 0
  %1762 = vmatprep.subr.bf16.mxu0 0
  %1763 = vmatpush2.bf16.msra.mxu0 0
  %1764 = vmatprep.mubr.bf16.mxu0 0
  %1765 = vmatmul.mubr.bf16.gmra.mxu0 %v1226
  %v1766 = vpop.f32.mrf.mxu0
  %v1767 = vadd.f32 0.0, %v1766
  %v1768 = vpop.f32.mrf.mxu0
  %v1769 = vpop.f32.mrf.mxu0
  %v1770 = vadd.f32 0.0, %v1769
  %v1771 = vpop.f32.mrf.mxu0
  %1772 = vmatprep.mubr.bf16.mxu0 0
  %1773 = vmatmul.mubr.bf16.gmra.mxu0 %v1229
  %v1774 = vpop.f32.mrf.mxu0
  %v1775 = vadd.f32 0.0, %v1774
  %v1776 = vpop.f32.mrf.mxu0
  %v1777 = vpop.f32.mrf.mxu0
  %v1778 = vadd.f32 0.0, %v1777
  %v1779 = vpop.f32.mrf.mxu0
  %1780 = vmatprep.mubr.bf16.mxu0 0
  %1781 = vmatmul.mubr.bf16.gmra.mxu0 %v1232
  %v1782 = vpop.f32.mrf.mxu0
  %v1783 = vadd.f32 0.0, %v1782
  %v1784 = vpop.f32.mrf.mxu0
  %v1785 = vpop.f32.mrf.mxu0
  %v1786 = vadd.f32 0.0, %v1785
  %v1787 = vpop.f32.mrf.mxu0
  %1788 = vmatprep.mubr.bf16.mxu0 0
  %1789 = vmatmul.mubr.bf16.gmra.mxu0 %v1235
  %v1790 = vpop.f32.mrf.mxu0
  %v1791 = vadd.f32 0.0, %v1790
  %v1792 = vpop.f32.mrf.mxu0
  %v1793 = vpop.f32.mrf.mxu0
  %v1794 = vadd.f32 0.0, %v1793
  %v1795 = vpop.f32.mrf.mxu0
  %1796 = vmatprep.mubr.bf16.mxu0 0
  %1797 = vmatmul.mubr.bf16.gmra.mxu0 %v1238
  %v1798 = vpop.f32.mrf.mxu0
  %v1799 = vadd.f32 0.0, %v1798
  %v1800 = vpop.f32.mrf.mxu0
  %v1801 = vpop.f32.mrf.mxu0
  %v1802 = vadd.f32 0.0, %v1801
  %v1803 = vpop.f32.mrf.mxu0
  %1804 = vmatprep.mubr.bf16.mxu0 0
  %1805 = vmatmul.mubr.bf16.gmra.mxu0 %v1241
  %v1806 = vpop.f32.mrf.mxu0
  %v1807 = vadd.f32 0.0, %v1806
  %v1808 = vpop.f32.mrf.mxu0
  %v1809 = vpop.f32.mrf.mxu0
  %v1810 = vadd.f32 0.0, %v1809
  %v1811 = vpop.f32.mrf.mxu0
  %1812 = vmatprep.mubr.bf16.mxu0 0
  %1813 = vmatmul.mubr.bf16.gmra.mxu0 %v1244
  %v1814 = vpop.f32.mrf.mxu0
  %v1815 = vadd.f32 0.0, %v1814
  %v1816 = vpop.f32.mrf.mxu0
  %v1817 = vpop.f32.mrf.mxu0
  %v1818 = vadd.f32 0.0, %v1817
  %v1819 = vpop.f32.mrf.mxu0
  %1820 = vmatprep.mubr.bf16.mxu0 0
  %1821 = vmatmul.mubr.bf16.gmra.mxu0 %v1247
  %v1822 = vpop.f32.mrf.mxu0
  %v1823 = vadd.f32 0.0, %v1822
  %v1824 = vpop.f32.mrf.mxu0
  %v1825 = vpop.f32.mrf.mxu0
  %v1826 = vadd.f32 0.0, %v1825
  %v1827 = vpop.f32.mrf.mxu0
  %1828 = vmatprep.mubr.bf16.mxu0 0
  %1829 = vmatmul.mubr.bf16.gmra.mxu0 %v1250
  %v1830 = vpop.f32.mrf.mxu0
  %v1831 = vadd.f32 0.0, %v1830
  %v1832 = vpop.f32.mrf.mxu0
  %v1833 = vpop.f32.mrf.mxu0
  %v1834 = vadd.f32 0.0, %v1833
  %v1835 = vpop.f32.mrf.mxu0
  %1836 = vmatprep.mubr.bf16.mxu0 0
  %1837 = vmatmul.mubr.bf16.gmra.mxu0 %v1253
  %v1838 = vpop.f32.mrf.mxu0
  %v1839 = vadd.f32 0.0, %v1838
  %v1840 = vpop.f32.mrf.mxu0
  %v1841 = vpop.f32.mrf.mxu0
  %v1842 = vadd.f32 0.0, %v1841
  %v1843 = vpop.f32.mrf.mxu0
  %1844 = vmatprep.mubr.bf16.mxu0 0
  %1845 = vmatmul.mubr.bf16.gmra.mxu0 %v1256
  %v1846 = vpop.f32.mrf.mxu0
  %v1847 = vadd.f32 0.0, %v1846
  %v1848 = vpop.f32.mrf.mxu0
  %v1849 = vpop.f32.mrf.mxu0
  %v1850 = vadd.f32 0.0, %v1849
  %v1851 = vpop.f32.mrf.mxu0
  %1852 = vmatprep.mubr.bf16.mxu0 0
  %1853 = vmatmul.mubr.bf16.gmra.mxu0 %v1259
  %v1854 = vpop.f32.mrf.mxu0
  %v1855 = vadd.f32 0.0, %v1854
  %v1856 = vpop.f32.mrf.mxu0
  %v1857 = vpop.f32.mrf.mxu0
  %v1858 = vadd.f32 0.0, %v1857
  %v1859 = vpop.f32.mrf.mxu0
  %1860 = vmatprep.mubr.bf16.mxu0 0
  %1861 = vmatmul.mubr.bf16.gmra.mxu0 %v1262
  %v1862 = vpop.f32.mrf.mxu0
  %v1863 = vadd.f32 0.0, %v1862
  %v1864 = vpop.f32.mrf.mxu0
  %v1865 = vpop.f32.mrf.mxu0
  %v1866 = vadd.f32 0.0, %v1865
  %v1867 = vpop.f32.mrf.mxu0
  %1868 = vmatprep.mubr.bf16.mxu0 0
  %1869 = vmatmul.mubr.bf16.gmra.mxu0 %v1265
  %v1870 = vpop.f32.mrf.mxu0
  %v1871 = vadd.f32 0.0, %v1870
  %v1872 = vpop.f32.mrf.mxu0
  %v1873 = vpop.f32.mrf.mxu0
  %v1874 = vadd.f32 0.0, %v1873
  %v1875 = vpop.f32.mrf.mxu0
  %1876 = vmatprep.mubr.bf16.mxu0 0
  %1877 = vmatmul.mubr.bf16.gmra.mxu0 %v1268
  %v1878 = vpop.f32.mrf.mxu0
  %v1879 = vadd.f32 0.0, %v1878
  %v1880 = vpop.f32.mrf.mxu0
  %v1881 = vpop.f32.mrf.mxu0
  %v1882 = vadd.f32 0.0, %v1881
  %v1883 = vpop.f32.mrf.mxu0
  %1884 = vmatprep.mubr.bf16.mxu0 0
  %1885 = vmatmul.mubr.bf16.gmra.mxu0 %v1271
  %v1886 = vpop.f32.mrf.mxu0
  %v1887 = vadd.f32 0.0, %v1886
  %v1888 = vpop.f32.mrf.mxu0
  %v1889 = vpop.f32.mrf.mxu0
  %v1890 = vadd.f32 0.0, %v1889
  %v1891 = vpop.f32.mrf.mxu0
  %1892 = vmatprep.mubr.bf16.mxu0 0
  %1893 = vmatmul.mubr.bf16.gmra.mxu0 %v1274
  %v1894 = vpop.f32.mrf.mxu0
  %v1895 = vadd.f32 0.0, %v1894
  %v1896 = vpop.f32.mrf.mxu0
  %v1897 = vpop.f32.mrf.mxu0
  %v1898 = vadd.f32 0.0, %v1897
  %v1899 = vpop.f32.mrf.mxu0
  %1900 = vmatprep.mubr.bf16.mxu0 0
  %1901 = vmatmul.mubr.bf16.gmra.mxu0 %v1277
  %v1902 = vpop.f32.mrf.mxu0
  %v1903 = vadd.f32 0.0, %v1902
  %v1904 = vpop.f32.mrf.mxu0
  %v1905 = vpop.f32.mrf.mxu0
  %v1906 = vadd.f32 0.0, %v1905
  %v1907 = vpop.f32.mrf.mxu0
  %1908 = vmatprep.mubr.bf16.mxu0 0
  %1909 = vmatmul.mubr.bf16.gmra.mxu0 %v1280
  %v1910 = vpop.f32.mrf.mxu0
  %v1911 = vadd.f32 0.0, %v1910
  %v1912 = vpop.f32.mrf.mxu0
  %v1913 = vpop.f32.mrf.mxu0
  %v1914 = vadd.f32 0.0, %v1913
  %v1915 = vpop.f32.mrf.mxu0
  %1916 = vmatprep.mubr.bf16.mxu0 0
  %1917 = vmatmul.mubr.bf16.gmra.mxu0 %v1283
  %v1918 = vpop.f32.mrf.mxu0
  %v1919 = vadd.f32 0.0, %v1918
  %v1920 = vpop.f32.mrf.mxu0
  %v1921 = vpop.f32.mrf.mxu0
  %v1922 = vadd.f32 0.0, %v1921
  %v1923 = vpop.f32.mrf.mxu0
  %1924 = vmatprep.mubr.bf16.mxu0 0
  %1925 = vmatmul.mubr.bf16.gmra.mxu0 %v1286
  %v1926 = vpop.f32.mrf.mxu0
  %v1927 = vadd.f32 0.0, %v1926
  %v1928 = vpop.f32.mrf.mxu0
  %v1929 = vpop.f32.mrf.mxu0
  %v1930 = vadd.f32 0.0, %v1929
  %v1931 = vpop.f32.mrf.mxu0
  %1932 = vmatprep.mubr.bf16.mxu0 0
  %1933 = vmatmul.mubr.bf16.gmra.mxu0 %v1289
  %v1934 = vpop.f32.mrf.mxu0
  %v1935 = vadd.f32 0.0, %v1934
  %v1936 = vpop.f32.mrf.mxu0
  %v1937 = vpop.f32.mrf.mxu0
  %v1938 = vadd.f32 0.0, %v1937
  %v1939 = vpop.f32.mrf.mxu0
  %1940 = vmatprep.mubr.bf16.mxu0 0
  %1941 = vmatmul.mubr.bf16.gmra.mxu0 %v1292
  %v1942 = vpop.f32.mrf.mxu0
  %v1943 = vadd.f32 0.0, %v1942
  %v1944 = vpop.f32.mrf.mxu0
  %v1945 = vpop.f32.mrf.mxu0
  %v1946 = vadd.f32 0.0, %v1945
  %v1947 = vpop.f32.mrf.mxu0
  %1948 = vmatprep.mubr.bf16.mxu0 0
  %1949 = vmatmul.mubr.bf16.gmra.mxu0 %v1295
  %v1950 = vpop.f32.mrf.mxu0
  %v1951 = vadd.f32 0.0, %v1950
  %v1952 = vpop.f32.mrf.mxu0
  %v1953 = vpop.f32.mrf.mxu0
  %v1954 = vadd.f32 0.0, %v1953
  %v1955 = vpop.f32.mrf.mxu0
  %1956 = vmatprep.mubr.bf16.mxu0 0
  %1957 = vmatmul.mubr.bf16.gmra.mxu0 %v1298
  %v1958 = vpop.f32.mrf.mxu0
  %v1959 = vadd.f32 0.0, %v1958
  %v1960 = vpop.f32.mrf.mxu0
  %v1961 = vpop.f32.mrf.mxu0
  %v1962 = vadd.f32 0.0, %v1961
  %v1963 = vpop.f32.mrf.mxu0
  %1964 = vmatprep.mubr.bf16.mxu0 0
  %1965 = vmatmul.mubr.bf16.gmra.mxu0 %v1301
  %v1966 = vpop.f32.mrf.mxu0
  %v1967 = vadd.f32 0.0, %v1966
  %v1968 = vpop.f32.mrf.mxu0
  %v1969 = vpop.f32.mrf.mxu0
  %v1970 = vadd.f32 0.0, %v1969
  %v1971 = vpop.f32.mrf.mxu0
  %1972 = vmatprep.mubr.bf16.mxu0 0
  %1973 = vmatmul.mubr.bf16.gmra.mxu0 %v1304
  %v1974 = vpop.f32.mrf.mxu0
  %v1975 = vadd.f32 0.0, %v1974
  %v1976 = vpop.f32.mrf.mxu0
  %v1977 = vpop.f32.mrf.mxu0
  %v1978 = vadd.f32 0.0, %v1977
  %v1979 = vpop.f32.mrf.mxu0
  %1980 = vmatprep.mubr.bf16.mxu0 0
  %1981 = vmatmul.mubr.bf16.gmra.mxu0 %v1307
  %v1982 = vpop.f32.mrf.mxu0
  %v1983 = vadd.f32 0.0, %v1982
  %v1984 = vpop.f32.mrf.mxu0
  %v1985 = vpop.f32.mrf.mxu0
  %v1986 = vadd.f32 0.0, %v1985
  %v1987 = vpop.f32.mrf.mxu0
  %1988 = vmatprep.mubr.bf16.mxu0 0
  %1989 = vmatmul.mubr.bf16.gmra.mxu0 %v1310
  %v1990 = vpop.f32.mrf.mxu0
  %v1991 = vadd.f32 0.0, %v1990
  %v1992 = vpop.f32.mrf.mxu0
  %v1993 = vpop.f32.mrf.mxu0
  %v1994 = vadd.f32 0.0, %v1993
  %v1995 = vpop.f32.mrf.mxu0
  %1996 = vmatprep.mubr.bf16.mxu0 0
  %1997 = vmatmul.mubr.bf16.gmra.mxu0 %v1313
  %v1998 = vpop.f32.mrf.mxu0
  %v1999 = vadd.f32 0.0, %v1998
  %v2000 = vpop.f32.mrf.mxu0
  %v2001 = vpop.f32.mrf.mxu0
  %v2002 = vadd.f32 0.0, %v2001
  %v2003 = vpop.f32.mrf.mxu0
  %2004 = vmatprep.mubr.bf16.mxu0 0
  %2005 = vmatmul.mubr.bf16.gmra.mxu0 %v1316
  %v2006 = vpop.f32.mrf.mxu0
  %v2007 = vadd.f32 0.0, %v2006
  %v2008 = vpop.f32.mrf.mxu0
  %v2009 = vpop.f32.mrf.mxu0
  %v2010 = vadd.f32 0.0, %v2009
  %v2011 = vpop.f32.mrf.mxu0
  %2012 = vmatprep.mubr.bf16.mxu0 0
  %2013 = vmatmul.mubr.bf16.gmra.mxu0 %v1319
  %v2014 = vpop.f32.mrf.mxu0
  %v2015 = vadd.f32 0.0, %v2014
  %v2016 = vpop.f32.mrf.mxu0
  %v2017 = vpop.f32.mrf.mxu0
  %v2018 = vadd.f32 0.0, %v2017
  %v2019 = vpop.f32.mrf.mxu0
  %2020 = vmatprep.mubr.bf16.mxu0 0
  %2021 = vmatmul.mubr.bf16.gmra.mxu0 %v1322
  %v2022 = vpop.f32.mrf.mxu0
  %v2023 = vadd.f32 0.0, %v2022
  %v2024 = vpop.f32.mrf.mxu0
  %v2025 = vpop.f32.mrf.mxu0
  %v2026 = vadd.f32 0.0, %v2025
  %v2027 = vpop.f32.mrf.mxu0
  %2028 = vmatprep.mubr.bf16.mxu0 0
  %2029 = vmatmul.mubr.bf16.gmra.mxu0 %v1325
  %v2030 = vpop.f32.mrf.mxu0
  %v2031 = vadd.f32 0.0, %v2030
  %v2032 = vpop.f32.mrf.mxu0
  %v2033 = vpop.f32.mrf.mxu0
  %v2034 = vadd.f32 0.0, %v2033
  %v2035 = vpop.f32.mrf.mxu0
  %2036 = vmatprep.mubr.bf16.mxu0 0
  %2037 = vmatmul.mubr.bf16.gmra.mxu0 %v1328
  %v2038 = vpop.f32.mrf.mxu0
  %v2039 = vadd.f32 0.0, %v2038
  %v2040 = vpop.f32.mrf.mxu0
  %v2041 = vpop.f32.mrf.mxu0
  %v2042 = vadd.f32 0.0, %v2041
  %v2043 = vpop.f32.mrf.mxu0
  %2044 = vmatprep.mubr.bf16.mxu0 0
  %2045 = vmatmul.mubr.bf16.gmra.mxu0 %v1331
  %v2046 = vpop.f32.mrf.mxu0
  %v2047 = vadd.f32 0.0, %v2046
  %v2048 = vpop.f32.mrf.mxu0
  %v2049 = vpop.f32.mrf.mxu0
  %v2050 = vadd.f32 0.0, %v2049
  %v2051 = vpop.f32.mrf.mxu0
  %2052 = vmatprep.mubr.bf16.mxu0 0
  %2053 = vmatmul.mubr.bf16.gmra.mxu0 %v1334
  %v2054 = vpop.f32.mrf.mxu0
  %v2055 = vadd.f32 0.0, %v2054
  %v2056 = vpop.f32.mrf.mxu0
  %v2057 = vpop.f32.mrf.mxu0
  %v2058 = vadd.f32 0.0, %v2057
  %v2059 = vpop.f32.mrf.mxu0
  %2060 = vmatprep.mubr.bf16.mxu0 0
  %2061 = vmatmul.mubr.bf16.gmra.mxu0 %v1337
  %v2062 = vpop.f32.mrf.mxu0
  %v2063 = vadd.f32 0.0, %v2062
  %v2064 = vpop.f32.mrf.mxu0
  %v2065 = vpop.f32.mrf.mxu0
  %v2066 = vadd.f32 0.0, %v2065
  %v2067 = vpop.f32.mrf.mxu0
  %2068 = vmatprep.mubr.bf16.mxu0 0
  %2069 = vmatmul.mubr.bf16.gmra.mxu0 %v1340
  %v2070 = vpop.f32.mrf.mxu0
  %v2071 = vadd.f32 0.0, %v2070
  %v2072 = vpop.f32.mrf.mxu0
  %v2073 = vpop.f32.mrf.mxu0
  %v2074 = vadd.f32 0.0, %v2073
  %v2075 = vpop.f32.mrf.mxu0
  %2076 = vmatprep.mubr.bf16.mxu0 0
  %2077 = vmatmul.mubr.bf16.gmra.mxu0 %v1343
  %v2078 = vpop.f32.mrf.mxu0
  %v2079 = vadd.f32 0.0, %v2078
  %v2080 = vpop.f32.mrf.mxu0
  %v2081 = vpop.f32.mrf.mxu0
  %v2082 = vadd.f32 0.0, %v2081
  %v2083 = vpop.f32.mrf.mxu0
  %2084 = vmatprep.mubr.bf16.mxu0 0
  %2085 = vmatmul.mubr.bf16.gmra.mxu0 %v1346
  %v2086 = vpop.f32.mrf.mxu0
  %v2087 = vadd.f32 0.0, %v2086
  %v2088 = vpop.f32.mrf.mxu0
  %v2089 = vpop.f32.mrf.mxu0
  %v2090 = vadd.f32 0.0, %v2089
  %v2091 = vpop.f32.mrf.mxu0
  %2092 = vmatprep.mubr.bf16.mxu0 0
  %2093 = vmatmul.mubr.bf16.gmra.mxu0 %v1349
  %v2094 = vpop.f32.mrf.mxu0
  %v2095 = vadd.f32 0.0, %v2094
  %v2096 = vpop.f32.mrf.mxu0
  %v2097 = vpop.f32.mrf.mxu0
  %v2098 = vadd.f32 0.0, %v2097
  %v2099 = vpop.f32.mrf.mxu0
  %2100 = vmatprep.mubr.bf16.mxu0 0
  %2101 = vmatmul.mubr.bf16.gmra.mxu0 %v1352
  %v2102 = vpop.f32.mrf.mxu0
  %v2103 = vadd.f32 0.0, %v2102
  %v2104 = vpop.f32.mrf.mxu0
  %v2105 = vpop.f32.mrf.mxu0
  %v2106 = vadd.f32 0.0, %v2105
  %v2107 = vpop.f32.mrf.mxu0
  %2108 = vmatprep.mubr.bf16.mxu0 0
  %2109 = vmatmul.mubr.bf16.gmra.mxu0 %v1355
  %v2110 = vpop.f32.mrf.mxu0
  %v2111 = vadd.f32 0.0, %v2110
  %v2112 = vpop.f32.mrf.mxu0
  %v2113 = vpop.f32.mrf.mxu0
  %v2114 = vadd.f32 0.0, %v2113
  %v2115 = vpop.f32.mrf.mxu0
  %2116 = vmatprep.mubr.bf16.mxu0 0
  %2117 = vmatmul.mubr.bf16.gmra.mxu0 %v1358
  %v2118 = vpop.f32.mrf.mxu0
  %v2119 = vadd.f32 0.0, %v2118
  %v2120 = vpop.f32.mrf.mxu0
  %v2121 = vpop.f32.mrf.mxu0
  %v2122 = vadd.f32 0.0, %v2121
  %v2123 = vpop.f32.mrf.mxu0
  %2124 = vmatprep.mubr.bf16.mxu0 0
  %2125 = vmatmul.mubr.bf16.gmra.mxu0 %v1361
  %v2126 = vpop.f32.mrf.mxu0
  %v2127 = vadd.f32 0.0, %v2126
  %v2128 = vpop.f32.mrf.mxu0
  %v2129 = vpop.f32.mrf.mxu0
  %v2130 = vadd.f32 0.0, %v2129
  %v2131 = vpop.f32.mrf.mxu0
  %2132 = vmatprep.mubr.bf16.mxu0 0
  %2133 = vmatmul.mubr.bf16.gmra.mxu0 %v1364
  %v2134 = vpop.f32.mrf.mxu0
  %v2135 = vadd.f32 0.0, %v2134
  %v2136 = vpop.f32.mrf.mxu0
  %v2137 = vpop.f32.mrf.mxu0
  %v2138 = vadd.f32 0.0, %v2137
  %v2139 = vpop.f32.mrf.mxu0
  %2140 = vmatprep.mubr.bf16.mxu0 0
  %2141 = vmatmul.mubr.bf16.gmra.mxu0 %v1367
  %v2142 = vpop.f32.mrf.mxu0
  %v2143 = vadd.f32 0.0, %v2142
  %v2144 = vpop.f32.mrf.mxu0
  %v2145 = vpop.f32.mrf.mxu0
  %v2146 = vadd.f32 0.0, %v2145
  %v2147 = vpop.f32.mrf.mxu0
  %2148 = vmatprep.mubr.bf16.mxu0 0
  %2149 = vmatmul.mubr.bf16.gmra.mxu0 %v1370
  %v2150 = vpop.f32.mrf.mxu0
  %v2151 = vadd.f32 0.0, %v2150
  %v2152 = vpop.f32.mrf.mxu0
  %v2153 = vpop.f32.mrf.mxu0
  %v2154 = vadd.f32 0.0, %v2153
  %v2155 = vpop.f32.mrf.mxu0
  %2156 = vmatprep.mubr.bf16.mxu0 0
  %2157 = vmatmul.mubr.bf16.gmra.mxu0 %v1373
  %v2158 = vpop.f32.mrf.mxu0
  %v2159 = vadd.f32 0.0, %v2158
  %v2160 = vpop.f32.mrf.mxu0
  %v2161 = vpop.f32.mrf.mxu0
  %v2162 = vadd.f32 0.0, %v2161
  %v2163 = vpop.f32.mrf.mxu0
  %2164 = vmatprep.mubr.bf16.mxu0 0
  %2165 = vmatmul.mubr.bf16.gmra.mxu0 %v1376
  %v2166 = vpop.f32.mrf.mxu0
  %v2167 = vadd.f32 0.0, %v2166
  %v2168 = vpop.f32.mrf.mxu0
  %v2169 = vpop.f32.mrf.mxu0
  %v2170 = vadd.f32 0.0, %v2169
  %v2171 = vpop.f32.mrf.mxu0
  %2172 = vmatprep.mubr.bf16.mxu0 0
  %2173 = vmatmul.mubr.bf16.gmra.mxu0 %v1379
  %v2174 = vpop.f32.mrf.mxu0
  %v2175 = vadd.f32 0.0, %v2174
  %v2176 = vpop.f32.mrf.mxu0
  %v2177 = vpop.f32.mrf.mxu0
  %v2178 = vadd.f32 0.0, %v2177
  %v2179 = vpop.f32.mrf.mxu0
  %2180 = vmatprep.mubr.bf16.mxu0 0
  %2181 = vmatmul.mubr.bf16.gmra.mxu0 %v1382
  %v2182 = vpop.f32.mrf.mxu0
  %v2183 = vadd.f32 0.0, %v2182
  %v2184 = vpop.f32.mrf.mxu0
  %v2185 = vpop.f32.mrf.mxu0
  %v2186 = vadd.f32 0.0, %v2185
  %v2187 = vpop.f32.mrf.mxu0
  %2188 = vmatprep.mubr.bf16.mxu0 0
  %2189 = vmatmul.mubr.bf16.gmra.mxu0 %v1385
  %v2190 = vpop.f32.mrf.mxu0
  %v2191 = vadd.f32 0.0, %v2190
  %v2192 = vpop.f32.mrf.mxu0
  %v2193 = vpop.f32.mrf.mxu0
  %v2194 = vadd.f32 0.0, %v2193
  %v2195 = vpop.f32.mrf.mxu0
  %2196 = vmatprep.mubr.bf16.mxu0 0
  %2197 = vmatmul.mubr.bf16.gmra.mxu0 %v1388
  %v2198 = vpop.f32.mrf.mxu0
  %v2199 = vadd.f32 0.0, %v2198
  %v2200 = vpop.f32.mrf.mxu0
  %v2201 = vpop.f32.mrf.mxu0
  %v2202 = vadd.f32 0.0, %v2201
  %v2203 = vpop.f32.mrf.mxu0
  %2204 = vmatprep.mubr.bf16.mxu0 0
  %2205 = vmatmul.mubr.bf16.gmra.mxu0 %v1391
  %v2206 = vpop.f32.mrf.mxu0
  %v2207 = vadd.f32 0.0, %v2206
  %v2208 = vpop.f32.mrf.mxu0
  %v2209 = vpop.f32.mrf.mxu0
  %v2210 = vadd.f32 0.0, %v2209
  %v2211 = vpop.f32.mrf.mxu0
  %2212 = vmatprep.mubr.bf16.mxu0 0
  %2213 = vmatmul.mubr.bf16.gmra.mxu0 %v1394
  %v2214 = vpop.f32.mrf.mxu0
  %v2215 = vadd.f32 0.0, %v2214
  %v2216 = vpop.f32.mrf.mxu0
  %v2217 = vpop.f32.mrf.mxu0
  %v2218 = vadd.f32 0.0, %v2217
  %v2219 = vpop.f32.mrf.mxu0
  %2220 = vmatprep.mubr.bf16.mxu0 0
  %2221 = vmatmul.mubr.bf16.gmra.mxu0 %v1397
  %v2222 = vpop.f32.mrf.mxu0
  %v2223 = vadd.f32 0.0, %v2222
  %v2224 = vpop.f32.mrf.mxu0
  %v2225 = vpop.f32.mrf.mxu0
  %v2226 = vadd.f32 0.0, %v2225
  %v2227 = vpop.f32.mrf.mxu0
  %2228 = vmatprep.mubr.bf16.mxu0 0
  %2229 = vmatmul.mubr.bf16.gmra.mxu0 %v1400
  %v2230 = vpop.f32.mrf.mxu0
  %v2231 = vadd.f32 0.0, %v2230
  %v2232 = vpop.f32.mrf.mxu0
  %v2233 = vpop.f32.mrf.mxu0
  %v2234 = vadd.f32 0.0, %v2233
  %v2235 = vpop.f32.mrf.mxu0
  %2236 = vmatprep.mubr.bf16.mxu0 0
  %2237 = vmatmul.mubr.bf16.gmra.mxu0 %v1403
  %v2238 = vpop.f32.mrf.mxu0
  %v2239 = vadd.f32 0.0, %v2238
  %v2240 = vpop.f32.mrf.mxu0
  %v2241 = vpop.f32.mrf.mxu0
  %v2242 = vadd.f32 0.0, %v2241
  %v2243 = vpop.f32.mrf.mxu0
  %2244 = vmatprep.mubr.bf16.mxu0 0
  %2245 = vmatmul.mubr.bf16.gmra.mxu0 %v1406
  %v2246 = vpop.f32.mrf.mxu0
  %v2247 = vadd.f32 0.0, %v2246
  %v2248 = vpop.f32.mrf.mxu0
  %v2249 = vpop.f32.mrf.mxu0
  %v2250 = vadd.f32 0.0, %v2249
  %v2251 = vpop.f32.mrf.mxu0
  %2252 = vmatprep.mubr.bf16.mxu0 0
  %2253 = vmatmul.mubr.bf16.gmra.mxu0 %v1409
  %v2254 = vpop.f32.mrf.mxu0
  %v2255 = vadd.f32 0.0, %v2254
  %v2256 = vpop.f32.mrf.mxu0
  %v2257 = vpop.f32.mrf.mxu0
  %v2258 = vadd.f32 0.0, %v2257
  %v2259 = vpop.f32.mrf.mxu0
  %2260 = vmatprep.mubr.bf16.mxu0 0
  %2261 = vmatmul.mubr.bf16.gmra.mxu0 %v1412
  %v2262 = vpop.f32.mrf.mxu0
  %v2263 = vadd.f32 0.0, %v2262
  %v2264 = vpop.f32.mrf.mxu0
  %v2265 = vpop.f32.mrf.mxu0
  %v2266 = vadd.f32 0.0, %v2265
  %v2267 = vpop.f32.mrf.mxu0
  %2268 = vmatprep.mubr.bf16.mxu0 0
  %2269 = vmatmul.mubr.bf16.gmra.mxu0 %v1415
  %v2270 = vpop.f32.mrf.mxu0
  %v2271 = vadd.f32 0.0, %v2270
  %v2272 = vpop.f32.mrf.mxu0
  %v2273 = vpop.f32.mrf.mxu0
  %v2274 = vadd.f32 0.0, %v2273
  %v2275 = vpop.f32.mrf.mxu0
  %2276 = vmatprep.mubr.bf16.mxu0 0
  %2277 = vmatmul.mubr.bf16.gmra.mxu0 %v1418
  %v2278 = vpop.f32.mrf.mxu0
  %v2279 = vadd.f32 0.0, %v2278
  %v2280 = vpop.f32.mrf.mxu0
  %v2281 = vpop.f32.mrf.mxu0
  %v2282 = vadd.f32 0.0, %v2281
  %v2283 = vpop.f32.mrf.mxu0
  %2284 = vmatprep.mubr.bf16.mxu0 0
  %2285 = vmatmul.mubr.bf16.gmra.mxu0 %v1421
  %v2286 = vpop.f32.mrf.mxu0
  %v2287 = vadd.f32 0.0, %v2286
  %v2288 = vpop.f32.mrf.mxu0
  %v2289 = vpop.f32.mrf.mxu0
  %v2290 = vadd.f32 0.0, %v2289
  %v2291 = vpop.f32.mrf.mxu0
  %2292 = vmatprep.mubr.bf16.mxu0 0
  %2293 = vmatmul.mubr.bf16.gmra.mxu0 %v1424
  %v2294 = vpop.f32.mrf.mxu0
  %v2295 = vadd.f32 0.0, %v2294
  %v2296 = vpop.f32.mrf.mxu0
  %v2297 = vpop.f32.mrf.mxu0
  %v2298 = vadd.f32 0.0, %v2297
  %v2299 = vpop.f32.mrf.mxu0
  %2300 = vmatprep.mubr.bf16.mxu0 0
  %2301 = vmatmul.mubr.bf16.gmra.mxu0 %v1427
  %v2302 = vpop.f32.mrf.mxu0
  %v2303 = vadd.f32 0.0, %v2302
  %v2304 = vpop.f32.mrf.mxu0
  %v2305 = vpop.f32.mrf.mxu0
  %v2306 = vadd.f32 0.0, %v2305
  %v2307 = vpop.f32.mrf.mxu0
  %2308 = vmatprep.mubr.bf16.mxu0 0
  %2309 = vmatmul.mubr.bf16.gmra.mxu0 %v1430
  %v2310 = vpop.f32.mrf.mxu0
  %v2311 = vadd.f32 0.0, %v2310
  %v2312 = vpop.f32.mrf.mxu0
  %v2313 = vpop.f32.mrf.mxu0
  %v2314 = vadd.f32 0.0, %v2313
  %v2315 = vpop.f32.mrf.mxu0
  %2316 = vmatprep.mubr.bf16.mxu0 0
  %2317 = vmatmul.mubr.bf16.gmra.mxu0 %v1433
  %v2318 = vpop.f32.mrf.mxu0
  %v2319 = vadd.f32 0.0, %v2318
  %v2320 = vpop.f32.mrf.mxu0
  %v2321 = vpop.f32.mrf.mxu0
  %v2322 = vadd.f32 0.0, %v2321
  %v2323 = vpop.f32.mrf.mxu0
  %2324 = vmatprep.mubr.bf16.mxu0 0
  %2325 = vmatmul.mubr.bf16.gmra.mxu0 %v1436
  %v2326 = vpop.f32.mrf.mxu0
  %v2327 = vadd.f32 0.0, %v2326
  %v2328 = vpop.f32.mrf.mxu0
  %v2329 = vpop.f32.mrf.mxu0
  %v2330 = vadd.f32 0.0, %v2329
  %v2331 = vpop.f32.mrf.mxu0
  %2332 = vmatprep.mubr.bf16.mxu0 0
  %2333 = vmatmul.mubr.bf16.gmra.mxu0 %v1439
  %v2334 = vpop.f32.mrf.mxu0
  %v2335 = vadd.f32 0.0, %v2334
  %v2336 = vpop.f32.mrf.mxu0
  %v2337 = vpop.f32.mrf.mxu0
  %v2338 = vadd.f32 0.0, %v2337
  %v2339 = vpop.f32.mrf.mxu0
  %2340 = vmatprep.mubr.bf16.mxu0 0
  %2341 = vmatmul.mubr.bf16.gmra.mxu0 %v1442
  %v2342 = vpop.f32.mrf.mxu0
  %v2343 = vadd.f32 0.0, %v2342
  %v2344 = vpop.f32.mrf.mxu0
  %v2345 = vpop.f32.mrf.mxu0
  %v2346 = vadd.f32 0.0, %v2345
  %v2347 = vpop.f32.mrf.mxu0
  %2348 = vmatprep.mubr.bf16.mxu0 0
  %2349 = vmatmul.mubr.bf16.gmra.mxu0 %v1445
  %v2350 = vpop.f32.mrf.mxu0
  %v2351 = vadd.f32 0.0, %v2350
  %v2352 = vpop.f32.mrf.mxu0
  %v2353 = vpop.f32.mrf.mxu0
  %v2354 = vadd.f32 0.0, %v2353
  %v2355 = vpop.f32.mrf.mxu0
  %2356 = vmatprep.mubr.bf16.mxu0 0
  %2357 = vmatmul.mubr.bf16.gmra.mxu0 %v1448
  %v2358 = vpop.f32.mrf.mxu0
  %v2359 = vadd.f32 0.0, %v2358
  %v2360 = vpop.f32.mrf.mxu0
  %v2361 = vpop.f32.mrf.mxu0
  %v2362 = vadd.f32 0.0, %v2361
  %v2363 = vpop.f32.mrf.mxu0
  %2364 = vmatprep.mubr.bf16.mxu0 0
  %2365 = vmatmul.mubr.bf16.gmra.mxu0 %v1451
  %v2366 = vpop.f32.mrf.mxu0
  %v2367 = vadd.f32 0.0, %v2366
  %v2368 = vpop.f32.mrf.mxu0
  %v2369 = vpop.f32.mrf.mxu0
  %v2370 = vadd.f32 0.0, %v2369
  %v2371 = vpop.f32.mrf.mxu0
  %2372 = vmatprep.mubr.bf16.mxu0 0
  %2373 = vmatmul.mubr.bf16.gmra.mxu0 %v1454
  %v2374 = vpop.f32.mrf.mxu0
  %v2375 = vadd.f32 0.0, %v2374
  %v2376 = vpop.f32.mrf.mxu0
  %v2377 = vpop.f32.mrf.mxu0
  %v2378 = vadd.f32 0.0, %v2377
  %v2379 = vpop.f32.mrf.mxu0
  %2380 = vmatprep.mubr.bf16.mxu0 0
  %2381 = vmatmul.mubr.bf16.gmra.mxu0 %v1457
  %v2382 = vpop.f32.mrf.mxu0
  %v2383 = vadd.f32 0.0, %v2382
  %v2384 = vpop.f32.mrf.mxu0
  %v2385 = vpop.f32.mrf.mxu0
  %v2386 = vadd.f32 0.0, %v2385
  %v2387 = vpop.f32.mrf.mxu0
  %2388 = vmatprep.mubr.bf16.mxu0 0
  %2389 = vmatmul.mubr.bf16.gmra.mxu0 %v1460
  %v2390 = vpop.f32.mrf.mxu0
  %v2391 = vadd.f32 0.0, %v2390
  %v2392 = vpop.f32.mrf.mxu0
  %v2393 = vpop.f32.mrf.mxu0
  %v2394 = vadd.f32 0.0, %v2393
  %v2395 = vpop.f32.mrf.mxu0
  %2396 = vmatprep.mubr.bf16.mxu0 0
  %2397 = vmatmul.mubr.bf16.gmra.mxu0 %v1463
  %v2398 = vpop.f32.mrf.mxu0
  %v2399 = vadd.f32 0.0, %v2398
  %v2400 = vpop.f32.mrf.mxu0
  %v2401 = vpop.f32.mrf.mxu0
  %v2402 = vadd.f32 0.0, %v2401
  %v2403 = vpop.f32.mrf.mxu0
  %2404 = vmatprep.mubr.bf16.mxu0 0
  %2405 = vmatmul.mubr.bf16.gmra.mxu0 %v1466
  %v2406 = vpop.f32.mrf.mxu0
  %v2407 = vadd.f32 0.0, %v2406
  %v2408 = vpop.f32.mrf.mxu0
  %v2409 = vpop.f32.mrf.mxu0
  %v2410 = vadd.f32 0.0, %v2409
  %v2411 = vpop.f32.mrf.mxu0
  %2412 = vmatprep.mubr.bf16.mxu0 0
  %2413 = vmatmul.mubr.bf16.gmra.mxu0 %v1469
  %v2414 = vpop.f32.mrf.mxu0
  %v2415 = vadd.f32 0.0, %v2414
  %v2416 = vpop.f32.mrf.mxu0
  %v2417 = vpop.f32.mrf.mxu0
  %v2418 = vadd.f32 0.0, %v2417
  %v2419 = vpop.f32.mrf.mxu0
  %2420 = vmatprep.mubr.bf16.mxu0 0
  %2421 = vmatmul.mubr.bf16.gmra.mxu0 %v1472
  %v2422 = vpop.f32.mrf.mxu0
  %v2423 = vadd.f32 0.0, %v2422
  %v2424 = vpop.f32.mrf.mxu0
  %v2425 = vpop.f32.mrf.mxu0
  %v2426 = vadd.f32 0.0, %v2425
  %v2427 = vpop.f32.mrf.mxu0
  %2428 = vmatprep.mubr.bf16.mxu0 0
  %2429 = vmatmul.mubr.bf16.gmra.mxu0 %v1475
  %v2430 = vpop.f32.mrf.mxu0
  %v2431 = vadd.f32 0.0, %v2430
  %v2432 = vpop.f32.mrf.mxu0
  %v2433 = vpop.f32.mrf.mxu0
  %v2434 = vadd.f32 0.0, %v2433
  %v2435 = vpop.f32.mrf.mxu0
  %2436 = vmatprep.mubr.bf16.mxu0 0
  %2437 = vmatmul.mubr.bf16.gmra.mxu0 %v1478
  %v2438 = vpop.f32.mrf.mxu0
  %v2439 = vadd.f32 0.0, %v2438
  %v2440 = vpop.f32.mrf.mxu0
  %v2441 = vpop.f32.mrf.mxu0
  %v2442 = vadd.f32 0.0, %v2441
  %v2443 = vpop.f32.mrf.mxu0
  %2444 = vmatprep.mubr.bf16.mxu0 0
  %2445 = vmatmul.mubr.bf16.gmra.mxu0 %v1481
  %v2446 = vpop.f32.mrf.mxu0
  %v2447 = vadd.f32 0.0, %v2446
  %v2448 = vpop.f32.mrf.mxu0
  %v2449 = vpop.f32.mrf.mxu0
  %v2450 = vadd.f32 0.0, %v2449
  %v2451 = vpop.f32.mrf.mxu0
  %2452 = vmatprep.mubr.bf16.mxu0 0
  %2453 = vmatmul.mubr.bf16.gmra.mxu0 %v1484
  %v2454 = vpop.f32.mrf.mxu0
  %v2455 = vadd.f32 0.0, %v2454
  %v2456 = vpop.f32.mrf.mxu0
  %v2457 = vpop.f32.mrf.mxu0
  %v2458 = vadd.f32 0.0, %v2457
  %v2459 = vpop.f32.mrf.mxu0
  %2460 = vmatprep.mubr.bf16.mxu0 0
  %2461 = vmatmul.mubr.bf16.gmra.mxu0 %v1487
  %v2462 = vpop.f32.mrf.mxu0
  %v2463 = vadd.f32 0.0, %v2462
  %v2464 = vpop.f32.mrf.mxu0
  %v2465 = vpop.f32.mrf.mxu0
  %v2466 = vadd.f32 0.0, %v2465
  %v2467 = vpop.f32.mrf.mxu0
  %2468 = vmatprep.mubr.bf16.mxu0 0
  %2469 = vmatmul.mubr.bf16.gmra.mxu0 %v1490
  %v2470 = vpop.f32.mrf.mxu0
  %v2471 = vadd.f32 0.0, %v2470
  %v2472 = vpop.f32.mrf.mxu0
  %v2473 = vpop.f32.mrf.mxu0
  %v2474 = vadd.f32 0.0, %v2473
  %v2475 = vpop.f32.mrf.mxu0
  %2476 = vmatprep.mubr.bf16.mxu0 0
  %2477 = vmatmul.mubr.bf16.gmra.mxu0 %v1493
  %v2478 = vpop.f32.mrf.mxu0
  %v2479 = vadd.f32 0.0, %v2478
  %v2480 = vpop.f32.mrf.mxu0
  %v2481 = vpop.f32.mrf.mxu0
  %v2482 = vadd.f32 0.0, %v2481
  %v2483 = vpop.f32.mrf.mxu0
  %2484 = vmatprep.mubr.bf16.mxu0 0
  %2485 = vmatmul.mubr.bf16.gmra.mxu0 %v1496
  %v2486 = vpop.f32.mrf.mxu0
  %v2487 = vadd.f32 0.0, %v2486
  %v2488 = vpop.f32.mrf.mxu0
  %v2489 = vpop.f32.mrf.mxu0
  %v2490 = vadd.f32 0.0, %v2489
  %v2491 = vpop.f32.mrf.mxu0
  %2492 = vmatprep.mubr.bf16.mxu0 0
  %2493 = vmatmul.mubr.bf16.gmra.mxu0 %v1499
  %v2494 = vpop.f32.mrf.mxu0
  %v2495 = vadd.f32 0.0, %v2494
  %v2496 = vpop.f32.mrf.mxu0
  %v2497 = vpop.f32.mrf.mxu0
  %v2498 = vadd.f32 0.0, %v2497
  %v2499 = vpop.f32.mrf.mxu0
  %2500 = vmatprep.mubr.bf16.mxu0 0
  %2501 = vmatmul.mubr.bf16.gmra.mxu0 %v1502
  %v2502 = vpop.f32.mrf.mxu0
  %v2503 = vadd.f32 0.0, %v2502
  %v2504 = vpop.f32.mrf.mxu0
  %v2505 = vpop.f32.mrf.mxu0
  %v2506 = vadd.f32 0.0, %v2505
  %v2507 = vpop.f32.mrf.mxu0
  %2508 = vmatprep.mubr.bf16.mxu0 0
  %2509 = vmatmul.mubr.bf16.gmra.mxu0 %v1505
  %v2510 = vpop.f32.mrf.mxu0
  %v2511 = vadd.f32 0.0, %v2510
  %v2512 = vpop.f32.mrf.mxu0
  %v2513 = vpop.f32.mrf.mxu0
  %v2514 = vadd.f32 0.0, %v2513
  %v2515 = vpop.f32.mrf.mxu0
  %2516 = vmatprep.mubr.bf16.mxu0 0
  %2517 = vmatmul.mubr.bf16.gmra.mxu0 %v1508
  %v2518 = vpop.f32.mrf.mxu0
  %v2519 = vadd.f32 0.0, %v2518
  %v2520 = vpop.f32.mrf.mxu0
  %v2521 = vpop.f32.mrf.mxu0
  %v2522 = vadd.f32 0.0, %v2521
  %v2523 = vpop.f32.mrf.mxu0
  %2524 = vmatprep.mubr.bf16.mxu0 0
  %2525 = vmatmul.mubr.bf16.gmra.mxu0 %v1511
  %v2526 = vpop.f32.mrf.mxu0
  %v2527 = vadd.f32 0.0, %v2526
  %v2528 = vpop.f32.mrf.mxu0
  %v2529 = vpop.f32.mrf.mxu0
  %v2530 = vadd.f32 0.0, %v2529
  %v2531 = vpop.f32.mrf.mxu0
  %2532 = vmatprep.mubr.bf16.mxu0 0
  %2533 = vmatmul.mubr.bf16.gmra.mxu0 %v1514
  %v2534 = vpop.f32.mrf.mxu0
  %v2535 = vadd.f32 0.0, %v2534
  %v2536 = vpop.f32.mrf.mxu0
  %v2537 = vpop.f32.mrf.mxu0
  %v2538 = vadd.f32 0.0, %v2537
  %v2539 = vpop.f32.mrf.mxu0
  %2540 = vmatprep.mubr.bf16.mxu0 0
  %2541 = vmatmul.mubr.bf16.gmra.mxu0 %v1517
  %v2542 = vpop.f32.mrf.mxu0
  %v2543 = vadd.f32 0.0, %v2542
  %v2544 = vpop.f32.mrf.mxu0
  %v2545 = vpop.f32.mrf.mxu0
  %v2546 = vadd.f32 0.0, %v2545
  %v2547 = vpop.f32.mrf.mxu0
  %2548 = vmatprep.mubr.bf16.mxu0 0
  %2549 = vmatmul.mubr.bf16.gmra.mxu0 %v1520
  %v2550 = vpop.f32.mrf.mxu0
  %v2551 = vadd.f32 0.0, %v2550
  %v2552 = vpop.f32.mrf.mxu0
  %v2553 = vpop.f32.mrf.mxu0
  %v2554 = vadd.f32 0.0, %v2553
  %v2555 = vpop.f32.mrf.mxu0
  %2556 = vmatprep.mubr.bf16.mxu0 0
  %2557 = vmatmul.mubr.bf16.gmra.mxu0 %v1523
  %v2558 = vpop.f32.mrf.mxu0
  %v2559 = vadd.f32 0.0, %v2558
  %v2560 = vpop.f32.mrf.mxu0
  %v2561 = vpop.f32.mrf.mxu0
  %v2562 = vadd.f32 0.0, %v2561
  %v2563 = vpop.f32.mrf.mxu0
  %2564 = vmatprep.mubr.bf16.mxu0 0
  %2565 = vmatmul.mubr.bf16.gmra.mxu0 %v1526
  %v2566 = vpop.f32.mrf.mxu0
  %v2567 = vadd.f32 0.0, %v2566
  %v2568 = vpop.f32.mrf.mxu0
  %v2569 = vpop.f32.mrf.mxu0
  %v2570 = vadd.f32 0.0, %v2569
  %v2571 = vpop.f32.mrf.mxu0
  %2572 = vmatprep.mubr.bf16.mxu0 0
  %2573 = vmatmul.mubr.bf16.gmra.mxu0 %v1529
  %v2574 = vpop.f32.mrf.mxu0
  %v2575 = vadd.f32 0.0, %v2574
  %v2576 = vpop.f32.mrf.mxu0
  %v2577 = vpop.f32.mrf.mxu0
  %v2578 = vadd.f32 0.0, %v2577
  %v2579 = vpop.f32.mrf.mxu0
  %2580 = vmatprep.mubr.bf16.mxu0 0
  %2581 = vmatmul.mubr.bf16.gmra.mxu0 %v1532
  %v2582 = vpop.f32.mrf.mxu0
  %v2583 = vadd.f32 0.0, %v2582
  %v2584 = vpop.f32.mrf.mxu0
  %v2585 = vpop.f32.mrf.mxu0
  %v2586 = vadd.f32 0.0, %v2585
  %v2587 = vpop.f32.mrf.mxu0
  %2588 = vmatprep.mubr.bf16.mxu0 0
  %2589 = vmatmul.mubr.bf16.gmra.mxu0 %v1535
  %v2590 = vpop.f32.mrf.mxu0
  %v2591 = vadd.f32 0.0, %v2590
  %v2592 = vpop.f32.mrf.mxu0
  %v2593 = vpop.f32.mrf.mxu0
  %v2594 = vadd.f32 0.0, %v2593
  %v2595 = vpop.f32.mrf.mxu0
  %2596 = vmatprep.mubr.bf16.mxu0 0
  %2597 = vmatmul.mubr.bf16.gmra.mxu0 %v1538
  %v2598 = vpop.f32.mrf.mxu0
  %v2599 = vadd.f32 0.0, %v2598
  %v2600 = vpop.f32.mrf.mxu0
  %v2601 = vpop.f32.mrf.mxu0
  %v2602 = vadd.f32 0.0, %v2601
  %v2603 = vpop.f32.mrf.mxu0
  %2604 = vmatprep.mubr.bf16.mxu0 0
  %2605 = vmatmul.mubr.bf16.gmra.mxu0 %v1541
  %v2606 = vpop.f32.mrf.mxu0
  %v2607 = vadd.f32 0.0, %v2606
  %v2608 = vpop.f32.mrf.mxu0
  %v2609 = vpop.f32.mrf.mxu0
  %v2610 = vadd.f32 0.0, %v2609
  %v2611 = vpop.f32.mrf.mxu0
  %2612 = vmatprep.mubr.bf16.mxu0 0
  %2613 = vmatmul.mubr.bf16.gmra.mxu0 %v1544
  %v2614 = vpop.f32.mrf.mxu0
  %v2615 = vadd.f32 0.0, %v2614
  %v2616 = vpop.f32.mrf.mxu0
  %v2617 = vpop.f32.mrf.mxu0
  %v2618 = vadd.f32 0.0, %v2617
  %v2619 = vpop.f32.mrf.mxu0
  %2620 = vmatprep.mubr.bf16.mxu0 0
  %2621 = vmatmul.mubr.bf16.gmra.mxu0 %v1547
  %v2622 = vpop.f32.mrf.mxu0
  %v2623 = vadd.f32 0.0, %v2622
  %v2624 = vpop.f32.mrf.mxu0
  %v2625 = vpop.f32.mrf.mxu0
  %v2626 = vadd.f32 0.0, %v2625
  %v2627 = vpop.f32.mrf.mxu0
  %2628 = vmatprep.mubr.bf16.mxu0 0
  %2629 = vmatmul.mubr.bf16.gmra.mxu0 %v1550
  %v2630 = vpop.f32.mrf.mxu0
  %v2631 = vadd.f32 0.0, %v2630
  %v2632 = vpop.f32.mrf.mxu0
  %v2633 = vpop.f32.mrf.mxu0
  %v2634 = vadd.f32 0.0, %v2633
  %v2635 = vpop.f32.mrf.mxu0
  %2636 = vmatprep.mubr.bf16.mxu0 0
  %2637 = vmatmul.mubr.bf16.gmra.mxu0 %v1553
  %v2638 = vpop.f32.mrf.mxu0
  %v2639 = vadd.f32 0.0, %v2638
  %v2640 = vpop.f32.mrf.mxu0
  %v2641 = vpop.f32.mrf.mxu0
  %v2642 = vadd.f32 0.0, %v2641
  %v2643 = vpop.f32.mrf.mxu0
  %2644 = vmatprep.mubr.bf16.mxu0 0
  %2645 = vmatmul.mubr.bf16.gmra.mxu0 %v1556
  %v2646 = vpop.f32.mrf.mxu0
  %v2647 = vadd.f32 0.0, %v2646
  %v2648 = vpop.f32.mrf.mxu0
  %v2649 = vpop.f32.mrf.mxu0
  %v2650 = vadd.f32 0.0, %v2649
  %v2651 = vpop.f32.mrf.mxu0
  %2652 = vmatprep.mubr.bf16.mxu0 0
  %2653 = vmatmul.mubr.bf16.gmra.mxu0 %v1559
  %v2654 = vpop.f32.mrf.mxu0
  %v2655 = vadd.f32 0.0, %v2654
  %v2656 = vpop.f32.mrf.mxu0
  %v2657 = vpop.f32.mrf.mxu0
  %v2658 = vadd.f32 0.0, %v2657
  %v2659 = vpop.f32.mrf.mxu0
  %2660 = vmatprep.mubr.bf16.mxu0 0
  %2661 = vmatmul.mubr.bf16.gmra.mxu0 %v1562
  %v2662 = vpop.f32.mrf.mxu0
  %v2663 = vadd.f32 0.0, %v2662
  %v2664 = vpop.f32.mrf.mxu0
  %v2665 = vpop.f32.mrf.mxu0
  %v2666 = vadd.f32 0.0, %v2665
  %v2667 = vpop.f32.mrf.mxu0
  %2668 = vmatprep.mubr.bf16.mxu0 0
  %2669 = vmatmul.mubr.bf16.gmra.mxu0 %v1565
  %v2670 = vpop.f32.mrf.mxu0
  %v2671 = vadd.f32 0.0, %v2670
  %v2672 = vpop.f32.mrf.mxu0
  %v2673 = vpop.f32.mrf.mxu0
  %v2674 = vadd.f32 0.0, %v2673
  %v2675 = vpop.f32.mrf.mxu0
  %2676 = vmatprep.mubr.bf16.mxu0 0
  %2677 = vmatmul.mubr.bf16.gmra.mxu0 %v1568
  %v2678 = vpop.f32.mrf.mxu0
  %v2679 = vadd.f32 0.0, %v2678
  %v2680 = vpop.f32.mrf.mxu0
  %v2681 = vpop.f32.mrf.mxu0
  %v2682 = vadd.f32 0.0, %v2681
  %v2683 = vpop.f32.mrf.mxu0
  %2684 = vmatprep.mubr.bf16.mxu0 0
  %2685 = vmatmul.mubr.bf16.gmra.mxu0 %v1571
  %v2686 = vpop.f32.mrf.mxu0
  %v2687 = vadd.f32 0.0, %v2686
  %v2688 = vpop.f32.mrf.mxu0
  %v2689 = vpop.f32.mrf.mxu0
  %v2690 = vadd.f32 0.0, %v2689
  %v2691 = vpop.f32.mrf.mxu0
  %2692 = vmatprep.mubr.bf16.mxu0 0
  %2693 = vmatmul.mubr.bf16.gmra.mxu0 %v1574
  %v2694 = vpop.f32.mrf.mxu0
  %v2695 = vadd.f32 0.0, %v2694
  %v2696 = vpop.f32.mrf.mxu0
  %v2697 = vpop.f32.mrf.mxu0
  %v2698 = vadd.f32 0.0, %v2697
  %v2699 = vpop.f32.mrf.mxu0
  %2700 = vmatprep.mubr.bf16.mxu0 0
  %2701 = vmatmul.mubr.bf16.gmra.mxu0 %v1577
  %v2702 = vpop.f32.mrf.mxu0
  %v2703 = vadd.f32 0.0, %v2702
  %v2704 = vpop.f32.mrf.mxu0
  %v2705 = vpop.f32.mrf.mxu0
  %v2706 = vadd.f32 0.0, %v2705
  %v2707 = vpop.f32.mrf.mxu0
  %2708 = vmatprep.mubr.bf16.mxu0 0
  %2709 = vmatmul.mubr.bf16.gmra.mxu0 %v1580
  %v2710 = vpop.f32.mrf.mxu0
  %v2711 = vadd.f32 0.0, %v2710
  %v2712 = vpop.f32.mrf.mxu0
  %v2713 = vpop.f32.mrf.mxu0
  %v2714 = vadd.f32 0.0, %v2713
  %v2715 = vpop.f32.mrf.mxu0
  %2716 = vmatprep.mubr.bf16.mxu0 0
  %2717 = vmatmul.mubr.bf16.gmra.mxu0 %v1583
  %v2718 = vpop.f32.mrf.mxu0
  %v2719 = vadd.f32 0.0, %v2718
  %v2720 = vpop.f32.mrf.mxu0
  %v2721 = vpop.f32.mrf.mxu0
  %v2722 = vadd.f32 0.0, %v2721
  %v2723 = vpop.f32.mrf.mxu0
  %2724 = vmatprep.mubr.bf16.mxu0 0
  %2725 = vmatmul.mubr.bf16.gmra.mxu0 %v1586
  %v2726 = vpop.f32.mrf.mxu0
  %v2727 = vadd.f32 0.0, %v2726
  %v2728 = vpop.f32.mrf.mxu0
  %v2729 = vpop.f32.mrf.mxu0
  %v2730 = vadd.f32 0.0, %v2729
  %v2731 = vpop.f32.mrf.mxu0
  %2732 = vmatprep.mubr.bf16.mxu0 0
  %2733 = vmatmul.mubr.bf16.gmra.mxu0 %v1589
  %v2734 = vpop.f32.mrf.mxu0
  %v2735 = vadd.f32 0.0, %v2734
  %v2736 = vpop.f32.mrf.mxu0
  %v2737 = vpop.f32.mrf.mxu0
  %v2738 = vadd.f32 0.0, %v2737
  %v2739 = vpop.f32.mrf.mxu0
  %2740 = vmatprep.mubr.bf16.mxu0 0
  %2741 = vmatmul.mubr.bf16.gmra.mxu0 %v1592
  %v2742 = vpop.f32.mrf.mxu0
  %v2743 = vadd.f32 0.0, %v2742
  %v2744 = vpop.f32.mrf.mxu0
  %v2745 = vpop.f32.mrf.mxu0
  %v2746 = vadd.f32 0.0, %v2745
  %v2747 = vpop.f32.mrf.mxu0
  %2748 = vmatprep.mubr.bf16.mxu0 0
  %2749 = vmatmul.mubr.bf16.gmra.mxu0 %v1595
  %v2750 = vpop.f32.mrf.mxu0
  %v2751 = vadd.f32 0.0, %v2750
  %v2752 = vpop.f32.mrf.mxu0
  %v2753 = vpop.f32.mrf.mxu0
  %v2754 = vadd.f32 0.0, %v2753
  %v2755 = vpop.f32.mrf.mxu0
  %2756 = vmatprep.mubr.bf16.mxu0 0
  %2757 = vmatmul.mubr.bf16.gmra.mxu0 %v1598
  %v2758 = vpop.f32.mrf.mxu0
  %v2759 = vadd.f32 0.0, %v2758
  %v2760 = vpop.f32.mrf.mxu0
  %v2761 = vpop.f32.mrf.mxu0
  %v2762 = vadd.f32 0.0, %v2761
  %v2763 = vpop.f32.mrf.mxu0
  %2764 = vmatprep.mubr.bf16.mxu0 0
  %2765 = vmatmul.mubr.bf16.gmra.mxu0 %v1601
  %v2766 = vpop.f32.mrf.mxu0
  %v2767 = vadd.f32 0.0, %v2766
  %v2768 = vpop.f32.mrf.mxu0
  %v2769 = vpop.f32.mrf.mxu0
  %v2770 = vadd.f32 0.0, %v2769
  %v2771 = vpop.f32.mrf.mxu0
  %2772 = vmatprep.mubr.bf16.mxu0 0
  %2773 = vmatmul.mubr.bf16.gmra.mxu0 %v1604
  %v2774 = vpop.f32.mrf.mxu0
  %v2775 = vadd.f32 0.0, %v2774
  %v2776 = vpop.f32.mrf.mxu0
  %v2777 = vpop.f32.mrf.mxu0
  %v2778 = vadd.f32 0.0, %v2777
  %v2779 = vpop.f32.mrf.mxu0
  %2780 = vmatprep.mubr.bf16.mxu0 0
  %2781 = vmatmul.mubr.bf16.gmra.mxu0 %v1607
  %v2782 = vpop.f32.mrf.mxu0
  %v2783 = vadd.f32 0.0, %v2782
  %v2784 = vpop.f32.mrf.mxu0
  %v2785 = vpop.f32.mrf.mxu0
  %v2786 = vadd.f32 0.0, %v2785
  %v2787 = vpop.f32.mrf.mxu0
  %2788 = vmatprep.mubr.bf16.mxu0 0
  %2789 = vmatmul.mubr.bf16.gmra.mxu0 %v1610
  %v2790 = vpop.f32.mrf.mxu0
  %v2791 = vadd.f32 0.0, %v2790
  %v2792 = vpop.f32.mrf.mxu0
  %v2793 = vpop.f32.mrf.mxu0
  %v2794 = vadd.f32 0.0, %v2793
  %v2795 = vpop.f32.mrf.mxu0
  %2796 = vmatprep.mubr.bf16.mxu0 0
  %2797 = vmatmul.mubr.bf16.gmra.mxu0 %v1613
  %v2798 = vpop.f32.mrf.mxu0
  %v2799 = vadd.f32 0.0, %v2798
  %v2800 = vpop.f32.mrf.mxu0
  %v2801 = vpop.f32.mrf.mxu0
  %v2802 = vadd.f32 0.0, %v2801
  %v2803 = vpop.f32.mrf.mxu0
  %2804 = vmatprep.mubr.bf16.mxu0 0
  %2805 = vmatmul.mubr.bf16.gmra.mxu0 %v1616
  %v2806 = vpop.f32.mrf.mxu0
  %v2807 = vadd.f32 0.0, %v2806
  %v2808 = vpop.f32.mrf.mxu0
  %v2809 = vpop.f32.mrf.mxu0
  %v2810 = vadd.f32 0.0, %v2809
  %v2811 = vpop.f32.mrf.mxu0
  %2812 = vmatprep.mubr.bf16.mxu0 0
  %2813 = vmatmul.mubr.bf16.gmra.mxu0 %v1619
  %v2814 = vpop.f32.mrf.mxu0
  %v2815 = vadd.f32 0.0, %v2814
  %v2816 = vpop.f32.mrf.mxu0
  %v2817 = vpop.f32.mrf.mxu0
  %v2818 = vadd.f32 0.0, %v2817
  %v2819 = vpop.f32.mrf.mxu0
  %2820 = vmatprep.mubr.bf16.mxu0 0
  %2821 = vmatmul.mubr.bf16.gmra.mxu0 %v1622
  %v2822 = vpop.f32.mrf.mxu0
  %v2823 = vadd.f32 0.0, %v2822
  %v2824 = vpop.f32.mrf.mxu0
  %v2825 = vpop.f32.mrf.mxu0
  %v2826 = vadd.f32 0.0, %v2825
  %v2827 = vpop.f32.mrf.mxu0
  %2828 = vmatprep.mubr.bf16.mxu0 0
  %2829 = vmatmul.mubr.bf16.gmra.mxu0 %v1625
  %v2830 = vpop.f32.mrf.mxu0
  %v2831 = vadd.f32 0.0, %v2830
  %v2832 = vpop.f32.mrf.mxu0
  %v2833 = vpop.f32.mrf.mxu0
  %v2834 = vadd.f32 0.0, %v2833
  %v2835 = vpop.f32.mrf.mxu0
  %2836 = vmatprep.mubr.bf16.mxu0 0
  %2837 = vmatmul.mubr.bf16.gmra.mxu0 %v1628
  %v2838 = vpop.f32.mrf.mxu0
  %v2839 = vadd.f32 0.0, %v2838
  %v2840 = vpop.f32.mrf.mxu0
  %v2841 = vpop.f32.mrf.mxu0
  %v2842 = vadd.f32 0.0, %v2841
  %v2843 = vpop.f32.mrf.mxu0
  %2844 = vmatprep.mubr.bf16.mxu0 0
  %2845 = vmatmul.mubr.bf16.gmra.mxu0 %v1631
  %v2846 = vpop.f32.mrf.mxu0
  %v2847 = vadd.f32 0.0, %v2846
  %v2848 = vpop.f32.mrf.mxu0
  %v2849 = vpop.f32.mrf.mxu0
  %v2850 = vadd.f32 0.0, %v2849
  %v2851 = vpop.f32.mrf.mxu0
  %2852 = vmatprep.mubr.bf16.mxu0 0
  %2853 = vmatmul.mubr.bf16.gmra.mxu0 %v1634
  %v2854 = vpop.f32.mrf.mxu0
  %v2855 = vadd.f32 0.0, %v2854
  %v2856 = vpop.f32.mrf.mxu0
  %v2857 = vpop.f32.mrf.mxu0
  %v2858 = vadd.f32 0.0, %v2857
  %v2859 = vpop.f32.mrf.mxu0
  %2860 = vmatprep.mubr.bf16.mxu0 0
  %2861 = vmatmul.mubr.bf16.gmra.mxu0 %v1637
  %v2862 = vpop.f32.mrf.mxu0
  %v2863 = vadd.f32 0.0, %v2862
  %v2864 = vpop.f32.mrf.mxu0
  %v2865 = vpop.f32.mrf.mxu0
  %v2866 = vadd.f32 0.0, %v2865
  %v2867 = vpop.f32.mrf.mxu0
  %2868 = vmatprep.mubr.bf16.mxu0 0
  %2869 = vmatmul.mubr.bf16.gmra.mxu0 %v1640
  %v2870 = vpop.f32.mrf.mxu0
  %v2871 = vadd.f32 0.0, %v2870
  %v2872 = vpop.f32.mrf.mxu0
  %v2873 = vpop.f32.mrf.mxu0
  %v2874 = vadd.f32 0.0, %v2873
  %v2875 = vpop.f32.mrf.mxu0
  %2876 = vmatprep.mubr.bf16.mxu0 0
  %2877 = vmatmul.mubr.bf16.gmra.mxu0 %v1643
  %v2878 = vpop.f32.mrf.mxu0
  %v2879 = vadd.f32 0.0, %v2878
  %v2880 = vpop.f32.mrf.mxu0
  %v2881 = vpop.f32.mrf.mxu0
  %v2882 = vadd.f32 0.0, %v2881
  %v2883 = vpop.f32.mrf.mxu0
  %2884 = vmatprep.mubr.bf16.mxu0 0
  %2885 = vmatmul.mubr.bf16.gmra.mxu0 %v1646
  %v2886 = vpop.f32.mrf.mxu0
  %v2887 = vadd.f32 0.0, %v2886
  %v2888 = vpop.f32.mrf.mxu0
  %v2889 = vpop.f32.mrf.mxu0
  %v2890 = vadd.f32 0.0, %v2889
  %v2891 = vpop.f32.mrf.mxu0
  %2892 = vmatprep.mubr.bf16.mxu0 0
  %2893 = vmatmul.mubr.bf16.gmra.mxu0 %v1649
  %v2894 = vpop.f32.mrf.mxu0
  %v2895 = vadd.f32 0.0, %v2894
  %v2896 = vpop.f32.mrf.mxu0
  %v2897 = vpop.f32.mrf.mxu0
  %v2898 = vadd.f32 0.0, %v2897
  %v2899 = vpop.f32.mrf.mxu0
  %2900 = vmatprep.mubr.bf16.mxu0 0
  %2901 = vmatmul.mubr.bf16.gmra.mxu0 %v1652
  %v2902 = vpop.f32.mrf.mxu0
  %v2903 = vadd.f32 0.0, %v2902
  %v2904 = vpop.f32.mrf.mxu0
  %v2905 = vpop.f32.mrf.mxu0
  %v2906 = vadd.f32 0.0, %v2905
  %v2907 = vpop.f32.mrf.mxu0
  %2908 = vmatprep.mubr.bf16.mxu0 0
  %2909 = vmatmul.mubr.bf16.gmra.mxu0 %v1655
  %v2910 = vpop.f32.mrf.mxu0
  %v2911 = vadd.f32 0.0, %v2910
  %v2912 = vpop.f32.mrf.mxu0
  %v2913 = vpop.f32.mrf.mxu0
  %v2914 = vadd.f32 0.0, %v2913
  %v2915 = vpop.f32.mrf.mxu0
  %2916 = vmatprep.mubr.bf16.mxu0 0
  %2917 = vmatmul.mubr.bf16.gmra.mxu0 %v1658
  %v2918 = vpop.f32.mrf.mxu0
  %v2919 = vadd.f32 0.0, %v2918
  %v2920 = vpop.f32.mrf.mxu0
  %v2921 = vpop.f32.mrf.mxu0
  %v2922 = vadd.f32 0.0, %v2921
  %v2923 = vpop.f32.mrf.mxu0
  %2924 = vmatprep.mubr.bf16.mxu0 0
  %2925 = vmatmul.mubr.bf16.gmra.mxu0 %v1661
  %v2926 = vpop.f32.mrf.mxu0
  %v2927 = vadd.f32 0.0, %v2926
  %v2928 = vpop.f32.mrf.mxu0
  %v2929 = vpop.f32.mrf.mxu0
  %v2930 = vadd.f32 0.0, %v2929
  %v2931 = vpop.f32.mrf.mxu0
  %2932 = vmatprep.mubr.bf16.mxu0 0
  %2933 = vmatmul.mubr.bf16.gmra.mxu0 %v1664
  %v2934 = vpop.f32.mrf.mxu0
  %v2935 = vadd.f32 0.0, %v2934
  %v2936 = vpop.f32.mrf.mxu0
  %v2937 = vpop.f32.mrf.mxu0
  %v2938 = vadd.f32 0.0, %v2937
  %v2939 = vpop.f32.mrf.mxu0
  %2940 = vmatprep.mubr.bf16.mxu0 0
  %2941 = vmatmul.mubr.bf16.gmra.mxu0 %v1667
  %v2942 = vpop.f32.mrf.mxu0
  %v2943 = vadd.f32 0.0, %v2942
  %v2944 = vpop.f32.mrf.mxu0
  %v2945 = vpop.f32.mrf.mxu0
  %v2946 = vadd.f32 0.0, %v2945
  %v2947 = vpop.f32.mrf.mxu0
  %2948 = vmatprep.mubr.bf16.mxu0 0
  %2949 = vmatmul.mubr.bf16.gmra.mxu0 %v1670
  %v2950 = vpop.f32.mrf.mxu0
  %v2951 = vadd.f32 0.0, %v2950
  %v2952 = vpop.f32.mrf.mxu0
  %v2953 = vpop.f32.mrf.mxu0
  %v2954 = vadd.f32 0.0, %v2953
  %v2955 = vpop.f32.mrf.mxu0
  %2956 = vmatprep.mubr.bf16.mxu0 0
  %2957 = vmatmul.mubr.bf16.gmra.mxu0 %v1673
  %v2958 = vpop.f32.mrf.mxu0
  %v2959 = vadd.f32 0.0, %v2958
  %v2960 = vpop.f32.mrf.mxu0
  %v2961 = vpop.f32.mrf.mxu0
  %v2962 = vadd.f32 0.0, %v2961
  %v2963 = vpop.f32.mrf.mxu0
  %2964 = vmatprep.mubr.bf16.mxu0 0
  %2965 = vmatmul.mubr.bf16.gmra.mxu0 %v1676
  %v2966 = vpop.f32.mrf.mxu0
  %v2967 = vadd.f32 0.0, %v2966
  %v2968 = vpop.f32.mrf.mxu0
  %v2969 = vpop.f32.mrf.mxu0
  %v2970 = vadd.f32 0.0, %v2969
  %v2971 = vpop.f32.mrf.mxu0
  %2972 = vmatprep.mubr.bf16.mxu0 0
  %2973 = vmatmul.mubr.bf16.gmra.mxu0 %v1679
  %v2974 = vpop.f32.mrf.mxu0
  %v2975 = vadd.f32 0.0, %v2974
  %v2976 = vpop.f32.mrf.mxu0
  %v2977 = vpop.f32.mrf.mxu0
  %v2978 = vadd.f32 0.0, %v2977
  %v2979 = vpop.f32.mrf.mxu0
  %2980 = vmatprep.mubr.bf16.mxu0 0
  %2981 = vmatmul.mubr.bf16.gmra.mxu0 %v1682
  %v2982 = vpop.f32.mrf.mxu0
  %v2983 = vadd.f32 0.0, %v2982
  %v2984 = vpop.f32.mrf.mxu0
  %v2985 = vpop.f32.mrf.mxu0
  %v2986 = vadd.f32 0.0, %v2985
  %v2987 = vpop.f32.mrf.mxu0
  %2988 = vmatprep.mubr.bf16.mxu0 0
  %2989 = vmatmul.mubr.bf16.gmra.mxu0 %v1685
  %v2990 = vpop.f32.mrf.mxu0
  %v2991 = vadd.f32 0.0, %v2990
  %v2992 = vpop.f32.mrf.mxu0
  %v2993 = vpop.f32.mrf.mxu0
  %v2994 = vadd.f32 0.0, %v2993
  %v2995 = vpop.f32.mrf.mxu0
  %2996 = vmatprep.mubr.bf16.mxu0 0
  %2997 = vmatmul.mubr.bf16.gmra.mxu0 %v1688
  %v2998 = vpop.f32.mrf.mxu0
  %v2999 = vadd.f32 0.0, %v2998
  %v3000 = vpop.f32.mrf.mxu0
  %v3001 = vpop.f32.mrf.mxu0
  %v3002 = vadd.f32 0.0, %v3001
  %v3003 = vpop.f32.mrf.mxu0
  %3004 = vmatprep.mubr.bf16.mxu0 0
  %3005 = vmatmul.mubr.bf16.gmra.mxu0 %v1691
  %v3006 = vpop.f32.mrf.mxu0
  %v3007 = vadd.f32 0.0, %v3006
  %v3008 = vpop.f32.mrf.mxu0
  %v3009 = vpop.f32.mrf.mxu0
  %v3010 = vadd.f32 0.0, %v3009
  %v3011 = vpop.f32.mrf.mxu0
  %3012 = vmatprep.mubr.bf16.mxu0 0
  %3013 = vmatmul.mubr.bf16.gmra.mxu0 %v1694
  %v3014 = vpop.f32.mrf.mxu0
  %v3015 = vadd.f32 0.0, %v3014
  %v3016 = vpop.f32.mrf.mxu0
  %v3017 = vpop.f32.mrf.mxu0
  %v3018 = vadd.f32 0.0, %v3017
  %v3019 = vpop.f32.mrf.mxu0
  %3020 = vmatprep.mubr.bf16.mxu0 0
  %3021 = vmatmul.mubr.bf16.gmra.mxu0 %v1697
  %v3022 = vpop.f32.mrf.mxu0
  %v3023 = vadd.f32 0.0, %v3022
  %v3024 = vpop.f32.mrf.mxu0
  %v3025 = vpop.f32.mrf.mxu0
  %v3026 = vadd.f32 0.0, %v3025
  %v3027 = vpop.f32.mrf.mxu0
  %3028 = vmatprep.mubr.bf16.mxu0 0
  %3029 = vmatmul.mubr.bf16.gmra.mxu0 %v1700
  %v3030 = vpop.f32.mrf.mxu0
  %v3031 = vadd.f32 0.0, %v3030
  %v3032 = vpop.f32.mrf.mxu0
  %v3033 = vpop.f32.mrf.mxu0
  %v3034 = vadd.f32 0.0, %v3033
  %v3035 = vpop.f32.mrf.mxu0
  %3036 = vmatprep.mubr.bf16.mxu0 0
  %3037 = vmatmul.mubr.bf16.gmra.mxu0 %v1703
  %v3038 = vpop.f32.mrf.mxu0
  %v3039 = vadd.f32 0.0, %v3038
  %v3040 = vpop.f32.mrf.mxu0
  %v3041 = vpop.f32.mrf.mxu0
  %v3042 = vadd.f32 0.0, %v3041
  %v3043 = vpop.f32.mrf.mxu0
  %3044 = vmatprep.mubr.bf16.mxu0 0
  %3045 = vmatmul.mubr.bf16.gmra.mxu0 %v1706
  %v3046 = vpop.f32.mrf.mxu0
  %v3047 = vadd.f32 0.0, %v3046
  %v3048 = vpop.f32.mrf.mxu0
  %v3049 = vpop.f32.mrf.mxu0
  %v3050 = vadd.f32 0.0, %v3049
  %v3051 = vpop.f32.mrf.mxu0
  %3052 = vmatprep.mubr.bf16.mxu0 0
  %3053 = vmatmul.mubr.bf16.gmra.mxu0 %v1709
  %v3054 = vpop.f32.mrf.mxu0
  %v3055 = vadd.f32 0.0, %v3054
  %v3056 = vpop.f32.mrf.mxu0
  %v3057 = vpop.f32.mrf.mxu0
  %v3058 = vadd.f32 0.0, %v3057
  %v3059 = vpop.f32.mrf.mxu0
  %3060 = vmatprep.mubr.bf16.mxu0 0
  %3061 = vmatmul.mubr.bf16.gmra.mxu0 %v1712
  %v3062 = vpop.f32.mrf.mxu0
  %v3063 = vadd.f32 0.0, %v3062
  %v3064 = vpop.f32.mrf.mxu0
  %v3065 = vpop.f32.mrf.mxu0
  %v3066 = vadd.f32 0.0, %v3065
  %v3067 = vpop.f32.mrf.mxu0
  %3068 = vmatprep.mubr.bf16.mxu0 0
  %3069 = vmatmul.mubr.bf16.gmra.mxu0 %v1715
  %v3070 = vpop.f32.mrf.mxu0
  %v3071 = vadd.f32 0.0, %v3070
  %v3072 = vpop.f32.mrf.mxu0
  %v3073 = vpop.f32.mrf.mxu0
  %v3074 = vadd.f32 0.0, %v3073
  %v3075 = vpop.f32.mrf.mxu0
  %3076 = vmatprep.mubr.bf16.mxu0 0
  %3077 = vmatmul.mubr.bf16.gmra.mxu0 %v1718
  %v3078 = vpop.f32.mrf.mxu0
  %v3079 = vadd.f32 0.0, %v3078
  %v3080 = vpop.f32.mrf.mxu0
  %v3081 = vpop.f32.mrf.mxu0
  %v3082 = vadd.f32 0.0, %v3081
  %v3083 = vpop.f32.mrf.mxu0
  %3084 = vmatprep.mubr.bf16.mxu0 0
  %3085 = vmatmul.mubr.bf16.gmra.mxu0 %v1721
  %v3086 = vpop.f32.mrf.mxu0
  %v3087 = vadd.f32 0.0, %v3086
  %v3088 = vpop.f32.mrf.mxu0
  %v3089 = vpop.f32.mrf.mxu0
  %v3090 = vadd.f32 0.0, %v3089
  %v3091 = vpop.f32.mrf.mxu0
  %3092 = vmatprep.mubr.bf16.mxu0 0
  %3093 = vmatmul.mubr.bf16.gmra.mxu0 %v1724
  %v3094 = vpop.f32.mrf.mxu0
  %v3095 = vadd.f32 0.0, %v3094
  %v3096 = vpop.f32.mrf.mxu0
  %v3097 = vpop.f32.mrf.mxu0
  %v3098 = vadd.f32 0.0, %v3097
  %v3099 = vpop.f32.mrf.mxu0
  %3100 = vmatprep.mubr.bf16.mxu0 0
  %3101 = vmatmul.mubr.bf16.gmra.mxu0 %v1727
  %v3102 = vpop.f32.mrf.mxu0
  %v3103 = vadd.f32 0.0, %v3102
  %v3104 = vpop.f32.mrf.mxu0
  %v3105 = vpop.f32.mrf.mxu0
  %v3106 = vadd.f32 0.0, %v3105
  %v3107 = vpop.f32.mrf.mxu0
  %3108 = vmatprep.mubr.bf16.mxu0 0
  %3109 = vmatmul.mubr.bf16.gmra.mxu0 %v1730
  %v3110 = vpop.f32.mrf.mxu0
  %v3111 = vadd.f32 0.0, %v3110
  %v3112 = vpop.f32.mrf.mxu0
  %v3113 = vpop.f32.mrf.mxu0
  %v3114 = vadd.f32 0.0, %v3113
  %v3115 = vpop.f32.mrf.mxu0
  %3116 = vdwg.mxu0
  %3455 = vrot.lane.b32.xlu0 %v1767, 96
  %v3456 = vpop.permute.xlu0 %3455
  %3457 = vrot.lane.b32.xlu0 %v1770, 96
  %v3458 = vpop.permute.xlu0 %3457
  %3459 = vrot.lane.b32.xlu0 %v1775, 96
  %v3460 = vpop.permute.xlu0 %3459
  %3461 = vrot.lane.b32.xlu0 %v1778, 96
  %v3462 = vpop.permute.xlu0 %3461
  %3463 = vrot.lane.b32.xlu0 %v1783, 96
  %v3464 = vpop.permute.xlu0 %3463
  %3465 = vrot.lane.b32.xlu0 %v1786, 96
  %v3466 = vpop.permute.xlu0 %3465
  %3467 = vrot.lane.b32.xlu0 %v1791, 96
  %v3468 = vpop.permute.xlu0 %3467
  %3469 = vrot.lane.b32.xlu0 %v1794, 96
  %v3470 = vpop.permute.xlu0 %3469
  %3471 = vrot.lane.b32.xlu0 %v1799, 96
  %v3472 = vpop.permute.xlu0 %3471
  %3473 = vrot.lane.b32.xlu0 %v1802, 96
  %v3474 = vpop.permute.xlu0 %3473
  %3475 = vrot.lane.b32.xlu0 %v1807, 96
  %v3476 = vpop.permute.xlu0 %3475
  %3477 = vrot.lane.b32.xlu0 %v1810, 96
  %v3478 = vpop.permute.xlu0 %3477
  %3479 = vrot.lane.b32.xlu0 %v1815, 96
  %v3480 = vpop.permute.xlu0 %3479
  %3481 = vrot.lane.b32.xlu0 %v1818, 96
  %v3482 = vpop.permute.xlu0 %3481
  %3483 = vrot.lane.b32.xlu0 %v1823, 96
  %v3484 = vpop.permute.xlu0 %3483
  %3485 = vrot.lane.b32.xlu0 %v1826, 96
  %v3486 = vpop.permute.xlu0 %3485
  %3487 = vrot.lane.b32.xlu0 %v1831, 96
  %v3488 = vpop.permute.xlu0 %3487
  %3489 = vrot.lane.b32.xlu0 %v1834, 96
  %v3490 = vpop.permute.xlu0 %3489
  %3491 = vrot.lane.b32.xlu0 %v1839, 96
  %v3492 = vpop.permute.xlu0 %3491
  %3493 = vrot.lane.b32.xlu0 %v1842, 96
  %v3494 = vpop.permute.xlu0 %3493
  %3495 = vrot.lane.b32.xlu0 %v1847, 96
  %v3496 = vpop.permute.xlu0 %3495
  %3497 = vrot.lane.b32.xlu0 %v1850, 96
  %v3498 = vpop.permute.xlu0 %3497
  %3499 = vrot.lane.b32.xlu0 %v1855, 96
  %v3500 = vpop.permute.xlu0 %3499
  %3501 = vrot.lane.b32.xlu0 %v1858, 96
  %v3502 = vpop.permute.xlu0 %3501
  %3503 = vrot.lane.b32.xlu0 %v1863, 96
  %v3504 = vpop.permute.xlu0 %3503
  %3505 = vrot.lane.b32.xlu0 %v1866, 96
  %v3506 = vpop.permute.xlu0 %3505
  %3507 = vrot.lane.b32.xlu0 %v1871, 96
  %v3508 = vpop.permute.xlu0 %3507
  %3509 = vrot.lane.b32.xlu0 %v1874, 96
  %v3510 = vpop.permute.xlu0 %3509
  %3511 = vrot.lane.b32.xlu0 %v1879, 96
  %v3512 = vpop.permute.xlu0 %3511
  %3513 = vrot.lane.b32.xlu0 %v1882, 96
  %v3514 = vpop.permute.xlu0 %3513
  %3515 = vrot.lane.b32.xlu0 %v1887, 96
  %v3516 = vpop.permute.xlu0 %3515
  %3517 = vrot.lane.b32.xlu0 %v1890, 96
  %v3518 = vpop.permute.xlu0 %3517
  %3519 = vrot.lane.b32.xlu0 %v1895, 96
  %v3520 = vpop.permute.xlu0 %3519
  %3521 = vrot.lane.b32.xlu0 %v1898, 96
  %v3522 = vpop.permute.xlu0 %3521
  %3523 = vrot.lane.b32.xlu0 %v1903, 96
  %v3524 = vpop.permute.xlu0 %3523
  %3525 = vrot.lane.b32.xlu0 %v1906, 96
  %v3526 = vpop.permute.xlu0 %3525
  %3527 = vrot.lane.b32.xlu0 %v1911, 96
  %v3528 = vpop.permute.xlu0 %3527
  %3529 = vrot.lane.b32.xlu0 %v1914, 96
  %v3530 = vpop.permute.xlu0 %3529
  %3531 = vrot.lane.b32.xlu0 %v1919, 96
  %v3532 = vpop.permute.xlu0 %3531
  %3533 = vrot.lane.b32.xlu0 %v1922, 96
  %v3534 = vpop.permute.xlu0 %3533
  %3535 = vrot.lane.b32.xlu0 %v1927, 96
  %v3536 = vpop.permute.xlu0 %3535
  %3537 = vrot.lane.b32.xlu0 %v1930, 96
  %v3538 = vpop.permute.xlu0 %3537
  %3539 = vrot.lane.b32.xlu0 %v1935, 96
  %v3540 = vpop.permute.xlu0 %3539
  %3541 = vrot.lane.b32.xlu0 %v1938, 96
  %v3542 = vpop.permute.xlu0 %3541
  %3543 = vrot.lane.b32.xlu0 %v1943, 96
  %v3544 = vpop.permute.xlu0 %3543
  %3545 = vrot.lane.b32.xlu0 %v1946, 96
  %v3546 = vpop.permute.xlu0 %3545
  %3547 = vrot.lane.b32.xlu0 %v1951, 96
  %v3548 = vpop.permute.xlu0 %3547
  %3549 = vrot.lane.b32.xlu0 %v1954, 96
  %v3550 = vpop.permute.xlu0 %3549
  %3551 = vrot.lane.b32.xlu0 %v1959, 96
  %v3552 = vpop.permute.xlu0 %3551
  %3553 = vrot.lane.b32.xlu0 %v1962, 96
  %v3554 = vpop.permute.xlu0 %3553
  %3555 = vrot.lane.b32.xlu0 %v1967, 96
  %v3556 = vpop.permute.xlu0 %3555
  %3557 = vrot.lane.b32.xlu0 %v1970, 96
  %v3558 = vpop.permute.xlu0 %3557
  %3559 = vrot.lane.b32.xlu0 %v1975, 96
  %v3560 = vpop.permute.xlu0 %3559
  %3561 = vrot.lane.b32.xlu0 %v1978, 96
  %v3562 = vpop.permute.xlu0 %3561
  %3563 = vrot.lane.b32.xlu0 %v1983, 96
  %v3564 = vpop.permute.xlu0 %3563
  %3565 = vrot.lane.b32.xlu0 %v1986, 96
  %v3566 = vpop.permute.xlu0 %3565
  %3567 = vrot.lane.b32.xlu0 %v1991, 96
  %v3568 = vpop.permute.xlu0 %3567
  %3569 = vrot.lane.b32.xlu0 %v1994, 96
  %v3570 = vpop.permute.xlu0 %3569
  %3571 = vrot.lane.b32.xlu0 %v1999, 96
  %v3572 = vpop.permute.xlu0 %3571
  %3573 = vrot.lane.b32.xlu0 %v2002, 96
  %v3574 = vpop.permute.xlu0 %3573
  %3575 = vrot.lane.b32.xlu0 %v2007, 96
  %v3576 = vpop.permute.xlu0 %3575
  %3577 = vrot.lane.b32.xlu0 %v2010, 96
  %v3578 = vpop.permute.xlu0 %3577
  %3579 = vrot.lane.b32.xlu0 %v2015, 96
  %v3580 = vpop.permute.xlu0 %3579
  %3581 = vrot.lane.b32.xlu0 %v2018, 96
  %v3582 = vpop.permute.xlu0 %3581
  %3583 = vrot.lane.b32.xlu0 %v2023, 96
  %v3584 = vpop.permute.xlu0 %3583
  %3585 = vrot.lane.b32.xlu0 %v2026, 96
  %v3586 = vpop.permute.xlu0 %3585
  %3587 = vrot.lane.b32.xlu0 %v2031, 96
  %v3588 = vpop.permute.xlu0 %3587
  %3589 = vrot.lane.b32.xlu0 %v2034, 96
  %v3590 = vpop.permute.xlu0 %3589
  %3591 = vrot.lane.b32.xlu0 %v2039, 96
  %v3592 = vpop.permute.xlu0 %3591
  %3593 = vrot.lane.b32.xlu0 %v2042, 96
  %v3594 = vpop.permute.xlu0 %3593
  %3595 = vrot.lane.b32.xlu0 %v2047, 96
  %v3596 = vpop.permute.xlu0 %3595
  %3597 = vrot.lane.b32.xlu0 %v2050, 96
  %v3598 = vpop.permute.xlu0 %3597
  %3599 = vrot.lane.b32.xlu0 %v2055, 96
  %v3600 = vpop.permute.xlu0 %3599
  %3601 = vrot.lane.b32.xlu0 %v2058, 96
  %v3602 = vpop.permute.xlu0 %3601
  %3603 = vrot.lane.b32.xlu0 %v2063, 96
  %v3604 = vpop.permute.xlu0 %3603
  %3605 = vrot.lane.b32.xlu0 %v2066, 96
  %v3606 = vpop.permute.xlu0 %3605
  %3607 = vrot.lane.b32.xlu0 %v2071, 96
  %v3608 = vpop.permute.xlu0 %3607
  %3609 = vrot.lane.b32.xlu0 %v2074, 96
  %v3610 = vpop.permute.xlu0 %3609
  %3611 = vrot.lane.b32.xlu0 %v2079, 96
  %v3612 = vpop.permute.xlu0 %3611
  %3613 = vrot.lane.b32.xlu0 %v2082, 96
  %v3614 = vpop.permute.xlu0 %3613
  %3615 = vrot.lane.b32.xlu0 %v2087, 96
  %v3616 = vpop.permute.xlu0 %3615
  %3617 = vrot.lane.b32.xlu0 %v2090, 96
  %v3618 = vpop.permute.xlu0 %3617
  %3619 = vrot.lane.b32.xlu0 %v2095, 96
  %v3620 = vpop.permute.xlu0 %3619
  %3621 = vrot.lane.b32.xlu0 %v2098, 96
  %v3622 = vpop.permute.xlu0 %3621
  %3623 = vrot.lane.b32.xlu0 %v2103, 96
  %v3624 = vpop.permute.xlu0 %3623
  %3625 = vrot.lane.b32.xlu0 %v2106, 96
  %v3626 = vpop.permute.xlu0 %3625
  %3627 = vrot.lane.b32.xlu0 %v2111, 96
  %v3628 = vpop.permute.xlu0 %3627
  %3629 = vrot.lane.b32.xlu0 %v2114, 96
  %v3630 = vpop.permute.xlu0 %3629
  %3631 = vrot.lane.b32.xlu0 %v2119, 96
  %v3632 = vpop.permute.xlu0 %3631
  %3633 = vrot.lane.b32.xlu0 %v2122, 96
  %v3634 = vpop.permute.xlu0 %3633
  %3635 = vrot.lane.b32.xlu0 %v2127, 96
  %v3636 = vpop.permute.xlu0 %3635
  %3637 = vrot.lane.b32.xlu0 %v2130, 96
  %v3638 = vpop.permute.xlu0 %3637
  %3639 = vrot.lane.b32.xlu0 %v2135, 96
  %v3640 = vpop.permute.xlu0 %3639
  %3641 = vrot.lane.b32.xlu0 %v2138, 96
  %v3642 = vpop.permute.xlu0 %3641
  %3643 = vrot.lane.b32.xlu0 %v2143, 96
  %v3644 = vpop.permute.xlu0 %3643
  %3645 = vrot.lane.b32.xlu0 %v2146, 96
  %v3646 = vpop.permute.xlu0 %3645
  %3647 = vrot.lane.b32.xlu0 %v2151, 96
  %v3648 = vpop.permute.xlu0 %3647
  %3649 = vrot.lane.b32.xlu0 %v2154, 96
  %v3650 = vpop.permute.xlu0 %3649
  %3651 = vrot.lane.b32.xlu0 %v2159, 96
  %v3652 = vpop.permute.xlu0 %3651
  %3653 = vrot.lane.b32.xlu0 %v2162, 96
  %v3654 = vpop.permute.xlu0 %3653
  %3655 = vrot.lane.b32.xlu0 %v2167, 96
  %v3656 = vpop.permute.xlu0 %3655
  %3657 = vrot.lane.b32.xlu0 %v2170, 96
  %v3658 = vpop.permute.xlu0 %3657
  %3659 = vrot.lane.b32.xlu0 %v2175, 96
  %v3660 = vpop.permute.xlu0 %3659
  %3661 = vrot.lane.b32.xlu0 %v2178, 96
  %v3662 = vpop.permute.xlu0 %3661
  %3663 = vrot.lane.b32.xlu0 %v2183, 96
  %v3664 = vpop.permute.xlu0 %3663
  %3665 = vrot.lane.b32.xlu0 %v2186, 96
  %v3666 = vpop.permute.xlu0 %3665
  %3667 = vrot.lane.b32.xlu0 %v2191, 96
  %v3668 = vpop.permute.xlu0 %3667
  %3669 = vrot.lane.b32.xlu0 %v2194, 96
  %v3670 = vpop.permute.xlu0 %3669
  %3671 = vrot.lane.b32.xlu0 %v2199, 96
  %v3672 = vpop.permute.xlu0 %3671
  %3673 = vrot.lane.b32.xlu0 %v2202, 96
  %v3674 = vpop.permute.xlu0 %3673
  %3675 = vrot.lane.b32.xlu0 %v2207, 96
  %v3676 = vpop.permute.xlu0 %3675
  %3677 = vrot.lane.b32.xlu0 %v2210, 96
  %v3678 = vpop.permute.xlu0 %3677
  %3679 = vrot.lane.b32.xlu0 %v2215, 96
  %v3680 = vpop.permute.xlu0 %3679
  %3681 = vrot.lane.b32.xlu0 %v2218, 96
  %v3682 = vpop.permute.xlu0 %3681
  %3683 = vrot.lane.b32.xlu0 %v2223, 96
  %v3684 = vpop.permute.xlu0 %3683
  %3685 = vrot.lane.b32.xlu0 %v2226, 96
  %v3686 = vpop.permute.xlu0 %3685
  %3687 = vrot.lane.b32.xlu0 %v2231, 96
  %v3688 = vpop.permute.xlu0 %3687
  %3689 = vrot.lane.b32.xlu0 %v2234, 96
  %v3690 = vpop.permute.xlu0 %3689
  %3691 = vrot.lane.b32.xlu0 %v2239, 96
  %v3692 = vpop.permute.xlu0 %3691
  %3693 = vrot.lane.b32.xlu0 %v2242, 96
  %v3694 = vpop.permute.xlu0 %3693
  %3695 = vrot.lane.b32.xlu0 %v2247, 96
  %v3696 = vpop.permute.xlu0 %3695
  %3697 = vrot.lane.b32.xlu0 %v2250, 96
  %v3698 = vpop.permute.xlu0 %3697
  %3699 = vrot.lane.b32.xlu0 %v2255, 96
  %v3700 = vpop.permute.xlu0 %3699
  %3701 = vrot.lane.b32.xlu0 %v2258, 96
  %v3702 = vpop.permute.xlu0 %3701
  %3703 = vrot.lane.b32.xlu0 %v2263, 96
  %v3704 = vpop.permute.xlu0 %3703
  %3705 = vrot.lane.b32.xlu0 %v2266, 96
  %v3706 = vpop.permute.xlu0 %3705
  %3707 = vrot.lane.b32.xlu0 %v2271, 96
  %v3708 = vpop.permute.xlu0 %3707
  %3709 = vrot.lane.b32.xlu0 %v2274, 96
  %v3710 = vpop.permute.xlu0 %3709
  %3711 = vrot.lane.b32.xlu0 %v2279, 96
  %v3712 = vpop.permute.xlu0 %3711
  %3713 = vrot.lane.b32.xlu0 %v2282, 96
  %v3714 = vpop.permute.xlu0 %3713
  %3715 = vrot.lane.b32.xlu0 %v2287, 96
  %v3716 = vpop.permute.xlu0 %3715
  %3717 = vrot.lane.b32.xlu0 %v2290, 96
  %v3718 = vpop.permute.xlu0 %3717
  %3719 = vrot.lane.b32.xlu0 %v2295, 96
  %v3720 = vpop.permute.xlu0 %3719
  %3721 = vrot.lane.b32.xlu0 %v2298, 96
  %v3722 = vpop.permute.xlu0 %3721
  %3723 = vrot.lane.b32.xlu0 %v2303, 96
  %v3724 = vpop.permute.xlu0 %3723
  %3725 = vrot.lane.b32.xlu0 %v2306, 96
  %v3726 = vpop.permute.xlu0 %3725
  %3727 = vrot.lane.b32.xlu0 %v2311, 96
  %v3728 = vpop.permute.xlu0 %3727
  %3729 = vrot.lane.b32.xlu0 %v2314, 96
  %v3730 = vpop.permute.xlu0 %3729
  %3731 = vrot.lane.b32.xlu0 %v2319, 96
  %v3732 = vpop.permute.xlu0 %3731
  %3733 = vrot.lane.b32.xlu0 %v2322, 96
  %v3734 = vpop.permute.xlu0 %3733
  %3735 = vrot.lane.b32.xlu0 %v2327, 96
  %v3736 = vpop.permute.xlu0 %3735
  %3737 = vrot.lane.b32.xlu0 %v2330, 96
  %v3738 = vpop.permute.xlu0 %3737
  %3739 = vrot.lane.b32.xlu0 %v2335, 96
  %v3740 = vpop.permute.xlu0 %3739
  %3741 = vrot.lane.b32.xlu0 %v2338, 96
  %v3742 = vpop.permute.xlu0 %3741
  %3743 = vrot.lane.b32.xlu0 %v2343, 96
  %v3744 = vpop.permute.xlu0 %3743
  %3745 = vrot.lane.b32.xlu0 %v2346, 96
  %v3746 = vpop.permute.xlu0 %3745
  %3747 = vrot.lane.b32.xlu0 %v2351, 96
  %v3748 = vpop.permute.xlu0 %3747
  %3749 = vrot.lane.b32.xlu0 %v2354, 96
  %v3750 = vpop.permute.xlu0 %3749
  %3751 = vrot.lane.b32.xlu0 %v2359, 96
  %v3752 = vpop.permute.xlu0 %3751
  %3753 = vrot.lane.b32.xlu0 %v2362, 96
  %v3754 = vpop.permute.xlu0 %3753
  %3755 = vrot.lane.b32.xlu0 %v2367, 96
  %v3756 = vpop.permute.xlu0 %3755
  %3757 = vrot.lane.b32.xlu0 %v2370, 96
  %v3758 = vpop.permute.xlu0 %3757
  %3759 = vrot.lane.b32.xlu0 %v2375, 96
  %v3760 = vpop.permute.xlu0 %3759
  %3761 = vrot.lane.b32.xlu0 %v2378, 96
  %v3762 = vpop.permute.xlu0 %3761
  %3763 = vrot.lane.b32.xlu0 %v2383, 96
  %v3764 = vpop.permute.xlu0 %3763
  %3765 = vrot.lane.b32.xlu0 %v2386, 96
  %v3766 = vpop.permute.xlu0 %3765
  %3767 = vrot.lane.b32.xlu0 %v2391, 96
  %v3768 = vpop.permute.xlu0 %3767
  %3769 = vrot.lane.b32.xlu0 %v2394, 96
  %v3770 = vpop.permute.xlu0 %3769
  %3771 = vrot.lane.b32.xlu0 %v2399, 96
  %v3772 = vpop.permute.xlu0 %3771
  %3773 = vrot.lane.b32.xlu0 %v2402, 96
  %v3774 = vpop.permute.xlu0 %3773
  %3775 = vrot.lane.b32.xlu0 %v2407, 96
  %v3776 = vpop.permute.xlu0 %3775
  %3777 = vrot.lane.b32.xlu0 %v2410, 96
  %v3778 = vpop.permute.xlu0 %3777
  %3779 = vrot.lane.b32.xlu0 %v2415, 96
  %v3780 = vpop.permute.xlu0 %3779
  %3781 = vrot.lane.b32.xlu0 %v2418, 96
  %v3782 = vpop.permute.xlu0 %3781
  %3783 = vrot.lane.b32.xlu0 %v2423, 96
  %v3784 = vpop.permute.xlu0 %3783
  %3785 = vrot.lane.b32.xlu0 %v2426, 96
  %v3786 = vpop.permute.xlu0 %3785
  %3787 = vrot.lane.b32.xlu0 %v2431, 96
  %v3788 = vpop.permute.xlu0 %3787
  %3789 = vrot.lane.b32.xlu0 %v2434, 96
  %v3790 = vpop.permute.xlu0 %3789
  %3791 = vrot.lane.b32.xlu0 %v2439, 96
  %v3792 = vpop.permute.xlu0 %3791
  %3793 = vrot.lane.b32.xlu0 %v2442, 96
  %v3794 = vpop.permute.xlu0 %3793
  %3795 = vrot.lane.b32.xlu0 %v2447, 96
  %v3796 = vpop.permute.xlu0 %3795
  %3797 = vrot.lane.b32.xlu0 %v2450, 96
  %v3798 = vpop.permute.xlu0 %3797
  %3799 = vrot.lane.b32.xlu0 %v2455, 96
  %v3800 = vpop.permute.xlu0 %3799
  %3801 = vrot.lane.b32.xlu0 %v2458, 96
  %v3802 = vpop.permute.xlu0 %3801
  %3803 = vrot.lane.b32.xlu0 %v2463, 96
  %v3804 = vpop.permute.xlu0 %3803
  %3805 = vrot.lane.b32.xlu0 %v2466, 96
  %v3806 = vpop.permute.xlu0 %3805
  %3807 = vrot.lane.b32.xlu0 %v2471, 96
  %v3808 = vpop.permute.xlu0 %3807
  %3809 = vrot.lane.b32.xlu0 %v2474, 96
  %v3810 = vpop.permute.xlu0 %3809
  %3811 = vrot.lane.b32.xlu0 %v2479, 96
  %v3812 = vpop.permute.xlu0 %3811
  %3813 = vrot.lane.b32.xlu0 %v2482, 96
  %v3814 = vpop.permute.xlu0 %3813
  %3815 = vrot.lane.b32.xlu0 %v2487, 96
  %v3816 = vpop.permute.xlu0 %3815
  %3817 = vrot.lane.b32.xlu0 %v2490, 96
  %v3818 = vpop.permute.xlu0 %3817
  %3819 = vrot.lane.b32.xlu0 %v2495, 96
  %v3820 = vpop.permute.xlu0 %3819
  %3821 = vrot.lane.b32.xlu0 %v2498, 96
  %v3822 = vpop.permute.xlu0 %3821
  %3823 = vrot.lane.b32.xlu0 %v2503, 96
  %v3824 = vpop.permute.xlu0 %3823
  %3825 = vrot.lane.b32.xlu0 %v2506, 96
  %v3826 = vpop.permute.xlu0 %3825
  %3827 = vrot.lane.b32.xlu0 %v2511, 96
  %v3828 = vpop.permute.xlu0 %3827
  %3829 = vrot.lane.b32.xlu0 %v2514, 96
  %v3830 = vpop.permute.xlu0 %3829
  %3831 = vrot.lane.b32.xlu0 %v2519, 96
  %v3832 = vpop.permute.xlu0 %3831
  %3833 = vrot.lane.b32.xlu0 %v2522, 96
  %v3834 = vpop.permute.xlu0 %3833
  %3835 = vrot.lane.b32.xlu0 %v2527, 96
  %v3836 = vpop.permute.xlu0 %3835
  %3837 = vrot.lane.b32.xlu0 %v2530, 96
  %v3838 = vpop.permute.xlu0 %3837
  %3839 = vrot.lane.b32.xlu0 %v2535, 96
  %v3840 = vpop.permute.xlu0 %3839
  %3841 = vrot.lane.b32.xlu0 %v2538, 96
  %v3842 = vpop.permute.xlu0 %3841
  %3843 = vrot.lane.b32.xlu0 %v2543, 96
  %v3844 = vpop.permute.xlu0 %3843
  %3845 = vrot.lane.b32.xlu0 %v2546, 96
  %v3846 = vpop.permute.xlu0 %3845
  %3847 = vrot.lane.b32.xlu0 %v2551, 96
  %v3848 = vpop.permute.xlu0 %3847
  %3849 = vrot.lane.b32.xlu0 %v2554, 96
  %v3850 = vpop.permute.xlu0 %3849
  %3851 = vrot.lane.b32.xlu0 %v2559, 96
  %v3852 = vpop.permute.xlu0 %3851
  %3853 = vrot.lane.b32.xlu0 %v2562, 96
  %v3854 = vpop.permute.xlu0 %3853
  %3855 = vrot.lane.b32.xlu0 %v2567, 96
  %v3856 = vpop.permute.xlu0 %3855
  %3857 = vrot.lane.b32.xlu0 %v2570, 96
  %v3858 = vpop.permute.xlu0 %3857
  %3859 = vrot.lane.b32.xlu0 %v2575, 96
  %v3860 = vpop.permute.xlu0 %3859
  %3861 = vrot.lane.b32.xlu0 %v2578, 96
  %v3862 = vpop.permute.xlu0 %3861
  %3863 = vrot.lane.b32.xlu0 %v2583, 96
  %v3864 = vpop.permute.xlu0 %3863
  %3865 = vrot.lane.b32.xlu0 %v2586, 96
  %v3866 = vpop.permute.xlu0 %3865
  %3867 = vrot.lane.b32.xlu0 %v2591, 96
  %v3868 = vpop.permute.xlu0 %3867
  %3869 = vrot.lane.b32.xlu0 %v2594, 96
  %v3870 = vpop.permute.xlu0 %3869
  %3871 = vrot.lane.b32.xlu0 %v2599, 96
  %v3872 = vpop.permute.xlu0 %3871
  %3873 = vrot.lane.b32.xlu0 %v2602, 96
  %v3874 = vpop.permute.xlu0 %3873
  %3875 = vrot.lane.b32.xlu0 %v2607, 96
  %v3876 = vpop.permute.xlu0 %3875
  %3877 = vrot.lane.b32.xlu0 %v2610, 96
  %v3878 = vpop.permute.xlu0 %3877
  %3879 = vrot.lane.b32.xlu0 %v2615, 96
  %v3880 = vpop.permute.xlu0 %3879
  %3881 = vrot.lane.b32.xlu0 %v2618, 96
  %v3882 = vpop.permute.xlu0 %3881
  %3883 = vrot.lane.b32.xlu0 %v2623, 96
  %v3884 = vpop.permute.xlu0 %3883
  %3885 = vrot.lane.b32.xlu0 %v2626, 96
  %v3886 = vpop.permute.xlu0 %3885
  %3887 = vrot.lane.b32.xlu0 %v2631, 96
  %v3888 = vpop.permute.xlu0 %3887
  %3889 = vrot.lane.b32.xlu0 %v2634, 96
  %v3890 = vpop.permute.xlu0 %3889
  %3891 = vrot.lane.b32.xlu0 %v2639, 96
  %v3892 = vpop.permute.xlu0 %3891
  %3893 = vrot.lane.b32.xlu0 %v2642, 96
  %v3894 = vpop.permute.xlu0 %3893
  %3895 = vrot.lane.b32.xlu0 %v2647, 96
  %v3896 = vpop.permute.xlu0 %3895
  %3897 = vrot.lane.b32.xlu0 %v2650, 96
  %v3898 = vpop.permute.xlu0 %3897
  %3899 = vrot.lane.b32.xlu0 %v2655, 96
  %v3900 = vpop.permute.xlu0 %3899
  %3901 = vrot.lane.b32.xlu0 %v2658, 96
  %v3902 = vpop.permute.xlu0 %3901
  %3903 = vrot.lane.b32.xlu0 %v2663, 96
  %v3904 = vpop.permute.xlu0 %3903
  %3905 = vrot.lane.b32.xlu0 %v2666, 96
  %v3906 = vpop.permute.xlu0 %3905
  %3907 = vrot.lane.b32.xlu0 %v2671, 96
  %v3908 = vpop.permute.xlu0 %3907
  %3909 = vrot.lane.b32.xlu0 %v2674, 96
  %v3910 = vpop.permute.xlu0 %3909
  %3911 = vrot.lane.b32.xlu0 %v2679, 96
  %v3912 = vpop.permute.xlu0 %3911
  %3913 = vrot.lane.b32.xlu0 %v2682, 96
  %v3914 = vpop.permute.xlu0 %3913
  %3915 = vrot.lane.b32.xlu0 %v2687, 96
  %v3916 = vpop.permute.xlu0 %3915
  %3917 = vrot.lane.b32.xlu0 %v2690, 96
  %v3918 = vpop.permute.xlu0 %3917
  %3919 = vrot.lane.b32.xlu0 %v2695, 96
  %v3920 = vpop.permute.xlu0 %3919
  %3921 = vrot.lane.b32.xlu0 %v2698, 96
  %v3922 = vpop.permute.xlu0 %3921
  %3923 = vrot.lane.b32.xlu0 %v2703, 96
  %v3924 = vpop.permute.xlu0 %3923
  %3925 = vrot.lane.b32.xlu0 %v2706, 96
  %v3926 = vpop.permute.xlu0 %3925
  %3927 = vrot.lane.b32.xlu0 %v2711, 96
  %v3928 = vpop.permute.xlu0 %3927
  %3929 = vrot.lane.b32.xlu0 %v2714, 96
  %v3930 = vpop.permute.xlu0 %3929
  %3931 = vrot.lane.b32.xlu0 %v2719, 96
  %v3932 = vpop.permute.xlu0 %3931
  %3933 = vrot.lane.b32.xlu0 %v2722, 96
  %v3934 = vpop.permute.xlu0 %3933
  %3935 = vrot.lane.b32.xlu0 %v2727, 96
  %v3936 = vpop.permute.xlu0 %3935
  %3937 = vrot.lane.b32.xlu0 %v2730, 96
  %v3938 = vpop.permute.xlu0 %3937
  %3939 = vrot.lane.b32.xlu0 %v2735, 96
  %v3940 = vpop.permute.xlu0 %3939
  %3941 = vrot.lane.b32.xlu0 %v2738, 96
  %v3942 = vpop.permute.xlu0 %3941
  %3943 = vrot.lane.b32.xlu0 %v2743, 96
  %v3944 = vpop.permute.xlu0 %3943
  %3945 = vrot.lane.b32.xlu0 %v2746, 96
  %v3946 = vpop.permute.xlu0 %3945
  %3947 = vrot.lane.b32.xlu0 %v2751, 96
  %v3948 = vpop.permute.xlu0 %3947
  %3949 = vrot.lane.b32.xlu0 %v2754, 96
  %v3950 = vpop.permute.xlu0 %3949
  %3951 = vrot.lane.b32.xlu0 %v2759, 96
  %v3952 = vpop.permute.xlu0 %3951
  %3953 = vrot.lane.b32.xlu0 %v2762, 96
  %v3954 = vpop.permute.xlu0 %3953
  %3955 = vrot.lane.b32.xlu0 %v2767, 96
  %v3956 = vpop.permute.xlu0 %3955
  %3957 = vrot.lane.b32.xlu0 %v2770, 96
  %v3958 = vpop.permute.xlu0 %3957
  %3959 = vrot.lane.b32.xlu0 %v2775, 96
  %v3960 = vpop.permute.xlu0 %3959
  %3961 = vrot.lane.b32.xlu0 %v2778, 96
  %v3962 = vpop.permute.xlu0 %3961
  %3963 = vrot.lane.b32.xlu0 %v2783, 96
  %v3964 = vpop.permute.xlu0 %3963
  %3965 = vrot.lane.b32.xlu0 %v2786, 96
  %v3966 = vpop.permute.xlu0 %3965
  %3967 = vrot.lane.b32.xlu0 %v2791, 96
  %v3968 = vpop.permute.xlu0 %3967
  %3969 = vrot.lane.b32.xlu0 %v2794, 96
  %v3970 = vpop.permute.xlu0 %3969
  %3971 = vrot.lane.b32.xlu0 %v2799, 96
  %v3972 = vpop.permute.xlu0 %3971
  %3973 = vrot.lane.b32.xlu0 %v2802, 96
  %v3974 = vpop.permute.xlu0 %3973
  %3975 = vrot.lane.b32.xlu0 %v2807, 96
  %v3976 = vpop.permute.xlu0 %3975
  %3977 = vrot.lane.b32.xlu0 %v2810, 96
  %v3978 = vpop.permute.xlu0 %3977
  %3979 = vrot.lane.b32.xlu0 %v2815, 96
  %v3980 = vpop.permute.xlu0 %3979
  %3981 = vrot.lane.b32.xlu0 %v2818, 96
  %v3982 = vpop.permute.xlu0 %3981
  %3983 = vrot.lane.b32.xlu0 %v2823, 96
  %v3984 = vpop.permute.xlu0 %3983
  %3985 = vrot.lane.b32.xlu0 %v2826, 96
  %v3986 = vpop.permute.xlu0 %3985
  %3987 = vrot.lane.b32.xlu0 %v2831, 96
  %v3988 = vpop.permute.xlu0 %3987
  %3989 = vrot.lane.b32.xlu0 %v2834, 96
  %v3990 = vpop.permute.xlu0 %3989
  %3991 = vrot.lane.b32.xlu0 %v2839, 96
  %v3992 = vpop.permute.xlu0 %3991
  %3993 = vrot.lane.b32.xlu0 %v2842, 96
  %v3994 = vpop.permute.xlu0 %3993
  %3995 = vrot.lane.b32.xlu0 %v2847, 96
  %v3996 = vpop.permute.xlu0 %3995
  %3997 = vrot.lane.b32.xlu0 %v2850, 96
  %v3998 = vpop.permute.xlu0 %3997
  %3999 = vrot.lane.b32.xlu0 %v2855, 96
  %v4000 = vpop.permute.xlu0 %3999
  %4001 = vrot.lane.b32.xlu0 %v2858, 96
  %v4002 = vpop.permute.xlu0 %4001
  %4003 = vrot.lane.b32.xlu0 %v2863, 96
  %v4004 = vpop.permute.xlu0 %4003
  %4005 = vrot.lane.b32.xlu0 %v2866, 96
  %v4006 = vpop.permute.xlu0 %4005
  %4007 = vrot.lane.b32.xlu0 %v2871, 96
  %v4008 = vpop.permute.xlu0 %4007
  %4009 = vrot.lane.b32.xlu0 %v2874, 96
  %v4010 = vpop.permute.xlu0 %4009
  %4011 = vrot.lane.b32.xlu0 %v2879, 96
  %v4012 = vpop.permute.xlu0 %4011
  %4013 = vrot.lane.b32.xlu0 %v2882, 96
  %v4014 = vpop.permute.xlu0 %4013
  %4015 = vrot.lane.b32.xlu0 %v2887, 96
  %v4016 = vpop.permute.xlu0 %4015
  %4017 = vrot.lane.b32.xlu0 %v2890, 96
  %v4018 = vpop.permute.xlu0 %4017
  %4019 = vrot.lane.b32.xlu0 %v2895, 96
  %v4020 = vpop.permute.xlu0 %4019
  %4021 = vrot.lane.b32.xlu0 %v2898, 96
  %v4022 = vpop.permute.xlu0 %4021
  %4023 = vrot.lane.b32.xlu0 %v2903, 96
  %v4024 = vpop.permute.xlu0 %4023
  %4025 = vrot.lane.b32.xlu0 %v2906, 96
  %v4026 = vpop.permute.xlu0 %4025
  %4027 = vrot.lane.b32.xlu0 %v2911, 96
  %v4028 = vpop.permute.xlu0 %4027
  %4029 = vrot.lane.b32.xlu0 %v2914, 96
  %v4030 = vpop.permute.xlu0 %4029
  %4031 = vrot.lane.b32.xlu0 %v2919, 96
  %v4032 = vpop.permute.xlu0 %4031
  %4033 = vrot.lane.b32.xlu0 %v2922, 96
  %v4034 = vpop.permute.xlu0 %4033
  %4035 = vrot.lane.b32.xlu0 %v2927, 96
  %v4036 = vpop.permute.xlu0 %4035
  %4037 = vrot.lane.b32.xlu0 %v2930, 96
  %v4038 = vpop.permute.xlu0 %4037
  %4039 = vrot.lane.b32.xlu0 %v2935, 96
  %v4040 = vpop.permute.xlu0 %4039
  %4041 = vrot.lane.b32.xlu0 %v2938, 96
  %v4042 = vpop.permute.xlu0 %4041
  %4043 = vrot.lane.b32.xlu0 %v2943, 96
  %v4044 = vpop.permute.xlu0 %4043
  %4045 = vrot.lane.b32.xlu0 %v2946, 96
  %v4046 = vpop.permute.xlu0 %4045
  %4047 = vrot.lane.b32.xlu0 %v2951, 96
  %v4048 = vpop.permute.xlu0 %4047
  %4049 = vrot.lane.b32.xlu0 %v2954, 96
  %v4050 = vpop.permute.xlu0 %4049
  %4051 = vrot.lane.b32.xlu0 %v2959, 96
  %v4052 = vpop.permute.xlu0 %4051
  %4053 = vrot.lane.b32.xlu0 %v2962, 96
  %v4054 = vpop.permute.xlu0 %4053
  %4055 = vrot.lane.b32.xlu0 %v2967, 96
  %v4056 = vpop.permute.xlu0 %4055
  %4057 = vrot.lane.b32.xlu0 %v2970, 96
  %v4058 = vpop.permute.xlu0 %4057
  %4059 = vrot.lane.b32.xlu0 %v2975, 96
  %v4060 = vpop.permute.xlu0 %4059
  %4061 = vrot.lane.b32.xlu0 %v2978, 96
  %v4062 = vpop.permute.xlu0 %4061
  %4063 = vrot.lane.b32.xlu0 %v2983, 96
  %v4064 = vpop.permute.xlu0 %4063
  %4065 = vrot.lane.b32.xlu0 %v2986, 96
  %v4066 = vpop.permute.xlu0 %4065
  %4067 = vrot.lane.b32.xlu0 %v2991, 96
  %v4068 = vpop.permute.xlu0 %4067
  %4069 = vrot.lane.b32.xlu0 %v2994, 96
  %v4070 = vpop.permute.xlu0 %4069
  %4071 = vrot.lane.b32.xlu0 %v2999, 96
  %v4072 = vpop.permute.xlu0 %4071
  %4073 = vrot.lane.b32.xlu0 %v3002, 96
  %v4074 = vpop.permute.xlu0 %4073
  %4075 = vrot.lane.b32.xlu0 %v3007, 96
  %v4076 = vpop.permute.xlu0 %4075
  %4077 = vrot.lane.b32.xlu0 %v3010, 96
  %v4078 = vpop.permute.xlu0 %4077
  %4079 = vrot.lane.b32.xlu0 %v3015, 96
  %v4080 = vpop.permute.xlu0 %4079
  %4081 = vrot.lane.b32.xlu0 %v3018, 96
  %v4082 = vpop.permute.xlu0 %4081
  %4083 = vrot.lane.b32.xlu0 %v3023, 96
  %v4084 = vpop.permute.xlu0 %4083
  %4085 = vrot.lane.b32.xlu0 %v3026, 96
  %v4086 = vpop.permute.xlu0 %4085
  %4087 = vrot.lane.b32.xlu0 %v3031, 96
  %v4088 = vpop.permute.xlu0 %4087
  %4089 = vrot.lane.b32.xlu0 %v3034, 96
  %v4090 = vpop.permute.xlu0 %4089
  %4091 = vrot.lane.b32.xlu0 %v3039, 96
  %v4092 = vpop.permute.xlu0 %4091
  %4093 = vrot.lane.b32.xlu0 %v3042, 96
  %v4094 = vpop.permute.xlu0 %4093
  %4095 = vrot.lane.b32.xlu0 %v3047, 96
  %v4096 = vpop.permute.xlu0 %4095
  %4097 = vrot.lane.b32.xlu0 %v3050, 96
  %v4098 = vpop.permute.xlu0 %4097
  %4099 = vrot.lane.b32.xlu0 %v3055, 96
  %v4100 = vpop.permute.xlu0 %4099
  %4101 = vrot.lane.b32.xlu0 %v3058, 96
  %v4102 = vpop.permute.xlu0 %4101
  %4103 = vrot.lane.b32.xlu0 %v3063, 96
  %v4104 = vpop.permute.xlu0 %4103
  %4105 = vrot.lane.b32.xlu0 %v3066, 96
  %v4106 = vpop.permute.xlu0 %4105
  %4107 = vrot.lane.b32.xlu0 %v3071, 96
  %v4108 = vpop.permute.xlu0 %4107
  %4109 = vrot.lane.b32.xlu0 %v3074, 96
  %v4110 = vpop.permute.xlu0 %4109
  %4111 = vrot.lane.b32.xlu0 %v3079, 96
  %v4112 = vpop.permute.xlu0 %4111
  %4113 = vrot.lane.b32.xlu0 %v3082, 96
  %v4114 = vpop.permute.xlu0 %4113
  %4115 = vrot.lane.b32.xlu0 %v3087, 96
  %v4116 = vpop.permute.xlu0 %4115
  %4117 = vrot.lane.b32.xlu0 %v3090, 96
  %v4118 = vpop.permute.xlu0 %4117
  %4119 = vrot.lane.b32.xlu0 %v3095, 96
  %v4120 = vpop.permute.xlu0 %4119
  %4121 = vrot.lane.b32.xlu0 %v3098, 96
  %v4122 = vpop.permute.xlu0 %4121
  %4123 = vrot.lane.b32.xlu0 %v3103, 96
  %v4124 = vpop.permute.xlu0 %4123
  %4125 = vrot.lane.b32.xlu0 %v3106, 96
  %v4126 = vpop.permute.xlu0 %4125
  %4127 = vrot.lane.b32.xlu0 %v3111, 96
  %v4128 = vpop.permute.xlu0 %4127
  %4129 = vrot.lane.b32.xlu0 %v3114, 96
  %v4130 = vpop.permute.xlu0 %4129
  %v4469 = vmax.f32 %v1767, %v3456
  %v4470 = vmax.f32 %v1770, %v3458
  %v4471 = vmax.f32 %v1775, %v3460
  %v4472 = vmax.f32 %v1778, %v3462
  %v4473 = vmax.f32 %v1783, %v3464
  %v4474 = vmax.f32 %v1786, %v3466
  %v4475 = vmax.f32 %v1791, %v3468
  %v4476 = vmax.f32 %v1794, %v3470
  %v4477 = vmax.f32 %v1799, %v3472
  %v4478 = vmax.f32 %v1802, %v3474
  %v4479 = vmax.f32 %v1807, %v3476
  %v4480 = vmax.f32 %v1810, %v3478
  %v4481 = vmax.f32 %v1815, %v3480
  %v4482 = vmax.f32 %v1818, %v3482
  %v4483 = vmax.f32 %v1823, %v3484
  %v4484 = vmax.f32 %v1826, %v3486
  %v4485 = vmax.f32 %v1831, %v3488
  %v4486 = vmax.f32 %v1834, %v3490
  %v4487 = vmax.f32 %v1839, %v3492
  %v4488 = vmax.f32 %v1842, %v3494
  %v4489 = vmax.f32 %v1847, %v3496
  %v4490 = vmax.f32 %v1850, %v3498
  %v4491 = vmax.f32 %v1855, %v3500
  %v4492 = vmax.f32 %v1858, %v3502
  %v4493 = vmax.f32 %v1863, %v3504
  %v4494 = vmax.f32 %v1866, %v3506
  %v4495 = vmax.f32 %v1871, %v3508
  %v4496 = vmax.f32 %v1874, %v3510
  %v4497 = vmax.f32 %v1879, %v3512
  %v4498 = vmax.f32 %v1882, %v3514
  %v4499 = vmax.f32 %v1887, %v3516
  %v4500 = vmax.f32 %v1890, %v3518
  %v4501 = vmax.f32 %v1895, %v3520
  %v4502 = vmax.f32 %v1898, %v3522
  %v4503 = vmax.f32 %v1903, %v3524
  %v4504 = vmax.f32 %v1906, %v3526
  %v4505 = vmax.f32 %v1911, %v3528
  %v4506 = vmax.f32 %v1914, %v3530
  %v4507 = vmax.f32 %v1919, %v3532
  %v4508 = vmax.f32 %v1922, %v3534
  %v4509 = vmax.f32 %v1927, %v3536
  %v4510 = vmax.f32 %v1930, %v3538
  %v4511 = vmax.f32 %v1935, %v3540
  %v4512 = vmax.f32 %v1938, %v3542
  %v4513 = vmax.f32 %v1943, %v3544
  %v4514 = vmax.f32 %v1946, %v3546
  %v4515 = vmax.f32 %v1951, %v3548
  %v4516 = vmax.f32 %v1954, %v3550
  %v4517 = vmax.f32 %v1959, %v3552
  %v4518 = vmax.f32 %v1962, %v3554
  %v4519 = vmax.f32 %v1967, %v3556
  %v4520 = vmax.f32 %v1970, %v3558
  %v4521 = vmax.f32 %v1975, %v3560
  %v4522 = vmax.f32 %v1978, %v3562
  %v4523 = vmax.f32 %v1983, %v3564
  %v4524 = vmax.f32 %v1986, %v3566
  %v4525 = vmax.f32 %v1991, %v3568
  %v4526 = vmax.f32 %v1994, %v3570
  %v4527 = vmax.f32 %v1999, %v3572
  %v4528 = vmax.f32 %v2002, %v3574
  %v4529 = vmax.f32 %v2007, %v3576
  %v4530 = vmax.f32 %v2010, %v3578
  %v4531 = vmax.f32 %v2015, %v3580
  %v4532 = vmax.f32 %v2018, %v3582
  %v4533 = vmax.f32 %v2023, %v3584
  %v4534 = vmax.f32 %v2026, %v3586
  %v4535 = vmax.f32 %v2031, %v3588
  %v4536 = vmax.f32 %v2034, %v3590
  %v4537 = vmax.f32 %v2039, %v3592
  %v4538 = vmax.f32 %v2042, %v3594
  %v4539 = vmax.f32 %v2047, %v3596
  %v4540 = vmax.f32 %v2050, %v3598
  %v4541 = vmax.f32 %v2055, %v3600
  %v4542 = vmax.f32 %v2058, %v3602
  %v4543 = vmax.f32 %v2063, %v3604
  %v4544 = vmax.f32 %v2066, %v3606
  %v4545 = vmax.f32 %v2071, %v3608
  %v4546 = vmax.f32 %v2074, %v3610
  %v4547 = vmax.f32 %v2079, %v3612
  %v4548 = vmax.f32 %v2082, %v3614
  %v4549 = vmax.f32 %v2087, %v3616
  %v4550 = vmax.f32 %v2090, %v3618
  %v4551 = vmax.f32 %v2095, %v3620
  %v4552 = vmax.f32 %v2098, %v3622
  %v4553 = vmax.f32 %v2103, %v3624
  %v4554 = vmax.f32 %v2106, %v3626
  %v4555 = vmax.f32 %v2111, %v3628
  %v4556 = vmax.f32 %v2114, %v3630
  %v4557 = vmax.f32 %v2119, %v3632
  %v4558 = vmax.f32 %v2122, %v3634
  %v4559 = vmax.f32 %v2127, %v3636
  %v4560 = vmax.f32 %v2130, %v3638
  %v4561 = vmax.f32 %v2135, %v3640
  %v4562 = vmax.f32 %v2138, %v3642
  %v4563 = vmax.f32 %v2143, %v3644
  %v4564 = vmax.f32 %v2146, %v3646
  %v4565 = vmax.f32 %v2151, %v3648
  %v4566 = vmax.f32 %v2154, %v3650
  %v4567 = vmax.f32 %v2159, %v3652
  %v4568 = vmax.f32 %v2162, %v3654
  %v4569 = vmax.f32 %v2167, %v3656
  %v4570 = vmax.f32 %v2170, %v3658
  %v4571 = vmax.f32 %v2175, %v3660
  %v4572 = vmax.f32 %v2178, %v3662
  %v4573 = vmax.f32 %v2183, %v3664
  %v4574 = vmax.f32 %v2186, %v3666
  %v4575 = vmax.f32 %v2191, %v3668
  %v4576 = vmax.f32 %v2194, %v3670
  %v4577 = vmax.f32 %v2199, %v3672
  %v4578 = vmax.f32 %v2202, %v3674
  %v4579 = vmax.f32 %v2207, %v3676
  %v4580 = vmax.f32 %v2210, %v3678
  %v4581 = vmax.f32 %v2215, %v3680
  %v4582 = vmax.f32 %v2218, %v3682
  %v4583 = vmax.f32 %v2223, %v3684
  %v4584 = vmax.f32 %v2226, %v3686
  %v4585 = vmax.f32 %v2231, %v3688
  %v4586 = vmax.f32 %v2234, %v3690
  %v4587 = vmax.f32 %v2239, %v3692
  %v4588 = vmax.f32 %v2242, %v3694
  %v4589 = vmax.f32 %v2247, %v3696
  %v4590 = vmax.f32 %v2250, %v3698
  %v4591 = vmax.f32 %v2255, %v3700
  %v4592 = vmax.f32 %v2258, %v3702
  %v4593 = vmax.f32 %v2263, %v3704
  %v4594 = vmax.f32 %v2266, %v3706
  %v4595 = vmax.f32 %v2271, %v3708
  %v4596 = vmax.f32 %v2274, %v3710
  %v4597 = vmax.f32 %v2279, %v3712
  %v4598 = vmax.f32 %v2282, %v3714
  %v4599 = vmax.f32 %v2287, %v3716
  %v4600 = vmax.f32 %v2290, %v3718
  %v4601 = vmax.f32 %v2295, %v3720
  %v4602 = vmax.f32 %v2298, %v3722
  %v4603 = vmax.f32 %v2303, %v3724
  %v4604 = vmax.f32 %v2306, %v3726
  %v4605 = vmax.f32 %v2311, %v3728
  %v4606 = vmax.f32 %v2314, %v3730
  %v4607 = vmax.f32 %v2319, %v3732
  %v4608 = vmax.f32 %v2322, %v3734
  %v4609 = vmax.f32 %v2327, %v3736
  %v4610 = vmax.f32 %v2330, %v3738
  %v4611 = vmax.f32 %v2335, %v3740
  %v4612 = vmax.f32 %v2338, %v3742
  %v4613 = vmax.f32 %v2343, %v3744
  %v4614 = vmax.f32 %v2346, %v3746
  %v4615 = vmax.f32 %v2351, %v3748
  %v4616 = vmax.f32 %v2354, %v3750
  %v4617 = vmax.f32 %v2359, %v3752
  %v4618 = vmax.f32 %v2362, %v3754
  %v4619 = vmax.f32 %v2367, %v3756
  %v4620 = vmax.f32 %v2370, %v3758
  %v4621 = vmax.f32 %v2375, %v3760
  %v4622 = vmax.f32 %v2378, %v3762
  %v4623 = vmax.f32 %v2383, %v3764
  %v4624 = vmax.f32 %v2386, %v3766
  %v4625 = vmax.f32 %v2391, %v3768
  %v4626 = vmax.f32 %v2394, %v3770
  %v4627 = vmax.f32 %v2399, %v3772
  %v4628 = vmax.f32 %v2402, %v3774
  %v4629 = vmax.f32 %v2407, %v3776
  %v4630 = vmax.f32 %v2410, %v3778
  %v4631 = vmax.f32 %v2415, %v3780
  %v4632 = vmax.f32 %v2418, %v3782
  %v4633 = vmax.f32 %v2423, %v3784
  %v4634 = vmax.f32 %v2426, %v3786
  %v4635 = vmax.f32 %v2431, %v3788
  %v4636 = vmax.f32 %v2434, %v3790
  %v4637 = vmax.f32 %v2439, %v3792
  %v4638 = vmax.f32 %v2442, %v3794
  %v4639 = vmax.f32 %v2447, %v3796
  %v4640 = vmax.f32 %v2450, %v3798
  %v4641 = vmax.f32 %v2455, %v3800
  %v4642 = vmax.f32 %v2458, %v3802
  %v4643 = vmax.f32 %v2463, %v3804
  %v4644 = vmax.f32 %v2466, %v3806
  %v4645 = vmax.f32 %v2471, %v3808
  %v4646 = vmax.f32 %v2474, %v3810
  %v4647 = vmax.f32 %v2479, %v3812
  %v4648 = vmax.f32 %v2482, %v3814
  %v4649 = vmax.f32 %v2487, %v3816
  %v4650 = vmax.f32 %v2490, %v3818
  %v4651 = vmax.f32 %v2495, %v3820
  %v4652 = vmax.f32 %v2498, %v3822
  %v4653 = vmax.f32 %v2503, %v3824
  %v4654 = vmax.f32 %v2506, %v3826
  %v4655 = vmax.f32 %v2511, %v3828
  %v4656 = vmax.f32 %v2514, %v3830
  %v4657 = vmax.f32 %v2519, %v3832
  %v4658 = vmax.f32 %v2522, %v3834
  %v4659 = vmax.f32 %v2527, %v3836
  %v4660 = vmax.f32 %v2530, %v3838
  %v4661 = vmax.f32 %v2535, %v3840
  %v4662 = vmax.f32 %v2538, %v3842
  %v4663 = vmax.f32 %v2543, %v3844
  %v4664 = vmax.f32 %v2546, %v3846
  %v4665 = vmax.f32 %v2551, %v3848
  %v4666 = vmax.f32 %v2554, %v3850
  %v4667 = vmax.f32 %v2559, %v3852
  %v4668 = vmax.f32 %v2562, %v3854
  %v4669 = vmax.f32 %v2567, %v3856
  %v4670 = vmax.f32 %v2570, %v3858
  %v4671 = vmax.f32 %v2575, %v3860
  %v4672 = vmax.f32 %v2578, %v3862
  %v4673 = vmax.f32 %v2583, %v3864
  %v4674 = vmax.f32 %v2586, %v3866
  %v4675 = vmax.f32 %v2591, %v3868
  %v4676 = vmax.f32 %v2594, %v3870
  %v4677 = vmax.f32 %v2599, %v3872
  %v4678 = vmax.f32 %v2602, %v3874
  %v4679 = vmax.f32 %v2607, %v3876
  %v4680 = vmax.f32 %v2610, %v3878
  %v4681 = vmax.f32 %v2615, %v3880
  %v4682 = vmax.f32 %v2618, %v3882
  %v4683 = vmax.f32 %v2623, %v3884
  %v4684 = vmax.f32 %v2626, %v3886
  %v4685 = vmax.f32 %v2631, %v3888
  %v4686 = vmax.f32 %v2634, %v3890
  %v4687 = vmax.f32 %v2639, %v3892
  %v4688 = vmax.f32 %v2642, %v3894
  %v4689 = vmax.f32 %v2647, %v3896
  %v4690 = vmax.f32 %v2650, %v3898
  %v4691 = vmax.f32 %v2655, %v3900
  %v4692 = vmax.f32 %v2658, %v3902
  %v4693 = vmax.f32 %v2663, %v3904
  %v4694 = vmax.f32 %v2666, %v3906
  %v4695 = vmax.f32 %v2671, %v3908
  %v4696 = vmax.f32 %v2674, %v3910
  %v4697 = vmax.f32 %v2679, %v3912
  %v4698 = vmax.f32 %v2682, %v3914
  %v4699 = vmax.f32 %v2687, %v3916
  %v4700 = vmax.f32 %v2690, %v3918
  %v4701 = vmax.f32 %v2695, %v3920
  %v4702 = vmax.f32 %v2698, %v3922
  %v4703 = vmax.f32 %v2703, %v3924
  %v4704 = vmax.f32 %v2706, %v3926
  %v4705 = vmax.f32 %v2711, %v3928
  %v4706 = vmax.f32 %v2714, %v3930
  %v4707 = vmax.f32 %v2719, %v3932
  %v4708 = vmax.f32 %v2722, %v3934
  %v4709 = vmax.f32 %v2727, %v3936
  %v4710 = vmax.f32 %v2730, %v3938
  %v4711 = vmax.f32 %v2735, %v3940
  %v4712 = vmax.f32 %v2738, %v3942
  %v4713 = vmax.f32 %v2743, %v3944
  %v4714 = vmax.f32 %v2746, %v3946
  %v4715 = vmax.f32 %v2751, %v3948
  %v4716 = vmax.f32 %v2754, %v3950
  %v4717 = vmax.f32 %v2759, %v3952
  %v4718 = vmax.f32 %v2762, %v3954
  %v4719 = vmax.f32 %v2767, %v3956
  %v4720 = vmax.f32 %v2770, %v3958
  %v4721 = vmax.f32 %v2775, %v3960
  %v4722 = vmax.f32 %v2778, %v3962
  %v4723 = vmax.f32 %v2783, %v3964
  %v4724 = vmax.f32 %v2786, %v3966
  %v4725 = vmax.f32 %v2791, %v3968
  %v4726 = vmax.f32 %v2794, %v3970
  %v4727 = vmax.f32 %v2799, %v3972
  %v4728 = vmax.f32 %v2802, %v3974
  %v4729 = vmax.f32 %v2807, %v3976
  %v4730 = vmax.f32 %v2810, %v3978
  %v4731 = vmax.f32 %v2815, %v3980
  %v4732 = vmax.f32 %v2818, %v3982
  %v4733 = vmax.f32 %v2823, %v3984
  %v4734 = vmax.f32 %v2826, %v3986
  %v4735 = vmax.f32 %v2831, %v3988
  %v4736 = vmax.f32 %v2834, %v3990
  %v4737 = vmax.f32 %v2839, %v3992
  %v4738 = vmax.f32 %v2842, %v3994
  %v4739 = vmax.f32 %v2847, %v3996
  %v4740 = vmax.f32 %v2850, %v3998
  %v4741 = vmax.f32 %v2855, %v4000
  %v4742 = vmax.f32 %v2858, %v4002
  %v4743 = vmax.f32 %v2863, %v4004
  %v4744 = vmax.f32 %v2866, %v4006
  %v4745 = vmax.f32 %v2871, %v4008
  %v4746 = vmax.f32 %v2874, %v4010
  %v4747 = vmax.f32 %v2879, %v4012
  %v4748 = vmax.f32 %v2882, %v4014
  %v4749 = vmax.f32 %v2887, %v4016
  %v4750 = vmax.f32 %v2890, %v4018
  %v4751 = vmax.f32 %v2895, %v4020
  %v4752 = vmax.f32 %v2898, %v4022
  %v4753 = vmax.f32 %v2903, %v4024
  %v4754 = vmax.f32 %v2906, %v4026
  %v4755 = vmax.f32 %v2911, %v4028
  %v4756 = vmax.f32 %v2914, %v4030
  %v4757 = vmax.f32 %v2919, %v4032
  %v4758 = vmax.f32 %v2922, %v4034
  %v4759 = vmax.f32 %v2927, %v4036
  %v4760 = vmax.f32 %v2930, %v4038
  %v4761 = vmax.f32 %v2935, %v4040
  %v4762 = vmax.f32 %v2938, %v4042
  %v4763 = vmax.f32 %v2943, %v4044
  %v4764 = vmax.f32 %v2946, %v4046
  %v4765 = vmax.f32 %v2951, %v4048
  %v4766 = vmax.f32 %v2954, %v4050
  %v4767 = vmax.f32 %v2959, %v4052
  %v4768 = vmax.f32 %v2962, %v4054
  %v4769 = vmax.f32 %v2967, %v4056
  %v4770 = vmax.f32 %v2970, %v4058
  %v4771 = vmax.f32 %v2975, %v4060
  %v4772 = vmax.f32 %v2978, %v4062
  %v4773 = vmax.f32 %v2983, %v4064
  %v4774 = vmax.f32 %v2986, %v4066
  %v4775 = vmax.f32 %v2991, %v4068
  %v4776 = vmax.f32 %v2994, %v4070
  %v4777 = vmax.f32 %v2999, %v4072
  %v4778 = vmax.f32 %v3002, %v4074
  %v4779 = vmax.f32 %v3007, %v4076
  %v4780 = vmax.f32 %v3010, %v4078
  %v4781 = vmax.f32 %v3015, %v4080
  %v4782 = vmax.f32 %v3018, %v4082
  %v4783 = vmax.f32 %v3023, %v4084
  %v4784 = vmax.f32 %v3026, %v4086
  %v4785 = vmax.f32 %v3031, %v4088
  %v4786 = vmax.f32 %v3034, %v4090
  %v4787 = vmax.f32 %v3039, %v4092
  %v4788 = vmax.f32 %v3042, %v4094
  %v4789 = vmax.f32 %v3047, %v4096
  %v4790 = vmax.f32 %v3050, %v4098
  %v4791 = vmax.f32 %v3055, %v4100
  %v4792 = vmax.f32 %v3058, %v4102
  %v4793 = vmax.f32 %v3063, %v4104
  %v4794 = vmax.f32 %v3066, %v4106
  %v4795 = vmax.f32 %v3071, %v4108
  %v4796 = vmax.f32 %v3074, %v4110
  %v4797 = vmax.f32 %v3079, %v4112
  %v4798 = vmax.f32 %v3082, %v4114
  %v4799 = vmax.f32 %v3087, %v4116
  %v4800 = vmax.f32 %v3090, %v4118
  %v4801 = vmax.f32 %v3095, %v4120
  %v4802 = vmax.f32 %v3098, %v4122
  %v4803 = vmax.f32 %v3103, %v4124
  %v4804 = vmax.f32 %v3106, %v4126
  %v4805 = vmax.f32 %v3111, %v4128
  %v4806 = vmax.f32 %v3114, %v4130
  %5145 = vrot.lane.b32.xlu0 %v4469, 112
  %v5146 = vpop.permute.xlu0 %5145
  %5147 = vrot.lane.b32.xlu0 %v4470, 112
  %v5148 = vpop.permute.xlu0 %5147
  %5149 = vrot.lane.b32.xlu0 %v4471, 112
  %v5150 = vpop.permute.xlu0 %5149
  %5151 = vrot.lane.b32.xlu0 %v4472, 112
  %v5152 = vpop.permute.xlu0 %5151
  %5153 = vrot.lane.b32.xlu0 %v4473, 112
  %v5154 = vpop.permute.xlu0 %5153
  %5155 = vrot.lane.b32.xlu0 %v4474, 112
  %v5156 = vpop.permute.xlu0 %5155
  %5157 = vrot.lane.b32.xlu0 %v4475, 112
  %v5158 = vpop.permute.xlu0 %5157
  %5159 = vrot.lane.b32.xlu0 %v4476, 112
  %v5160 = vpop.permute.xlu0 %5159
  %5161 = vrot.lane.b32.xlu0 %v4477, 112
  %v5162 = vpop.permute.xlu0 %5161
  %5163 = vrot.lane.b32.xlu0 %v4478, 112
  %v5164 = vpop.permute.xlu0 %5163
  %5165 = vrot.lane.b32.xlu0 %v4479, 112
  %v5166 = vpop.permute.xlu0 %5165
  %5167 = vrot.lane.b32.xlu0 %v4480, 112
  %v5168 = vpop.permute.xlu0 %5167
  %5169 = vrot.lane.b32.xlu0 %v4481, 112
  %v5170 = vpop.permute.xlu0 %5169
  %5171 = vrot.lane.b32.xlu0 %v4482, 112
  %v5172 = vpop.permute.xlu0 %5171
  %5173 = vrot.lane.b32.xlu0 %v4483, 112
  %v5174 = vpop.permute.xlu0 %5173
  %5175 = vrot.lane.b32.xlu0 %v4484, 112
  %v5176 = vpop.permute.xlu0 %5175
  %5177 = vrot.lane.b32.xlu0 %v4485, 112
  %v5178 = vpop.permute.xlu0 %5177
  %5179 = vrot.lane.b32.xlu0 %v4486, 112
  %v5180 = vpop.permute.xlu0 %5179
  %5181 = vrot.lane.b32.xlu0 %v4487, 112
  %v5182 = vpop.permute.xlu0 %5181
  %5183 = vrot.lane.b32.xlu0 %v4488, 112
  %v5184 = vpop.permute.xlu0 %5183
  %5185 = vrot.lane.b32.xlu0 %v4489, 112
  %v5186 = vpop.permute.xlu0 %5185
  %5187 = vrot.lane.b32.xlu0 %v4490, 112
  %v5188 = vpop.permute.xlu0 %5187
  %5189 = vrot.lane.b32.xlu0 %v4491, 112
  %v5190 = vpop.permute.xlu0 %5189
  %5191 = vrot.lane.b32.xlu0 %v4492, 112
  %v5192 = vpop.permute.xlu0 %5191
  %5193 = vrot.lane.b32.xlu0 %v4493, 112
  %v5194 = vpop.permute.xlu0 %5193
  %5195 = vrot.lane.b32.xlu0 %v4494, 112
  %v5196 = vpop.permute.xlu0 %5195
  %5197 = vrot.lane.b32.xlu0 %v4495, 112
  %v5198 = vpop.permute.xlu0 %5197
  %5199 = vrot.lane.b32.xlu0 %v4496, 112
  %v5200 = vpop.permute.xlu0 %5199
  %5201 = vrot.lane.b32.xlu0 %v4497, 112
  %v5202 = vpop.permute.xlu0 %5201
  %5203 = vrot.lane.b32.xlu0 %v4498, 112
  %v5204 = vpop.permute.xlu0 %5203
  %5205 = vrot.lane.b32.xlu0 %v4499, 112
  %v5206 = vpop.permute.xlu0 %5205
  %5207 = vrot.lane.b32.xlu0 %v4500, 112
  %v5208 = vpop.permute.xlu0 %5207
  %5209 = vrot.lane.b32.xlu0 %v4501, 112
  %v5210 = vpop.permute.xlu0 %5209
  %5211 = vrot.lane.b32.xlu0 %v4502, 112
  %v5212 = vpop.permute.xlu0 %5211
  %5213 = vrot.lane.b32.xlu0 %v4503, 112
  %v5214 = vpop.permute.xlu0 %5213
  %5215 = vrot.lane.b32.xlu0 %v4504, 112
  %v5216 = vpop.permute.xlu0 %5215
  %5217 = vrot.lane.b32.xlu0 %v4505, 112
  %v5218 = vpop.permute.xlu0 %5217
  %5219 = vrot.lane.b32.xlu0 %v4506, 112
  %v5220 = vpop.permute.xlu0 %5219
  %5221 = vrot.lane.b32.xlu0 %v4507, 112
  %v5222 = vpop.permute.xlu0 %5221
  %5223 = vrot.lane.b32.xlu0 %v4508, 112
  %v5224 = vpop.permute.xlu0 %5223
  %5225 = vrot.lane.b32.xlu0 %v4509, 112
  %v5226 = vpop.permute.xlu0 %5225
  %5227 = vrot.lane.b32.xlu0 %v4510, 112
  %v5228 = vpop.permute.xlu0 %5227
  %5229 = vrot.lane.b32.xlu0 %v4511, 112
  %v5230 = vpop.permute.xlu0 %5229
  %5231 = vrot.lane.b32.xlu0 %v4512, 112
  %v5232 = vpop.permute.xlu0 %5231
  %5233 = vrot.lane.b32.xlu0 %v4513, 112
  %v5234 = vpop.permute.xlu0 %5233
  %5235 = vrot.lane.b32.xlu0 %v4514, 112
  %v5236 = vpop.permute.xlu0 %5235
  %5237 = vrot.lane.b32.xlu0 %v4515, 112
  %v5238 = vpop.permute.xlu0 %5237
  %5239 = vrot.lane.b32.xlu0 %v4516, 112
  %v5240 = vpop.permute.xlu0 %5239
  %5241 = vrot.lane.b32.xlu0 %v4517, 112
  %v5242 = vpop.permute.xlu0 %5241
  %5243 = vrot.lane.b32.xlu0 %v4518, 112
  %v5244 = vpop.permute.xlu0 %5243
  %5245 = vrot.lane.b32.xlu0 %v4519, 112
  %v5246 = vpop.permute.xlu0 %5245
  %5247 = vrot.lane.b32.xlu0 %v4520, 112
  %v5248 = vpop.permute.xlu0 %5247
  %5249 = vrot.lane.b32.xlu0 %v4521, 112
  %v5250 = vpop.permute.xlu0 %5249
  %5251 = vrot.lane.b32.xlu0 %v4522, 112
  %v5252 = vpop.permute.xlu0 %5251
  %5253 = vrot.lane.b32.xlu0 %v4523, 112
  %v5254 = vpop.permute.xlu0 %5253
  %5255 = vrot.lane.b32.xlu0 %v4524, 112
  %v5256 = vpop.permute.xlu0 %5255
  %5257 = vrot.lane.b32.xlu0 %v4525, 112
  %v5258 = vpop.permute.xlu0 %5257
  %5259 = vrot.lane.b32.xlu0 %v4526, 112
  %v5260 = vpop.permute.xlu0 %5259
  %5261 = vrot.lane.b32.xlu0 %v4527, 112
  %v5262 = vpop.permute.xlu0 %5261
  %5263 = vrot.lane.b32.xlu0 %v4528, 112
  %v5264 = vpop.permute.xlu0 %5263
  %5265 = vrot.lane.b32.xlu0 %v4529, 112
  %v5266 = vpop.permute.xlu0 %5265
  %5267 = vrot.lane.b32.xlu0 %v4530, 112
  %v5268 = vpop.permute.xlu0 %5267
  %5269 = vrot.lane.b32.xlu0 %v4531, 112
  %v5270 = vpop.permute.xlu0 %5269
  %5271 = vrot.lane.b32.xlu0 %v4532, 112
  %v5272 = vpop.permute.xlu0 %5271
  %5273 = vrot.lane.b32.xlu0 %v4533, 112
  %v5274 = vpop.permute.xlu0 %5273
  %5275 = vrot.lane.b32.xlu0 %v4534, 112
  %v5276 = vpop.permute.xlu0 %5275
  %5277 = vrot.lane.b32.xlu0 %v4535, 112
  %v5278 = vpop.permute.xlu0 %5277
  %5279 = vrot.lane.b32.xlu0 %v4536, 112
  %v5280 = vpop.permute.xlu0 %5279
  %5281 = vrot.lane.b32.xlu0 %v4537, 112
  %v5282 = vpop.permute.xlu0 %5281
  %5283 = vrot.lane.b32.xlu0 %v4538, 112
  %v5284 = vpop.permute.xlu0 %5283
  %5285 = vrot.lane.b32.xlu0 %v4539, 112
  %v5286 = vpop.permute.xlu0 %5285
  %5287 = vrot.lane.b32.xlu0 %v4540, 112
  %v5288 = vpop.permute.xlu0 %5287
  %5289 = vrot.lane.b32.xlu0 %v4541, 112
  %v5290 = vpop.permute.xlu0 %5289
  %5291 = vrot.lane.b32.xlu0 %v4542, 112
  %v5292 = vpop.permute.xlu0 %5291
  %5293 = vrot.lane.b32.xlu0 %v4543, 112
  %v5294 = vpop.permute.xlu0 %5293
  %5295 = vrot.lane.b32.xlu0 %v4544, 112
  %v5296 = vpop.permute.xlu0 %5295
  %5297 = vrot.lane.b32.xlu0 %v4545, 112
  %v5298 = vpop.permute.xlu0 %5297
  %5299 = vrot.lane.b32.xlu0 %v4546, 112
  %v5300 = vpop.permute.xlu0 %5299
  %5301 = vrot.lane.b32.xlu0 %v4547, 112
  %v5302 = vpop.permute.xlu0 %5301
  %5303 = vrot.lane.b32.xlu0 %v4548, 112
  %v5304 = vpop.permute.xlu0 %5303
  %5305 = vrot.lane.b32.xlu0 %v4549, 112
  %v5306 = vpop.permute.xlu0 %5305
  %5307 = vrot.lane.b32.xlu0 %v4550, 112
  %v5308 = vpop.permute.xlu0 %5307
  %5309 = vrot.lane.b32.xlu0 %v4551, 112
  %v5310 = vpop.permute.xlu0 %5309
  %5311 = vrot.lane.b32.xlu0 %v4552, 112
  %v5312 = vpop.permute.xlu0 %5311
  %5313 = vrot.lane.b32.xlu0 %v4553, 112
  %v5314 = vpop.permute.xlu0 %5313
  %5315 = vrot.lane.b32.xlu0 %v4554, 112
  %v5316 = vpop.permute.xlu0 %5315
  %5317 = vrot.lane.b32.xlu0 %v4555, 112
  %v5318 = vpop.permute.xlu0 %5317
  %5319 = vrot.lane.b32.xlu0 %v4556, 112
  %v5320 = vpop.permute.xlu0 %5319
  %5321 = vrot.lane.b32.xlu0 %v4557, 112
  %v5322 = vpop.permute.xlu0 %5321
  %5323 = vrot.lane.b32.xlu0 %v4558, 112
  %v5324 = vpop.permute.xlu0 %5323
  %5325 = vrot.lane.b32.xlu0 %v4559, 112
  %v5326 = vpop.permute.xlu0 %5325
  %5327 = vrot.lane.b32.xlu0 %v4560, 112
  %v5328 = vpop.permute.xlu0 %5327
  %5329 = vrot.lane.b32.xlu0 %v4561, 112
  %v5330 = vpop.permute.xlu0 %5329
  %5331 = vrot.lane.b32.xlu0 %v4562, 112
  %v5332 = vpop.permute.xlu0 %5331
  %5333 = vrot.lane.b32.xlu0 %v4563, 112
  %v5334 = vpop.permute.xlu0 %5333
  %5335 = vrot.lane.b32.xlu0 %v4564, 112
  %v5336 = vpop.permute.xlu0 %5335
  %5337 = vrot.lane.b32.xlu0 %v4565, 112
  %v5338 = vpop.permute.xlu0 %5337
  %5339 = vrot.lane.b32.xlu0 %v4566, 112
  %v5340 = vpop.permute.xlu0 %5339
  %5341 = vrot.lane.b32.xlu0 %v4567, 112
  %v5342 = vpop.permute.xlu0 %5341
  %5343 = vrot.lane.b32.xlu0 %v4568, 112
  %v5344 = vpop.permute.xlu0 %5343
  %5345 = vrot.lane.b32.xlu0 %v4569, 112
  %v5346 = vpop.permute.xlu0 %5345
  %5347 = vrot.lane.b32.xlu0 %v4570, 112
  %v5348 = vpop.permute.xlu0 %5347
  %5349 = vrot.lane.b32.xlu0 %v4571, 112
  %v5350 = vpop.permute.xlu0 %5349
  %5351 = vrot.lane.b32.xlu0 %v4572, 112
  %v5352 = vpop.permute.xlu0 %5351
  %5353 = vrot.lane.b32.xlu0 %v4573, 112
  %v5354 = vpop.permute.xlu0 %5353
  %5355 = vrot.lane.b32.xlu0 %v4574, 112
  %v5356 = vpop.permute.xlu0 %5355
  %5357 = vrot.lane.b32.xlu0 %v4575, 112
  %v5358 = vpop.permute.xlu0 %5357
  %5359 = vrot.lane.b32.xlu0 %v4576, 112
  %v5360 = vpop.permute.xlu0 %5359
  %5361 = vrot.lane.b32.xlu0 %v4577, 112
  %v5362 = vpop.permute.xlu0 %5361
  %5363 = vrot.lane.b32.xlu0 %v4578, 112
  %v5364 = vpop.permute.xlu0 %5363
  %5365 = vrot.lane.b32.xlu0 %v4579, 112
  %v5366 = vpop.permute.xlu0 %5365
  %5367 = vrot.lane.b32.xlu0 %v4580, 112
  %v5368 = vpop.permute.xlu0 %5367
  %5369 = vrot.lane.b32.xlu0 %v4581, 112
  %v5370 = vpop.permute.xlu0 %5369
  %5371 = vrot.lane.b32.xlu0 %v4582, 112
  %v5372 = vpop.permute.xlu0 %5371
  %5373 = vrot.lane.b32.xlu0 %v4583, 112
  %v5374 = vpop.permute.xlu0 %5373
  %5375 = vrot.lane.b32.xlu0 %v4584, 112
  %v5376 = vpop.permute.xlu0 %5375
  %5377 = vrot.lane.b32.xlu0 %v4585, 112
  %v5378 = vpop.permute.xlu0 %5377
  %5379 = vrot.lane.b32.xlu0 %v4586, 112
  %v5380 = vpop.permute.xlu0 %5379
  %5381 = vrot.lane.b32.xlu0 %v4587, 112
  %v5382 = vpop.permute.xlu0 %5381
  %5383 = vrot.lane.b32.xlu0 %v4588, 112
  %v5384 = vpop.permute.xlu0 %5383
  %5385 = vrot.lane.b32.xlu0 %v4589, 112
  %v5386 = vpop.permute.xlu0 %5385
  %5387 = vrot.lane.b32.xlu0 %v4590, 112
  %v5388 = vpop.permute.xlu0 %5387
  %5389 = vrot.lane.b32.xlu0 %v4591, 112
  %v5390 = vpop.permute.xlu0 %5389
  %5391 = vrot.lane.b32.xlu0 %v4592, 112
  %v5392 = vpop.permute.xlu0 %5391
  %5393 = vrot.lane.b32.xlu0 %v4593, 112
  %v5394 = vpop.permute.xlu0 %5393
  %5395 = vrot.lane.b32.xlu0 %v4594, 112
  %v5396 = vpop.permute.xlu0 %5395
  %5397 = vrot.lane.b32.xlu0 %v4595, 112
  %v5398 = vpop.permute.xlu0 %5397
  %5399 = vrot.lane.b32.xlu0 %v4596, 112
  %v5400 = vpop.permute.xlu0 %5399
  %5401 = vrot.lane.b32.xlu0 %v4597, 112
  %v5402 = vpop.permute.xlu0 %5401
  %5403 = vrot.lane.b32.xlu0 %v4598, 112
  %v5404 = vpop.permute.xlu0 %5403
  %5405 = vrot.lane.b32.xlu0 %v4599, 112
  %v5406 = vpop.permute.xlu0 %5405
  %5407 = vrot.lane.b32.xlu0 %v4600, 112
  %v5408 = vpop.permute.xlu0 %5407
  %5409 = vrot.lane.b32.xlu0 %v4601, 112
  %v5410 = vpop.permute.xlu0 %5409
  %5411 = vrot.lane.b32.xlu0 %v4602, 112
  %v5412 = vpop.permute.xlu0 %5411
  %5413 = vrot.lane.b32.xlu0 %v4603, 112
  %v5414 = vpop.permute.xlu0 %5413
  %5415 = vrot.lane.b32.xlu0 %v4604, 112
  %v5416 = vpop.permute.xlu0 %5415
  %5417 = vrot.lane.b32.xlu0 %v4605, 112
  %v5418 = vpop.permute.xlu0 %5417
  %5419 = vrot.lane.b32.xlu0 %v4606, 112
  %v5420 = vpop.permute.xlu0 %5419
  %5421 = vrot.lane.b32.xlu0 %v4607, 112
  %v5422 = vpop.permute.xlu0 %5421
  %5423 = vrot.lane.b32.xlu0 %v4608, 112
  %v5424 = vpop.permute.xlu0 %5423
  %5425 = vrot.lane.b32.xlu0 %v4609, 112
  %v5426 = vpop.permute.xlu0 %5425
  %5427 = vrot.lane.b32.xlu0 %v4610, 112
  %v5428 = vpop.permute.xlu0 %5427
  %5429 = vrot.lane.b32.xlu0 %v4611, 112
  %v5430 = vpop.permute.xlu0 %5429
  %5431 = vrot.lane.b32.xlu0 %v4612, 112
  %v5432 = vpop.permute.xlu0 %5431
  %5433 = vrot.lane.b32.xlu0 %v4613, 112
  %v5434 = vpop.permute.xlu0 %5433
  %5435 = vrot.lane.b32.xlu0 %v4614, 112
  %v5436 = vpop.permute.xlu0 %5435
  %5437 = vrot.lane.b32.xlu0 %v4615, 112
  %v5438 = vpop.permute.xlu0 %5437
  %5439 = vrot.lane.b32.xlu0 %v4616, 112
  %v5440 = vpop.permute.xlu0 %5439
  %5441 = vrot.lane.b32.xlu0 %v4617, 112
  %v5442 = vpop.permute.xlu0 %5441
  %5443 = vrot.lane.b32.xlu0 %v4618, 112
  %v5444 = vpop.permute.xlu0 %5443
  %5445 = vrot.lane.b32.xlu0 %v4619, 112
  %v5446 = vpop.permute.xlu0 %5445
  %5447 = vrot.lane.b32.xlu0 %v4620, 112
  %v5448 = vpop.permute.xlu0 %5447
  %5449 = vrot.lane.b32.xlu0 %v4621, 112
  %v5450 = vpop.permute.xlu0 %5449
  %5451 = vrot.lane.b32.xlu0 %v4622, 112
  %v5452 = vpop.permute.xlu0 %5451
  %5453 = vrot.lane.b32.xlu0 %v4623, 112
  %v5454 = vpop.permute.xlu0 %5453
  %5455 = vrot.lane.b32.xlu0 %v4624, 112
  %v5456 = vpop.permute.xlu0 %5455
  %5457 = vrot.lane.b32.xlu0 %v4625, 112
  %v5458 = vpop.permute.xlu0 %5457
  %5459 = vrot.lane.b32.xlu0 %v4626, 112
  %v5460 = vpop.permute.xlu0 %5459
  %5461 = vrot.lane.b32.xlu0 %v4627, 112
  %v5462 = vpop.permute.xlu0 %5461
  %5463 = vrot.lane.b32.xlu0 %v4628, 112
  %v5464 = vpop.permute.xlu0 %5463
  %5465 = vrot.lane.b32.xlu0 %v4629, 112
  %v5466 = vpop.permute.xlu0 %5465
  %5467 = vrot.lane.b32.xlu0 %v4630, 112
  %v5468 = vpop.permute.xlu0 %5467
  %5469 = vrot.lane.b32.xlu0 %v4631, 112
  %v5470 = vpop.permute.xlu0 %5469
  %5471 = vrot.lane.b32.xlu0 %v4632, 112
  %v5472 = vpop.permute.xlu0 %5471
  %5473 = vrot.lane.b32.xlu0 %v4633, 112
  %v5474 = vpop.permute.xlu0 %5473
  %5475 = vrot.lane.b32.xlu0 %v4634, 112
  %v5476 = vpop.permute.xlu0 %5475
  %5477 = vrot.lane.b32.xlu0 %v4635, 112
  %v5478 = vpop.permute.xlu0 %5477
  %5479 = vrot.lane.b32.xlu0 %v4636, 112
  %v5480 = vpop.permute.xlu0 %5479
  %5481 = vrot.lane.b32.xlu0 %v4637, 112
  %v5482 = vpop.permute.xlu0 %5481
  %5483 = vrot.lane.b32.xlu0 %v4638, 112
  %v5484 = vpop.permute.xlu0 %5483
  %5485 = vrot.lane.b32.xlu0 %v4639, 112
  %v5486 = vpop.permute.xlu0 %5485
  %5487 = vrot.lane.b32.xlu0 %v4640, 112
  %v5488 = vpop.permute.xlu0 %5487
  %5489 = vrot.lane.b32.xlu0 %v4641, 112
  %v5490 = vpop.permute.xlu0 %5489
  %5491 = vrot.lane.b32.xlu0 %v4642, 112
  %v5492 = vpop.permute.xlu0 %5491
  %5493 = vrot.lane.b32.xlu0 %v4643, 112
  %v5494 = vpop.permute.xlu0 %5493
  %5495 = vrot.lane.b32.xlu0 %v4644, 112
  %v5496 = vpop.permute.xlu0 %5495
  %5497 = vrot.lane.b32.xlu0 %v4645, 112
  %v5498 = vpop.permute.xlu0 %5497
  %5499 = vrot.lane.b32.xlu0 %v4646, 112
  %v5500 = vpop.permute.xlu0 %5499
  %5501 = vrot.lane.b32.xlu0 %v4647, 112
  %v5502 = vpop.permute.xlu0 %5501
  %5503 = vrot.lane.b32.xlu0 %v4648, 112
  %v5504 = vpop.permute.xlu0 %5503
  %5505 = vrot.lane.b32.xlu0 %v4649, 112
  %v5506 = vpop.permute.xlu0 %5505
  %5507 = vrot.lane.b32.xlu0 %v4650, 112
  %v5508 = vpop.permute.xlu0 %5507
  %5509 = vrot.lane.b32.xlu0 %v4651, 112
  %v5510 = vpop.permute.xlu0 %5509
  %5511 = vrot.lane.b32.xlu0 %v4652, 112
  %v5512 = vpop.permute.xlu0 %5511
  %5513 = vrot.lane.b32.xlu0 %v4653, 112
  %v5514 = vpop.permute.xlu0 %5513
  %5515 = vrot.lane.b32.xlu0 %v4654, 112
  %v5516 = vpop.permute.xlu0 %5515
  %5517 = vrot.lane.b32.xlu0 %v4655, 112
  %v5518 = vpop.permute.xlu0 %5517
  %5519 = vrot.lane.b32.xlu0 %v4656, 112
  %v5520 = vpop.permute.xlu0 %5519
  %5521 = vrot.lane.b32.xlu0 %v4657, 112
  %v5522 = vpop.permute.xlu0 %5521
  %5523 = vrot.lane.b32.xlu0 %v4658, 112
  %v5524 = vpop.permute.xlu0 %5523
  %5525 = vrot.lane.b32.xlu0 %v4659, 112
  %v5526 = vpop.permute.xlu0 %5525
  %5527 = vrot.lane.b32.xlu0 %v4660, 112
  %v5528 = vpop.permute.xlu0 %5527
  %5529 = vrot.lane.b32.xlu0 %v4661, 112
  %v5530 = vpop.permute.xlu0 %5529
  %5531 = vrot.lane.b32.xlu0 %v4662, 112
  %v5532 = vpop.permute.xlu0 %5531
  %5533 = vrot.lane.b32.xlu0 %v4663, 112
  %v5534 = vpop.permute.xlu0 %5533
  %5535 = vrot.lane.b32.xlu0 %v4664, 112
  %v5536 = vpop.permute.xlu0 %5535
  %5537 = vrot.lane.b32.xlu0 %v4665, 112
  %v5538 = vpop.permute.xlu0 %5537
  %5539 = vrot.lane.b32.xlu0 %v4666, 112
  %v5540 = vpop.permute.xlu0 %5539
  %5541 = vrot.lane.b32.xlu0 %v4667, 112
  %v5542 = vpop.permute.xlu0 %5541
  %5543 = vrot.lane.b32.xlu0 %v4668, 112
  %v5544 = vpop.permute.xlu0 %5543
  %5545 = vrot.lane.b32.xlu0 %v4669, 112
  %v5546 = vpop.permute.xlu0 %5545
  %5547 = vrot.lane.b32.xlu0 %v4670, 112
  %v5548 = vpop.permute.xlu0 %5547
  %5549 = vrot.lane.b32.xlu0 %v4671, 112
  %v5550 = vpop.permute.xlu0 %5549
  %5551 = vrot.lane.b32.xlu0 %v4672, 112
  %v5552 = vpop.permute.xlu0 %5551
  %5553 = vrot.lane.b32.xlu0 %v4673, 112
  %v5554 = vpop.permute.xlu0 %5553
  %5555 = vrot.lane.b32.xlu0 %v4674, 112
  %v5556 = vpop.permute.xlu0 %5555
  %5557 = vrot.lane.b32.xlu0 %v4675, 112
  %v5558 = vpop.permute.xlu0 %5557
  %5559 = vrot.lane.b32.xlu0 %v4676, 112
  %v5560 = vpop.permute.xlu0 %5559
  %5561 = vrot.lane.b32.xlu0 %v4677, 112
  %v5562 = vpop.permute.xlu0 %5561
  %5563 = vrot.lane.b32.xlu0 %v4678, 112
  %v5564 = vpop.permute.xlu0 %5563
  %5565 = vrot.lane.b32.xlu0 %v4679, 112
  %v5566 = vpop.permute.xlu0 %5565
  %5567 = vrot.lane.b32.xlu0 %v4680, 112
  %v5568 = vpop.permute.xlu0 %5567
  %5569 = vrot.lane.b32.xlu0 %v4681, 112
  %v5570 = vpop.permute.xlu0 %5569
  %5571 = vrot.lane.b32.xlu0 %v4682, 112
  %v5572 = vpop.permute.xlu0 %5571
  %5573 = vrot.lane.b32.xlu0 %v4683, 112
  %v5574 = vpop.permute.xlu0 %5573
  %5575 = vrot.lane.b32.xlu0 %v4684, 112
  %v5576 = vpop.permute.xlu0 %5575
  %5577 = vrot.lane.b32.xlu0 %v4685, 112
  %v5578 = vpop.permute.xlu0 %5577
  %5579 = vrot.lane.b32.xlu0 %v4686, 112
  %v5580 = vpop.permute.xlu0 %5579
  %5581 = vrot.lane.b32.xlu0 %v4687, 112
  %v5582 = vpop.permute.xlu0 %5581
  %5583 = vrot.lane.b32.xlu0 %v4688, 112
  %v5584 = vpop.permute.xlu0 %5583
  %5585 = vrot.lane.b32.xlu0 %v4689, 112
  %v5586 = vpop.permute.xlu0 %5585
  %5587 = vrot.lane.b32.xlu0 %v4690, 112
  %v5588 = vpop.permute.xlu0 %5587
  %5589 = vrot.lane.b32.xlu0 %v4691, 112
  %v5590 = vpop.permute.xlu0 %5589
  %5591 = vrot.lane.b32.xlu0 %v4692, 112
  %v5592 = vpop.permute.xlu0 %5591
  %5593 = vrot.lane.b32.xlu0 %v4693, 112
  %v5594 = vpop.permute.xlu0 %5593
  %5595 = vrot.lane.b32.xlu0 %v4694, 112
  %v5596 = vpop.permute.xlu0 %5595
  %5597 = vrot.lane.b32.xlu0 %v4695, 112
  %v5598 = vpop.permute.xlu0 %5597
  %5599 = vrot.lane.b32.xlu0 %v4696, 112
  %v5600 = vpop.permute.xlu0 %5599
  %5601 = vrot.lane.b32.xlu0 %v4697, 112
  %v5602 = vpop.permute.xlu0 %5601
  %5603 = vrot.lane.b32.xlu0 %v4698, 112
  %v5604 = vpop.permute.xlu0 %5603
  %5605 = vrot.lane.b32.xlu0 %v4699, 112
  %v5606 = vpop.permute.xlu0 %5605
  %5607 = vrot.lane.b32.xlu0 %v4700, 112
  %v5608 = vpop.permute.xlu0 %5607
  %5609 = vrot.lane.b32.xlu0 %v4701, 112
  %v5610 = vpop.permute.xlu0 %5609
  %5611 = vrot.lane.b32.xlu0 %v4702, 112
  %v5612 = vpop.permute.xlu0 %5611
  %5613 = vrot.lane.b32.xlu0 %v4703, 112
  %v5614 = vpop.permute.xlu0 %5613
  %5615 = vrot.lane.b32.xlu0 %v4704, 112
  %v5616 = vpop.permute.xlu0 %5615
  %5617 = vrot.lane.b32.xlu0 %v4705, 112
  %v5618 = vpop.permute.xlu0 %5617
  %5619 = vrot.lane.b32.xlu0 %v4706, 112
  %v5620 = vpop.permute.xlu0 %5619
  %5621 = vrot.lane.b32.xlu0 %v4707, 112
  %v5622 = vpop.permute.xlu0 %5621
  %5623 = vrot.lane.b32.xlu0 %v4708, 112
  %v5624 = vpop.permute.xlu0 %5623
  %5625 = vrot.lane.b32.xlu0 %v4709, 112
  %v5626 = vpop.permute.xlu0 %5625
  %5627 = vrot.lane.b32.xlu0 %v4710, 112
  %v5628 = vpop.permute.xlu0 %5627
  %5629 = vrot.lane.b32.xlu0 %v4711, 112
  %v5630 = vpop.permute.xlu0 %5629
  %5631 = vrot.lane.b32.xlu0 %v4712, 112
  %v5632 = vpop.permute.xlu0 %5631
  %5633 = vrot.lane.b32.xlu0 %v4713, 112
  %v5634 = vpop.permute.xlu0 %5633
  %5635 = vrot.lane.b32.xlu0 %v4714, 112
  %v5636 = vpop.permute.xlu0 %5635
  %5637 = vrot.lane.b32.xlu0 %v4715, 112
  %v5638 = vpop.permute.xlu0 %5637
  %5639 = vrot.lane.b32.xlu0 %v4716, 112
  %v5640 = vpop.permute.xlu0 %5639
  %5641 = vrot.lane.b32.xlu0 %v4717, 112
  %v5642 = vpop.permute.xlu0 %5641
  %5643 = vrot.lane.b32.xlu0 %v4718, 112
  %v5644 = vpop.permute.xlu0 %5643
  %5645 = vrot.lane.b32.xlu0 %v4719, 112
  %v5646 = vpop.permute.xlu0 %5645
  %5647 = vrot.lane.b32.xlu0 %v4720, 112
  %v5648 = vpop.permute.xlu0 %5647
  %5649 = vrot.lane.b32.xlu0 %v4721, 112
  %v5650 = vpop.permute.xlu0 %5649
  %5651 = vrot.lane.b32.xlu0 %v4722, 112
  %v5652 = vpop.permute.xlu0 %5651
  %5653 = vrot.lane.b32.xlu0 %v4723, 112
  %v5654 = vpop.permute.xlu0 %5653
  %5655 = vrot.lane.b32.xlu0 %v4724, 112
  %v5656 = vpop.permute.xlu0 %5655
  %5657 = vrot.lane.b32.xlu0 %v4725, 112
  %v5658 = vpop.permute.xlu0 %5657
  %5659 = vrot.lane.b32.xlu0 %v4726, 112
  %v5660 = vpop.permute.xlu0 %5659
  %5661 = vrot.lane.b32.xlu0 %v4727, 112
  %v5662 = vpop.permute.xlu0 %5661
  %5663 = vrot.lane.b32.xlu0 %v4728, 112
  %v5664 = vpop.permute.xlu0 %5663
  %5665 = vrot.lane.b32.xlu0 %v4729, 112
  %v5666 = vpop.permute.xlu0 %5665
  %5667 = vrot.lane.b32.xlu0 %v4730, 112
  %v5668 = vpop.permute.xlu0 %5667
  %5669 = vrot.lane.b32.xlu0 %v4731, 112
  %v5670 = vpop.permute.xlu0 %5669
  %5671 = vrot.lane.b32.xlu0 %v4732, 112
  %v5672 = vpop.permute.xlu0 %5671
  %5673 = vrot.lane.b32.xlu0 %v4733, 112
  %v5674 = vpop.permute.xlu0 %5673
  %5675 = vrot.lane.b32.xlu0 %v4734, 112
  %v5676 = vpop.permute.xlu0 %5675
  %5677 = vrot.lane.b32.xlu0 %v4735, 112
  %v5678 = vpop.permute.xlu0 %5677
  %5679 = vrot.lane.b32.xlu0 %v4736, 112
  %v5680 = vpop.permute.xlu0 %5679
  %5681 = vrot.lane.b32.xlu0 %v4737, 112
  %v5682 = vpop.permute.xlu0 %5681
  %5683 = vrot.lane.b32.xlu0 %v4738, 112
  %v5684 = vpop.permute.xlu0 %5683
  %5685 = vrot.lane.b32.xlu0 %v4739, 112
  %v5686 = vpop.permute.xlu0 %5685
  %5687 = vrot.lane.b32.xlu0 %v4740, 112
  %v5688 = vpop.permute.xlu0 %5687
  %5689 = vrot.lane.b32.xlu0 %v4741, 112
  %v5690 = vpop.permute.xlu0 %5689
  %5691 = vrot.lane.b32.xlu0 %v4742, 112
  %v5692 = vpop.permute.xlu0 %5691
  %5693 = vrot.lane.b32.xlu0 %v4743, 112
  %v5694 = vpop.permute.xlu0 %5693
  %5695 = vrot.lane.b32.xlu0 %v4744, 112
  %v5696 = vpop.permute.xlu0 %5695
  %5697 = vrot.lane.b32.xlu0 %v4745, 112
  %v5698 = vpop.permute.xlu0 %5697
  %5699 = vrot.lane.b32.xlu0 %v4746, 112
  %v5700 = vpop.permute.xlu0 %5699
  %5701 = vrot.lane.b32.xlu0 %v4747, 112
  %v5702 = vpop.permute.xlu0 %5701
  %5703 = vrot.lane.b32.xlu0 %v4748, 112
  %v5704 = vpop.permute.xlu0 %5703
  %5705 = vrot.lane.b32.xlu0 %v4749, 112
  %v5706 = vpop.permute.xlu0 %5705
  %5707 = vrot.lane.b32.xlu0 %v4750, 112
  %v5708 = vpop.permute.xlu0 %5707
  %5709 = vrot.lane.b32.xlu0 %v4751, 112
  %v5710 = vpop.permute.xlu0 %5709
  %5711 = vrot.lane.b32.xlu0 %v4752, 112
  %v5712 = vpop.permute.xlu0 %5711
  %5713 = vrot.lane.b32.xlu0 %v4753, 112
  %v5714 = vpop.permute.xlu0 %5713
  %5715 = vrot.lane.b32.xlu0 %v4754, 112
  %v5716 = vpop.permute.xlu0 %5715
  %5717 = vrot.lane.b32.xlu0 %v4755, 112
  %v5718 = vpop.permute.xlu0 %5717
  %5719 = vrot.lane.b32.xlu0 %v4756, 112
  %v5720 = vpop.permute.xlu0 %5719
  %5721 = vrot.lane.b32.xlu0 %v4757, 112
  %v5722 = vpop.permute.xlu0 %5721
  %5723 = vrot.lane.b32.xlu0 %v4758, 112
  %v5724 = vpop.permute.xlu0 %5723
  %5725 = vrot.lane.b32.xlu0 %v4759, 112
  %v5726 = vpop.permute.xlu0 %5725
  %5727 = vrot.lane.b32.xlu0 %v4760, 112
  %v5728 = vpop.permute.xlu0 %5727
  %5729 = vrot.lane.b32.xlu0 %v4761, 112
  %v5730 = vpop.permute.xlu0 %5729
  %5731 = vrot.lane.b32.xlu0 %v4762, 112
  %v5732 = vpop.permute.xlu0 %5731
  %5733 = vrot.lane.b32.xlu0 %v4763, 112
  %v5734 = vpop.permute.xlu0 %5733
  %5735 = vrot.lane.b32.xlu0 %v4764, 112
  %v5736 = vpop.permute.xlu0 %5735
  %5737 = vrot.lane.b32.xlu0 %v4765, 112
  %v5738 = vpop.permute.xlu0 %5737
  %5739 = vrot.lane.b32.xlu0 %v4766, 112
  %v5740 = vpop.permute.xlu0 %5739
  %5741 = vrot.lane.b32.xlu0 %v4767, 112
  %v5742 = vpop.permute.xlu0 %5741
  %5743 = vrot.lane.b32.xlu0 %v4768, 112
  %v5744 = vpop.permute.xlu0 %5743
  %5745 = vrot.lane.b32.xlu0 %v4769, 112
  %v5746 = vpop.permute.xlu0 %5745
  %5747 = vrot.lane.b32.xlu0 %v4770, 112
  %v5748 = vpop.permute.xlu0 %5747
  %5749 = vrot.lane.b32.xlu0 %v4771, 112
  %v5750 = vpop.permute.xlu0 %5749
  %5751 = vrot.lane.b32.xlu0 %v4772, 112
  %v5752 = vpop.permute.xlu0 %5751
  %5753 = vrot.lane.b32.xlu0 %v4773, 112
  %v5754 = vpop.permute.xlu0 %5753
  %5755 = vrot.lane.b32.xlu0 %v4774, 112
  %v5756 = vpop.permute.xlu0 %5755
  %5757 = vrot.lane.b32.xlu0 %v4775, 112
  %v5758 = vpop.permute.xlu0 %5757
  %5759 = vrot.lane.b32.xlu0 %v4776, 112
  %v5760 = vpop.permute.xlu0 %5759
  %5761 = vrot.lane.b32.xlu0 %v4777, 112
  %v5762 = vpop.permute.xlu0 %5761
  %5763 = vrot.lane.b32.xlu0 %v4778, 112
  %v5764 = vpop.permute.xlu0 %5763
  %5765 = vrot.lane.b32.xlu0 %v4779, 112
  %v5766 = vpop.permute.xlu0 %5765
  %5767 = vrot.lane.b32.xlu0 %v4780, 112
  %v5768 = vpop.permute.xlu0 %5767
  %5769 = vrot.lane.b32.xlu0 %v4781, 112
  %v5770 = vpop.permute.xlu0 %5769
  %5771 = vrot.lane.b32.xlu0 %v4782, 112
  %v5772 = vpop.permute.xlu0 %5771
  %5773 = vrot.lane.b32.xlu0 %v4783, 112
  %v5774 = vpop.permute.xlu0 %5773
  %5775 = vrot.lane.b32.xlu0 %v4784, 112
  %v5776 = vpop.permute.xlu0 %5775
  %5777 = vrot.lane.b32.xlu0 %v4785, 112
  %v5778 = vpop.permute.xlu0 %5777
  %5779 = vrot.lane.b32.xlu0 %v4786, 112
  %v5780 = vpop.permute.xlu0 %5779
  %5781 = vrot.lane.b32.xlu0 %v4787, 112
  %v5782 = vpop.permute.xlu0 %5781
  %5783 = vrot.lane.b32.xlu0 %v4788, 112
  %v5784 = vpop.permute.xlu0 %5783
  %5785 = vrot.lane.b32.xlu0 %v4789, 112
  %v5786 = vpop.permute.xlu0 %5785
  %5787 = vrot.lane.b32.xlu0 %v4790, 112
  %v5788 = vpop.permute.xlu0 %5787
  %5789 = vrot.lane.b32.xlu0 %v4791, 112
  %v5790 = vpop.permute.xlu0 %5789
  %5791 = vrot.lane.b32.xlu0 %v4792, 112
  %v5792 = vpop.permute.xlu0 %5791
  %5793 = vrot.lane.b32.xlu0 %v4793, 112
  %v5794 = vpop.permute.xlu0 %5793
  %5795 = vrot.lane.b32.xlu0 %v4794, 112
  %v5796 = vpop.permute.xlu0 %5795
  %5797 = vrot.lane.b32.xlu0 %v4795, 112
  %v5798 = vpop.permute.xlu0 %5797
  %5799 = vrot.lane.b32.xlu0 %v4796, 112
  %v5800 = vpop.permute.xlu0 %5799
  %5801 = vrot.lane.b32.xlu0 %v4797, 112
  %v5802 = vpop.permute.xlu0 %5801
  %5803 = vrot.lane.b32.xlu0 %v4798, 112
  %v5804 = vpop.permute.xlu0 %5803
  %5805 = vrot.lane.b32.xlu0 %v4799, 112
  %v5806 = vpop.permute.xlu0 %5805
  %5807 = vrot.lane.b32.xlu0 %v4800, 112
  %v5808 = vpop.permute.xlu0 %5807
  %5809 = vrot.lane.b32.xlu0 %v4801, 112
  %v5810 = vpop.permute.xlu0 %5809
  %5811 = vrot.lane.b32.xlu0 %v4802, 112
  %v5812 = vpop.permute.xlu0 %5811
  %5813 = vrot.lane.b32.xlu0 %v4803, 112
  %v5814 = vpop.permute.xlu0 %5813
  %5815 = vrot.lane.b32.xlu0 %v4804, 112
  %v5816 = vpop.permute.xlu0 %5815
  %5817 = vrot.lane.b32.xlu0 %v4805, 112
  %v5818 = vpop.permute.xlu0 %5817
  %5819 = vrot.lane.b32.xlu0 %v4806, 112
  %v5820 = vpop.permute.xlu0 %5819
  %v6159 = vmax.f32 %v4469, %v5146
  %v6160 = vmax.f32 %v4470, %v5148
  %v6161 = vmax.f32 %v4471, %v5150
  %v6162 = vmax.f32 %v4472, %v5152
  %v6163 = vmax.f32 %v4473, %v5154
  %v6164 = vmax.f32 %v4474, %v5156
  %v6165 = vmax.f32 %v4475, %v5158
  %v6166 = vmax.f32 %v4476, %v5160
  %v6167 = vmax.f32 %v4477, %v5162
  %v6168 = vmax.f32 %v4478, %v5164
  %v6169 = vmax.f32 %v4479, %v5166
  %v6170 = vmax.f32 %v4480, %v5168
  %v6171 = vmax.f32 %v4481, %v5170
  %v6172 = vmax.f32 %v4482, %v5172
  %v6173 = vmax.f32 %v4483, %v5174
  %v6174 = vmax.f32 %v4484, %v5176
  %v6175 = vmax.f32 %v4485, %v5178
  %v6176 = vmax.f32 %v4486, %v5180
  %v6177 = vmax.f32 %v4487, %v5182
  %v6178 = vmax.f32 %v4488, %v5184
  %v6179 = vmax.f32 %v4489, %v5186
  %v6180 = vmax.f32 %v4490, %v5188
  %v6181 = vmax.f32 %v4491, %v5190
  %v6182 = vmax.f32 %v4492, %v5192
  %v6183 = vmax.f32 %v4493, %v5194
  %v6184 = vmax.f32 %v4494, %v5196
  %v6185 = vmax.f32 %v4495, %v5198
  %v6186 = vmax.f32 %v4496, %v5200
  %v6187 = vmax.f32 %v4497, %v5202
  %v6188 = vmax.f32 %v4498, %v5204
  %v6189 = vmax.f32 %v4499, %v5206
  %v6190 = vmax.f32 %v4500, %v5208
  %v6191 = vmax.f32 %v4501, %v5210
  %v6192 = vmax.f32 %v4502, %v5212
  %v6193 = vmax.f32 %v4503, %v5214
  %v6194 = vmax.f32 %v4504, %v5216
  %v6195 = vmax.f32 %v4505, %v5218
  %v6196 = vmax.f32 %v4506, %v5220
  %v6197 = vmax.f32 %v4507, %v5222
  %v6198 = vmax.f32 %v4508, %v5224
  %v6199 = vmax.f32 %v4509, %v5226
  %v6200 = vmax.f32 %v4510, %v5228
  %v6201 = vmax.f32 %v4511, %v5230
  %v6202 = vmax.f32 %v4512, %v5232
  %v6203 = vmax.f32 %v4513, %v5234
  %v6204 = vmax.f32 %v4514, %v5236
  %v6205 = vmax.f32 %v4515, %v5238
  %v6206 = vmax.f32 %v4516, %v5240
  %v6207 = vmax.f32 %v4517, %v5242
  %v6208 = vmax.f32 %v4518, %v5244
  %v6209 = vmax.f32 %v4519, %v5246
  %v6210 = vmax.f32 %v4520, %v5248
  %v6211 = vmax.f32 %v4521, %v5250
  %v6212 = vmax.f32 %v4522, %v5252
  %v6213 = vmax.f32 %v4523, %v5254
  %v6214 = vmax.f32 %v4524, %v5256
  %v6215 = vmax.f32 %v4525, %v5258
  %v6216 = vmax.f32 %v4526, %v5260
  %v6217 = vmax.f32 %v4527, %v5262
  %v6218 = vmax.f32 %v4528, %v5264
  %v6219 = vmax.f32 %v4529, %v5266
  %v6220 = vmax.f32 %v4530, %v5268
  %v6221 = vmax.f32 %v4531, %v5270
  %v6222 = vmax.f32 %v4532, %v5272
  %v6223 = vmax.f32 %v4533, %v5274
  %v6224 = vmax.f32 %v4534, %v5276
  %v6225 = vmax.f32 %v4535, %v5278
  %v6226 = vmax.f32 %v4536, %v5280
  %v6227 = vmax.f32 %v4537, %v5282
  %v6228 = vmax.f32 %v4538, %v5284
  %v6229 = vmax.f32 %v4539, %v5286
  %v6230 = vmax.f32 %v4540, %v5288
  %v6231 = vmax.f32 %v4541, %v5290
  %v6232 = vmax.f32 %v4542, %v5292
  %v6233 = vmax.f32 %v4543, %v5294
  %v6234 = vmax.f32 %v4544, %v5296
  %v6235 = vmax.f32 %v4545, %v5298
  %v6236 = vmax.f32 %v4546, %v5300
  %v6237 = vmax.f32 %v4547, %v5302
  %v6238 = vmax.f32 %v4548, %v5304
  %v6239 = vmax.f32 %v4549, %v5306
  %v6240 = vmax.f32 %v4550, %v5308
  %v6241 = vmax.f32 %v4551, %v5310
  %v6242 = vmax.f32 %v4552, %v5312
  %v6243 = vmax.f32 %v4553, %v5314
  %v6244 = vmax.f32 %v4554, %v5316
  %v6245 = vmax.f32 %v4555, %v5318
  %v6246 = vmax.f32 %v4556, %v5320
  %v6247 = vmax.f32 %v4557, %v5322
  %v6248 = vmax.f32 %v4558, %v5324
  %v6249 = vmax.f32 %v4559, %v5326
  %v6250 = vmax.f32 %v4560, %v5328
  %v6251 = vmax.f32 %v4561, %v5330
  %v6252 = vmax.f32 %v4562, %v5332
  %v6253 = vmax.f32 %v4563, %v5334
  %v6254 = vmax.f32 %v4564, %v5336
  %v6255 = vmax.f32 %v4565, %v5338
  %v6256 = vmax.f32 %v4566, %v5340
  %v6257 = vmax.f32 %v4567, %v5342
  %v6258 = vmax.f32 %v4568, %v5344
  %v6259 = vmax.f32 %v4569, %v5346
  %v6260 = vmax.f32 %v4570, %v5348
  %v6261 = vmax.f32 %v4571, %v5350
  %v6262 = vmax.f32 %v4572, %v5352
  %v6263 = vmax.f32 %v4573, %v5354
  %v6264 = vmax.f32 %v4574, %v5356
  %v6265 = vmax.f32 %v4575, %v5358
  %v6266 = vmax.f32 %v4576, %v5360
  %v6267 = vmax.f32 %v4577, %v5362
  %v6268 = vmax.f32 %v4578, %v5364
  %v6269 = vmax.f32 %v4579, %v5366
  %v6270 = vmax.f32 %v4580, %v5368
  %v6271 = vmax.f32 %v4581, %v5370
  %v6272 = vmax.f32 %v4582, %v5372
  %v6273 = vmax.f32 %v4583, %v5374
  %v6274 = vmax.f32 %v4584, %v5376
  %v6275 = vmax.f32 %v4585, %v5378
  %v6276 = vmax.f32 %v4586, %v5380
  %v6277 = vmax.f32 %v4587, %v5382
  %v6278 = vmax.f32 %v4588, %v5384
  %v6279 = vmax.f32 %v4589, %v5386
  %v6280 = vmax.f32 %v4590, %v5388
  %v6281 = vmax.f32 %v4591, %v5390
  %v6282 = vmax.f32 %v4592, %v5392
  %v6283 = vmax.f32 %v4593, %v5394
  %v6284 = vmax.f32 %v4594, %v5396
  %v6285 = vmax.f32 %v4595, %v5398
  %v6286 = vmax.f32 %v4596, %v5400
  %v6287 = vmax.f32 %v4597, %v5402
  %v6288 = vmax.f32 %v4598, %v5404
  %v6289 = vmax.f32 %v4599, %v5406
  %v6290 = vmax.f32 %v4600, %v5408
  %v6291 = vmax.f32 %v4601, %v5410
  %v6292 = vmax.f32 %v4602, %v5412
  %v6293 = vmax.f32 %v4603, %v5414
  %v6294 = vmax.f32 %v4604, %v5416
  %v6295 = vmax.f32 %v4605, %v5418
  %v6296 = vmax.f32 %v4606, %v5420
  %v6297 = vmax.f32 %v4607, %v5422
  %v6298 = vmax.f32 %v4608, %v5424
  %v6299 = vmax.f32 %v4609, %v5426
  %v6300 = vmax.f32 %v4610, %v5428
  %v6301 = vmax.f32 %v4611, %v5430
  %v6302 = vmax.f32 %v4612, %v5432
  %v6303 = vmax.f32 %v4613, %v5434
  %v6304 = vmax.f32 %v4614, %v5436
  %v6305 = vmax.f32 %v4615, %v5438
  %v6306 = vmax.f32 %v4616, %v5440
  %v6307 = vmax.f32 %v4617, %v5442
  %v6308 = vmax.f32 %v4618, %v5444
  %v6309 = vmax.f32 %v4619, %v5446
  %v6310 = vmax.f32 %v4620, %v5448
  %v6311 = vmax.f32 %v4621, %v5450
  %v6312 = vmax.f32 %v4622, %v5452
  %v6313 = vmax.f32 %v4623, %v5454
  %v6314 = vmax.f32 %v4624, %v5456
  %v6315 = vmax.f32 %v4625, %v5458
  %v6316 = vmax.f32 %v4626, %v5460
  %v6317 = vmax.f32 %v4627, %v5462
  %v6318 = vmax.f32 %v4628, %v5464
  %v6319 = vmax.f32 %v4629, %v5466
  %v6320 = vmax.f32 %v4630, %v5468
  %v6321 = vmax.f32 %v4631, %v5470
  %v6322 = vmax.f32 %v4632, %v5472
  %v6323 = vmax.f32 %v4633, %v5474
  %v6324 = vmax.f32 %v4634, %v5476
  %v6325 = vmax.f32 %v4635, %v5478
  %v6326 = vmax.f32 %v4636, %v5480
  %v6327 = vmax.f32 %v4637, %v5482
  %v6328 = vmax.f32 %v4638, %v5484
  %v6329 = vmax.f32 %v4639, %v5486
  %v6330 = vmax.f32 %v4640, %v5488
  %v6331 = vmax.f32 %v4641, %v5490
  %v6332 = vmax.f32 %v4642, %v5492
  %v6333 = vmax.f32 %v4643, %v5494
  %v6334 = vmax.f32 %v4644, %v5496
  %v6335 = vmax.f32 %v4645, %v5498
  %v6336 = vmax.f32 %v4646, %v5500
  %v6337 = vmax.f32 %v4647, %v5502
  %v6338 = vmax.f32 %v4648, %v5504
  %v6339 = vmax.f32 %v4649, %v5506
  %v6340 = vmax.f32 %v4650, %v5508
  %v6341 = vmax.f32 %v4651, %v5510
  %v6342 = vmax.f32 %v4652, %v5512
  %v6343 = vmax.f32 %v4653, %v5514
  %v6344 = vmax.f32 %v4654, %v5516
  %v6345 = vmax.f32 %v4655, %v5518
  %v6346 = vmax.f32 %v4656, %v5520
  %v6347 = vmax.f32 %v4657, %v5522
  %v6348 = vmax.f32 %v4658, %v5524
  %v6349 = vmax.f32 %v4659, %v5526
  %v6350 = vmax.f32 %v4660, %v5528
  %v6351 = vmax.f32 %v4661, %v5530
  %v6352 = vmax.f32 %v4662, %v5532
  %v6353 = vmax.f32 %v4663, %v5534
  %v6354 = vmax.f32 %v4664, %v5536
  %v6355 = vmax.f32 %v4665, %v5538
  %v6356 = vmax.f32 %v4666, %v5540
  %v6357 = vmax.f32 %v4667, %v5542
  %v6358 = vmax.f32 %v4668, %v5544
  %v6359 = vmax.f32 %v4669, %v5546
  %v6360 = vmax.f32 %v4670, %v5548
  %v6361 = vmax.f32 %v4671, %v5550
  %v6362 = vmax.f32 %v4672, %v5552
  %v6363 = vmax.f32 %v4673, %v5554
  %v6364 = vmax.f32 %v4674, %v5556
  %v6365 = vmax.f32 %v4675, %v5558
  %v6366 = vmax.f32 %v4676, %v5560
  %v6367 = vmax.f32 %v4677, %v5562
  %v6368 = vmax.f32 %v4678, %v5564
  %v6369 = vmax.f32 %v4679, %v5566
  %v6370 = vmax.f32 %v4680, %v5568
  %v6371 = vmax.f32 %v4681, %v5570
  %v6372 = vmax.f32 %v4682, %v5572
  %v6373 = vmax.f32 %v4683, %v5574
  %v6374 = vmax.f32 %v4684, %v5576
  %v6375 = vmax.f32 %v4685, %v5578
  %v6376 = vmax.f32 %v4686, %v5580
  %v6377 = vmax.f32 %v4687, %v5582
  %v6378 = vmax.f32 %v4688, %v5584
  %v6379 = vmax.f32 %v4689, %v5586
  %v6380 = vmax.f32 %v4690, %v5588
  %v6381 = vmax.f32 %v4691, %v5590
  %v6382 = vmax.f32 %v4692, %v5592
  %v6383 = vmax.f32 %v4693, %v5594
  %v6384 = vmax.f32 %v4694, %v5596
  %v6385 = vmax.f32 %v4695, %v5598
  %v6386 = vmax.f32 %v4696, %v5600
  %v6387 = vmax.f32 %v4697, %v5602
  %v6388 = vmax.f32 %v4698, %v5604
  %v6389 = vmax.f32 %v4699, %v5606
  %v6390 = vmax.f32 %v4700, %v5608
  %v6391 = vmax.f32 %v4701, %v5610
  %v6392 = vmax.f32 %v4702, %v5612
  %v6393 = vmax.f32 %v4703, %v5614
  %v6394 = vmax.f32 %v4704, %v5616
  %v6395 = vmax.f32 %v4705, %v5618
  %v6396 = vmax.f32 %v4706, %v5620
  %v6397 = vmax.f32 %v4707, %v5622
  %v6398 = vmax.f32 %v4708, %v5624
  %v6399 = vmax.f32 %v4709, %v5626
  %v6400 = vmax.f32 %v4710, %v5628
  %v6401 = vmax.f32 %v4711, %v5630
  %v6402 = vmax.f32 %v4712, %v5632
  %v6403 = vmax.f32 %v4713, %v5634
  %v6404 = vmax.f32 %v4714, %v5636
  %v6405 = vmax.f32 %v4715, %v5638
  %v6406 = vmax.f32 %v4716, %v5640
  %v6407 = vmax.f32 %v4717, %v5642
  %v6408 = vmax.f32 %v4718, %v5644
  %v6409 = vmax.f32 %v4719, %v5646
  %v6410 = vmax.f32 %v4720, %v5648
  %v6411 = vmax.f32 %v4721, %v5650
  %v6412 = vmax.f32 %v4722, %v5652
  %v6413 = vmax.f32 %v4723, %v5654
  %v6414 = vmax.f32 %v4724, %v5656
  %v6415 = vmax.f32 %v4725, %v5658
  %v6416 = vmax.f32 %v4726, %v5660
  %v6417 = vmax.f32 %v4727, %v5662
  %v6418 = vmax.f32 %v4728, %v5664
  %v6419 = vmax.f32 %v4729, %v5666
  %v6420 = vmax.f32 %v4730, %v5668
  %v6421 = vmax.f32 %v4731, %v5670
  %v6422 = vmax.f32 %v4732, %v5672
  %v6423 = vmax.f32 %v4733, %v5674
  %v6424 = vmax.f32 %v4734, %v5676
  %v6425 = vmax.f32 %v4735, %v5678
  %v6426 = vmax.f32 %v4736, %v5680
  %v6427 = vmax.f32 %v4737, %v5682
  %v6428 = vmax.f32 %v4738, %v5684
  %v6429 = vmax.f32 %v4739, %v5686
  %v6430 = vmax.f32 %v4740, %v5688
  %v6431 = vmax.f32 %v4741, %v5690
  %v6432 = vmax.f32 %v4742, %v5692
  %v6433 = vmax.f32 %v4743, %v5694
  %v6434 = vmax.f32 %v4744, %v5696
  %v6435 = vmax.f32 %v4745, %v5698
  %v6436 = vmax.f32 %v4746, %v5700
  %v6437 = vmax.f32 %v4747, %v5702
  %v6438 = vmax.f32 %v4748, %v5704
  %v6439 = vmax.f32 %v4749, %v5706
  %v6440 = vmax.f32 %v4750, %v5708
  %v6441 = vmax.f32 %v4751, %v5710
  %v6442 = vmax.f32 %v4752, %v5712
  %v6443 = vmax.f32 %v4753, %v5714
  %v6444 = vmax.f32 %v4754, %v5716
  %v6445 = vmax.f32 %v4755, %v5718
  %v6446 = vmax.f32 %v4756, %v5720
  %v6447 = vmax.f32 %v4757, %v5722
  %v6448 = vmax.f32 %v4758, %v5724
  %v6449 = vmax.f32 %v4759, %v5726
  %v6450 = vmax.f32 %v4760, %v5728
  %v6451 = vmax.f32 %v4761, %v5730
  %v6452 = vmax.f32 %v4762, %v5732
  %v6453 = vmax.f32 %v4763, %v5734
  %v6454 = vmax.f32 %v4764, %v5736
  %v6455 = vmax.f32 %v4765, %v5738
  %v6456 = vmax.f32 %v4766, %v5740
  %v6457 = vmax.f32 %v4767, %v5742
  %v6458 = vmax.f32 %v4768, %v5744
  %v6459 = vmax.f32 %v4769, %v5746
  %v6460 = vmax.f32 %v4770, %v5748
  %v6461 = vmax.f32 %v4771, %v5750
  %v6462 = vmax.f32 %v4772, %v5752
  %v6463 = vmax.f32 %v4773, %v5754
  %v6464 = vmax.f32 %v4774, %v5756
  %v6465 = vmax.f32 %v4775, %v5758
  %v6466 = vmax.f32 %v4776, %v5760
  %v6467 = vmax.f32 %v4777, %v5762
  %v6468 = vmax.f32 %v4778, %v5764
  %v6469 = vmax.f32 %v4779, %v5766
  %v6470 = vmax.f32 %v4780, %v5768
  %v6471 = vmax.f32 %v4781, %v5770
  %v6472 = vmax.f32 %v4782, %v5772
  %v6473 = vmax.f32 %v4783, %v5774
  %v6474 = vmax.f32 %v4784, %v5776
  %v6475 = vmax.f32 %v4785, %v5778
  %v6476 = vmax.f32 %v4786, %v5780
  %v6477 = vmax.f32 %v4787, %v5782
  %v6478 = vmax.f32 %v4788, %v5784
  %v6479 = vmax.f32 %v4789, %v5786
  %v6480 = vmax.f32 %v4790, %v5788
  %v6481 = vmax.f32 %v4791, %v5790
  %v6482 = vmax.f32 %v4792, %v5792
  %v6483 = vmax.f32 %v4793, %v5794
  %v6484 = vmax.f32 %v4794, %v5796
  %v6485 = vmax.f32 %v4795, %v5798
  %v6486 = vmax.f32 %v4796, %v5800
  %v6487 = vmax.f32 %v4797, %v5802
  %v6488 = vmax.f32 %v4798, %v5804
  %v6489 = vmax.f32 %v4799, %v5806
  %v6490 = vmax.f32 %v4800, %v5808
  %v6491 = vmax.f32 %v4801, %v5810
  %v6492 = vmax.f32 %v4802, %v5812
  %v6493 = vmax.f32 %v4803, %v5814
  %v6494 = vmax.f32 %v4804, %v5816
  %v6495 = vmax.f32 %v4805, %v5818
  %v6496 = vmax.f32 %v4806, %v5820
  %v6497 = vld [vmem:[%s2] sm:$0x1]
  %v6499 = vlaneseq
  %v6500 = vshrl.u32 %v6499, 7
  %v6501 = vsub.s32 0, %v6500
  %v6502 = vrot.slane %v6497, %v6501
  %v6504 = vadd.f32 %v6159, %v6502
  %v6505 = vadd.f32 %v6160, %v6502
  %v6506 = vadd.f32 %v6161, %v6502
  %v6507 = vadd.f32 %v6162, %v6502
  %v6508 = vadd.f32 %v6163, %v6502
  %v6509 = vadd.f32 %v6164, %v6502
  %v6510 = vadd.f32 %v6165, %v6502
  %v6511 = vadd.f32 %v6166, %v6502
  %v6512 = vadd.f32 %v6167, %v6502
  %v6513 = vadd.f32 %v6168, %v6502
  %v6514 = vadd.f32 %v6169, %v6502
  %v6515 = vadd.f32 %v6170, %v6502
  %v6516 = vadd.f32 %v6171, %v6502
  %v6517 = vadd.f32 %v6172, %v6502
  %v6518 = vadd.f32 %v6173, %v6502
  %v6519 = vadd.f32 %v6174, %v6502
  %v6520 = vadd.f32 %v6175, %v6502
  %v6521 = vadd.f32 %v6176, %v6502
  %v6522 = vadd.f32 %v6177, %v6502
  %v6523 = vadd.f32 %v6178, %v6502
  %v6524 = vadd.f32 %v6179, %v6502
  %v6525 = vadd.f32 %v6180, %v6502
  %v6526 = vadd.f32 %v6181, %v6502
  %v6527 = vadd.f32 %v6182, %v6502
  %v6528 = vadd.f32 %v6183, %v6502
  %v6529 = vadd.f32 %v6184, %v6502
  %v6530 = vadd.f32 %v6185, %v6502
  %v6531 = vadd.f32 %v6186, %v6502
  %v6532 = vadd.f32 %v6187, %v6502
  %v6533 = vadd.f32 %v6188, %v6502
  %v6534 = vadd.f32 %v6189, %v6502
  %v6535 = vadd.f32 %v6190, %v6502
  %v6536 = vadd.f32 %v6191, %v6502
  %v6537 = vadd.f32 %v6192, %v6502
  %v6538 = vadd.f32 %v6193, %v6502
  %v6539 = vadd.f32 %v6194, %v6502
  %v6540 = vadd.f32 %v6195, %v6502
  %v6541 = vadd.f32 %v6196, %v6502
  %v6542 = vadd.f32 %v6197, %v6502
  %v6543 = vadd.f32 %v6198, %v6502
  %v6544 = vadd.f32 %v6199, %v6502
  %v6545 = vadd.f32 %v6200, %v6502
  %v6546 = vadd.f32 %v6201, %v6502
  %v6547 = vadd.f32 %v6202, %v6502
  %v6548 = vadd.f32 %v6203, %v6502
  %v6549 = vadd.f32 %v6204, %v6502
  %v6550 = vadd.f32 %v6205, %v6502
  %v6551 = vadd.f32 %v6206, %v6502
  %v6552 = vadd.f32 %v6207, %v6502
  %v6553 = vadd.f32 %v6208, %v6502
  %v6554 = vadd.f32 %v6209, %v6502
  %v6555 = vadd.f32 %v6210, %v6502
  %v6556 = vadd.f32 %v6211, %v6502
  %v6557 = vadd.f32 %v6212, %v6502
  %v6558 = vadd.f32 %v6213, %v6502
  %v6559 = vadd.f32 %v6214, %v6502
  %v6560 = vadd.f32 %v6215, %v6502
  %v6561 = vadd.f32 %v6216, %v6502
  %v6562 = vadd.f32 %v6217, %v6502
  %v6563 = vadd.f32 %v6218, %v6502
  %v6564 = vadd.f32 %v6219, %v6502
  %v6565 = vadd.f32 %v6220, %v6502
  %v6566 = vadd.f32 %v6221, %v6502
  %v6567 = vadd.f32 %v6222, %v6502
  %v6568 = vadd.f32 %v6223, %v6502
  %v6569 = vadd.f32 %v6224, %v6502
  %v6570 = vadd.f32 %v6225, %v6502
  %v6571 = vadd.f32 %v6226, %v6502
  %v6572 = vadd.f32 %v6227, %v6502
  %v6573 = vadd.f32 %v6228, %v6502
  %v6574 = vadd.f32 %v6229, %v6502
  %v6575 = vadd.f32 %v6230, %v6502
  %v6576 = vadd.f32 %v6231, %v6502
  %v6577 = vadd.f32 %v6232, %v6502
  %v6578 = vadd.f32 %v6233, %v6502
  %v6579 = vadd.f32 %v6234, %v6502
  %v6580 = vadd.f32 %v6235, %v6502
  %v6581 = vadd.f32 %v6236, %v6502
  %v6582 = vadd.f32 %v6237, %v6502
  %v6583 = vadd.f32 %v6238, %v6502
  %v6584 = vadd.f32 %v6239, %v6502
  %v6585 = vadd.f32 %v6240, %v6502
  %v6586 = vadd.f32 %v6241, %v6502
  %v6587 = vadd.f32 %v6242, %v6502
  %v6588 = vadd.f32 %v6243, %v6502
  %v6589 = vadd.f32 %v6244, %v6502
  %v6590 = vadd.f32 %v6245, %v6502
  %v6591 = vadd.f32 %v6246, %v6502
  %v6592 = vadd.f32 %v6247, %v6502
  %v6593 = vadd.f32 %v6248, %v6502
  %v6594 = vadd.f32 %v6249, %v6502
  %v6595 = vadd.f32 %v6250, %v6502
  %v6596 = vadd.f32 %v6251, %v6502
  %v6597 = vadd.f32 %v6252, %v6502
  %v6598 = vadd.f32 %v6253, %v6502
  %v6599 = vadd.f32 %v6254, %v6502
  %v6600 = vadd.f32 %v6255, %v6502
  %v6601 = vadd.f32 %v6256, %v6502
  %v6602 = vadd.f32 %v6257, %v6502
  %v6603 = vadd.f32 %v6258, %v6502
  %v6604 = vadd.f32 %v6259, %v6502
  %v6605 = vadd.f32 %v6260, %v6502
  %v6606 = vadd.f32 %v6261, %v6502
  %v6607 = vadd.f32 %v6262, %v6502
  %v6608 = vadd.f32 %v6263, %v6502
  %v6609 = vadd.f32 %v6264, %v6502
  %v6610 = vadd.f32 %v6265, %v6502
  %v6611 = vadd.f32 %v6266, %v6502
  %v6612 = vadd.f32 %v6267, %v6502
  %v6613 = vadd.f32 %v6268, %v6502
  %v6614 = vadd.f32 %v6269, %v6502
  %v6615 = vadd.f32 %v6270, %v6502
  %v6616 = vadd.f32 %v6271, %v6502
  %v6617 = vadd.f32 %v6272, %v6502
  %v6618 = vadd.f32 %v6273, %v6502
  %v6619 = vadd.f32 %v6274, %v6502
  %v6620 = vadd.f32 %v6275, %v6502
  %v6621 = vadd.f32 %v6276, %v6502
  %v6622 = vadd.f32 %v6277, %v6502
  %v6623 = vadd.f32 %v6278, %v6502
  %v6624 = vadd.f32 %v6279, %v6502
  %v6625 = vadd.f32 %v6280, %v6502
  %v6626 = vadd.f32 %v6281, %v6502
  %v6627 = vadd.f32 %v6282, %v6502
  %v6628 = vadd.f32 %v6283, %v6502
  %v6629 = vadd.f32 %v6284, %v6502
  %v6630 = vadd.f32 %v6285, %v6502
  %v6631 = vadd.f32 %v6286, %v6502
  %v6632 = vadd.f32 %v6287, %v6502
  %v6633 = vadd.f32 %v6288, %v6502
  %v6634 = vadd.f32 %v6289, %v6502
  %v6635 = vadd.f32 %v6290, %v6502
  %v6636 = vadd.f32 %v6291, %v6502
  %v6637 = vadd.f32 %v6292, %v6502
  %v6638 = vadd.f32 %v6293, %v6502
  %v6639 = vadd.f32 %v6294, %v6502
  %v6640 = vadd.f32 %v6295, %v6502
  %v6641 = vadd.f32 %v6296, %v6502
  %v6642 = vadd.f32 %v6297, %v6502
  %v6643 = vadd.f32 %v6298, %v6502
  %v6644 = vadd.f32 %v6299, %v6502
  %v6645 = vadd.f32 %v6300, %v6502
  %v6646 = vadd.f32 %v6301, %v6502
  %v6647 = vadd.f32 %v6302, %v6502
  %v6648 = vadd.f32 %v6303, %v6502
  %v6649 = vadd.f32 %v6304, %v6502
  %v6650 = vadd.f32 %v6305, %v6502
  %v6651 = vadd.f32 %v6306, %v6502
  %v6652 = vadd.f32 %v6307, %v6502
  %v6653 = vadd.f32 %v6308, %v6502
  %v6654 = vadd.f32 %v6309, %v6502
  %v6655 = vadd.f32 %v6310, %v6502
  %v6656 = vadd.f32 %v6311, %v6502
  %v6657 = vadd.f32 %v6312, %v6502
  %v6658 = vadd.f32 %v6313, %v6502
  %v6659 = vadd.f32 %v6314, %v6502
  %v6660 = vadd.f32 %v6315, %v6502
  %v6661 = vadd.f32 %v6316, %v6502
  %v6662 = vadd.f32 %v6317, %v6502
  %v6663 = vadd.f32 %v6318, %v6502
  %v6664 = vadd.f32 %v6319, %v6502
  %v6665 = vadd.f32 %v6320, %v6502
  %v6666 = vadd.f32 %v6321, %v6502
  %v6667 = vadd.f32 %v6322, %v6502
  %v6668 = vadd.f32 %v6323, %v6502
  %v6669 = vadd.f32 %v6324, %v6502
  %v6670 = vadd.f32 %v6325, %v6502
  %v6671 = vadd.f32 %v6326, %v6502
  %v6672 = vadd.f32 %v6327, %v6502
  %v6673 = vadd.f32 %v6328, %v6502
  %v6674 = vadd.f32 %v6329, %v6502
  %v6675 = vadd.f32 %v6330, %v6502
  %v6676 = vadd.f32 %v6331, %v6502
  %v6677 = vadd.f32 %v6332, %v6502
  %v6678 = vadd.f32 %v6333, %v6502
  %v6679 = vadd.f32 %v6334, %v6502
  %v6680 = vadd.f32 %v6335, %v6502
  %v6681 = vadd.f32 %v6336, %v6502
  %v6682 = vadd.f32 %v6337, %v6502
  %v6683 = vadd.f32 %v6338, %v6502
  %v6684 = vadd.f32 %v6339, %v6502
  %v6685 = vadd.f32 %v6340, %v6502
  %v6686 = vadd.f32 %v6341, %v6502
  %v6687 = vadd.f32 %v6342, %v6502
  %v6688 = vadd.f32 %v6343, %v6502
  %v6689 = vadd.f32 %v6344, %v6502
  %v6690 = vadd.f32 %v6345, %v6502
  %v6691 = vadd.f32 %v6346, %v6502
  %v6692 = vadd.f32 %v6347, %v6502
  %v6693 = vadd.f32 %v6348, %v6502
  %v6694 = vadd.f32 %v6349, %v6502
  %v6695 = vadd.f32 %v6350, %v6502
  %v6696 = vadd.f32 %v6351, %v6502
  %v6697 = vadd.f32 %v6352, %v6502
  %v6698 = vadd.f32 %v6353, %v6502
  %v6699 = vadd.f32 %v6354, %v6502
  %v6700 = vadd.f32 %v6355, %v6502
  %v6701 = vadd.f32 %v6356, %v6502
  %v6702 = vadd.f32 %v6357, %v6502
  %v6703 = vadd.f32 %v6358, %v6502
  %v6704 = vadd.f32 %v6359, %v6502
  %v6705 = vadd.f32 %v6360, %v6502
  %v6706 = vadd.f32 %v6361, %v6502
  %v6707 = vadd.f32 %v6362, %v6502
  %v6708 = vadd.f32 %v6363, %v6502
  %v6709 = vadd.f32 %v6364, %v6502
  %v6710 = vadd.f32 %v6365, %v6502
  %v6711 = vadd.f32 %v6366, %v6502
  %v6712 = vadd.f32 %v6367, %v6502
  %v6713 = vadd.f32 %v6368, %v6502
  %v6714 = vadd.f32 %v6369, %v6502
  %v6715 = vadd.f32 %v6370, %v6502
  %v6716 = vadd.f32 %v6371, %v6502
  %v6717 = vadd.f32 %v6372, %v6502
  %v6718 = vadd.f32 %v6373, %v6502
  %v6719 = vadd.f32 %v6374, %v6502
  %v6720 = vadd.f32 %v6375, %v6502
  %v6721 = vadd.f32 %v6376, %v6502
  %v6722 = vadd.f32 %v6377, %v6502
  %v6723 = vadd.f32 %v6378, %v6502
  %v6724 = vadd.f32 %v6379, %v6502
  %v6725 = vadd.f32 %v6380, %v6502
  %v6726 = vadd.f32 %v6381, %v6502
  %v6727 = vadd.f32 %v6382, %v6502
  %v6728 = vadd.f32 %v6383, %v6502
  %v6729 = vadd.f32 %v6384, %v6502
  %v6730 = vadd.f32 %v6385, %v6502
  %v6731 = vadd.f32 %v6386, %v6502
  %v6732 = vadd.f32 %v6387, %v6502
  %v6733 = vadd.f32 %v6388, %v6502
  %v6734 = vadd.f32 %v6389, %v6502
  %v6735 = vadd.f32 %v6390, %v6502
  %v6736 = vadd.f32 %v6391, %v6502
  %v6737 = vadd.f32 %v6392, %v6502
  %v6738 = vadd.f32 %v6393, %v6502
  %v6739 = vadd.f32 %v6394, %v6502
  %v6740 = vadd.f32 %v6395, %v6502
  %v6741 = vadd.f32 %v6396, %v6502
  %v6742 = vadd.f32 %v6397, %v6502
  %v6743 = vadd.f32 %v6398, %v6502
  %v6744 = vadd.f32 %v6399, %v6502
  %v6745 = vadd.f32 %v6400, %v6502
  %v6746 = vadd.f32 %v6401, %v6502
  %v6747 = vadd.f32 %v6402, %v6502
  %v6748 = vadd.f32 %v6403, %v6502
  %v6749 = vadd.f32 %v6404, %v6502
  %v6750 = vadd.f32 %v6405, %v6502
  %v6751 = vadd.f32 %v6406, %v6502
  %v6752 = vadd.f32 %v6407, %v6502
  %v6753 = vadd.f32 %v6408, %v6502
  %v6754 = vadd.f32 %v6409, %v6502
  %v6755 = vadd.f32 %v6410, %v6502
  %v6756 = vadd.f32 %v6411, %v6502
  %v6757 = vadd.f32 %v6412, %v6502
  %v6758 = vadd.f32 %v6413, %v6502
  %v6759 = vadd.f32 %v6414, %v6502
  %v6760 = vadd.f32 %v6415, %v6502
  %v6761 = vadd.f32 %v6416, %v6502
  %v6762 = vadd.f32 %v6417, %v6502
  %v6763 = vadd.f32 %v6418, %v6502
  %v6764 = vadd.f32 %v6419, %v6502
  %v6765 = vadd.f32 %v6420, %v6502
  %v6766 = vadd.f32 %v6421, %v6502
  %v6767 = vadd.f32 %v6422, %v6502
  %v6768 = vadd.f32 %v6423, %v6502
  %v6769 = vadd.f32 %v6424, %v6502
  %v6770 = vadd.f32 %v6425, %v6502
  %v6771 = vadd.f32 %v6426, %v6502
  %v6772 = vadd.f32 %v6427, %v6502
  %v6773 = vadd.f32 %v6428, %v6502
  %v6774 = vadd.f32 %v6429, %v6502
  %v6775 = vadd.f32 %v6430, %v6502
  %v6776 = vadd.f32 %v6431, %v6502
  %v6777 = vadd.f32 %v6432, %v6502
  %v6778 = vadd.f32 %v6433, %v6502
  %v6779 = vadd.f32 %v6434, %v6502
  %v6780 = vadd.f32 %v6435, %v6502
  %v6781 = vadd.f32 %v6436, %v6502
  %v6782 = vadd.f32 %v6437, %v6502
  %v6783 = vadd.f32 %v6438, %v6502
  %v6784 = vadd.f32 %v6439, %v6502
  %v6785 = vadd.f32 %v6440, %v6502
  %v6786 = vadd.f32 %v6441, %v6502
  %v6787 = vadd.f32 %v6442, %v6502
  %v6788 = vadd.f32 %v6443, %v6502
  %v6789 = vadd.f32 %v6444, %v6502
  %v6790 = vadd.f32 %v6445, %v6502
  %v6791 = vadd.f32 %v6446, %v6502
  %v6792 = vadd.f32 %v6447, %v6502
  %v6793 = vadd.f32 %v6448, %v6502
  %v6794 = vadd.f32 %v6449, %v6502
  %v6795 = vadd.f32 %v6450, %v6502
  %v6796 = vadd.f32 %v6451, %v6502
  %v6797 = vadd.f32 %v6452, %v6502
  %v6798 = vadd.f32 %v6453, %v6502
  %v6799 = vadd.f32 %v6454, %v6502
  %v6800 = vadd.f32 %v6455, %v6502
  %v6801 = vadd.f32 %v6456, %v6502
  %v6802 = vadd.f32 %v6457, %v6502
  %v6803 = vadd.f32 %v6458, %v6502
  %v6804 = vadd.f32 %v6459, %v6502
  %v6805 = vadd.f32 %v6460, %v6502
  %v6806 = vadd.f32 %v6461, %v6502
  %v6807 = vadd.f32 %v6462, %v6502
  %v6808 = vadd.f32 %v6463, %v6502
  %v6809 = vadd.f32 %v6464, %v6502
  %v6810 = vadd.f32 %v6465, %v6502
  %v6811 = vadd.f32 %v6466, %v6502
  %v6812 = vadd.f32 %v6467, %v6502
  %v6813 = vadd.f32 %v6468, %v6502
  %v6814 = vadd.f32 %v6469, %v6502
  %v6815 = vadd.f32 %v6470, %v6502
  %v6816 = vadd.f32 %v6471, %v6502
  %v6817 = vadd.f32 %v6472, %v6502
  %v6818 = vadd.f32 %v6473, %v6502
  %v6819 = vadd.f32 %v6474, %v6502
  %v6820 = vadd.f32 %v6475, %v6502
  %v6821 = vadd.f32 %v6476, %v6502
  %v6822 = vadd.f32 %v6477, %v6502
  %v6823 = vadd.f32 %v6478, %v6502
  %v6824 = vadd.f32 %v6479, %v6502
  %v6825 = vadd.f32 %v6480, %v6502
  %v6826 = vadd.f32 %v6481, %v6502
  %v6827 = vadd.f32 %v6482, %v6502
  %v6828 = vadd.f32 %v6483, %v6502
  %v6829 = vadd.f32 %v6484, %v6502
  %v6830 = vadd.f32 %v6485, %v6502
  %v6831 = vadd.f32 %v6486, %v6502
  %v6832 = vadd.f32 %v6487, %v6502
  %v6833 = vadd.f32 %v6488, %v6502
  %v6834 = vadd.f32 %v6489, %v6502
  %v6835 = vadd.f32 %v6490, %v6502
  %v6836 = vadd.f32 %v6491, %v6502
  %v6837 = vadd.f32 %v6492, %v6502
  %v6838 = vadd.f32 %v6493, %v6502
  %v6839 = vadd.f32 %v6494, %v6502
  %v6840 = vadd.f32 %v6495, %v6502
  %v6841 = vadd.f32 %v6496, %v6502
  %v6842 = vmax.f32 %v6504, 0.0
  %v6843 = vmax.f32 %v6505, 0.0
  %v6844 = vmax.f32 %v6506, 0.0
  %v6845 = vmax.f32 %v6507, 0.0
  %v6846 = vmax.f32 %v6508, 0.0
  %v6847 = vmax.f32 %v6509, 0.0
  %v6848 = vmax.f32 %v6510, 0.0
  %v6849 = vmax.f32 %v6511, 0.0
  %v6850 = vmax.f32 %v6512, 0.0
  %v6851 = vmax.f32 %v6513, 0.0
  %v6852 = vmax.f32 %v6514, 0.0
  %v6853 = vmax.f32 %v6515, 0.0
  %v6854 = vmax.f32 %v6516, 0.0
  %v6855 = vmax.f32 %v6517, 0.0
  %v6856 = vmax.f32 %v6518, 0.0
  %v6857 = vmax.f32 %v6519, 0.0
  %v6858 = vmax.f32 %v6520, 0.0
  %v6859 = vmax.f32 %v6521, 0.0
  %v6860 = vmax.f32 %v6522, 0.0
  %v6861 = vmax.f32 %v6523, 0.0
  %v6862 = vmax.f32 %v6524, 0.0
  %v6863 = vmax.f32 %v6525, 0.0
  %v6864 = vmax.f32 %v6526, 0.0
  %v6865 = vmax.f32 %v6527, 0.0
  %v6866 = vmax.f32 %v6528, 0.0
  %v6867 = vmax.f32 %v6529, 0.0
  %v6868 = vmax.f32 %v6530, 0.0
  %v6869 = vmax.f32 %v6531, 0.0
  %v6870 = vmax.f32 %v6532, 0.0
  %v6871 = vmax.f32 %v6533, 0.0
  %v6872 = vmax.f32 %v6534, 0.0
  %v6873 = vmax.f32 %v6535, 0.0
  %v6874 = vmax.f32 %v6536, 0.0
  %v6875 = vmax.f32 %v6537, 0.0
  %v6876 = vmax.f32 %v6538, 0.0
  %v6877 = vmax.f32 %v6539, 0.0
  %v6878 = vmax.f32 %v6540, 0.0
  %v6879 = vmax.f32 %v6541, 0.0
  %v6880 = vmax.f32 %v6542, 0.0
  %v6881 = vmax.f32 %v6543, 0.0
  %v6882 = vmax.f32 %v6544, 0.0
  %v6883 = vmax.f32 %v6545, 0.0
  %v6884 = vmax.f32 %v6546, 0.0
  %v6885 = vmax.f32 %v6547, 0.0
  %v6886 = vmax.f32 %v6548, 0.0
  %v6887 = vmax.f32 %v6549, 0.0
  %v6888 = vmax.f32 %v6550, 0.0
  %v6889 = vmax.f32 %v6551, 0.0
  %v6890 = vmax.f32 %v6552, 0.0
  %v6891 = vmax.f32 %v6553, 0.0
  %v6892 = vmax.f32 %v6554, 0.0
  %v6893 = vmax.f32 %v6555, 0.0
  %v6894 = vmax.f32 %v6556, 0.0
  %v6895 = vmax.f32 %v6557, 0.0
  %v6896 = vmax.f32 %v6558, 0.0
  %v6897 = vmax.f32 %v6559, 0.0
  %v6898 = vmax.f32 %v6560, 0.0
  %v6899 = vmax.f32 %v6561, 0.0
  %v6900 = vmax.f32 %v6562, 0.0
  %v6901 = vmax.f32 %v6563, 0.0
  %v6902 = vmax.f32 %v6564, 0.0
  %v6903 = vmax.f32 %v6565, 0.0
  %v6904 = vmax.f32 %v6566, 0.0
  %v6905 = vmax.f32 %v6567, 0.0
  %v6906 = vmax.f32 %v6568, 0.0
  %v6907 = vmax.f32 %v6569, 0.0
  %v6908 = vmax.f32 %v6570, 0.0
  %v6909 = vmax.f32 %v6571, 0.0
  %v6910 = vmax.f32 %v6572, 0.0
  %v6911 = vmax.f32 %v6573, 0.0
  %v6912 = vmax.f32 %v6574, 0.0
  %v6913 = vmax.f32 %v6575, 0.0
  %v6914 = vmax.f32 %v6576, 0.0
  %v6915 = vmax.f32 %v6577, 0.0
  %v6916 = vmax.f32 %v6578, 0.0
  %v6917 = vmax.f32 %v6579, 0.0
  %v6918 = vmax.f32 %v6580, 0.0
  %v6919 = vmax.f32 %v6581, 0.0
  %v6920 = vmax.f32 %v6582, 0.0
  %v6921 = vmax.f32 %v6583, 0.0
  %v6922 = vmax.f32 %v6584, 0.0
  %v6923 = vmax.f32 %v6585, 0.0
  %v6924 = vmax.f32 %v6586, 0.0
  %v6925 = vmax.f32 %v6587, 0.0
  %v6926 = vmax.f32 %v6588, 0.0
  %v6927 = vmax.f32 %v6589, 0.0
  %v6928 = vmax.f32 %v6590, 0.0
  %v6929 = vmax.f32 %v6591, 0.0
  %v6930 = vmax.f32 %v6592, 0.0
  %v6931 = vmax.f32 %v6593, 0.0
  %v6932 = vmax.f32 %v6594, 0.0
  %v6933 = vmax.f32 %v6595, 0.0
  %v6934 = vmax.f32 %v6596, 0.0
  %v6935 = vmax.f32 %v6597, 0.0
  %v6936 = vmax.f32 %v6598, 0.0
  %v6937 = vmax.f32 %v6599, 0.0
  %v6938 = vmax.f32 %v6600, 0.0
  %v6939 = vmax.f32 %v6601, 0.0
  %v6940 = vmax.f32 %v6602, 0.0
  %v6941 = vmax.f32 %v6603, 0.0
  %v6942 = vmax.f32 %v6604, 0.0
  %v6943 = vmax.f32 %v6605, 0.0
  %v6944 = vmax.f32 %v6606, 0.0
  %v6945 = vmax.f32 %v6607, 0.0
  %v6946 = vmax.f32 %v6608, 0.0
  %v6947 = vmax.f32 %v6609, 0.0
  %v6948 = vmax.f32 %v6610, 0.0
  %v6949 = vmax.f32 %v6611, 0.0
  %v6950 = vmax.f32 %v6612, 0.0
  %v6951 = vmax.f32 %v6613, 0.0
  %v6952 = vmax.f32 %v6614, 0.0
  %v6953 = vmax.f32 %v6615, 0.0
  %v6954 = vmax.f32 %v6616, 0.0
  %v6955 = vmax.f32 %v6617, 0.0
  %v6956 = vmax.f32 %v6618, 0.0
  %v6957 = vmax.f32 %v6619, 0.0
  %v6958 = vmax.f32 %v6620, 0.0
  %v6959 = vmax.f32 %v6621, 0.0
  %v6960 = vmax.f32 %v6622, 0.0
  %v6961 = vmax.f32 %v6623, 0.0
  %v6962 = vmax.f32 %v6624, 0.0
  %v6963 = vmax.f32 %v6625, 0.0
  %v6964 = vmax.f32 %v6626, 0.0
  %v6965 = vmax.f32 %v6627, 0.0
  %v6966 = vmax.f32 %v6628, 0.0
  %v6967 = vmax.f32 %v6629, 0.0
  %v6968 = vmax.f32 %v6630, 0.0
  %v6969 = vmax.f32 %v6631, 0.0
  %v6970 = vmax.f32 %v6632, 0.0
  %v6971 = vmax.f32 %v6633, 0.0
  %v6972 = vmax.f32 %v6634, 0.0
  %v6973 = vmax.f32 %v6635, 0.0
  %v6974 = vmax.f32 %v6636, 0.0
  %v6975 = vmax.f32 %v6637, 0.0
  %v6976 = vmax.f32 %v6638, 0.0
  %v6977 = vmax.f32 %v6639, 0.0
  %v6978 = vmax.f32 %v6640, 0.0
  %v6979 = vmax.f32 %v6641, 0.0
  %v6980 = vmax.f32 %v6642, 0.0
  %v6981 = vmax.f32 %v6643, 0.0
  %v6982 = vmax.f32 %v6644, 0.0
  %v6983 = vmax.f32 %v6645, 0.0
  %v6984 = vmax.f32 %v6646, 0.0
  %v6985 = vmax.f32 %v6647, 0.0
  %v6986 = vmax.f32 %v6648, 0.0
  %v6987 = vmax.f32 %v6649, 0.0
  %v6988 = vmax.f32 %v6650, 0.0
  %v6989 = vmax.f32 %v6651, 0.0
  %v6990 = vmax.f32 %v6652, 0.0
  %v6991 = vmax.f32 %v6653, 0.0
  %v6992 = vmax.f32 %v6654, 0.0
  %v6993 = vmax.f32 %v6655, 0.0
  %v6994 = vmax.f32 %v6656, 0.0
  %v6995 = vmax.f32 %v6657, 0.0
  %v6996 = vmax.f32 %v6658, 0.0
  %v6997 = vmax.f32 %v6659, 0.0
  %v6998 = vmax.f32 %v6660, 0.0
  %v6999 = vmax.f32 %v6661, 0.0
  %v7000 = vmax.f32 %v6662, 0.0
  %v7001 = vmax.f32 %v6663, 0.0
  %v7002 = vmax.f32 %v6664, 0.0
  %v7003 = vmax.f32 %v6665, 0.0
  %v7004 = vmax.f32 %v6666, 0.0
  %v7005 = vmax.f32 %v6667, 0.0
  %v7006 = vmax.f32 %v6668, 0.0
  %v7007 = vmax.f32 %v6669, 0.0
  %v7008 = vmax.f32 %v6670, 0.0
  %v7009 = vmax.f32 %v6671, 0.0
  %v7010 = vmax.f32 %v6672, 0.0
  %v7011 = vmax.f32 %v6673, 0.0
  %v7012 = vmax.f32 %v6674, 0.0
  %v7013 = vmax.f32 %v6675, 0.0
  %v7014 = vmax.f32 %v6676, 0.0
  %v7015 = vmax.f32 %v6677, 0.0
  %v7016 = vmax.f32 %v6678, 0.0
  %v7017 = vmax.f32 %v6679, 0.0
  %v7018 = vmax.f32 %v6680, 0.0
  %v7019 = vmax.f32 %v6681, 0.0
  %v7020 = vmax.f32 %v6682, 0.0
  %v7021 = vmax.f32 %v6683, 0.0
  %v7022 = vmax.f32 %v6684, 0.0
  %v7023 = vmax.f32 %v6685, 0.0
  %v7024 = vmax.f32 %v6686, 0.0
  %v7025 = vmax.f32 %v6687, 0.0
  %v7026 = vmax.f32 %v6688, 0.0
  %v7027 = vmax.f32 %v6689, 0.0
  %v7028 = vmax.f32 %v6690, 0.0
  %v7029 = vmax.f32 %v6691, 0.0
  %v7030 = vmax.f32 %v6692, 0.0
  %v7031 = vmax.f32 %v6693, 0.0
  %v7032 = vmax.f32 %v6694, 0.0
  %v7033 = vmax.f32 %v6695, 0.0
  %v7034 = vmax.f32 %v6696, 0.0
  %v7035 = vmax.f32 %v6697, 0.0
  %v7036 = vmax.f32 %v6698, 0.0
  %v7037 = vmax.f32 %v6699, 0.0
  %v7038 = vmax.f32 %v6700, 0.0
  %v7039 = vmax.f32 %v6701, 0.0
  %v7040 = vmax.f32 %v6702, 0.0
  %v7041 = vmax.f32 %v6703, 0.0
  %v7042 = vmax.f32 %v6704, 0.0
  %v7043 = vmax.f32 %v6705, 0.0
  %v7044 = vmax.f32 %v6706, 0.0
  %v7045 = vmax.f32 %v6707, 0.0
  %v7046 = vmax.f32 %v6708, 0.0
  %v7047 = vmax.f32 %v6709, 0.0
  %v7048 = vmax.f32 %v6710, 0.0
  %v7049 = vmax.f32 %v6711, 0.0
  %v7050 = vmax.f32 %v6712, 0.0
  %v7051 = vmax.f32 %v6713, 0.0
  %v7052 = vmax.f32 %v6714, 0.0
  %v7053 = vmax.f32 %v6715, 0.0
  %v7054 = vmax.f32 %v6716, 0.0
  %v7055 = vmax.f32 %v6717, 0.0
  %v7056 = vmax.f32 %v6718, 0.0
  %v7057 = vmax.f32 %v6719, 0.0
  %v7058 = vmax.f32 %v6720, 0.0
  %v7059 = vmax.f32 %v6721, 0.0
  %v7060 = vmax.f32 %v6722, 0.0
  %v7061 = vmax.f32 %v6723, 0.0
  %v7062 = vmax.f32 %v6724, 0.0
  %v7063 = vmax.f32 %v6725, 0.0
  %v7064 = vmax.f32 %v6726, 0.0
  %v7065 = vmax.f32 %v6727, 0.0
  %v7066 = vmax.f32 %v6728, 0.0
  %v7067 = vmax.f32 %v6729, 0.0
  %v7068 = vmax.f32 %v6730, 0.0
  %v7069 = vmax.f32 %v6731, 0.0
  %v7070 = vmax.f32 %v6732, 0.0
  %v7071 = vmax.f32 %v6733, 0.0
  %v7072 = vmax.f32 %v6734, 0.0
  %v7073 = vmax.f32 %v6735, 0.0
  %v7074 = vmax.f32 %v6736, 0.0
  %v7075 = vmax.f32 %v6737, 0.0
  %v7076 = vmax.f32 %v6738, 0.0
  %v7077 = vmax.f32 %v6739, 0.0
  %v7078 = vmax.f32 %v6740, 0.0
  %v7079 = vmax.f32 %v6741, 0.0
  %v7080 = vmax.f32 %v6742, 0.0
  %v7081 = vmax.f32 %v6743, 0.0
  %v7082 = vmax.f32 %v6744, 0.0
  %v7083 = vmax.f32 %v6745, 0.0
  %v7084 = vmax.f32 %v6746, 0.0
  %v7085 = vmax.f32 %v6747, 0.0
  %v7086 = vmax.f32 %v6748, 0.0
  %v7087 = vmax.f32 %v6749, 0.0
  %v7088 = vmax.f32 %v6750, 0.0
  %v7089 = vmax.f32 %v6751, 0.0
  %v7090 = vmax.f32 %v6752, 0.0
  %v7091 = vmax.f32 %v6753, 0.0
  %v7092 = vmax.f32 %v6754, 0.0
  %v7093 = vmax.f32 %v6755, 0.0
  %v7094 = vmax.f32 %v6756, 0.0
  %v7095 = vmax.f32 %v6757, 0.0
  %v7096 = vmax.f32 %v6758, 0.0
  %v7097 = vmax.f32 %v6759, 0.0
  %v7098 = vmax.f32 %v6760, 0.0
  %v7099 = vmax.f32 %v6761, 0.0
  %v7100 = vmax.f32 %v6762, 0.0
  %v7101 = vmax.f32 %v6763, 0.0
  %v7102 = vmax.f32 %v6764, 0.0
  %v7103 = vmax.f32 %v6765, 0.0
  %v7104 = vmax.f32 %v6766, 0.0
  %v7105 = vmax.f32 %v6767, 0.0
  %v7106 = vmax.f32 %v6768, 0.0
  %v7107 = vmax.f32 %v6769, 0.0
  %v7108 = vmax.f32 %v6770, 0.0
  %v7109 = vmax.f32 %v6771, 0.0
  %v7110 = vmax.f32 %v6772, 0.0
  %v7111 = vmax.f32 %v6773, 0.0
  %v7112 = vmax.f32 %v6774, 0.0
  %v7113 = vmax.f32 %v6775, 0.0
  %v7114 = vmax.f32 %v6776, 0.0
  %v7115 = vmax.f32 %v6777, 0.0
  %v7116 = vmax.f32 %v6778, 0.0
  %v7117 = vmax.f32 %v6779, 0.0
  %v7118 = vmax.f32 %v6780, 0.0
  %v7119 = vmax.f32 %v6781, 0.0
  %v7120 = vmax.f32 %v6782, 0.0
  %v7121 = vmax.f32 %v6783, 0.0
  %v7122 = vmax.f32 %v6784, 0.0
  %v7123 = vmax.f32 %v6785, 0.0
  %v7124 = vmax.f32 %v6786, 0.0
  %v7125 = vmax.f32 %v6787, 0.0
  %v7126 = vmax.f32 %v6788, 0.0
  %v7127 = vmax.f32 %v6789, 0.0
  %v7128 = vmax.f32 %v6790, 0.0
  %v7129 = vmax.f32 %v6791, 0.0
  %v7130 = vmax.f32 %v6792, 0.0
  %v7131 = vmax.f32 %v6793, 0.0
  %v7132 = vmax.f32 %v6794, 0.0
  %v7133 = vmax.f32 %v6795, 0.0
  %v7134 = vmax.f32 %v6796, 0.0
  %v7135 = vmax.f32 %v6797, 0.0
  %v7136 = vmax.f32 %v6798, 0.0
  %v7137 = vmax.f32 %v6799, 0.0
  %v7138 = vmax.f32 %v6800, 0.0
  %v7139 = vmax.f32 %v6801, 0.0
  %v7140 = vmax.f32 %v6802, 0.0
  %v7141 = vmax.f32 %v6803, 0.0
  %v7142 = vmax.f32 %v6804, 0.0
  %v7143 = vmax.f32 %v6805, 0.0
  %v7144 = vmax.f32 %v6806, 0.0
  %v7145 = vmax.f32 %v6807, 0.0
  %v7146 = vmax.f32 %v6808, 0.0
  %v7147 = vmax.f32 %v6809, 0.0
  %v7148 = vmax.f32 %v6810, 0.0
  %v7149 = vmax.f32 %v6811, 0.0
  %v7150 = vmax.f32 %v6812, 0.0
  %v7151 = vmax.f32 %v6813, 0.0
  %v7152 = vmax.f32 %v6814, 0.0
  %v7153 = vmax.f32 %v6815, 0.0
  %v7154 = vmax.f32 %v6816, 0.0
  %v7155 = vmax.f32 %v6817, 0.0
  %v7156 = vmax.f32 %v6818, 0.0
  %v7157 = vmax.f32 %v6819, 0.0
  %v7158 = vmax.f32 %v6820, 0.0
  %v7159 = vmax.f32 %v6821, 0.0
  %v7160 = vmax.f32 %v6822, 0.0
  %v7161 = vmax.f32 %v6823, 0.0
  %v7162 = vmax.f32 %v6824, 0.0
  %v7163 = vmax.f32 %v6825, 0.0
  %v7164 = vmax.f32 %v6826, 0.0
  %v7165 = vmax.f32 %v6827, 0.0
  %v7166 = vmax.f32 %v6828, 0.0
  %v7167 = vmax.f32 %v6829, 0.0
  %v7168 = vmax.f32 %v6830, 0.0
  %v7169 = vmax.f32 %v6831, 0.0
  %v7170 = vmax.f32 %v6832, 0.0
  %v7171 = vmax.f32 %v6833, 0.0
  %v7172 = vmax.f32 %v6834, 0.0
  %v7173 = vmax.f32 %v6835, 0.0
  %v7174 = vmax.f32 %v6836, 0.0
  %v7175 = vmax.f32 %v6837, 0.0
  %v7176 = vmax.f32 %v6838, 0.0
  %v7177 = vmax.f32 %v6839, 0.0
  %v7178 = vmax.f32 %v6840, 0.0
  %v7179 = vmax.f32 %v6841, 0.0
  %v7180 = vpack.c.bf16 %v6843, %v6842
  %v7181 = vpack.c.bf16 %v6845, %v6844
  %v7182 = vpack.c.bf16 %v6847, %v6846
  %v7183 = vpack.c.bf16 %v6849, %v6848
  %v7184 = vpack.c.bf16 %v6851, %v6850
  %v7185 = vpack.c.bf16 %v6853, %v6852
  %v7186 = vpack.c.bf16 %v6855, %v6854
  %v7187 = vpack.c.bf16 %v6857, %v6856
  %v7188 = vpack.c.bf16 %v6859, %v6858
  %v7189 = vpack.c.bf16 %v6861, %v6860
  %v7190 = vpack.c.bf16 %v6863, %v6862
  %v7191 = vpack.c.bf16 %v6865, %v6864
  %v7192 = vpack.c.bf16 %v6867, %v6866
  %v7193 = vpack.c.bf16 %v6869, %v6868
  %v7194 = vpack.c.bf16 %v6871, %v6870
  %v7195 = vpack.c.bf16 %v6873, %v6872
  %v7196 = vpack.c.bf16 %v6875, %v6874
  %v7197 = vpack.c.bf16 %v6877, %v6876
  %v7198 = vpack.c.bf16 %v6879, %v6878
  %v7199 = vpack.c.bf16 %v6881, %v6880
  %v7200 = vpack.c.bf16 %v6883, %v6882
  %v7201 = vpack.c.bf16 %v6885, %v6884
  %v7202 = vpack.c.bf16 %v6887, %v6886
  %v7203 = vpack.c.bf16 %v6889, %v6888
  %v7204 = vpack.c.bf16 %v6891, %v6890
  %v7205 = vpack.c.bf16 %v6893, %v6892
  %v7206 = vpack.c.bf16 %v6895, %v6894
  %v7207 = vpack.c.bf16 %v6897, %v6896
  %v7208 = vpack.c.bf16 %v6899, %v6898
  %v7209 = vpack.c.bf16 %v6901, %v6900
  %v7210 = vpack.c.bf16 %v6903, %v6902
  %v7211 = vpack.c.bf16 %v6905, %v6904
  %v7212 = vpack.c.bf16 %v6907, %v6906
  %v7213 = vpack.c.bf16 %v6909, %v6908
  %v7214 = vpack.c.bf16 %v6911, %v6910
  %v7215 = vpack.c.bf16 %v6913, %v6912
  %v7216 = vpack.c.bf16 %v6915, %v6914
  %v7217 = vpack.c.bf16 %v6917, %v6916
  %v7218 = vpack.c.bf16 %v6919, %v6918
  %v7219 = vpack.c.bf16 %v6921, %v6920
  %v7220 = vpack.c.bf16 %v6923, %v6922
  %v7221 = vpack.c.bf16 %v6925, %v6924
  %v7222 = vpack.c.bf16 %v6927, %v6926
  %v7223 = vpack.c.bf16 %v6929, %v6928
  %v7224 = vpack.c.bf16 %v6931, %v6930
  %v7225 = vpack.c.bf16 %v6933, %v6932
  %v7226 = vpack.c.bf16 %v6935, %v6934
  %v7227 = vpack.c.bf16 %v6937, %v6936
  %v7228 = vpack.c.bf16 %v6939, %v6938
  %v7229 = vpack.c.bf16 %v6941, %v6940
  %v7230 = vpack.c.bf16 %v6943, %v6942
  %v7231 = vpack.c.bf16 %v6945, %v6944
  %v7232 = vpack.c.bf16 %v6947, %v6946
  %v7233 = vpack.c.bf16 %v6949, %v6948
  %v7234 = vpack.c.bf16 %v6951, %v6950
  %v7235 = vpack.c.bf16 %v6953, %v6952
  %v7236 = vpack.c.bf16 %v6955, %v6954
  %v7237 = vpack.c.bf16 %v6957, %v6956
  %v7238 = vpack.c.bf16 %v6959, %v6958
  %v7239 = vpack.c.bf16 %v6961, %v6960
  %v7240 = vpack.c.bf16 %v6963, %v6962
  %v7241 = vpack.c.bf16 %v6965, %v6964
  %v7242 = vpack.c.bf16 %v6967, %v6966
  %v7243 = vpack.c.bf16 %v6969, %v6968
  %v7244 = vpack.c.bf16 %v6971, %v6970
  %v7245 = vpack.c.bf16 %v6973, %v6972
  %v7246 = vpack.c.bf16 %v6975, %v6974
  %v7247 = vpack.c.bf16 %v6977, %v6976
  %v7248 = vpack.c.bf16 %v6979, %v6978
  %v7249 = vpack.c.bf16 %v6981, %v6980
  %v7250 = vpack.c.bf16 %v6983, %v6982
  %v7251 = vpack.c.bf16 %v6985, %v6984
  %v7252 = vpack.c.bf16 %v6987, %v6986
  %v7253 = vpack.c.bf16 %v6989, %v6988
  %v7254 = vpack.c.bf16 %v6991, %v6990
  %v7255 = vpack.c.bf16 %v6993, %v6992
  %v7256 = vpack.c.bf16 %v6995, %v6994
  %v7257 = vpack.c.bf16 %v6997, %v6996
  %v7258 = vpack.c.bf16 %v6999, %v6998
  %v7259 = vpack.c.bf16 %v7001, %v7000
  %v7260 = vpack.c.bf16 %v7003, %v7002
  %v7261 = vpack.c.bf16 %v7005, %v7004
  %v7262 = vpack.c.bf16 %v7007, %v7006
  %v7263 = vpack.c.bf16 %v7009, %v7008
  %v7264 = vpack.c.bf16 %v7011, %v7010
  %v7265 = vpack.c.bf16 %v7013, %v7012
  %v7266 = vpack.c.bf16 %v7015, %v7014
  %v7267 = vpack.c.bf16 %v7017, %v7016
  %v7268 = vpack.c.bf16 %v7019, %v7018
  %v7269 = vpack.c.bf16 %v7021, %v7020
  %v7270 = vpack.c.bf16 %v7023, %v7022
  %v7271 = vpack.c.bf16 %v7025, %v7024
  %v7272 = vpack.c.bf16 %v7027, %v7026
  %v7273 = vpack.c.bf16 %v7029, %v7028
  %v7274 = vpack.c.bf16 %v7031, %v7030
  %v7275 = vpack.c.bf16 %v7033, %v7032
  %v7276 = vpack.c.bf16 %v7035, %v7034
  %v7277 = vpack.c.bf16 %v7037, %v7036
  %v7278 = vpack.c.bf16 %v7039, %v7038
  %v7279 = vpack.c.bf16 %v7041, %v7040
  %v7280 = vpack.c.bf16 %v7043, %v7042
  %v7281 = vpack.c.bf16 %v7045, %v7044
  %v7282 = vpack.c.bf16 %v7047, %v7046
  %v7283 = vpack.c.bf16 %v7049, %v7048
  %v7284 = vpack.c.bf16 %v7051, %v7050
  %v7285 = vpack.c.bf16 %v7053, %v7052
  %v7286 = vpack.c.bf16 %v7055, %v7054
  %v7287 = vpack.c.bf16 %v7057, %v7056
  %v7288 = vpack.c.bf16 %v7059, %v7058
  %v7289 = vpack.c.bf16 %v7061, %v7060
  %v7290 = vpack.c.bf16 %v7063, %v7062
  %v7291 = vpack.c.bf16 %v7065, %v7064
  %v7292 = vpack.c.bf16 %v7067, %v7066
  %v7293 = vpack.c.bf16 %v7069, %v7068
  %v7294 = vpack.c.bf16 %v7071, %v7070
  %v7295 = vpack.c.bf16 %v7073, %v7072
  %v7296 = vpack.c.bf16 %v7075, %v7074
  %v7297 = vpack.c.bf16 %v7077, %v7076
  %v7298 = vpack.c.bf16 %v7079, %v7078
  %v7299 = vpack.c.bf16 %v7081, %v7080
  %v7300 = vpack.c.bf16 %v7083, %v7082
  %v7301 = vpack.c.bf16 %v7085, %v7084
  %v7302 = vpack.c.bf16 %v7087, %v7086
  %v7303 = vpack.c.bf16 %v7089, %v7088
  %v7304 = vpack.c.bf16 %v7091, %v7090
  %v7305 = vpack.c.bf16 %v7093, %v7092
  %v7306 = vpack.c.bf16 %v7095, %v7094
  %v7307 = vpack.c.bf16 %v7097, %v7096
  %v7308 = vpack.c.bf16 %v7099, %v7098
  %v7309 = vpack.c.bf16 %v7101, %v7100
  %v7310 = vpack.c.bf16 %v7103, %v7102
  %v7311 = vpack.c.bf16 %v7105, %v7104
  %v7312 = vpack.c.bf16 %v7107, %v7106
  %v7313 = vpack.c.bf16 %v7109, %v7108
  %v7314 = vpack.c.bf16 %v7111, %v7110
  %v7315 = vpack.c.bf16 %v7113, %v7112
  %v7316 = vpack.c.bf16 %v7115, %v7114
  %v7317 = vpack.c.bf16 %v7117, %v7116
  %v7318 = vpack.c.bf16 %v7119, %v7118
  %v7319 = vpack.c.bf16 %v7121, %v7120
  %v7320 = vpack.c.bf16 %v7123, %v7122
  %v7321 = vpack.c.bf16 %v7125, %v7124
  %v7322 = vpack.c.bf16 %v7127, %v7126
  %v7323 = vpack.c.bf16 %v7129, %v7128
  %v7324 = vpack.c.bf16 %v7131, %v7130
  %v7325 = vpack.c.bf16 %v7133, %v7132
  %v7326 = vpack.c.bf16 %v7135, %v7134
  %v7327 = vpack.c.bf16 %v7137, %v7136
  %v7328 = vpack.c.bf16 %v7139, %v7138
  %v7329 = vpack.c.bf16 %v7141, %v7140
  %v7330 = vpack.c.bf16 %v7143, %v7142
  %v7331 = vpack.c.bf16 %v7145, %v7144
  %v7332 = vpack.c.bf16 %v7147, %v7146
  %v7333 = vpack.c.bf16 %v7149, %v7148
  %v7334 = vpack.c.bf16 %v7151, %v7150
  %v7335 = vpack.c.bf16 %v7153, %v7152
  %v7336 = vpack.c.bf16 %v7155, %v7154
  %v7337 = vpack.c.bf16 %v7157, %v7156
  %v7338 = vpack.c.bf16 %v7159, %v7158
  %v7339 = vpack.c.bf16 %v7161, %v7160
  %v7340 = vpack.c.bf16 %v7163, %v7162
  %v7341 = vpack.c.bf16 %v7165, %v7164
  %v7342 = vpack.c.bf16 %v7167, %v7166
  %v7343 = vpack.c.bf16 %v7169, %v7168
  %v7344 = vpack.c.bf16 %v7171, %v7170
  %v7345 = vpack.c.bf16 %v7173, %v7172
  %v7346 = vpack.c.bf16 %v7175, %v7174
  %v7347 = vpack.c.bf16 %v7177, %v7176
  %v7348 = vpack.c.bf16 %v7179, %v7178
  %7490 = vrot.lane.b32.xlu0 %v7181, 16
  %v7491 = vpop.permute.xlu0 %7490
  %7492 = vrot.lane.b32.xlu0 %v7182, 16
  %v7493 = vpop.permute.xlu0 %7492
  %7494 = vrot.lane.b32.xlu0 %v7183, 16
  %v7495 = vpop.permute.xlu0 %7494
  %7496 = vrot.lane.b32.xlu0 %v7184, 16
  %v7497 = vpop.permute.xlu0 %7496
  %7498 = vrot.lane.b32.xlu0 %v7185, 16
  %v7499 = vpop.permute.xlu0 %7498
  %7500 = vrot.lane.b32.xlu0 %v7186, 16
  %v7501 = vpop.permute.xlu0 %7500
  %7502 = vrot.lane.b32.xlu0 %v7187, 16
  %v7503 = vpop.permute.xlu0 %7502
  %7504 = vrot.lane.b32.xlu0 %v7188, 16
  %v7505 = vpop.permute.xlu0 %7504
  %7506 = vrot.lane.b32.xlu0 %v7189, 16
  %v7507 = vpop.permute.xlu0 %7506
  %7508 = vrot.lane.b32.xlu0 %v7190, 16
  %v7509 = vpop.permute.xlu0 %7508
  %7510 = vrot.lane.b32.xlu0 %v7191, 16
  %v7511 = vpop.permute.xlu0 %7510
  %7512 = vrot.lane.b32.xlu0 %v7192, 16
  %v7513 = vpop.permute.xlu0 %7512
  %7514 = vrot.lane.b32.xlu0 %v7193, 16
  %v7515 = vpop.permute.xlu0 %7514
  %7516 = vrot.lane.b32.xlu0 %v7194, 16
  %v7517 = vpop.permute.xlu0 %7516
  %7518 = vrot.lane.b32.xlu0 %v7195, 16
  %v7519 = vpop.permute.xlu0 %7518
  %7520 = vrot.lane.b32.xlu0 %v7196, 16
  %v7521 = vpop.permute.xlu0 %7520
  %7522 = vrot.lane.b32.xlu0 %v7197, 16
  %v7523 = vpop.permute.xlu0 %7522
  %7524 = vrot.lane.b32.xlu0 %v7198, 16
  %v7525 = vpop.permute.xlu0 %7524
  %7526 = vrot.lane.b32.xlu0 %v7199, 16
  %v7527 = vpop.permute.xlu0 %7526
  %7528 = vrot.lane.b32.xlu0 %v7200, 16
  %v7529 = vpop.permute.xlu0 %7528
  %7530 = vrot.lane.b32.xlu0 %v7201, 16
  %v7531 = vpop.permute.xlu0 %7530
  %7532 = vrot.lane.b32.xlu0 %v7202, 16
  %v7533 = vpop.permute.xlu0 %7532
  %7534 = vrot.lane.b32.xlu0 %v7203, 16
  %v7535 = vpop.permute.xlu0 %7534
  %7536 = vrot.lane.b32.xlu0 %v7204, 16
  %v7537 = vpop.permute.xlu0 %7536
  %7538 = vrot.lane.b32.xlu0 %v7205, 16
  %v7539 = vpop.permute.xlu0 %7538
  %7540 = vrot.lane.b32.xlu0 %v7206, 16
  %v7541 = vpop.permute.xlu0 %7540
  %7542 = vrot.lane.b32.xlu0 %v7207, 16
  %v7543 = vpop.permute.xlu0 %7542
  %7544 = vrot.lane.b32.xlu0 %v7208, 16
  %v7545 = vpop.permute.xlu0 %7544
  %7546 = vrot.lane.b32.xlu0 %v7209, 16
  %v7547 = vpop.permute.xlu0 %7546
  %7548 = vrot.lane.b32.xlu0 %v7210, 16
  %v7549 = vpop.permute.xlu0 %7548
  %7550 = vrot.lane.b32.xlu0 %v7211, 16
  %v7551 = vpop.permute.xlu0 %7550
  %7552 = vrot.lane.b32.xlu0 %v7212, 16
  %v7553 = vpop.permute.xlu0 %7552
  %7554 = vrot.lane.b32.xlu0 %v7213, 16
  %v7555 = vpop.permute.xlu0 %7554
  %7556 = vrot.lane.b32.xlu0 %v7214, 16
  %v7557 = vpop.permute.xlu0 %7556
  %7558 = vrot.lane.b32.xlu0 %v7215, 16
  %v7559 = vpop.permute.xlu0 %7558
  %7560 = vrot.lane.b32.xlu0 %v7216, 16
  %v7561 = vpop.permute.xlu0 %7560
  %7562 = vrot.lane.b32.xlu0 %v7217, 16
  %v7563 = vpop.permute.xlu0 %7562
  %7564 = vrot.lane.b32.xlu0 %v7218, 16
  %v7565 = vpop.permute.xlu0 %7564
  %7566 = vrot.lane.b32.xlu0 %v7219, 16
  %v7567 = vpop.permute.xlu0 %7566
  %7568 = vrot.lane.b32.xlu0 %v7220, 16
  %v7569 = vpop.permute.xlu0 %7568
  %7570 = vrot.lane.b32.xlu0 %v7221, 16
  %v7571 = vpop.permute.xlu0 %7570
  %7572 = vrot.lane.b32.xlu0 %v7222, 16
  %v7573 = vpop.permute.xlu0 %7572
  %7574 = vrot.lane.b32.xlu0 %v7223, 16
  %v7575 = vpop.permute.xlu0 %7574
  %7576 = vrot.lane.b32.xlu0 %v7224, 16
  %v7577 = vpop.permute.xlu0 %7576
  %7578 = vrot.lane.b32.xlu0 %v7225, 16
  %v7579 = vpop.permute.xlu0 %7578
  %7580 = vrot.lane.b32.xlu0 %v7226, 16
  %v7581 = vpop.permute.xlu0 %7580
  %7582 = vrot.lane.b32.xlu0 %v7227, 16
  %v7583 = vpop.permute.xlu0 %7582
  %7584 = vrot.lane.b32.xlu0 %v7228, 16
  %v7585 = vpop.permute.xlu0 %7584
  %7586 = vrot.lane.b32.xlu0 %v7229, 16
  %v7587 = vpop.permute.xlu0 %7586
  %7588 = vrot.lane.b32.xlu0 %v7230, 16
  %v7589 = vpop.permute.xlu0 %7588
  %7590 = vrot.lane.b32.xlu0 %v7231, 16
  %v7591 = vpop.permute.xlu0 %7590
  %7592 = vrot.lane.b32.xlu0 %v7232, 16
  %v7593 = vpop.permute.xlu0 %7592
  %7594 = vrot.lane.b32.xlu0 %v7233, 16
  %v7595 = vpop.permute.xlu0 %7594
  %7596 = vrot.lane.b32.xlu0 %v7234, 16
  %v7597 = vpop.permute.xlu0 %7596
  %7598 = vrot.lane.b32.xlu0 %v7235, 16
  %v7599 = vpop.permute.xlu0 %7598
  %7600 = vrot.lane.b32.xlu0 %v7236, 16
  %v7601 = vpop.permute.xlu0 %7600
  %7602 = vrot.lane.b32.xlu0 %v7237, 16
  %v7603 = vpop.permute.xlu0 %7602
  %7604 = vrot.lane.b32.xlu0 %v7238, 16
  %v7605 = vpop.permute.xlu0 %7604
  %7606 = vrot.lane.b32.xlu0 %v7239, 16
  %v7607 = vpop.permute.xlu0 %7606
  %7608 = vrot.lane.b32.xlu0 %v7240, 16
  %v7609 = vpop.permute.xlu0 %7608
  %7610 = vrot.lane.b32.xlu0 %v7241, 16
  %v7611 = vpop.permute.xlu0 %7610
  %7612 = vrot.lane.b32.xlu0 %v7242, 16
  %v7613 = vpop.permute.xlu0 %7612
  %7614 = vrot.lane.b32.xlu0 %v7243, 16
  %v7615 = vpop.permute.xlu0 %7614
  %7616 = vrot.lane.b32.xlu0 %v7244, 16
  %v7617 = vpop.permute.xlu0 %7616
  %7618 = vrot.lane.b32.xlu0 %v7245, 16
  %v7619 = vpop.permute.xlu0 %7618
  %7620 = vrot.lane.b32.xlu0 %v7246, 16
  %v7621 = vpop.permute.xlu0 %7620
  %7622 = vrot.lane.b32.xlu0 %v7247, 16
  %v7623 = vpop.permute.xlu0 %7622
  %7624 = vrot.lane.b32.xlu0 %v7248, 16
  %v7625 = vpop.permute.xlu0 %7624
  %7626 = vrot.lane.b32.xlu0 %v7249, 16
  %v7627 = vpop.permute.xlu0 %7626
  %7628 = vrot.lane.b32.xlu0 %v7250, 16
  %v7629 = vpop.permute.xlu0 %7628
  %7630 = vrot.lane.b32.xlu0 %v7251, 16
  %v7631 = vpop.permute.xlu0 %7630
  %7632 = vrot.lane.b32.xlu0 %v7252, 16
  %v7633 = vpop.permute.xlu0 %7632
  %7634 = vrot.lane.b32.xlu0 %v7253, 16
  %v7635 = vpop.permute.xlu0 %7634
  %7636 = vrot.lane.b32.xlu0 %v7254, 16
  %v7637 = vpop.permute.xlu0 %7636
  %7638 = vrot.lane.b32.xlu0 %v7255, 16
  %v7639 = vpop.permute.xlu0 %7638
  %7640 = vrot.lane.b32.xlu0 %v7256, 16
  %v7641 = vpop.permute.xlu0 %7640
  %7642 = vrot.lane.b32.xlu0 %v7257, 16
  %v7643 = vpop.permute.xlu0 %7642
  %7644 = vrot.lane.b32.xlu0 %v7258, 16
  %v7645 = vpop.permute.xlu0 %7644
  %7646 = vrot.lane.b32.xlu0 %v7259, 16
  %v7647 = vpop.permute.xlu0 %7646
  %7648 = vrot.lane.b32.xlu0 %v7260, 16
  %v7649 = vpop.permute.xlu0 %7648
  %7650 = vrot.lane.b32.xlu0 %v7261, 16
  %v7651 = vpop.permute.xlu0 %7650
  %7652 = vrot.lane.b32.xlu0 %v7262, 16
  %v7653 = vpop.permute.xlu0 %7652
  %7654 = vrot.lane.b32.xlu0 %v7263, 16
  %v7655 = vpop.permute.xlu0 %7654
  %7656 = vrot.lane.b32.xlu0 %v7264, 16
  %v7657 = vpop.permute.xlu0 %7656
  %7658 = vrot.lane.b32.xlu0 %v7265, 16
  %v7659 = vpop.permute.xlu0 %7658
  %7660 = vrot.lane.b32.xlu0 %v7266, 16
  %v7661 = vpop.permute.xlu0 %7660
  %7662 = vrot.lane.b32.xlu0 %v7267, 16
  %v7663 = vpop.permute.xlu0 %7662
  %7664 = vrot.lane.b32.xlu0 %v7268, 16
  %v7665 = vpop.permute.xlu0 %7664
  %7666 = vrot.lane.b32.xlu0 %v7269, 16
  %v7667 = vpop.permute.xlu0 %7666
  %7668 = vrot.lane.b32.xlu0 %v7270, 16
  %v7669 = vpop.permute.xlu0 %7668
  %7670 = vrot.lane.b32.xlu0 %v7271, 16
  %v7671 = vpop.permute.xlu0 %7670
  %7672 = vrot.lane.b32.xlu0 %v7272, 16
  %v7673 = vpop.permute.xlu0 %7672
  %7674 = vrot.lane.b32.xlu0 %v7273, 16
  %v7675 = vpop.permute.xlu0 %7674
  %7676 = vrot.lane.b32.xlu0 %v7274, 16
  %v7677 = vpop.permute.xlu0 %7676
  %7678 = vrot.lane.b32.xlu0 %v7275, 16
  %v7679 = vpop.permute.xlu0 %7678
  %7680 = vrot.lane.b32.xlu0 %v7276, 16
  %v7681 = vpop.permute.xlu0 %7680
  %7682 = vrot.lane.b32.xlu0 %v7277, 16
  %v7683 = vpop.permute.xlu0 %7682
  %7684 = vrot.lane.b32.xlu0 %v7278, 16
  %v7685 = vpop.permute.xlu0 %7684
  %7686 = vrot.lane.b32.xlu0 %v7279, 16
  %v7687 = vpop.permute.xlu0 %7686
  %7688 = vrot.lane.b32.xlu0 %v7280, 16
  %v7689 = vpop.permute.xlu0 %7688
  %7690 = vrot.lane.b32.xlu0 %v7281, 16
  %v7691 = vpop.permute.xlu0 %7690
  %7692 = vrot.lane.b32.xlu0 %v7282, 16
  %v7693 = vpop.permute.xlu0 %7692
  %7694 = vrot.lane.b32.xlu0 %v7283, 16
  %v7695 = vpop.permute.xlu0 %7694
  %7696 = vrot.lane.b32.xlu0 %v7284, 16
  %v7697 = vpop.permute.xlu0 %7696
  %7698 = vrot.lane.b32.xlu0 %v7285, 16
  %v7699 = vpop.permute.xlu0 %7698
  %7700 = vrot.lane.b32.xlu0 %v7286, 16
  %v7701 = vpop.permute.xlu0 %7700
  %7702 = vrot.lane.b32.xlu0 %v7287, 16
  %v7703 = vpop.permute.xlu0 %7702
  %7704 = vrot.lane.b32.xlu0 %v7288, 16
  %v7705 = vpop.permute.xlu0 %7704
  %7706 = vrot.lane.b32.xlu0 %v7289, 16
  %v7707 = vpop.permute.xlu0 %7706
  %7708 = vrot.lane.b32.xlu0 %v7290, 16
  %v7709 = vpop.permute.xlu0 %7708
  %7710 = vrot.lane.b32.xlu0 %v7291, 16
  %v7711 = vpop.permute.xlu0 %7710
  %7712 = vrot.lane.b32.xlu0 %v7292, 16
  %v7713 = vpop.permute.xlu0 %7712
  %7714 = vrot.lane.b32.xlu0 %v7293, 16
  %v7715 = vpop.permute.xlu0 %7714
  %7716 = vrot.lane.b32.xlu0 %v7294, 16
  %v7717 = vpop.permute.xlu0 %7716
  %7718 = vrot.lane.b32.xlu0 %v7295, 16
  %v7719 = vpop.permute.xlu0 %7718
  %7720 = vrot.lane.b32.xlu0 %v7296, 16
  %v7721 = vpop.permute.xlu0 %7720
  %7722 = vrot.lane.b32.xlu0 %v7297, 16
  %v7723 = vpop.permute.xlu0 %7722
  %7724 = vrot.lane.b32.xlu0 %v7298, 16
  %v7725 = vpop.permute.xlu0 %7724
  %7726 = vrot.lane.b32.xlu0 %v7299, 16
  %v7727 = vpop.permute.xlu0 %7726
  %7728 = vrot.lane.b32.xlu0 %v7300, 16
  %v7729 = vpop.permute.xlu0 %7728
  %7730 = vrot.lane.b32.xlu0 %v7301, 16
  %v7731 = vpop.permute.xlu0 %7730
  %7732 = vrot.lane.b32.xlu0 %v7302, 16
  %v7733 = vpop.permute.xlu0 %7732
  %7734 = vrot.lane.b32.xlu0 %v7303, 16
  %v7735 = vpop.permute.xlu0 %7734
  %7736 = vrot.lane.b32.xlu0 %v7304, 16
  %v7737 = vpop.permute.xlu0 %7736
  %7738 = vrot.lane.b32.xlu0 %v7305, 16
  %v7739 = vpop.permute.xlu0 %7738
  %7740 = vrot.lane.b32.xlu0 %v7306, 16
  %v7741 = vpop.permute.xlu0 %7740
  %7742 = vrot.lane.b32.xlu0 %v7307, 16
  %v7743 = vpop.permute.xlu0 %7742
  %7744 = vrot.lane.b32.xlu0 %v7308, 16
  %v7745 = vpop.permute.xlu0 %7744
  %7746 = vrot.lane.b32.xlu0 %v7309, 16
  %v7747 = vpop.permute.xlu0 %7746
  %7748 = vrot.lane.b32.xlu0 %v7310, 16
  %v7749 = vpop.permute.xlu0 %7748
  %7750 = vrot.lane.b32.xlu0 %v7311, 16
  %v7751 = vpop.permute.xlu0 %7750
  %7752 = vrot.lane.b32.xlu0 %v7312, 16
  %v7753 = vpop.permute.xlu0 %7752
  %7754 = vrot.lane.b32.xlu0 %v7313, 16
  %v7755 = vpop.permute.xlu0 %7754
  %7756 = vrot.lane.b32.xlu0 %v7314, 16
  %v7757 = vpop.permute.xlu0 %7756
  %7758 = vrot.lane.b32.xlu0 %v7315, 16
  %v7759 = vpop.permute.xlu0 %7758
  %7760 = vrot.lane.b32.xlu0 %v7316, 16
  %v7761 = vpop.permute.xlu0 %7760
  %7762 = vrot.lane.b32.xlu0 %v7317, 16
  %v7763 = vpop.permute.xlu0 %7762
  %7764 = vrot.lane.b32.xlu0 %v7318, 16
  %v7765 = vpop.permute.xlu0 %7764
  %7766 = vrot.lane.b32.xlu0 %v7319, 16
  %v7767 = vpop.permute.xlu0 %7766
  %7768 = vrot.lane.b32.xlu0 %v7320, 16
  %v7769 = vpop.permute.xlu0 %7768
  %7770 = vrot.lane.b32.xlu0 %v7321, 16
  %v7771 = vpop.permute.xlu0 %7770
  %7773 = vrot.lane.b32.xlu0 %v7182, 32
  %v7774 = vpop.permute.xlu0 %7773
  %7775 = vrot.lane.b32.xlu0 %v7183, 32
  %v7776 = vpop.permute.xlu0 %7775
  %7777 = vrot.lane.b32.xlu0 %v7184, 32
  %v7778 = vpop.permute.xlu0 %7777
  %7779 = vrot.lane.b32.xlu0 %v7185, 32
  %v7780 = vpop.permute.xlu0 %7779
  %7781 = vrot.lane.b32.xlu0 %v7186, 32
  %v7782 = vpop.permute.xlu0 %7781
  %7783 = vrot.lane.b32.xlu0 %v7187, 32
  %v7784 = vpop.permute.xlu0 %7783
  %7785 = vrot.lane.b32.xlu0 %v7188, 32
  %v7786 = vpop.permute.xlu0 %7785
  %7787 = vrot.lane.b32.xlu0 %v7189, 32
  %v7788 = vpop.permute.xlu0 %7787
  %7789 = vrot.lane.b32.xlu0 %v7190, 32
  %v7790 = vpop.permute.xlu0 %7789
  %7791 = vrot.lane.b32.xlu0 %v7191, 32
  %v7792 = vpop.permute.xlu0 %7791
  %7793 = vrot.lane.b32.xlu0 %v7192, 32
  %v7794 = vpop.permute.xlu0 %7793
  %7795 = vrot.lane.b32.xlu0 %v7193, 32
  %v7796 = vpop.permute.xlu0 %7795
  %7797 = vrot.lane.b32.xlu0 %v7194, 32
  %v7798 = vpop.permute.xlu0 %7797
  %7799 = vrot.lane.b32.xlu0 %v7195, 32
  %v7800 = vpop.permute.xlu0 %7799
  %7801 = vrot.lane.b32.xlu0 %v7196, 32
  %v7802 = vpop.permute.xlu0 %7801
  %7803 = vrot.lane.b32.xlu0 %v7197, 32
  %v7804 = vpop.permute.xlu0 %7803
  %7805 = vrot.lane.b32.xlu0 %v7198, 32
  %v7806 = vpop.permute.xlu0 %7805
  %7807 = vrot.lane.b32.xlu0 %v7199, 32
  %v7808 = vpop.permute.xlu0 %7807
  %7809 = vrot.lane.b32.xlu0 %v7200, 32
  %v7810 = vpop.permute.xlu0 %7809
  %7811 = vrot.lane.b32.xlu0 %v7201, 32
  %v7812 = vpop.permute.xlu0 %7811
  %7813 = vrot.lane.b32.xlu0 %v7202, 32
  %v7814 = vpop.permute.xlu0 %7813
  %7815 = vrot.lane.b32.xlu0 %v7203, 32
  %v7816 = vpop.permute.xlu0 %7815
  %7817 = vrot.lane.b32.xlu0 %v7204, 32
  %v7818 = vpop.permute.xlu0 %7817
  %7819 = vrot.lane.b32.xlu0 %v7205, 32
  %v7820 = vpop.permute.xlu0 %7819
  %7821 = vrot.lane.b32.xlu0 %v7206, 32
  %v7822 = vpop.permute.xlu0 %7821
  %7823 = vrot.lane.b32.xlu0 %v7207, 32
  %v7824 = vpop.permute.xlu0 %7823
  %7825 = vrot.lane.b32.xlu0 %v7208, 32
  %v7826 = vpop.permute.xlu0 %7825
  %7827 = vrot.lane.b32.xlu0 %v7209, 32
  %v7828 = vpop.permute.xlu0 %7827
  %7829 = vrot.lane.b32.xlu0 %v7210, 32
  %v7830 = vpop.permute.xlu0 %7829
  %7831 = vrot.lane.b32.xlu0 %v7211, 32
  %v7832 = vpop.permute.xlu0 %7831
  %7833 = vrot.lane.b32.xlu0 %v7212, 32
  %v7834 = vpop.permute.xlu0 %7833
  %7835 = vrot.lane.b32.xlu0 %v7213, 32
  %v7836 = vpop.permute.xlu0 %7835
  %7837 = vrot.lane.b32.xlu0 %v7214, 32
  %v7838 = vpop.permute.xlu0 %7837
  %7839 = vrot.lane.b32.xlu0 %v7215, 32
  %v7840 = vpop.permute.xlu0 %7839
  %7841 = vrot.lane.b32.xlu0 %v7216, 32
  %v7842 = vpop.permute.xlu0 %7841
  %7843 = vrot.lane.b32.xlu0 %v7217, 32
  %v7844 = vpop.permute.xlu0 %7843
  %7845 = vrot.lane.b32.xlu0 %v7218, 32
  %v7846 = vpop.permute.xlu0 %7845
  %7847 = vrot.lane.b32.xlu0 %v7219, 32
  %v7848 = vpop.permute.xlu0 %7847
  %7849 = vrot.lane.b32.xlu0 %v7220, 32
  %v7850 = vpop.permute.xlu0 %7849
  %7851 = vrot.lane.b32.xlu0 %v7221, 32
  %v7852 = vpop.permute.xlu0 %7851
  %7853 = vrot.lane.b32.xlu0 %v7222, 32
  %v7854 = vpop.permute.xlu0 %7853
  %7855 = vrot.lane.b32.xlu0 %v7223, 32
  %v7856 = vpop.permute.xlu0 %7855
  %7857 = vrot.lane.b32.xlu0 %v7224, 32
  %v7858 = vpop.permute.xlu0 %7857
  %7859 = vrot.lane.b32.xlu0 %v7225, 32
  %v7860 = vpop.permute.xlu0 %7859
  %7861 = vrot.lane.b32.xlu0 %v7226, 32
  %v7862 = vpop.permute.xlu0 %7861
  %7863 = vrot.lane.b32.xlu0 %v7227, 32
  %v7864 = vpop.permute.xlu0 %7863
  %7865 = vrot.lane.b32.xlu0 %v7228, 32
  %v7866 = vpop.permute.xlu0 %7865
  %7867 = vrot.lane.b32.xlu0 %v7229, 32
  %v7868 = vpop.permute.xlu0 %7867
  %7869 = vrot.lane.b32.xlu0 %v7230, 32
  %v7870 = vpop.permute.xlu0 %7869
  %7871 = vrot.lane.b32.xlu0 %v7231, 32
  %v7872 = vpop.permute.xlu0 %7871
  %7873 = vrot.lane.b32.xlu0 %v7232, 32
  %v7874 = vpop.permute.xlu0 %7873
  %7875 = vrot.lane.b32.xlu0 %v7233, 32
  %v7876 = vpop.permute.xlu0 %7875
  %7877 = vrot.lane.b32.xlu0 %v7234, 32
  %v7878 = vpop.permute.xlu0 %7877
  %7879 = vrot.lane.b32.xlu0 %v7235, 32
  %v7880 = vpop.permute.xlu0 %7879
  %7881 = vrot.lane.b32.xlu0 %v7236, 32
  %v7882 = vpop.permute.xlu0 %7881
  %7883 = vrot.lane.b32.xlu0 %v7237, 32
  %v7884 = vpop.permute.xlu0 %7883
  %7885 = vrot.lane.b32.xlu0 %v7238, 32
  %v7886 = vpop.permute.xlu0 %7885
  %7887 = vrot.lane.b32.xlu0 %v7239, 32
  %v7888 = vpop.permute.xlu0 %7887
  %7889 = vrot.lane.b32.xlu0 %v7240, 32
  %v7890 = vpop.permute.xlu0 %7889
  %7891 = vrot.lane.b32.xlu0 %v7241, 32
  %v7892 = vpop.permute.xlu0 %7891
  %7893 = vrot.lane.b32.xlu0 %v7242, 32
  %v7894 = vpop.permute.xlu0 %7893
  %7895 = vrot.lane.b32.xlu0 %v7243, 32
  %v7896 = vpop.permute.xlu0 %7895
  %7897 = vrot.lane.b32.xlu0 %v7244, 32
  %v7898 = vpop.permute.xlu0 %7897
  %7899 = vrot.lane.b32.xlu0 %v7245, 32
  %v7900 = vpop.permute.xlu0 %7899
  %7901 = vrot.lane.b32.xlu0 %v7246, 32
  %v7902 = vpop.permute.xlu0 %7901
  %7903 = vrot.lane.b32.xlu0 %v7247, 32
  %v7904 = vpop.permute.xlu0 %7903
  %7905 = vrot.lane.b32.xlu0 %v7248, 32
  %v7906 = vpop.permute.xlu0 %7905
  %7907 = vrot.lane.b32.xlu0 %v7249, 32
  %v7908 = vpop.permute.xlu0 %7907
  %7909 = vrot.lane.b32.xlu0 %v7250, 32
  %v7910 = vpop.permute.xlu0 %7909
  %7911 = vrot.lane.b32.xlu0 %v7251, 32
  %v7912 = vpop.permute.xlu0 %7911
  %7913 = vrot.lane.b32.xlu0 %v7252, 32
  %v7914 = vpop.permute.xlu0 %7913
  %7915 = vrot.lane.b32.xlu0 %v7253, 32
  %v7916 = vpop.permute.xlu0 %7915
  %7917 = vrot.lane.b32.xlu0 %v7254, 32
  %v7918 = vpop.permute.xlu0 %7917
  %7919 = vrot.lane.b32.xlu0 %v7255, 32
  %v7920 = vpop.permute.xlu0 %7919
  %7921 = vrot.lane.b32.xlu0 %v7256, 32
  %v7922 = vpop.permute.xlu0 %7921
  %7923 = vrot.lane.b32.xlu0 %v7257, 32
  %v7924 = vpop.permute.xlu0 %7923
  %7925 = vrot.lane.b32.xlu0 %v7258, 32
  %v7926 = vpop.permute.xlu0 %7925
  %7927 = vrot.lane.b32.xlu0 %v7259, 32
  %v7928 = vpop.permute.xlu0 %7927
  %7929 = vrot.lane.b32.xlu0 %v7260, 32
  %v7930 = vpop.permute.xlu0 %7929
  %7931 = vrot.lane.b32.xlu0 %v7261, 32
  %v7932 = vpop.permute.xlu0 %7931
  %7933 = vrot.lane.b32.xlu0 %v7262, 32
  %v7934 = vpop.permute.xlu0 %7933
  %7935 = vrot.lane.b32.xlu0 %v7263, 32
  %v7936 = vpop.permute.xlu0 %7935
  %7937 = vrot.lane.b32.xlu0 %v7264, 32
  %v7938 = vpop.permute.xlu0 %7937
  %7939 = vrot.lane.b32.xlu0 %v7265, 32
  %v7940 = vpop.permute.xlu0 %7939
  %7941 = vrot.lane.b32.xlu0 %v7266, 32
  %v7942 = vpop.permute.xlu0 %7941
  %7943 = vrot.lane.b32.xlu0 %v7267, 32
  %v7944 = vpop.permute.xlu0 %7943
  %7945 = vrot.lane.b32.xlu0 %v7268, 32
  %v7946 = vpop.permute.xlu0 %7945
  %7947 = vrot.lane.b32.xlu0 %v7269, 32
  %v7948 = vpop.permute.xlu0 %7947
  %7949 = vrot.lane.b32.xlu0 %v7270, 32
  %v7950 = vpop.permute.xlu0 %7949
  %7951 = vrot.lane.b32.xlu0 %v7271, 32
  %v7952 = vpop.permute.xlu0 %7951
  %7953 = vrot.lane.b32.xlu0 %v7272, 32
  %v7954 = vpop.permute.xlu0 %7953
  %7955 = vrot.lane.b32.xlu0 %v7273, 32
  %v7956 = vpop.permute.xlu0 %7955
  %7957 = vrot.lane.b32.xlu0 %v7274, 32
  %v7958 = vpop.permute.xlu0 %7957
  %7959 = vrot.lane.b32.xlu0 %v7275, 32
  %v7960 = vpop.permute.xlu0 %7959
  %7961 = vrot.lane.b32.xlu0 %v7276, 32
  %v7962 = vpop.permute.xlu0 %7961
  %7963 = vrot.lane.b32.xlu0 %v7277, 32
  %v7964 = vpop.permute.xlu0 %7963
  %7965 = vrot.lane.b32.xlu0 %v7278, 32
  %v7966 = vpop.permute.xlu0 %7965
  %7967 = vrot.lane.b32.xlu0 %v7279, 32
  %v7968 = vpop.permute.xlu0 %7967
  %7969 = vrot.lane.b32.xlu0 %v7280, 32
  %v7970 = vpop.permute.xlu0 %7969
  %7971 = vrot.lane.b32.xlu0 %v7281, 32
  %v7972 = vpop.permute.xlu0 %7971
  %7973 = vrot.lane.b32.xlu0 %v7282, 32
  %v7974 = vpop.permute.xlu0 %7973
  %7975 = vrot.lane.b32.xlu0 %v7283, 32
  %v7976 = vpop.permute.xlu0 %7975
  %7977 = vrot.lane.b32.xlu0 %v7284, 32
  %v7978 = vpop.permute.xlu0 %7977
  %7979 = vrot.lane.b32.xlu0 %v7285, 32
  %v7980 = vpop.permute.xlu0 %7979
  %7981 = vrot.lane.b32.xlu0 %v7286, 32
  %v7982 = vpop.permute.xlu0 %7981
  %7983 = vrot.lane.b32.xlu0 %v7287, 32
  %v7984 = vpop.permute.xlu0 %7983
  %7985 = vrot.lane.b32.xlu0 %v7288, 32
  %v7986 = vpop.permute.xlu0 %7985
  %7987 = vrot.lane.b32.xlu0 %v7289, 32
  %v7988 = vpop.permute.xlu0 %7987
  %7989 = vrot.lane.b32.xlu0 %v7290, 32
  %v7990 = vpop.permute.xlu0 %7989
  %7991 = vrot.lane.b32.xlu0 %v7291, 32
  %v7992 = vpop.permute.xlu0 %7991
  %7993 = vrot.lane.b32.xlu0 %v7292, 32
  %v7994 = vpop.permute.xlu0 %7993
  %7995 = vrot.lane.b32.xlu0 %v7293, 32
  %v7996 = vpop.permute.xlu0 %7995
  %7997 = vrot.lane.b32.xlu0 %v7294, 32
  %v7998 = vpop.permute.xlu0 %7997
  %7999 = vrot.lane.b32.xlu0 %v7295, 32
  %v8000 = vpop.permute.xlu0 %7999
  %8001 = vrot.lane.b32.xlu0 %v7296, 32
  %v8002 = vpop.permute.xlu0 %8001
  %8003 = vrot.lane.b32.xlu0 %v7297, 32
  %v8004 = vpop.permute.xlu0 %8003
  %8005 = vrot.lane.b32.xlu0 %v7298, 32
  %v8006 = vpop.permute.xlu0 %8005
  %8007 = vrot.lane.b32.xlu0 %v7299, 32
  %v8008 = vpop.permute.xlu0 %8007
  %8009 = vrot.lane.b32.xlu0 %v7300, 32
  %v8010 = vpop.permute.xlu0 %8009
  %8011 = vrot.lane.b32.xlu0 %v7301, 32
  %v8012 = vpop.permute.xlu0 %8011
  %8013 = vrot.lane.b32.xlu0 %v7302, 32
  %v8014 = vpop.permute.xlu0 %8013
  %8015 = vrot.lane.b32.xlu0 %v7303, 32
  %v8016 = vpop.permute.xlu0 %8015
  %8017 = vrot.lane.b32.xlu0 %v7304, 32
  %v8018 = vpop.permute.xlu0 %8017
  %8019 = vrot.lane.b32.xlu0 %v7305, 32
  %v8020 = vpop.permute.xlu0 %8019
  %8021 = vrot.lane.b32.xlu0 %v7306, 32
  %v8022 = vpop.permute.xlu0 %8021
  %8023 = vrot.lane.b32.xlu0 %v7307, 32
  %v8024 = vpop.permute.xlu0 %8023
  %8025 = vrot.lane.b32.xlu0 %v7308, 32
  %v8026 = vpop.permute.xlu0 %8025
  %8027 = vrot.lane.b32.xlu0 %v7309, 32
  %v8028 = vpop.permute.xlu0 %8027
  %8029 = vrot.lane.b32.xlu0 %v7310, 32
  %v8030 = vpop.permute.xlu0 %8029
  %8031 = vrot.lane.b32.xlu0 %v7311, 32
  %v8032 = vpop.permute.xlu0 %8031
  %8033 = vrot.lane.b32.xlu0 %v7312, 32
  %v8034 = vpop.permute.xlu0 %8033
  %8035 = vrot.lane.b32.xlu0 %v7313, 32
  %v8036 = vpop.permute.xlu0 %8035
  %8037 = vrot.lane.b32.xlu0 %v7314, 32
  %v8038 = vpop.permute.xlu0 %8037
  %8039 = vrot.lane.b32.xlu0 %v7315, 32
  %v8040 = vpop.permute.xlu0 %8039
  %8041 = vrot.lane.b32.xlu0 %v7316, 32
  %v8042 = vpop.permute.xlu0 %8041
  %8043 = vrot.lane.b32.xlu0 %v7317, 32
  %v8044 = vpop.permute.xlu0 %8043
  %8045 = vrot.lane.b32.xlu0 %v7318, 32
  %v8046 = vpop.permute.xlu0 %8045
  %8047 = vrot.lane.b32.xlu0 %v7319, 32
  %v8048 = vpop.permute.xlu0 %8047
  %8049 = vrot.lane.b32.xlu0 %v7320, 32
  %v8050 = vpop.permute.xlu0 %8049
  %8051 = vrot.lane.b32.xlu0 %v7321, 32
  %v8052 = vpop.permute.xlu0 %8051
  %8053 = vrot.lane.b32.xlu0 %v7322, 32
  %v8054 = vpop.permute.xlu0 %8053
  %8066 = vrot.lane.b32.xlu0 %v7193, 48
  %v8067 = vpop.permute.xlu0 %8066
  %8068 = vrot.lane.b32.xlu0 %v7194, 48
  %v8069 = vpop.permute.xlu0 %8068
  %8070 = vrot.lane.b32.xlu0 %v7195, 48
  %v8071 = vpop.permute.xlu0 %8070
  %8072 = vrot.lane.b32.xlu0 %v7196, 48
  %v8073 = vpop.permute.xlu0 %8072
  %8074 = vrot.lane.b32.xlu0 %v7197, 48
  %v8075 = vpop.permute.xlu0 %8074
  %8076 = vrot.lane.b32.xlu0 %v7198, 48
  %v8077 = vpop.permute.xlu0 %8076
  %8078 = vrot.lane.b32.xlu0 %v7199, 48
  %v8079 = vpop.permute.xlu0 %8078
  %8080 = vrot.lane.b32.xlu0 %v7200, 48
  %v8081 = vpop.permute.xlu0 %8080
  %8082 = vrot.lane.b32.xlu0 %v7201, 48
  %v8083 = vpop.permute.xlu0 %8082
  %8084 = vrot.lane.b32.xlu0 %v7202, 48
  %v8085 = vpop.permute.xlu0 %8084
  %8086 = vrot.lane.b32.xlu0 %v7203, 48
  %v8087 = vpop.permute.xlu0 %8086
  %8088 = vrot.lane.b32.xlu0 %v7204, 48
  %v8089 = vpop.permute.xlu0 %8088
  %8090 = vrot.lane.b32.xlu0 %v7205, 48
  %v8091 = vpop.permute.xlu0 %8090
  %8092 = vrot.lane.b32.xlu0 %v7206, 48
  %v8093 = vpop.permute.xlu0 %8092
  %8094 = vrot.lane.b32.xlu0 %v7207, 48
  %v8095 = vpop.permute.xlu0 %8094
  %8096 = vrot.lane.b32.xlu0 %v7208, 48
  %v8097 = vpop.permute.xlu0 %8096
  %8098 = vrot.lane.b32.xlu0 %v7209, 48
  %v8099 = vpop.permute.xlu0 %8098
  %8100 = vrot.lane.b32.xlu0 %v7210, 48
  %v8101 = vpop.permute.xlu0 %8100
  %8102 = vrot.lane.b32.xlu0 %v7211, 48
  %v8103 = vpop.permute.xlu0 %8102
  %8104 = vrot.lane.b32.xlu0 %v7212, 48
  %v8105 = vpop.permute.xlu0 %8104
  %8106 = vrot.lane.b32.xlu0 %v7213, 48
  %v8107 = vpop.permute.xlu0 %8106
  %8108 = vrot.lane.b32.xlu0 %v7214, 48
  %v8109 = vpop.permute.xlu0 %8108
  %8110 = vrot.lane.b32.xlu0 %v7215, 48
  %v8111 = vpop.permute.xlu0 %8110
  %8112 = vrot.lane.b32.xlu0 %v7216, 48
  %v8113 = vpop.permute.xlu0 %8112
  %8114 = vrot.lane.b32.xlu0 %v7217, 48
  %v8115 = vpop.permute.xlu0 %8114
  %8116 = vrot.lane.b32.xlu0 %v7218, 48
  %v8117 = vpop.permute.xlu0 %8116
  %8118 = vrot.lane.b32.xlu0 %v7219, 48
  %v8119 = vpop.permute.xlu0 %8118
  %8120 = vrot.lane.b32.xlu0 %v7220, 48
  %v8121 = vpop.permute.xlu0 %8120
  %8122 = vrot.lane.b32.xlu0 %v7221, 48
  %v8123 = vpop.permute.xlu0 %8122
  %8124 = vrot.lane.b32.xlu0 %v7222, 48
  %v8125 = vpop.permute.xlu0 %8124
  %8126 = vrot.lane.b32.xlu0 %v7223, 48
  %v8127 = vpop.permute.xlu0 %8126
  %8128 = vrot.lane.b32.xlu0 %v7224, 48
  %v8129 = vpop.permute.xlu0 %8128
  %8130 = vrot.lane.b32.xlu0 %v7225, 48
  %v8131 = vpop.permute.xlu0 %8130
  %8132 = vrot.lane.b32.xlu0 %v7226, 48
  %v8133 = vpop.permute.xlu0 %8132
  %8134 = vrot.lane.b32.xlu0 %v7227, 48
  %v8135 = vpop.permute.xlu0 %8134
  %8136 = vrot.lane.b32.xlu0 %v7228, 48
  %v8137 = vpop.permute.xlu0 %8136
  %8138 = vrot.lane.b32.xlu0 %v7229, 48
  %v8139 = vpop.permute.xlu0 %8138
  %8140 = vrot.lane.b32.xlu0 %v7230, 48
  %v8141 = vpop.permute.xlu0 %8140
  %8142 = vrot.lane.b32.xlu0 %v7231, 48
  %v8143 = vpop.permute.xlu0 %8142
  %8144 = vrot.lane.b32.xlu0 %v7232, 48
  %v8145 = vpop.permute.xlu0 %8144
  %8146 = vrot.lane.b32.xlu0 %v7233, 48
  %v8147 = vpop.permute.xlu0 %8146
  %8148 = vrot.lane.b32.xlu0 %v7234, 48
  %v8149 = vpop.permute.xlu0 %8148
  %8150 = vrot.lane.b32.xlu0 %v7235, 48
  %v8151 = vpop.permute.xlu0 %8150
  %8152 = vrot.lane.b32.xlu0 %v7236, 48
  %v8153 = vpop.permute.xlu0 %8152
  %8154 = vrot.lane.b32.xlu0 %v7237, 48
  %v8155 = vpop.permute.xlu0 %8154
  %8156 = vrot.lane.b32.xlu0 %v7238, 48
  %v8157 = vpop.permute.xlu0 %8156
  %8158 = vrot.lane.b32.xlu0 %v7239, 48
  %v8159 = vpop.permute.xlu0 %8158
  %8160 = vrot.lane.b32.xlu0 %v7240, 48
  %v8161 = vpop.permute.xlu0 %8160
  %8162 = vrot.lane.b32.xlu0 %v7241, 48
  %v8163 = vpop.permute.xlu0 %8162
  %8164 = vrot.lane.b32.xlu0 %v7242, 48
  %v8165 = vpop.permute.xlu0 %8164
  %8166 = vrot.lane.b32.xlu0 %v7243, 48
  %v8167 = vpop.permute.xlu0 %8166
  %8168 = vrot.lane.b32.xlu0 %v7244, 48
  %v8169 = vpop.permute.xlu0 %8168
  %8170 = vrot.lane.b32.xlu0 %v7245, 48
  %v8171 = vpop.permute.xlu0 %8170
  %8172 = vrot.lane.b32.xlu0 %v7246, 48
  %v8173 = vpop.permute.xlu0 %8172
  %8174 = vrot.lane.b32.xlu0 %v7247, 48
  %v8175 = vpop.permute.xlu0 %8174
  %8176 = vrot.lane.b32.xlu0 %v7248, 48
  %v8177 = vpop.permute.xlu0 %8176
  %8178 = vrot.lane.b32.xlu0 %v7249, 48
  %v8179 = vpop.permute.xlu0 %8178
  %8180 = vrot.lane.b32.xlu0 %v7250, 48
  %v8181 = vpop.permute.xlu0 %8180
  %8182 = vrot.lane.b32.xlu0 %v7251, 48
  %v8183 = vpop.permute.xlu0 %8182
  %8184 = vrot.lane.b32.xlu0 %v7252, 48
  %v8185 = vpop.permute.xlu0 %8184
  %8186 = vrot.lane.b32.xlu0 %v7253, 48
  %v8187 = vpop.permute.xlu0 %8186
  %8188 = vrot.lane.b32.xlu0 %v7254, 48
  %v8189 = vpop.permute.xlu0 %8188
  %8190 = vrot.lane.b32.xlu0 %v7255, 48
  %v8191 = vpop.permute.xlu0 %8190
  %8192 = vrot.lane.b32.xlu0 %v7256, 48
  %v8193 = vpop.permute.xlu0 %8192
  %8194 = vrot.lane.b32.xlu0 %v7257, 48
  %v8195 = vpop.permute.xlu0 %8194
  %8196 = vrot.lane.b32.xlu0 %v7258, 48
  %v8197 = vpop.permute.xlu0 %8196
  %8198 = vrot.lane.b32.xlu0 %v7259, 48
  %v8199 = vpop.permute.xlu0 %8198
  %8200 = vrot.lane.b32.xlu0 %v7260, 48
  %v8201 = vpop.permute.xlu0 %8200
  %8202 = vrot.lane.b32.xlu0 %v7261, 48
  %v8203 = vpop.permute.xlu0 %8202
  %8204 = vrot.lane.b32.xlu0 %v7262, 48
  %v8205 = vpop.permute.xlu0 %8204
  %8206 = vrot.lane.b32.xlu0 %v7263, 48
  %v8207 = vpop.permute.xlu0 %8206
  %8208 = vrot.lane.b32.xlu0 %v7264, 48
  %v8209 = vpop.permute.xlu0 %8208
  %8210 = vrot.lane.b32.xlu0 %v7265, 48
  %v8211 = vpop.permute.xlu0 %8210
  %8212 = vrot.lane.b32.xlu0 %v7266, 48
  %v8213 = vpop.permute.xlu0 %8212
  %8214 = vrot.lane.b32.xlu0 %v7267, 48
  %v8215 = vpop.permute.xlu0 %8214
  %8216 = vrot.lane.b32.xlu0 %v7268, 48
  %v8217 = vpop.permute.xlu0 %8216
  %8218 = vrot.lane.b32.xlu0 %v7269, 48
  %v8219 = vpop.permute.xlu0 %8218
  %8220 = vrot.lane.b32.xlu0 %v7270, 48
  %v8221 = vpop.permute.xlu0 %8220
  %8222 = vrot.lane.b32.xlu0 %v7271, 48
  %v8223 = vpop.permute.xlu0 %8222
  %8224 = vrot.lane.b32.xlu0 %v7272, 48
  %v8225 = vpop.permute.xlu0 %8224
  %8226 = vrot.lane.b32.xlu0 %v7273, 48
  %v8227 = vpop.permute.xlu0 %8226
  %8228 = vrot.lane.b32.xlu0 %v7274, 48
  %v8229 = vpop.permute.xlu0 %8228
  %8230 = vrot.lane.b32.xlu0 %v7275, 48
  %v8231 = vpop.permute.xlu0 %8230
  %8232 = vrot.lane.b32.xlu0 %v7276, 48
  %v8233 = vpop.permute.xlu0 %8232
  %8234 = vrot.lane.b32.xlu0 %v7277, 48
  %v8235 = vpop.permute.xlu0 %8234
  %8236 = vrot.lane.b32.xlu0 %v7278, 48
  %v8237 = vpop.permute.xlu0 %8236
  %8238 = vrot.lane.b32.xlu0 %v7279, 48
  %v8239 = vpop.permute.xlu0 %8238
  %8240 = vrot.lane.b32.xlu0 %v7280, 48
  %v8241 = vpop.permute.xlu0 %8240
  %8242 = vrot.lane.b32.xlu0 %v7281, 48
  %v8243 = vpop.permute.xlu0 %8242
  %8244 = vrot.lane.b32.xlu0 %v7282, 48
  %v8245 = vpop.permute.xlu0 %8244
  %8246 = vrot.lane.b32.xlu0 %v7283, 48
  %v8247 = vpop.permute.xlu0 %8246
  %8248 = vrot.lane.b32.xlu0 %v7284, 48
  %v8249 = vpop.permute.xlu0 %8248
  %8250 = vrot.lane.b32.xlu0 %v7285, 48
  %v8251 = vpop.permute.xlu0 %8250
  %8252 = vrot.lane.b32.xlu0 %v7286, 48
  %v8253 = vpop.permute.xlu0 %8252
  %8254 = vrot.lane.b32.xlu0 %v7287, 48
  %v8255 = vpop.permute.xlu0 %8254
  %8256 = vrot.lane.b32.xlu0 %v7288, 48
  %v8257 = vpop.permute.xlu0 %8256
  %8258 = vrot.lane.b32.xlu0 %v7289, 48
  %v8259 = vpop.permute.xlu0 %8258
  %8260 = vrot.lane.b32.xlu0 %v7290, 48
  %v8261 = vpop.permute.xlu0 %8260
  %8262 = vrot.lane.b32.xlu0 %v7291, 48
  %v8263 = vpop.permute.xlu0 %8262
  %8264 = vrot.lane.b32.xlu0 %v7292, 48
  %v8265 = vpop.permute.xlu0 %8264
  %8266 = vrot.lane.b32.xlu0 %v7293, 48
  %v8267 = vpop.permute.xlu0 %8266
  %8268 = vrot.lane.b32.xlu0 %v7294, 48
  %v8269 = vpop.permute.xlu0 %8268
  %8270 = vrot.lane.b32.xlu0 %v7295, 48
  %v8271 = vpop.permute.xlu0 %8270
  %8272 = vrot.lane.b32.xlu0 %v7296, 48
  %v8273 = vpop.permute.xlu0 %8272
  %8274 = vrot.lane.b32.xlu0 %v7297, 48
  %v8275 = vpop.permute.xlu0 %8274
  %8276 = vrot.lane.b32.xlu0 %v7298, 48
  %v8277 = vpop.permute.xlu0 %8276
  %8278 = vrot.lane.b32.xlu0 %v7299, 48
  %v8279 = vpop.permute.xlu0 %8278
  %8280 = vrot.lane.b32.xlu0 %v7300, 48
  %v8281 = vpop.permute.xlu0 %8280
  %8282 = vrot.lane.b32.xlu0 %v7301, 48
  %v8283 = vpop.permute.xlu0 %8282
  %8284 = vrot.lane.b32.xlu0 %v7302, 48
  %v8285 = vpop.permute.xlu0 %8284
  %8286 = vrot.lane.b32.xlu0 %v7303, 48
  %v8287 = vpop.permute.xlu0 %8286
  %8288 = vrot.lane.b32.xlu0 %v7304, 48
  %v8289 = vpop.permute.xlu0 %8288
  %8290 = vrot.lane.b32.xlu0 %v7305, 48
  %v8291 = vpop.permute.xlu0 %8290
  %8292 = vrot.lane.b32.xlu0 %v7306, 48
  %v8293 = vpop.permute.xlu0 %8292
  %8294 = vrot.lane.b32.xlu0 %v7307, 48
  %v8295 = vpop.permute.xlu0 %8294
  %8296 = vrot.lane.b32.xlu0 %v7308, 48
  %v8297 = vpop.permute.xlu0 %8296
  %8298 = vrot.lane.b32.xlu0 %v7309, 48
  %v8299 = vpop.permute.xlu0 %8298
  %8300 = vrot.lane.b32.xlu0 %v7310, 48
  %v8301 = vpop.permute.xlu0 %8300
  %8302 = vrot.lane.b32.xlu0 %v7311, 48
  %v8303 = vpop.permute.xlu0 %8302
  %8304 = vrot.lane.b32.xlu0 %v7312, 48
  %v8305 = vpop.permute.xlu0 %8304
  %8306 = vrot.lane.b32.xlu0 %v7313, 48
  %v8307 = vpop.permute.xlu0 %8306
  %8308 = vrot.lane.b32.xlu0 %v7314, 48
  %v8309 = vpop.permute.xlu0 %8308
  %8310 = vrot.lane.b32.xlu0 %v7315, 48
  %v8311 = vpop.permute.xlu0 %8310
  %8312 = vrot.lane.b32.xlu0 %v7316, 48
  %v8313 = vpop.permute.xlu0 %8312
  %8314 = vrot.lane.b32.xlu0 %v7317, 48
  %v8315 = vpop.permute.xlu0 %8314
  %8316 = vrot.lane.b32.xlu0 %v7318, 48
  %v8317 = vpop.permute.xlu0 %8316
  %8318 = vrot.lane.b32.xlu0 %v7319, 48
  %v8319 = vpop.permute.xlu0 %8318
  %8320 = vrot.lane.b32.xlu0 %v7320, 48
  %v8321 = vpop.permute.xlu0 %8320
  %8322 = vrot.lane.b32.xlu0 %v7321, 48
  %v8323 = vpop.permute.xlu0 %8322
  %8324 = vrot.lane.b32.xlu0 %v7322, 48
  %v8325 = vpop.permute.xlu0 %8324
  %8326 = vrot.lane.b32.xlu0 %v7323, 48
  %v8327 = vpop.permute.xlu0 %8326
  %8328 = vrot.lane.b32.xlu0 %v7324, 48
  %v8329 = vpop.permute.xlu0 %8328
  %8330 = vrot.lane.b32.xlu0 %v7325, 48
  %v8331 = vpop.permute.xlu0 %8330
  %8332 = vrot.lane.b32.xlu0 %v7326, 48
  %v8333 = vpop.permute.xlu0 %8332
  %8334 = vrot.lane.b32.xlu0 %v7327, 48
  %v8335 = vpop.permute.xlu0 %8334
  %8336 = vrot.lane.b32.xlu0 %v7328, 48
  %v8337 = vpop.permute.xlu0 %8336
  %8338 = vrot.lane.b32.xlu0 %v7329, 48
  %v8339 = vpop.permute.xlu0 %8338
  %8340 = vrot.lane.b32.xlu0 %v7330, 48
  %v8341 = vpop.permute.xlu0 %8340
  %8342 = vrot.lane.b32.xlu0 %v7331, 48
  %v8343 = vpop.permute.xlu0 %8342
  %8344 = vrot.lane.b32.xlu0 %v7332, 48
  %v8345 = vpop.permute.xlu0 %8344
  %8346 = vrot.lane.b32.xlu0 %v7333, 48
  %v8347 = vpop.permute.xlu0 %8346
  %8349 = vrot.lane.b32.xlu0 %v7194, 64
  %v8350 = vpop.permute.xlu0 %8349
  %8351 = vrot.lane.b32.xlu0 %v7195, 64
  %v8352 = vpop.permute.xlu0 %8351
  %8353 = vrot.lane.b32.xlu0 %v7196, 64
  %v8354 = vpop.permute.xlu0 %8353
  %8355 = vrot.lane.b32.xlu0 %v7197, 64
  %v8356 = vpop.permute.xlu0 %8355
  %8357 = vrot.lane.b32.xlu0 %v7198, 64
  %v8358 = vpop.permute.xlu0 %8357
  %8359 = vrot.lane.b32.xlu0 %v7199, 64
  %v8360 = vpop.permute.xlu0 %8359
  %8361 = vrot.lane.b32.xlu0 %v7200, 64
  %v8362 = vpop.permute.xlu0 %8361
  %8363 = vrot.lane.b32.xlu0 %v7201, 64
  %v8364 = vpop.permute.xlu0 %8363
  %8365 = vrot.lane.b32.xlu0 %v7202, 64
  %v8366 = vpop.permute.xlu0 %8365
  %8367 = vrot.lane.b32.xlu0 %v7203, 64
  %v8368 = vpop.permute.xlu0 %8367
  %8369 = vrot.lane.b32.xlu0 %v7204, 64
  %v8370 = vpop.permute.xlu0 %8369
  %8371 = vrot.lane.b32.xlu0 %v7205, 64
  %v8372 = vpop.permute.xlu0 %8371
  %8373 = vrot.lane.b32.xlu0 %v7206, 64
  %v8374 = vpop.permute.xlu0 %8373
  %8375 = vrot.lane.b32.xlu0 %v7207, 64
  %v8376 = vpop.permute.xlu0 %8375
  %8377 = vrot.lane.b32.xlu0 %v7208, 64
  %v8378 = vpop.permute.xlu0 %8377
  %8379 = vrot.lane.b32.xlu0 %v7209, 64
  %v8380 = vpop.permute.xlu0 %8379
  %8381 = vrot.lane.b32.xlu0 %v7210, 64
  %v8382 = vpop.permute.xlu0 %8381
  %8383 = vrot.lane.b32.xlu0 %v7211, 64
  %v8384 = vpop.permute.xlu0 %8383
  %8385 = vrot.lane.b32.xlu0 %v7212, 64
  %v8386 = vpop.permute.xlu0 %8385
  %8387 = vrot.lane.b32.xlu0 %v7213, 64
  %v8388 = vpop.permute.xlu0 %8387
  %8389 = vrot.lane.b32.xlu0 %v7214, 64
  %v8390 = vpop.permute.xlu0 %8389
  %8391 = vrot.lane.b32.xlu0 %v7215, 64
  %v8392 = vpop.permute.xlu0 %8391
  %8393 = vrot.lane.b32.xlu0 %v7216, 64
  %v8394 = vpop.permute.xlu0 %8393
  %8395 = vrot.lane.b32.xlu0 %v7217, 64
  %v8396 = vpop.permute.xlu0 %8395
  %8397 = vrot.lane.b32.xlu0 %v7218, 64
  %v8398 = vpop.permute.xlu0 %8397
  %8399 = vrot.lane.b32.xlu0 %v7219, 64
  %v8400 = vpop.permute.xlu0 %8399
  %8401 = vrot.lane.b32.xlu0 %v7220, 64
  %v8402 = vpop.permute.xlu0 %8401
  %8403 = vrot.lane.b32.xlu0 %v7221, 64
  %v8404 = vpop.permute.xlu0 %8403
  %8405 = vrot.lane.b32.xlu0 %v7222, 64
  %v8406 = vpop.permute.xlu0 %8405
  %8407 = vrot.lane.b32.xlu0 %v7223, 64
  %v8408 = vpop.permute.xlu0 %8407
  %8409 = vrot.lane.b32.xlu0 %v7224, 64
  %v8410 = vpop.permute.xlu0 %8409
  %8411 = vrot.lane.b32.xlu0 %v7225, 64
  %v8412 = vpop.permute.xlu0 %8411
  %8413 = vrot.lane.b32.xlu0 %v7226, 64
  %v8414 = vpop.permute.xlu0 %8413
  %8415 = vrot.lane.b32.xlu0 %v7227, 64
  %v8416 = vpop.permute.xlu0 %8415
  %8417 = vrot.lane.b32.xlu0 %v7228, 64
  %v8418 = vpop.permute.xlu0 %8417
  %8419 = vrot.lane.b32.xlu0 %v7229, 64
  %v8420 = vpop.permute.xlu0 %8419
  %8421 = vrot.lane.b32.xlu0 %v7230, 64
  %v8422 = vpop.permute.xlu0 %8421
  %8423 = vrot.lane.b32.xlu0 %v7231, 64
  %v8424 = vpop.permute.xlu0 %8423
  %8425 = vrot.lane.b32.xlu0 %v7232, 64
  %v8426 = vpop.permute.xlu0 %8425
  %8427 = vrot.lane.b32.xlu0 %v7233, 64
  %v8428 = vpop.permute.xlu0 %8427
  %8429 = vrot.lane.b32.xlu0 %v7234, 64
  %v8430 = vpop.permute.xlu0 %8429
  %8431 = vrot.lane.b32.xlu0 %v7235, 64
  %v8432 = vpop.permute.xlu0 %8431
  %8433 = vrot.lane.b32.xlu0 %v7236, 64
  %v8434 = vpop.permute.xlu0 %8433
  %8435 = vrot.lane.b32.xlu0 %v7237, 64
  %v8436 = vpop.permute.xlu0 %8435
  %8437 = vrot.lane.b32.xlu0 %v7238, 64
  %v8438 = vpop.permute.xlu0 %8437
  %8439 = vrot.lane.b32.xlu0 %v7239, 64
  %v8440 = vpop.permute.xlu0 %8439
  %8441 = vrot.lane.b32.xlu0 %v7240, 64
  %v8442 = vpop.permute.xlu0 %8441
  %8443 = vrot.lane.b32.xlu0 %v7241, 64
  %v8444 = vpop.permute.xlu0 %8443
  %8445 = vrot.lane.b32.xlu0 %v7242, 64
  %v8446 = vpop.permute.xlu0 %8445
  %8447 = vrot.lane.b32.xlu0 %v7243, 64
  %v8448 = vpop.permute.xlu0 %8447
  %8449 = vrot.lane.b32.xlu0 %v7244, 64
  %v8450 = vpop.permute.xlu0 %8449
  %8451 = vrot.lane.b32.xlu0 %v7245, 64
  %v8452 = vpop.permute.xlu0 %8451
  %8453 = vrot.lane.b32.xlu0 %v7246, 64
  %v8454 = vpop.permute.xlu0 %8453
  %8455 = vrot.lane.b32.xlu0 %v7247, 64
  %v8456 = vpop.permute.xlu0 %8455
  %8457 = vrot.lane.b32.xlu0 %v7248, 64
  %v8458 = vpop.permute.xlu0 %8457
  %8459 = vrot.lane.b32.xlu0 %v7249, 64
  %v8460 = vpop.permute.xlu0 %8459
  %8461 = vrot.lane.b32.xlu0 %v7250, 64
  %v8462 = vpop.permute.xlu0 %8461
  %8463 = vrot.lane.b32.xlu0 %v7251, 64
  %v8464 = vpop.permute.xlu0 %8463
  %8465 = vrot.lane.b32.xlu0 %v7252, 64
  %v8466 = vpop.permute.xlu0 %8465
  %8467 = vrot.lane.b32.xlu0 %v7253, 64
  %v8468 = vpop.permute.xlu0 %8467
  %8469 = vrot.lane.b32.xlu0 %v7254, 64
  %v8470 = vpop.permute.xlu0 %8469
  %8471 = vrot.lane.b32.xlu0 %v7255, 64
  %v8472 = vpop.permute.xlu0 %8471
  %8473 = vrot.lane.b32.xlu0 %v7256, 64
  %v8474 = vpop.permute.xlu0 %8473
  %8475 = vrot.lane.b32.xlu0 %v7257, 64
  %v8476 = vpop.permute.xlu0 %8475
  %8477 = vrot.lane.b32.xlu0 %v7258, 64
  %v8478 = vpop.permute.xlu0 %8477
  %8479 = vrot.lane.b32.xlu0 %v7259, 64
  %v8480 = vpop.permute.xlu0 %8479
  %8481 = vrot.lane.b32.xlu0 %v7260, 64
  %v8482 = vpop.permute.xlu0 %8481
  %8483 = vrot.lane.b32.xlu0 %v7261, 64
  %v8484 = vpop.permute.xlu0 %8483
  %8485 = vrot.lane.b32.xlu0 %v7262, 64
  %v8486 = vpop.permute.xlu0 %8485
  %8487 = vrot.lane.b32.xlu0 %v7263, 64
  %v8488 = vpop.permute.xlu0 %8487
  %8489 = vrot.lane.b32.xlu0 %v7264, 64
  %v8490 = vpop.permute.xlu0 %8489
  %8491 = vrot.lane.b32.xlu0 %v7265, 64
  %v8492 = vpop.permute.xlu0 %8491
  %8493 = vrot.lane.b32.xlu0 %v7266, 64
  %v8494 = vpop.permute.xlu0 %8493
  %8495 = vrot.lane.b32.xlu0 %v7267, 64
  %v8496 = vpop.permute.xlu0 %8495
  %8497 = vrot.lane.b32.xlu0 %v7268, 64
  %v8498 = vpop.permute.xlu0 %8497
  %8499 = vrot.lane.b32.xlu0 %v7269, 64
  %v8500 = vpop.permute.xlu0 %8499
  %8501 = vrot.lane.b32.xlu0 %v7270, 64
  %v8502 = vpop.permute.xlu0 %8501
  %8503 = vrot.lane.b32.xlu0 %v7271, 64
  %v8504 = vpop.permute.xlu0 %8503
  %8505 = vrot.lane.b32.xlu0 %v7272, 64
  %v8506 = vpop.permute.xlu0 %8505
  %8507 = vrot.lane.b32.xlu0 %v7273, 64
  %v8508 = vpop.permute.xlu0 %8507
  %8509 = vrot.lane.b32.xlu0 %v7274, 64
  %v8510 = vpop.permute.xlu0 %8509
  %8511 = vrot.lane.b32.xlu0 %v7275, 64
  %v8512 = vpop.permute.xlu0 %8511
  %8513 = vrot.lane.b32.xlu0 %v7276, 64
  %v8514 = vpop.permute.xlu0 %8513
  %8515 = vrot.lane.b32.xlu0 %v7277, 64
  %v8516 = vpop.permute.xlu0 %8515
  %8517 = vrot.lane.b32.xlu0 %v7278, 64
  %v8518 = vpop.permute.xlu0 %8517
  %8519 = vrot.lane.b32.xlu0 %v7279, 64
  %v8520 = vpop.permute.xlu0 %8519
  %8521 = vrot.lane.b32.xlu0 %v7280, 64
  %v8522 = vpop.permute.xlu0 %8521
  %8523 = vrot.lane.b32.xlu0 %v7281, 64
  %v8524 = vpop.permute.xlu0 %8523
  %8525 = vrot.lane.b32.xlu0 %v7282, 64
  %v8526 = vpop.permute.xlu0 %8525
  %8527 = vrot.lane.b32.xlu0 %v7283, 64
  %v8528 = vpop.permute.xlu0 %8527
  %8529 = vrot.lane.b32.xlu0 %v7284, 64
  %v8530 = vpop.permute.xlu0 %8529
  %8531 = vrot.lane.b32.xlu0 %v7285, 64
  %v8532 = vpop.permute.xlu0 %8531
  %8533 = vrot.lane.b32.xlu0 %v7286, 64
  %v8534 = vpop.permute.xlu0 %8533
  %8535 = vrot.lane.b32.xlu0 %v7287, 64
  %v8536 = vpop.permute.xlu0 %8535
  %8537 = vrot.lane.b32.xlu0 %v7288, 64
  %v8538 = vpop.permute.xlu0 %8537
  %8539 = vrot.lane.b32.xlu0 %v7289, 64
  %v8540 = vpop.permute.xlu0 %8539
  %8541 = vrot.lane.b32.xlu0 %v7290, 64
  %v8542 = vpop.permute.xlu0 %8541
  %8543 = vrot.lane.b32.xlu0 %v7291, 64
  %v8544 = vpop.permute.xlu0 %8543
  %8545 = vrot.lane.b32.xlu0 %v7292, 64
  %v8546 = vpop.permute.xlu0 %8545
  %8547 = vrot.lane.b32.xlu0 %v7293, 64
  %v8548 = vpop.permute.xlu0 %8547
  %8549 = vrot.lane.b32.xlu0 %v7294, 64
  %v8550 = vpop.permute.xlu0 %8549
  %8551 = vrot.lane.b32.xlu0 %v7295, 64
  %v8552 = vpop.permute.xlu0 %8551
  %8553 = vrot.lane.b32.xlu0 %v7296, 64
  %v8554 = vpop.permute.xlu0 %8553
  %8555 = vrot.lane.b32.xlu0 %v7297, 64
  %v8556 = vpop.permute.xlu0 %8555
  %8557 = vrot.lane.b32.xlu0 %v7298, 64
  %v8558 = vpop.permute.xlu0 %8557
  %8559 = vrot.lane.b32.xlu0 %v7299, 64
  %v8560 = vpop.permute.xlu0 %8559
  %8561 = vrot.lane.b32.xlu0 %v7300, 64
  %v8562 = vpop.permute.xlu0 %8561
  %8563 = vrot.lane.b32.xlu0 %v7301, 64
  %v8564 = vpop.permute.xlu0 %8563
  %8565 = vrot.lane.b32.xlu0 %v7302, 64
  %v8566 = vpop.permute.xlu0 %8565
  %8567 = vrot.lane.b32.xlu0 %v7303, 64
  %v8568 = vpop.permute.xlu0 %8567
  %8569 = vrot.lane.b32.xlu0 %v7304, 64
  %v8570 = vpop.permute.xlu0 %8569
  %8571 = vrot.lane.b32.xlu0 %v7305, 64
  %v8572 = vpop.permute.xlu0 %8571
  %8573 = vrot.lane.b32.xlu0 %v7306, 64
  %v8574 = vpop.permute.xlu0 %8573
  %8575 = vrot.lane.b32.xlu0 %v7307, 64
  %v8576 = vpop.permute.xlu0 %8575
  %8577 = vrot.lane.b32.xlu0 %v7308, 64
  %v8578 = vpop.permute.xlu0 %8577
  %8579 = vrot.lane.b32.xlu0 %v7309, 64
  %v8580 = vpop.permute.xlu0 %8579
  %8581 = vrot.lane.b32.xlu0 %v7310, 64
  %v8582 = vpop.permute.xlu0 %8581
  %8583 = vrot.lane.b32.xlu0 %v7311, 64
  %v8584 = vpop.permute.xlu0 %8583
  %8585 = vrot.lane.b32.xlu0 %v7312, 64
  %v8586 = vpop.permute.xlu0 %8585
  %8587 = vrot.lane.b32.xlu0 %v7313, 64
  %v8588 = vpop.permute.xlu0 %8587
  %8589 = vrot.lane.b32.xlu0 %v7314, 64
  %v8590 = vpop.permute.xlu0 %8589
  %8591 = vrot.lane.b32.xlu0 %v7315, 64
  %v8592 = vpop.permute.xlu0 %8591
  %8593 = vrot.lane.b32.xlu0 %v7316, 64
  %v8594 = vpop.permute.xlu0 %8593
  %8595 = vrot.lane.b32.xlu0 %v7317, 64
  %v8596 = vpop.permute.xlu0 %8595
  %8597 = vrot.lane.b32.xlu0 %v7318, 64
  %v8598 = vpop.permute.xlu0 %8597
  %8599 = vrot.lane.b32.xlu0 %v7319, 64
  %v8600 = vpop.permute.xlu0 %8599
  %8601 = vrot.lane.b32.xlu0 %v7320, 64
  %v8602 = vpop.permute.xlu0 %8601
  %8603 = vrot.lane.b32.xlu0 %v7321, 64
  %v8604 = vpop.permute.xlu0 %8603
  %8605 = vrot.lane.b32.xlu0 %v7322, 64
  %v8606 = vpop.permute.xlu0 %8605
  %8607 = vrot.lane.b32.xlu0 %v7323, 64
  %v8608 = vpop.permute.xlu0 %8607
  %8609 = vrot.lane.b32.xlu0 %v7324, 64
  %v8610 = vpop.permute.xlu0 %8609
  %8611 = vrot.lane.b32.xlu0 %v7325, 64
  %v8612 = vpop.permute.xlu0 %8611
  %8613 = vrot.lane.b32.xlu0 %v7326, 64
  %v8614 = vpop.permute.xlu0 %8613
  %8615 = vrot.lane.b32.xlu0 %v7327, 64
  %v8616 = vpop.permute.xlu0 %8615
  %8617 = vrot.lane.b32.xlu0 %v7328, 64
  %v8618 = vpop.permute.xlu0 %8617
  %8619 = vrot.lane.b32.xlu0 %v7329, 64
  %v8620 = vpop.permute.xlu0 %8619
  %8621 = vrot.lane.b32.xlu0 %v7330, 64
  %v8622 = vpop.permute.xlu0 %8621
  %8623 = vrot.lane.b32.xlu0 %v7331, 64
  %v8624 = vpop.permute.xlu0 %8623
  %8625 = vrot.lane.b32.xlu0 %v7332, 64
  %v8626 = vpop.permute.xlu0 %8625
  %8627 = vrot.lane.b32.xlu0 %v7333, 64
  %v8628 = vpop.permute.xlu0 %8627
  %8629 = vrot.lane.b32.xlu0 %v7334, 64
  %v8630 = vpop.permute.xlu0 %8629
  %8632 = vrot.lane.b32.xlu0 %v7195, 80
  %v8633 = vpop.permute.xlu0 %8632
  %8634 = vrot.lane.b32.xlu0 %v7196, 80
  %v8635 = vpop.permute.xlu0 %8634
  %8636 = vrot.lane.b32.xlu0 %v7197, 80
  %v8637 = vpop.permute.xlu0 %8636
  %8638 = vrot.lane.b32.xlu0 %v7198, 80
  %v8639 = vpop.permute.xlu0 %8638
  %8640 = vrot.lane.b32.xlu0 %v7199, 80
  %v8641 = vpop.permute.xlu0 %8640
  %8642 = vrot.lane.b32.xlu0 %v7200, 80
  %v8643 = vpop.permute.xlu0 %8642
  %8644 = vrot.lane.b32.xlu0 %v7201, 80
  %v8645 = vpop.permute.xlu0 %8644
  %8646 = vrot.lane.b32.xlu0 %v7202, 80
  %v8647 = vpop.permute.xlu0 %8646
  %8648 = vrot.lane.b32.xlu0 %v7203, 80
  %v8649 = vpop.permute.xlu0 %8648
  %8650 = vrot.lane.b32.xlu0 %v7204, 80
  %v8651 = vpop.permute.xlu0 %8650
  %8652 = vrot.lane.b32.xlu0 %v7205, 80
  %v8653 = vpop.permute.xlu0 %8652
  %8654 = vrot.lane.b32.xlu0 %v7206, 80
  %v8655 = vpop.permute.xlu0 %8654
  %8656 = vrot.lane.b32.xlu0 %v7207, 80
  %v8657 = vpop.permute.xlu0 %8656
  %8658 = vrot.lane.b32.xlu0 %v7208, 80
  %v8659 = vpop.permute.xlu0 %8658
  %8660 = vrot.lane.b32.xlu0 %v7209, 80
  %v8661 = vpop.permute.xlu0 %8660
  %8662 = vrot.lane.b32.xlu0 %v7210, 80
  %v8663 = vpop.permute.xlu0 %8662
  %8664 = vrot.lane.b32.xlu0 %v7211, 80
  %v8665 = vpop.permute.xlu0 %8664
  %8666 = vrot.lane.b32.xlu0 %v7212, 80
  %v8667 = vpop.permute.xlu0 %8666
  %8668 = vrot.lane.b32.xlu0 %v7213, 80
  %v8669 = vpop.permute.xlu0 %8668
  %8670 = vrot.lane.b32.xlu0 %v7214, 80
  %v8671 = vpop.permute.xlu0 %8670
  %8672 = vrot.lane.b32.xlu0 %v7215, 80
  %v8673 = vpop.permute.xlu0 %8672
  %8674 = vrot.lane.b32.xlu0 %v7216, 80
  %v8675 = vpop.permute.xlu0 %8674
  %8676 = vrot.lane.b32.xlu0 %v7217, 80
  %v8677 = vpop.permute.xlu0 %8676
  %8678 = vrot.lane.b32.xlu0 %v7218, 80
  %v8679 = vpop.permute.xlu0 %8678
  %8680 = vrot.lane.b32.xlu0 %v7219, 80
  %v8681 = vpop.permute.xlu0 %8680
  %8682 = vrot.lane.b32.xlu0 %v7220, 80
  %v8683 = vpop.permute.xlu0 %8682
  %8684 = vrot.lane.b32.xlu0 %v7221, 80
  %v8685 = vpop.permute.xlu0 %8684
  %8686 = vrot.lane.b32.xlu0 %v7222, 80
  %v8687 = vpop.permute.xlu0 %8686
  %8688 = vrot.lane.b32.xlu0 %v7223, 80
  %v8689 = vpop.permute.xlu0 %8688
  %8690 = vrot.lane.b32.xlu0 %v7224, 80
  %v8691 = vpop.permute.xlu0 %8690
  %8692 = vrot.lane.b32.xlu0 %v7225, 80
  %v8693 = vpop.permute.xlu0 %8692
  %8694 = vrot.lane.b32.xlu0 %v7226, 80
  %v8695 = vpop.permute.xlu0 %8694
  %8696 = vrot.lane.b32.xlu0 %v7227, 80
  %v8697 = vpop.permute.xlu0 %8696
  %8698 = vrot.lane.b32.xlu0 %v7228, 80
  %v8699 = vpop.permute.xlu0 %8698
  %8700 = vrot.lane.b32.xlu0 %v7229, 80
  %v8701 = vpop.permute.xlu0 %8700
  %8702 = vrot.lane.b32.xlu0 %v7230, 80
  %v8703 = vpop.permute.xlu0 %8702
  %8704 = vrot.lane.b32.xlu0 %v7231, 80
  %v8705 = vpop.permute.xlu0 %8704
  %8706 = vrot.lane.b32.xlu0 %v7232, 80
  %v8707 = vpop.permute.xlu0 %8706
  %8708 = vrot.lane.b32.xlu0 %v7233, 80
  %v8709 = vpop.permute.xlu0 %8708
  %8710 = vrot.lane.b32.xlu0 %v7234, 80
  %v8711 = vpop.permute.xlu0 %8710
  %8712 = vrot.lane.b32.xlu0 %v7235, 80
  %v8713 = vpop.permute.xlu0 %8712
  %8714 = vrot.lane.b32.xlu0 %v7236, 80
  %v8715 = vpop.permute.xlu0 %8714
  %8716 = vrot.lane.b32.xlu0 %v7237, 80
  %v8717 = vpop.permute.xlu0 %8716
  %8718 = vrot.lane.b32.xlu0 %v7238, 80
  %v8719 = vpop.permute.xlu0 %8718
  %8720 = vrot.lane.b32.xlu0 %v7239, 80
  %v8721 = vpop.permute.xlu0 %8720
  %8722 = vrot.lane.b32.xlu0 %v7240, 80
  %v8723 = vpop.permute.xlu0 %8722
  %8724 = vrot.lane.b32.xlu0 %v7241, 80
  %v8725 = vpop.permute.xlu0 %8724
  %8726 = vrot.lane.b32.xlu0 %v7242, 80
  %v8727 = vpop.permute.xlu0 %8726
  %8728 = vrot.lane.b32.xlu0 %v7243, 80
  %v8729 = vpop.permute.xlu0 %8728
  %8730 = vrot.lane.b32.xlu0 %v7244, 80
  %v8731 = vpop.permute.xlu0 %8730
  %8732 = vrot.lane.b32.xlu0 %v7245, 80
  %v8733 = vpop.permute.xlu0 %8732
  %8734 = vrot.lane.b32.xlu0 %v7246, 80
  %v8735 = vpop.permute.xlu0 %8734
  %8736 = vrot.lane.b32.xlu0 %v7247, 80
  %v8737 = vpop.permute.xlu0 %8736
  %8738 = vrot.lane.b32.xlu0 %v7248, 80
  %v8739 = vpop.permute.xlu0 %8738
  %8740 = vrot.lane.b32.xlu0 %v7249, 80
  %v8741 = vpop.permute.xlu0 %8740
  %8742 = vrot.lane.b32.xlu0 %v7250, 80
  %v8743 = vpop.permute.xlu0 %8742
  %8744 = vrot.lane.b32.xlu0 %v7251, 80
  %v8745 = vpop.permute.xlu0 %8744
  %8746 = vrot.lane.b32.xlu0 %v7252, 80
  %v8747 = vpop.permute.xlu0 %8746
  %8748 = vrot.lane.b32.xlu0 %v7253, 80
  %v8749 = vpop.permute.xlu0 %8748
  %8750 = vrot.lane.b32.xlu0 %v7254, 80
  %v8751 = vpop.permute.xlu0 %8750
  %8752 = vrot.lane.b32.xlu0 %v7255, 80
  %v8753 = vpop.permute.xlu0 %8752
  %8754 = vrot.lane.b32.xlu0 %v7256, 80
  %v8755 = vpop.permute.xlu0 %8754
  %8756 = vrot.lane.b32.xlu0 %v7257, 80
  %v8757 = vpop.permute.xlu0 %8756
  %8758 = vrot.lane.b32.xlu0 %v7258, 80
  %v8759 = vpop.permute.xlu0 %8758
  %8760 = vrot.lane.b32.xlu0 %v7259, 80
  %v8761 = vpop.permute.xlu0 %8760
  %8762 = vrot.lane.b32.xlu0 %v7260, 80
  %v8763 = vpop.permute.xlu0 %8762
  %8764 = vrot.lane.b32.xlu0 %v7261, 80
  %v8765 = vpop.permute.xlu0 %8764
  %8766 = vrot.lane.b32.xlu0 %v7262, 80
  %v8767 = vpop.permute.xlu0 %8766
  %8768 = vrot.lane.b32.xlu0 %v7263, 80
  %v8769 = vpop.permute.xlu0 %8768
  %8770 = vrot.lane.b32.xlu0 %v7264, 80
  %v8771 = vpop.permute.xlu0 %8770
  %8772 = vrot.lane.b32.xlu0 %v7265, 80
  %v8773 = vpop.permute.xlu0 %8772
  %8774 = vrot.lane.b32.xlu0 %v7266, 80
  %v8775 = vpop.permute.xlu0 %8774
  %8776 = vrot.lane.b32.xlu0 %v7267, 80
  %v8777 = vpop.permute.xlu0 %8776
  %8778 = vrot.lane.b32.xlu0 %v7268, 80
  %v8779 = vpop.permute.xlu0 %8778
  %8780 = vrot.lane.b32.xlu0 %v7269, 80
  %v8781 = vpop.permute.xlu0 %8780
  %8782 = vrot.lane.b32.xlu0 %v7270, 80
  %v8783 = vpop.permute.xlu0 %8782
  %8784 = vrot.lane.b32.xlu0 %v7271, 80
  %v8785 = vpop.permute.xlu0 %8784
  %8786 = vrot.lane.b32.xlu0 %v7272, 80
  %v8787 = vpop.permute.xlu0 %8786
  %8788 = vrot.lane.b32.xlu0 %v7273, 80
  %v8789 = vpop.permute.xlu0 %8788
  %8790 = vrot.lane.b32.xlu0 %v7274, 80
  %v8791 = vpop.permute.xlu0 %8790
  %8792 = vrot.lane.b32.xlu0 %v7275, 80
  %v8793 = vpop.permute.xlu0 %8792
  %8794 = vrot.lane.b32.xlu0 %v7276, 80
  %v8795 = vpop.permute.xlu0 %8794
  %8796 = vrot.lane.b32.xlu0 %v7277, 80
  %v8797 = vpop.permute.xlu0 %8796
  %8798 = vrot.lane.b32.xlu0 %v7278, 80
  %v8799 = vpop.permute.xlu0 %8798
  %8800 = vrot.lane.b32.xlu0 %v7279, 80
  %v8801 = vpop.permute.xlu0 %8800
  %8802 = vrot.lane.b32.xlu0 %v7280, 80
  %v8803 = vpop.permute.xlu0 %8802
  %8804 = vrot.lane.b32.xlu0 %v7281, 80
  %v8805 = vpop.permute.xlu0 %8804
  %8806 = vrot.lane.b32.xlu0 %v7282, 80
  %v8807 = vpop.permute.xlu0 %8806
  %8808 = vrot.lane.b32.xlu0 %v7283, 80
  %v8809 = vpop.permute.xlu0 %8808
  %8810 = vrot.lane.b32.xlu0 %v7284, 80
  %v8811 = vpop.permute.xlu0 %8810
  %8812 = vrot.lane.b32.xlu0 %v7285, 80
  %v8813 = vpop.permute.xlu0 %8812
  %8814 = vrot.lane.b32.xlu0 %v7286, 80
  %v8815 = vpop.permute.xlu0 %8814
  %8816 = vrot.lane.b32.xlu0 %v7287, 80
  %v8817 = vpop.permute.xlu0 %8816
  %8818 = vrot.lane.b32.xlu0 %v7288, 80
  %v8819 = vpop.permute.xlu0 %8818
  %8820 = vrot.lane.b32.xlu0 %v7289, 80
  %v8821 = vpop.permute.xlu0 %8820
  %8822 = vrot.lane.b32.xlu0 %v7290, 80
  %v8823 = vpop.permute.xlu0 %8822
  %8824 = vrot.lane.b32.xlu0 %v7291, 80
  %v8825 = vpop.permute.xlu0 %8824
  %8826 = vrot.lane.b32.xlu0 %v7292, 80
  %v8827 = vpop.permute.xlu0 %8826
  %8828 = vrot.lane.b32.xlu0 %v7293, 80
  %v8829 = vpop.permute.xlu0 %8828
  %8830 = vrot.lane.b32.xlu0 %v7294, 80
  %v8831 = vpop.permute.xlu0 %8830
  %8832 = vrot.lane.b32.xlu0 %v7295, 80
  %v8833 = vpop.permute.xlu0 %8832
  %8834 = vrot.lane.b32.xlu0 %v7296, 80
  %v8835 = vpop.permute.xlu0 %8834
  %8836 = vrot.lane.b32.xlu0 %v7297, 80
  %v8837 = vpop.permute.xlu0 %8836
  %8838 = vrot.lane.b32.xlu0 %v7298, 80
  %v8839 = vpop.permute.xlu0 %8838
  %8840 = vrot.lane.b32.xlu0 %v7299, 80
  %v8841 = vpop.permute.xlu0 %8840
  %8842 = vrot.lane.b32.xlu0 %v7300, 80
  %v8843 = vpop.permute.xlu0 %8842
  %8844 = vrot.lane.b32.xlu0 %v7301, 80
  %v8845 = vpop.permute.xlu0 %8844
  %8846 = vrot.lane.b32.xlu0 %v7302, 80
  %v8847 = vpop.permute.xlu0 %8846
  %8848 = vrot.lane.b32.xlu0 %v7303, 80
  %v8849 = vpop.permute.xlu0 %8848
  %8850 = vrot.lane.b32.xlu0 %v7304, 80
  %v8851 = vpop.permute.xlu0 %8850
  %8852 = vrot.lane.b32.xlu0 %v7305, 80
  %v8853 = vpop.permute.xlu0 %8852
  %8854 = vrot.lane.b32.xlu0 %v7306, 80
  %v8855 = vpop.permute.xlu0 %8854
  %8856 = vrot.lane.b32.xlu0 %v7307, 80
  %v8857 = vpop.permute.xlu0 %8856
  %8858 = vrot.lane.b32.xlu0 %v7308, 80
  %v8859 = vpop.permute.xlu0 %8858
  %8860 = vrot.lane.b32.xlu0 %v7309, 80
  %v8861 = vpop.permute.xlu0 %8860
  %8862 = vrot.lane.b32.xlu0 %v7310, 80
  %v8863 = vpop.permute.xlu0 %8862
  %8864 = vrot.lane.b32.xlu0 %v7311, 80
  %v8865 = vpop.permute.xlu0 %8864
  %8866 = vrot.lane.b32.xlu0 %v7312, 80
  %v8867 = vpop.permute.xlu0 %8866
  %8868 = vrot.lane.b32.xlu0 %v7313, 80
  %v8869 = vpop.permute.xlu0 %8868
  %8870 = vrot.lane.b32.xlu0 %v7314, 80
  %v8871 = vpop.permute.xlu0 %8870
  %8872 = vrot.lane.b32.xlu0 %v7315, 80
  %v8873 = vpop.permute.xlu0 %8872
  %8874 = vrot.lane.b32.xlu0 %v7316, 80
  %v8875 = vpop.permute.xlu0 %8874
  %8876 = vrot.lane.b32.xlu0 %v7317, 80
  %v8877 = vpop.permute.xlu0 %8876
  %8878 = vrot.lane.b32.xlu0 %v7318, 80
  %v8879 = vpop.permute.xlu0 %8878
  %8880 = vrot.lane.b32.xlu0 %v7319, 80
  %v8881 = vpop.permute.xlu0 %8880
  %8882 = vrot.lane.b32.xlu0 %v7320, 80
  %v8883 = vpop.permute.xlu0 %8882
  %8884 = vrot.lane.b32.xlu0 %v7321, 80
  %v8885 = vpop.permute.xlu0 %8884
  %8886 = vrot.lane.b32.xlu0 %v7322, 80
  %v8887 = vpop.permute.xlu0 %8886
  %8888 = vrot.lane.b32.xlu0 %v7323, 80
  %v8889 = vpop.permute.xlu0 %8888
  %8890 = vrot.lane.b32.xlu0 %v7324, 80
  %v8891 = vpop.permute.xlu0 %8890
  %8892 = vrot.lane.b32.xlu0 %v7325, 80
  %v8893 = vpop.permute.xlu0 %8892
  %8894 = vrot.lane.b32.xlu0 %v7326, 80
  %v8895 = vpop.permute.xlu0 %8894
  %8896 = vrot.lane.b32.xlu0 %v7327, 80
  %v8897 = vpop.permute.xlu0 %8896
  %8898 = vrot.lane.b32.xlu0 %v7328, 80
  %v8899 = vpop.permute.xlu0 %8898
  %8900 = vrot.lane.b32.xlu0 %v7329, 80
  %v8901 = vpop.permute.xlu0 %8900
  %8902 = vrot.lane.b32.xlu0 %v7330, 80
  %v8903 = vpop.permute.xlu0 %8902
  %8904 = vrot.lane.b32.xlu0 %v7331, 80
  %v8905 = vpop.permute.xlu0 %8904
  %8906 = vrot.lane.b32.xlu0 %v7332, 80
  %v8907 = vpop.permute.xlu0 %8906
  %8908 = vrot.lane.b32.xlu0 %v7333, 80
  %v8909 = vpop.permute.xlu0 %8908
  %8910 = vrot.lane.b32.xlu0 %v7334, 80
  %v8911 = vpop.permute.xlu0 %8910
  %8912 = vrot.lane.b32.xlu0 %v7335, 80
  %v8913 = vpop.permute.xlu0 %8912
  %8925 = vrot.lane.b32.xlu0 %v7206, 96
  %v8926 = vpop.permute.xlu0 %8925
  %8927 = vrot.lane.b32.xlu0 %v7207, 96
  %v8928 = vpop.permute.xlu0 %8927
  %8929 = vrot.lane.b32.xlu0 %v7208, 96
  %v8930 = vpop.permute.xlu0 %8929
  %8931 = vrot.lane.b32.xlu0 %v7209, 96
  %v8932 = vpop.permute.xlu0 %8931
  %8933 = vrot.lane.b32.xlu0 %v7210, 96
  %v8934 = vpop.permute.xlu0 %8933
  %8935 = vrot.lane.b32.xlu0 %v7211, 96
  %v8936 = vpop.permute.xlu0 %8935
  %8937 = vrot.lane.b32.xlu0 %v7212, 96
  %v8938 = vpop.permute.xlu0 %8937
  %8939 = vrot.lane.b32.xlu0 %v7213, 96
  %v8940 = vpop.permute.xlu0 %8939
  %8941 = vrot.lane.b32.xlu0 %v7214, 96
  %v8942 = vpop.permute.xlu0 %8941
  %8943 = vrot.lane.b32.xlu0 %v7215, 96
  %v8944 = vpop.permute.xlu0 %8943
  %8945 = vrot.lane.b32.xlu0 %v7216, 96
  %v8946 = vpop.permute.xlu0 %8945
  %8947 = vrot.lane.b32.xlu0 %v7217, 96
  %v8948 = vpop.permute.xlu0 %8947
  %8949 = vrot.lane.b32.xlu0 %v7218, 96
  %v8950 = vpop.permute.xlu0 %8949
  %8951 = vrot.lane.b32.xlu0 %v7219, 96
  %v8952 = vpop.permute.xlu0 %8951
  %8953 = vrot.lane.b32.xlu0 %v7220, 96
  %v8954 = vpop.permute.xlu0 %8953
  %8955 = vrot.lane.b32.xlu0 %v7221, 96
  %v8956 = vpop.permute.xlu0 %8955
  %8957 = vrot.lane.b32.xlu0 %v7222, 96
  %v8958 = vpop.permute.xlu0 %8957
  %8959 = vrot.lane.b32.xlu0 %v7223, 96
  %v8960 = vpop.permute.xlu0 %8959
  %8961 = vrot.lane.b32.xlu0 %v7224, 96
  %v8962 = vpop.permute.xlu0 %8961
  %8963 = vrot.lane.b32.xlu0 %v7225, 96
  %v8964 = vpop.permute.xlu0 %8963
  %8965 = vrot.lane.b32.xlu0 %v7226, 96
  %v8966 = vpop.permute.xlu0 %8965
  %8967 = vrot.lane.b32.xlu0 %v7227, 96
  %v8968 = vpop.permute.xlu0 %8967
  %8969 = vrot.lane.b32.xlu0 %v7228, 96
  %v8970 = vpop.permute.xlu0 %8969
  %8971 = vrot.lane.b32.xlu0 %v7229, 96
  %v8972 = vpop.permute.xlu0 %8971
  %8973 = vrot.lane.b32.xlu0 %v7230, 96
  %v8974 = vpop.permute.xlu0 %8973
  %8975 = vrot.lane.b32.xlu0 %v7231, 96
  %v8976 = vpop.permute.xlu0 %8975
  %8977 = vrot.lane.b32.xlu0 %v7232, 96
  %v8978 = vpop.permute.xlu0 %8977
  %8979 = vrot.lane.b32.xlu0 %v7233, 96
  %v8980 = vpop.permute.xlu0 %8979
  %8981 = vrot.lane.b32.xlu0 %v7234, 96
  %v8982 = vpop.permute.xlu0 %8981
  %8983 = vrot.lane.b32.xlu0 %v7235, 96
  %v8984 = vpop.permute.xlu0 %8983
  %8985 = vrot.lane.b32.xlu0 %v7236, 96
  %v8986 = vpop.permute.xlu0 %8985
  %8987 = vrot.lane.b32.xlu0 %v7237, 96
  %v8988 = vpop.permute.xlu0 %8987
  %8989 = vrot.lane.b32.xlu0 %v7238, 96
  %v8990 = vpop.permute.xlu0 %8989
  %8991 = vrot.lane.b32.xlu0 %v7239, 96
  %v8992 = vpop.permute.xlu0 %8991
  %8993 = vrot.lane.b32.xlu0 %v7240, 96
  %v8994 = vpop.permute.xlu0 %8993
  %8995 = vrot.lane.b32.xlu0 %v7241, 96
  %v8996 = vpop.permute.xlu0 %8995
  %8997 = vrot.lane.b32.xlu0 %v7242, 96
  %v8998 = vpop.permute.xlu0 %8997
  %8999 = vrot.lane.b32.xlu0 %v7243, 96
  %v9000 = vpop.permute.xlu0 %8999
  %9001 = vrot.lane.b32.xlu0 %v7244, 96
  %v9002 = vpop.permute.xlu0 %9001
  %9003 = vrot.lane.b32.xlu0 %v7245, 96
  %v9004 = vpop.permute.xlu0 %9003
  %9005 = vrot.lane.b32.xlu0 %v7246, 96
  %v9006 = vpop.permute.xlu0 %9005
  %9007 = vrot.lane.b32.xlu0 %v7247, 96
  %v9008 = vpop.permute.xlu0 %9007
  %9009 = vrot.lane.b32.xlu0 %v7248, 96
  %v9010 = vpop.permute.xlu0 %9009
  %9011 = vrot.lane.b32.xlu0 %v7249, 96
  %v9012 = vpop.permute.xlu0 %9011
  %9013 = vrot.lane.b32.xlu0 %v7250, 96
  %v9014 = vpop.permute.xlu0 %9013
  %9015 = vrot.lane.b32.xlu0 %v7251, 96
  %v9016 = vpop.permute.xlu0 %9015
  %9017 = vrot.lane.b32.xlu0 %v7252, 96
  %v9018 = vpop.permute.xlu0 %9017
  %9019 = vrot.lane.b32.xlu0 %v7253, 96
  %v9020 = vpop.permute.xlu0 %9019
  %9021 = vrot.lane.b32.xlu0 %v7254, 96
  %v9022 = vpop.permute.xlu0 %9021
  %9023 = vrot.lane.b32.xlu0 %v7255, 96
  %v9024 = vpop.permute.xlu0 %9023
  %9025 = vrot.lane.b32.xlu0 %v7256, 96
  %v9026 = vpop.permute.xlu0 %9025
  %9027 = vrot.lane.b32.xlu0 %v7257, 96
  %v9028 = vpop.permute.xlu0 %9027
  %9029 = vrot.lane.b32.xlu0 %v7258, 96
  %v9030 = vpop.permute.xlu0 %9029
  %9031 = vrot.lane.b32.xlu0 %v7259, 96
  %v9032 = vpop.permute.xlu0 %9031
  %9033 = vrot.lane.b32.xlu0 %v7260, 96
  %v9034 = vpop.permute.xlu0 %9033
  %9035 = vrot.lane.b32.xlu0 %v7261, 96
  %v9036 = vpop.permute.xlu0 %9035
  %9037 = vrot.lane.b32.xlu0 %v7262, 96
  %v9038 = vpop.permute.xlu0 %9037
  %9039 = vrot.lane.b32.xlu0 %v7263, 96
  %v9040 = vpop.permute.xlu0 %9039
  %9041 = vrot.lane.b32.xlu0 %v7264, 96
  %v9042 = vpop.permute.xlu0 %9041
  %9043 = vrot.lane.b32.xlu0 %v7265, 96
  %v9044 = vpop.permute.xlu0 %9043
  %9045 = vrot.lane.b32.xlu0 %v7266, 96
  %v9046 = vpop.permute.xlu0 %9045
  %9047 = vrot.lane.b32.xlu0 %v7267, 96
  %v9048 = vpop.permute.xlu0 %9047
  %9049 = vrot.lane.b32.xlu0 %v7268, 96
  %v9050 = vpop.permute.xlu0 %9049
  %9051 = vrot.lane.b32.xlu0 %v7269, 96
  %v9052 = vpop.permute.xlu0 %9051
  %9053 = vrot.lane.b32.xlu0 %v7270, 96
  %v9054 = vpop.permute.xlu0 %9053
  %9055 = vrot.lane.b32.xlu0 %v7271, 96
  %v9056 = vpop.permute.xlu0 %9055
  %9057 = vrot.lane.b32.xlu0 %v7272, 96
  %v9058 = vpop.permute.xlu0 %9057
  %9059 = vrot.lane.b32.xlu0 %v7273, 96
  %v9060 = vpop.permute.xlu0 %9059
  %9061 = vrot.lane.b32.xlu0 %v7274, 96
  %v9062 = vpop.permute.xlu0 %9061
  %9063 = vrot.lane.b32.xlu0 %v7275, 96
  %v9064 = vpop.permute.xlu0 %9063
  %9065 = vrot.lane.b32.xlu0 %v7276, 96
  %v9066 = vpop.permute.xlu0 %9065
  %9067 = vrot.lane.b32.xlu0 %v7277, 96
  %v9068 = vpop.permute.xlu0 %9067
  %9069 = vrot.lane.b32.xlu0 %v7278, 96
  %v9070 = vpop.permute.xlu0 %9069
  %9071 = vrot.lane.b32.xlu0 %v7279, 96
  %v9072 = vpop.permute.xlu0 %9071
  %9073 = vrot.lane.b32.xlu0 %v7280, 96
  %v9074 = vpop.permute.xlu0 %9073
  %9075 = vrot.lane.b32.xlu0 %v7281, 96
  %v9076 = vpop.permute.xlu0 %9075
  %9077 = vrot.lane.b32.xlu0 %v7282, 96
  %v9078 = vpop.permute.xlu0 %9077
  %9079 = vrot.lane.b32.xlu0 %v7283, 96
  %v9080 = vpop.permute.xlu0 %9079
  %9081 = vrot.lane.b32.xlu0 %v7284, 96
  %v9082 = vpop.permute.xlu0 %9081
  %9083 = vrot.lane.b32.xlu0 %v7285, 96
  %v9084 = vpop.permute.xlu0 %9083
  %9085 = vrot.lane.b32.xlu0 %v7286, 96
  %v9086 = vpop.permute.xlu0 %9085
  %9087 = vrot.lane.b32.xlu0 %v7287, 96
  %v9088 = vpop.permute.xlu0 %9087
  %9089 = vrot.lane.b32.xlu0 %v7288, 96
  %v9090 = vpop.permute.xlu0 %9089
  %9091 = vrot.lane.b32.xlu0 %v7289, 96
  %v9092 = vpop.permute.xlu0 %9091
  %9093 = vrot.lane.b32.xlu0 %v7290, 96
  %v9094 = vpop.permute.xlu0 %9093
  %9095 = vrot.lane.b32.xlu0 %v7291, 96
  %v9096 = vpop.permute.xlu0 %9095
  %9097 = vrot.lane.b32.xlu0 %v7292, 96
  %v9098 = vpop.permute.xlu0 %9097
  %9099 = vrot.lane.b32.xlu0 %v7293, 96
  %v9100 = vpop.permute.xlu0 %9099
  %9101 = vrot.lane.b32.xlu0 %v7294, 96
  %v9102 = vpop.permute.xlu0 %9101
  %9103 = vrot.lane.b32.xlu0 %v7295, 96
  %v9104 = vpop.permute.xlu0 %9103
  %9105 = vrot.lane.b32.xlu0 %v7296, 96
  %v9106 = vpop.permute.xlu0 %9105
  %9107 = vrot.lane.b32.xlu0 %v7297, 96
  %v9108 = vpop.permute.xlu0 %9107
  %9109 = vrot.lane.b32.xlu0 %v7298, 96
  %v9110 = vpop.permute.xlu0 %9109
  %9111 = vrot.lane.b32.xlu0 %v7299, 96
  %v9112 = vpop.permute.xlu0 %9111
  %9113 = vrot.lane.b32.xlu0 %v7300, 96
  %v9114 = vpop.permute.xlu0 %9113
  %9115 = vrot.lane.b32.xlu0 %v7301, 96
  %v9116 = vpop.permute.xlu0 %9115
  %9117 = vrot.lane.b32.xlu0 %v7302, 96
  %v9118 = vpop.permute.xlu0 %9117
  %9119 = vrot.lane.b32.xlu0 %v7303, 96
  %v9120 = vpop.permute.xlu0 %9119
  %9121 = vrot.lane.b32.xlu0 %v7304, 96
  %v9122 = vpop.permute.xlu0 %9121
  %9123 = vrot.lane.b32.xlu0 %v7305, 96
  %v9124 = vpop.permute.xlu0 %9123
  %9125 = vrot.lane.b32.xlu0 %v7306, 96
  %v9126 = vpop.permute.xlu0 %9125
  %9127 = vrot.lane.b32.xlu0 %v7307, 96
  %v9128 = vpop.permute.xlu0 %9127
  %9129 = vrot.lane.b32.xlu0 %v7308, 96
  %v9130 = vpop.permute.xlu0 %9129
  %9131 = vrot.lane.b32.xlu0 %v7309, 96
  %v9132 = vpop.permute.xlu0 %9131
  %9133 = vrot.lane.b32.xlu0 %v7310, 96
  %v9134 = vpop.permute.xlu0 %9133
  %9135 = vrot.lane.b32.xlu0 %v7311, 96
  %v9136 = vpop.permute.xlu0 %9135
  %9137 = vrot.lane.b32.xlu0 %v7312, 96
  %v9138 = vpop.permute.xlu0 %9137
  %9139 = vrot.lane.b32.xlu0 %v7313, 96
  %v9140 = vpop.permute.xlu0 %9139
  %9141 = vrot.lane.b32.xlu0 %v7314, 96
  %v9142 = vpop.permute.xlu0 %9141
  %9143 = vrot.lane.b32.xlu0 %v7315, 96
  %v9144 = vpop.permute.xlu0 %9143
  %9145 = vrot.lane.b32.xlu0 %v7316, 96
  %v9146 = vpop.permute.xlu0 %9145
  %9147 = vrot.lane.b32.xlu0 %v7317, 96
  %v9148 = vpop.permute.xlu0 %9147
  %9149 = vrot.lane.b32.xlu0 %v7318, 96
  %v9150 = vpop.permute.xlu0 %9149
  %9151 = vrot.lane.b32.xlu0 %v7319, 96
  %v9152 = vpop.permute.xlu0 %9151
  %9153 = vrot.lane.b32.xlu0 %v7320, 96
  %v9154 = vpop.permute.xlu0 %9153
  %9155 = vrot.lane.b32.xlu0 %v7321, 96
  %v9156 = vpop.permute.xlu0 %9155
  %9157 = vrot.lane.b32.xlu0 %v7322, 96
  %v9158 = vpop.permute.xlu0 %9157
  %9159 = vrot.lane.b32.xlu0 %v7323, 96
  %v9160 = vpop.permute.xlu0 %9159
  %9161 = vrot.lane.b32.xlu0 %v7324, 96
  %v9162 = vpop.permute.xlu0 %9161
  %9163 = vrot.lane.b32.xlu0 %v7325, 96
  %v9164 = vpop.permute.xlu0 %9163
  %9165 = vrot.lane.b32.xlu0 %v7326, 96
  %v9166 = vpop.permute.xlu0 %9165
  %9167 = vrot.lane.b32.xlu0 %v7327, 96
  %v9168 = vpop.permute.xlu0 %9167
  %9169 = vrot.lane.b32.xlu0 %v7328, 96
  %v9170 = vpop.permute.xlu0 %9169
  %9171 = vrot.lane.b32.xlu0 %v7329, 96
  %v9172 = vpop.permute.xlu0 %9171
  %9173 = vrot.lane.b32.xlu0 %v7330, 96
  %v9174 = vpop.permute.xlu0 %9173
  %9175 = vrot.lane.b32.xlu0 %v7331, 96
  %v9176 = vpop.permute.xlu0 %9175
  %9177 = vrot.lane.b32.xlu0 %v7332, 96
  %v9178 = vpop.permute.xlu0 %9177
  %9179 = vrot.lane.b32.xlu0 %v7333, 96
  %v9180 = vpop.permute.xlu0 %9179
  %9181 = vrot.lane.b32.xlu0 %v7334, 96
  %v9182 = vpop.permute.xlu0 %9181
  %9183 = vrot.lane.b32.xlu0 %v7335, 96
  %v9184 = vpop.permute.xlu0 %9183
  %9185 = vrot.lane.b32.xlu0 %v7336, 96
  %v9186 = vpop.permute.xlu0 %9185
  %9187 = vrot.lane.b32.xlu0 %v7337, 96
  %v9188 = vpop.permute.xlu0 %9187
  %9189 = vrot.lane.b32.xlu0 %v7338, 96
  %v9190 = vpop.permute.xlu0 %9189
  %9191 = vrot.lane.b32.xlu0 %v7339, 96
  %v9192 = vpop.permute.xlu0 %9191
  %9193 = vrot.lane.b32.xlu0 %v7340, 96
  %v9194 = vpop.permute.xlu0 %9193
  %9195 = vrot.lane.b32.xlu0 %v7341, 96
  %v9196 = vpop.permute.xlu0 %9195
  %9197 = vrot.lane.b32.xlu0 %v7342, 96
  %v9198 = vpop.permute.xlu0 %9197
  %9199 = vrot.lane.b32.xlu0 %v7343, 96
  %v9200 = vpop.permute.xlu0 %9199
  %9201 = vrot.lane.b32.xlu0 %v7344, 96
  %v9202 = vpop.permute.xlu0 %9201
  %9203 = vrot.lane.b32.xlu0 %v7345, 96
  %v9204 = vpop.permute.xlu0 %9203
  %9205 = vrot.lane.b32.xlu0 %v7346, 96
  %v9206 = vpop.permute.xlu0 %9205
  %9208 = vrot.lane.b32.xlu0 %v7207, 112
  %v9209 = vpop.permute.xlu0 %9208
  %9210 = vrot.lane.b32.xlu0 %v7208, 112
  %v9211 = vpop.permute.xlu0 %9210
  %9212 = vrot.lane.b32.xlu0 %v7209, 112
  %v9213 = vpop.permute.xlu0 %9212
  %9214 = vrot.lane.b32.xlu0 %v7210, 112
  %v9215 = vpop.permute.xlu0 %9214
  %9216 = vrot.lane.b32.xlu0 %v7211, 112
  %v9217 = vpop.permute.xlu0 %9216
  %9218 = vrot.lane.b32.xlu0 %v7212, 112
  %v9219 = vpop.permute.xlu0 %9218
  %9220 = vrot.lane.b32.xlu0 %v7213, 112
  %v9221 = vpop.permute.xlu0 %9220
  %9222 = vrot.lane.b32.xlu0 %v7214, 112
  %v9223 = vpop.permute.xlu0 %9222
  %9224 = vrot.lane.b32.xlu0 %v7215, 112
  %v9225 = vpop.permute.xlu0 %9224
  %9226 = vrot.lane.b32.xlu0 %v7216, 112
  %v9227 = vpop.permute.xlu0 %9226
  %9228 = vrot.lane.b32.xlu0 %v7217, 112
  %v9229 = vpop.permute.xlu0 %9228
  %9230 = vrot.lane.b32.xlu0 %v7218, 112
  %v9231 = vpop.permute.xlu0 %9230
  %9232 = vrot.lane.b32.xlu0 %v7219, 112
  %v9233 = vpop.permute.xlu0 %9232
  %9234 = vrot.lane.b32.xlu0 %v7220, 112
  %v9235 = vpop.permute.xlu0 %9234
  %9236 = vrot.lane.b32.xlu0 %v7221, 112
  %v9237 = vpop.permute.xlu0 %9236
  %9238 = vrot.lane.b32.xlu0 %v7222, 112
  %v9239 = vpop.permute.xlu0 %9238
  %9240 = vrot.lane.b32.xlu0 %v7223, 112
  %v9241 = vpop.permute.xlu0 %9240
  %9242 = vrot.lane.b32.xlu0 %v7224, 112
  %v9243 = vpop.permute.xlu0 %9242
  %9244 = vrot.lane.b32.xlu0 %v7225, 112
  %v9245 = vpop.permute.xlu0 %9244
  %9246 = vrot.lane.b32.xlu0 %v7226, 112
  %v9247 = vpop.permute.xlu0 %9246
  %9248 = vrot.lane.b32.xlu0 %v7227, 112
  %v9249 = vpop.permute.xlu0 %9248
  %9250 = vrot.lane.b32.xlu0 %v7228, 112
  %v9251 = vpop.permute.xlu0 %9250
  %9252 = vrot.lane.b32.xlu0 %v7229, 112
  %v9253 = vpop.permute.xlu0 %9252
  %9254 = vrot.lane.b32.xlu0 %v7230, 112
  %v9255 = vpop.permute.xlu0 %9254
  %9256 = vrot.lane.b32.xlu0 %v7231, 112
  %v9257 = vpop.permute.xlu0 %9256
  %9258 = vrot.lane.b32.xlu0 %v7232, 112
  %v9259 = vpop.permute.xlu0 %9258
  %9260 = vrot.lane.b32.xlu0 %v7233, 112
  %v9261 = vpop.permute.xlu0 %9260
  %9262 = vrot.lane.b32.xlu0 %v7234, 112
  %v9263 = vpop.permute.xlu0 %9262
  %9264 = vrot.lane.b32.xlu0 %v7235, 112
  %v9265 = vpop.permute.xlu0 %9264
  %9266 = vrot.lane.b32.xlu0 %v7236, 112
  %v9267 = vpop.permute.xlu0 %9266
  %9268 = vrot.lane.b32.xlu0 %v7237, 112
  %v9269 = vpop.permute.xlu0 %9268
  %9270 = vrot.lane.b32.xlu0 %v7238, 112
  %v9271 = vpop.permute.xlu0 %9270
  %9272 = vrot.lane.b32.xlu0 %v7239, 112
  %v9273 = vpop.permute.xlu0 %9272
  %9274 = vrot.lane.b32.xlu0 %v7240, 112
  %v9275 = vpop.permute.xlu0 %9274
  %9276 = vrot.lane.b32.xlu0 %v7241, 112
  %v9277 = vpop.permute.xlu0 %9276
  %9278 = vrot.lane.b32.xlu0 %v7242, 112
  %v9279 = vpop.permute.xlu0 %9278
  %9280 = vrot.lane.b32.xlu0 %v7243, 112
  %v9281 = vpop.permute.xlu0 %9280
  %9282 = vrot.lane.b32.xlu0 %v7244, 112
  %v9283 = vpop.permute.xlu0 %9282
  %9284 = vrot.lane.b32.xlu0 %v7245, 112
  %v9285 = vpop.permute.xlu0 %9284
  %9286 = vrot.lane.b32.xlu0 %v7246, 112
  %v9287 = vpop.permute.xlu0 %9286
  %9288 = vrot.lane.b32.xlu0 %v7247, 112
  %v9289 = vpop.permute.xlu0 %9288
  %9290 = vrot.lane.b32.xlu0 %v7248, 112
  %v9291 = vpop.permute.xlu0 %9290
  %9292 = vrot.lane.b32.xlu0 %v7249, 112
  %v9293 = vpop.permute.xlu0 %9292
  %9294 = vrot.lane.b32.xlu0 %v7250, 112
  %v9295 = vpop.permute.xlu0 %9294
  %9296 = vrot.lane.b32.xlu0 %v7251, 112
  %v9297 = vpop.permute.xlu0 %9296
  %9298 = vrot.lane.b32.xlu0 %v7252, 112
  %v9299 = vpop.permute.xlu0 %9298
  %9300 = vrot.lane.b32.xlu0 %v7253, 112
  %v9301 = vpop.permute.xlu0 %9300
  %9302 = vrot.lane.b32.xlu0 %v7254, 112
  %v9303 = vpop.permute.xlu0 %9302
  %9304 = vrot.lane.b32.xlu0 %v7255, 112
  %v9305 = vpop.permute.xlu0 %9304
  %9306 = vrot.lane.b32.xlu0 %v7256, 112
  %v9307 = vpop.permute.xlu0 %9306
  %9308 = vrot.lane.b32.xlu0 %v7257, 112
  %v9309 = vpop.permute.xlu0 %9308
  %9310 = vrot.lane.b32.xlu0 %v7258, 112
  %v9311 = vpop.permute.xlu0 %9310
  %9312 = vrot.lane.b32.xlu0 %v7259, 112
  %v9313 = vpop.permute.xlu0 %9312
  %9314 = vrot.lane.b32.xlu0 %v7260, 112
  %v9315 = vpop.permute.xlu0 %9314
  %9316 = vrot.lane.b32.xlu0 %v7261, 112
  %v9317 = vpop.permute.xlu0 %9316
  %9318 = vrot.lane.b32.xlu0 %v7262, 112
  %v9319 = vpop.permute.xlu0 %9318
  %9320 = vrot.lane.b32.xlu0 %v7263, 112
  %v9321 = vpop.permute.xlu0 %9320
  %9322 = vrot.lane.b32.xlu0 %v7264, 112
  %v9323 = vpop.permute.xlu0 %9322
  %9324 = vrot.lane.b32.xlu0 %v7265, 112
  %v9325 = vpop.permute.xlu0 %9324
  %9326 = vrot.lane.b32.xlu0 %v7266, 112
  %v9327 = vpop.permute.xlu0 %9326
  %9328 = vrot.lane.b32.xlu0 %v7267, 112
  %v9329 = vpop.permute.xlu0 %9328
  %9330 = vrot.lane.b32.xlu0 %v7268, 112
  %v9331 = vpop.permute.xlu0 %9330
  %9332 = vrot.lane.b32.xlu0 %v7269, 112
  %v9333 = vpop.permute.xlu0 %9332
  %9334 = vrot.lane.b32.xlu0 %v7270, 112
  %v9335 = vpop.permute.xlu0 %9334
  %9336 = vrot.lane.b32.xlu0 %v7271, 112
  %v9337 = vpop.permute.xlu0 %9336
  %9338 = vrot.lane.b32.xlu0 %v7272, 112
  %v9339 = vpop.permute.xlu0 %9338
  %9340 = vrot.lane.b32.xlu0 %v7273, 112
  %v9341 = vpop.permute.xlu0 %9340
  %9342 = vrot.lane.b32.xlu0 %v7274, 112
  %v9343 = vpop.permute.xlu0 %9342
  %9344 = vrot.lane.b32.xlu0 %v7275, 112
  %v9345 = vpop.permute.xlu0 %9344
  %9346 = vrot.lane.b32.xlu0 %v7276, 112
  %v9347 = vpop.permute.xlu0 %9346
  %9348 = vrot.lane.b32.xlu0 %v7277, 112
  %v9349 = vpop.permute.xlu0 %9348
  %9350 = vrot.lane.b32.xlu0 %v7278, 112
  %v9351 = vpop.permute.xlu0 %9350
  %9352 = vrot.lane.b32.xlu0 %v7279, 112
  %v9353 = vpop.permute.xlu0 %9352
  %9354 = vrot.lane.b32.xlu0 %v7280, 112
  %v9355 = vpop.permute.xlu0 %9354
  %9356 = vrot.lane.b32.xlu0 %v7281, 112
  %v9357 = vpop.permute.xlu0 %9356
  %9358 = vrot.lane.b32.xlu0 %v7282, 112
  %v9359 = vpop.permute.xlu0 %9358
  %9360 = vrot.lane.b32.xlu0 %v7283, 112
  %v9361 = vpop.permute.xlu0 %9360
  %9362 = vrot.lane.b32.xlu0 %v7284, 112
  %v9363 = vpop.permute.xlu0 %9362
  %9364 = vrot.lane.b32.xlu0 %v7285, 112
  %v9365 = vpop.permute.xlu0 %9364
  %9366 = vrot.lane.b32.xlu0 %v7286, 112
  %v9367 = vpop.permute.xlu0 %9366
  %9368 = vrot.lane.b32.xlu0 %v7287, 112
  %v9369 = vpop.permute.xlu0 %9368
  %9370 = vrot.lane.b32.xlu0 %v7288, 112
  %v9371 = vpop.permute.xlu0 %9370
  %9372 = vrot.lane.b32.xlu0 %v7289, 112
  %v9373 = vpop.permute.xlu0 %9372
  %9374 = vrot.lane.b32.xlu0 %v7290, 112
  %v9375 = vpop.permute.xlu0 %9374
  %9376 = vrot.lane.b32.xlu0 %v7291, 112
  %v9377 = vpop.permute.xlu0 %9376
  %9378 = vrot.lane.b32.xlu0 %v7292, 112
  %v9379 = vpop.permute.xlu0 %9378
  %9380 = vrot.lane.b32.xlu0 %v7293, 112
  %v9381 = vpop.permute.xlu0 %9380
  %9382 = vrot.lane.b32.xlu0 %v7294, 112
  %v9383 = vpop.permute.xlu0 %9382
  %9384 = vrot.lane.b32.xlu0 %v7295, 112
  %v9385 = vpop.permute.xlu0 %9384
  %9386 = vrot.lane.b32.xlu0 %v7296, 112
  %v9387 = vpop.permute.xlu0 %9386
  %9388 = vrot.lane.b32.xlu0 %v7297, 112
  %v9389 = vpop.permute.xlu0 %9388
  %9390 = vrot.lane.b32.xlu0 %v7298, 112
  %v9391 = vpop.permute.xlu0 %9390
  %9392 = vrot.lane.b32.xlu0 %v7299, 112
  %v9393 = vpop.permute.xlu0 %9392
  %9394 = vrot.lane.b32.xlu0 %v7300, 112
  %v9395 = vpop.permute.xlu0 %9394
  %9396 = vrot.lane.b32.xlu0 %v7301, 112
  %v9397 = vpop.permute.xlu0 %9396
  %9398 = vrot.lane.b32.xlu0 %v7302, 112
  %v9399 = vpop.permute.xlu0 %9398
  %9400 = vrot.lane.b32.xlu0 %v7303, 112
  %v9401 = vpop.permute.xlu0 %9400
  %9402 = vrot.lane.b32.xlu0 %v7304, 112
  %v9403 = vpop.permute.xlu0 %9402
  %9404 = vrot.lane.b32.xlu0 %v7305, 112
  %v9405 = vpop.permute.xlu0 %9404
  %9406 = vrot.lane.b32.xlu0 %v7306, 112
  %v9407 = vpop.permute.xlu0 %9406
  %9408 = vrot.lane.b32.xlu0 %v7307, 112
  %v9409 = vpop.permute.xlu0 %9408
  %9410 = vrot.lane.b32.xlu0 %v7308, 112
  %v9411 = vpop.permute.xlu0 %9410
  %9412 = vrot.lane.b32.xlu0 %v7309, 112
  %v9413 = vpop.permute.xlu0 %9412
  %9414 = vrot.lane.b32.xlu0 %v7310, 112
  %v9415 = vpop.permute.xlu0 %9414
  %9416 = vrot.lane.b32.xlu0 %v7311, 112
  %v9417 = vpop.permute.xlu0 %9416
  %9418 = vrot.lane.b32.xlu0 %v7312, 112
  %v9419 = vpop.permute.xlu0 %9418
  %9420 = vrot.lane.b32.xlu0 %v7313, 112
  %v9421 = vpop.permute.xlu0 %9420
  %9422 = vrot.lane.b32.xlu0 %v7314, 112
  %v9423 = vpop.permute.xlu0 %9422
  %9424 = vrot.lane.b32.xlu0 %v7315, 112
  %v9425 = vpop.permute.xlu0 %9424
  %9426 = vrot.lane.b32.xlu0 %v7316, 112
  %v9427 = vpop.permute.xlu0 %9426
  %9428 = vrot.lane.b32.xlu0 %v7317, 112
  %v9429 = vpop.permute.xlu0 %9428
  %9430 = vrot.lane.b32.xlu0 %v7318, 112
  %v9431 = vpop.permute.xlu0 %9430
  %9432 = vrot.lane.b32.xlu0 %v7319, 112
  %v9433 = vpop.permute.xlu0 %9432
  %9434 = vrot.lane.b32.xlu0 %v7320, 112
  %v9435 = vpop.permute.xlu0 %9434
  %9436 = vrot.lane.b32.xlu0 %v7321, 112
  %v9437 = vpop.permute.xlu0 %9436
  %9438 = vrot.lane.b32.xlu0 %v7322, 112
  %v9439 = vpop.permute.xlu0 %9438
  %9440 = vrot.lane.b32.xlu0 %v7323, 112
  %v9441 = vpop.permute.xlu0 %9440
  %9442 = vrot.lane.b32.xlu0 %v7324, 112
  %v9443 = vpop.permute.xlu0 %9442
  %9444 = vrot.lane.b32.xlu0 %v7325, 112
  %v9445 = vpop.permute.xlu0 %9444
  %9446 = vrot.lane.b32.xlu0 %v7326, 112
  %v9447 = vpop.permute.xlu0 %9446
  %9448 = vrot.lane.b32.xlu0 %v7327, 112
  %v9449 = vpop.permute.xlu0 %9448
  %9450 = vrot.lane.b32.xlu0 %v7328, 112
  %v9451 = vpop.permute.xlu0 %9450
  %9452 = vrot.lane.b32.xlu0 %v7329, 112
  %v9453 = vpop.permute.xlu0 %9452
  %9454 = vrot.lane.b32.xlu0 %v7330, 112
  %v9455 = vpop.permute.xlu0 %9454
  %9456 = vrot.lane.b32.xlu0 %v7331, 112
  %v9457 = vpop.permute.xlu0 %9456
  %9458 = vrot.lane.b32.xlu0 %v7332, 112
  %v9459 = vpop.permute.xlu0 %9458
  %9460 = vrot.lane.b32.xlu0 %v7333, 112
  %v9461 = vpop.permute.xlu0 %9460
  %9462 = vrot.lane.b32.xlu0 %v7334, 112
  %v9463 = vpop.permute.xlu0 %9462
  %9464 = vrot.lane.b32.xlu0 %v7335, 112
  %v9465 = vpop.permute.xlu0 %9464
  %9466 = vrot.lane.b32.xlu0 %v7336, 112
  %v9467 = vpop.permute.xlu0 %9466
  %9468 = vrot.lane.b32.xlu0 %v7337, 112
  %v9469 = vpop.permute.xlu0 %9468
  %9470 = vrot.lane.b32.xlu0 %v7338, 112
  %v9471 = vpop.permute.xlu0 %9470
  %9472 = vrot.lane.b32.xlu0 %v7339, 112
  %v9473 = vpop.permute.xlu0 %9472
  %9474 = vrot.lane.b32.xlu0 %v7340, 112
  %v9475 = vpop.permute.xlu0 %9474
  %9476 = vrot.lane.b32.xlu0 %v7341, 112
  %v9477 = vpop.permute.xlu0 %9476
  %9478 = vrot.lane.b32.xlu0 %v7342, 112
  %v9479 = vpop.permute.xlu0 %9478
  %9480 = vrot.lane.b32.xlu0 %v7343, 112
  %v9481 = vpop.permute.xlu0 %9480
  %9482 = vrot.lane.b32.xlu0 %v7344, 112
  %v9483 = vpop.permute.xlu0 %9482
  %9484 = vrot.lane.b32.xlu0 %v7345, 112
  %v9485 = vpop.permute.xlu0 %9484
  %9486 = vrot.lane.b32.xlu0 %v7346, 112
  %v9487 = vpop.permute.xlu0 %9486
  %9488 = vrot.lane.b32.xlu0 %v7347, 112
  %v9489 = vpop.permute.xlu0 %9488
  %v9492 = vsel %vm1224, %v7180, %v7491
  %v9495 = vsel %vm1224, %v7181, %v7493
  %v9498 = vsel %vm1224, %v7182, %v7495
  %v9501 = vsel %vm1224, %v7183, %v7497
  %v9504 = vsel %vm1224, %v7184, %v7499
  %v9507 = vsel %vm1224, %v7185, %v7501
  %v9510 = vsel %vm1224, %v7186, %v7503
  %v9513 = vsel %vm1224, %v7187, %v7505
  %v9516 = vsel %vm1224, %v7188, %v7507
  %v9519 = vsel %vm1224, %v7189, %v7509
  %v9522 = vsel %vm1224, %v7190, %v7511
  %v9525 = vsel %vm1224, %v7191, %v7513
  %v9528 = vsel %vm1224, %v7192, %v7515
  %v9531 = vsel %vm1224, %v7193, %v7517
  %v9534 = vsel %vm1224, %v7194, %v7519
  %v9537 = vsel %vm1224, %v7195, %v7521
  %v9540 = vsel %vm1224, %v7196, %v7523
  %v9543 = vsel %vm1224, %v7197, %v7525
  %v9546 = vsel %vm1224, %v7198, %v7527
  %v9549 = vsel %vm1224, %v7199, %v7529
  %v9552 = vsel %vm1224, %v7200, %v7531
  %v9555 = vsel %vm1224, %v7201, %v7533
  %v9558 = vsel %vm1224, %v7202, %v7535
  %v9561 = vsel %vm1224, %v7203, %v7537
  %v9564 = vsel %vm1224, %v7204, %v7539
  %v9567 = vsel %vm1224, %v7205, %v7541
  %v9570 = vsel %vm1224, %v7206, %v7543
  %v9573 = vsel %vm1224, %v7207, %v7545
  %v9576 = vsel %vm1224, %v7208, %v7547
  %v9579 = vsel %vm1224, %v7209, %v7549
  %v9582 = vsel %vm1224, %v7210, %v7551
  %v9585 = vsel %vm1224, %v7211, %v7553
  %v9588 = vsel %vm1224, %v7212, %v7555
  %v9591 = vsel %vm1224, %v7213, %v7557
  %v9594 = vsel %vm1224, %v7214, %v7559
  %v9597 = vsel %vm1224, %v7215, %v7561
  %v9600 = vsel %vm1224, %v7216, %v7563
  %v9603 = vsel %vm1224, %v7217, %v7565
  %v9606 = vsel %vm1224, %v7218, %v7567
  %v9609 = vsel %vm1224, %v7219, %v7569
  %v9612 = vsel %vm1224, %v7220, %v7571
  %v9615 = vsel %vm1224, %v7221, %v7573
  %v9618 = vsel %vm1224, %v7222, %v7575
  %v9621 = vsel %vm1224, %v7223, %v7577
  %v9624 = vsel %vm1224, %v7224, %v7579
  %v9627 = vsel %vm1224, %v7225, %v7581
  %v9630 = vsel %vm1224, %v7226, %v7583
  %v9633 = vsel %vm1224, %v7227, %v7585
  %v9636 = vsel %vm1224, %v7228, %v7587
  %v9639 = vsel %vm1224, %v7229, %v7589
  %v9642 = vsel %vm1224, %v7230, %v7591
  %v9645 = vsel %vm1224, %v7231, %v7593
  %v9648 = vsel %vm1224, %v7232, %v7595
  %v9651 = vsel %vm1224, %v7233, %v7597
  %v9654 = vsel %vm1224, %v7234, %v7599
  %v9657 = vsel %vm1224, %v7235, %v7601
  %v9660 = vsel %vm1224, %v7236, %v7603
  %v9663 = vsel %vm1224, %v7237, %v7605
  %v9666 = vsel %vm1224, %v7238, %v7607
  %v9669 = vsel %vm1224, %v7239, %v7609
  %v9672 = vsel %vm1224, %v7240, %v7611
  %v9675 = vsel %vm1224, %v7241, %v7613
  %v9678 = vsel %vm1224, %v7242, %v7615
  %v9681 = vsel %vm1224, %v7243, %v7617
  %v9684 = vsel %vm1224, %v7244, %v7619
  %v9687 = vsel %vm1224, %v7245, %v7621
  %v9690 = vsel %vm1224, %v7246, %v7623
  %v9693 = vsel %vm1224, %v7247, %v7625
  %v9696 = vsel %vm1224, %v7248, %v7627
  %v9699 = vsel %vm1224, %v7249, %v7629
  %v9702 = vsel %vm1224, %v7250, %v7631
  %v9705 = vsel %vm1224, %v7251, %v7633
  %v9708 = vsel %vm1224, %v7252, %v7635
  %v9711 = vsel %vm1224, %v7253, %v7637
  %v9714 = vsel %vm1224, %v7254, %v7639
  %v9717 = vsel %vm1224, %v7255, %v7641
  %v9720 = vsel %vm1224, %v7256, %v7643
  %v9723 = vsel %vm1224, %v7257, %v7645
  %v9726 = vsel %vm1224, %v7258, %v7647
  %v9729 = vsel %vm1224, %v7259, %v7649
  %v9732 = vsel %vm1224, %v7260, %v7651
  %v9735 = vsel %vm1224, %v7261, %v7653
  %v9738 = vsel %vm1224, %v7262, %v7655
  %v9741 = vsel %vm1224, %v7263, %v7657
  %v9744 = vsel %vm1224, %v7264, %v7659
  %v9747 = vsel %vm1224, %v7265, %v7661
  %v9750 = vsel %vm1224, %v7266, %v7663
  %v9753 = vsel %vm1224, %v7267, %v7665
  %v9756 = vsel %vm1224, %v7268, %v7667
  %v9759 = vsel %vm1224, %v7269, %v7669
  %v9762 = vsel %vm1224, %v7270, %v7671
  %v9765 = vsel %vm1224, %v7271, %v7673
  %v9768 = vsel %vm1224, %v7272, %v7675
  %v9771 = vsel %vm1224, %v7273, %v7677
  %v9774 = vsel %vm1224, %v7274, %v7679
  %v9777 = vsel %vm1224, %v7275, %v7681
  %v9780 = vsel %vm1224, %v7276, %v7683
  %v9783 = vsel %vm1224, %v7277, %v7685
  %v9786 = vsel %vm1224, %v7278, %v7687
  %v9789 = vsel %vm1224, %v7279, %v7689
  %v9792 = vsel %vm1224, %v7280, %v7691
  %v9795 = vsel %vm1224, %v7281, %v7693
  %v9798 = vsel %vm1224, %v7282, %v7695
  %v9801 = vsel %vm1224, %v7283, %v7697
  %v9804 = vsel %vm1224, %v7284, %v7699
  %v9807 = vsel %vm1224, %v7285, %v7701
  %v9810 = vsel %vm1224, %v7286, %v7703
  %v9813 = vsel %vm1224, %v7287, %v7705
  %v9816 = vsel %vm1224, %v7288, %v7707
  %v9819 = vsel %vm1224, %v7289, %v7709
  %v9822 = vsel %vm1224, %v7290, %v7711
  %v9825 = vsel %vm1224, %v7291, %v7713
  %v9828 = vsel %vm1224, %v7292, %v7715
  %v9831 = vsel %vm1224, %v7293, %v7717
  %v9834 = vsel %vm1224, %v7294, %v7719
  %v9837 = vsel %vm1224, %v7295, %v7721
  %v9840 = vsel %vm1224, %v7296, %v7723
  %v9843 = vsel %vm1224, %v7297, %v7725
  %v9846 = vsel %vm1224, %v7298, %v7727
  %v9849 = vsel %vm1224, %v7299, %v7729
  %v9852 = vsel %vm1224, %v7300, %v7731
  %v9855 = vsel %vm1224, %v7301, %v7733
  %v9858 = vsel %vm1224, %v7302, %v7735
  %v9861 = vsel %vm1224, %v7303, %v7737
  %v9864 = vsel %vm1224, %v7304, %v7739
  %v9867 = vsel %vm1224, %v7305, %v7741
  %v9870 = vsel %vm1224, %v7306, %v7743
  %v9873 = vsel %vm1224, %v7307, %v7745
  %v9876 = vsel %vm1224, %v7308, %v7747
  %v9879 = vsel %vm1224, %v7309, %v7749
  %v9882 = vsel %vm1224, %v7310, %v7751
  %v9885 = vsel %vm1224, %v7311, %v7753
  %v9888 = vsel %vm1224, %v7312, %v7755
  %v9891 = vsel %vm1224, %v7313, %v7757
  %v9894 = vsel %vm1224, %v7314, %v7759
  %v9897 = vsel %vm1224, %v7315, %v7761
  %v9900 = vsel %vm1224, %v7316, %v7763
  %v9903 = vsel %vm1224, %v7317, %v7765
  %v9906 = vsel %vm1224, %v7318, %v7767
  %v9909 = vsel %vm1224, %v7319, %v7769
  %v9912 = vsel %vm1224, %v7320, %v7771
  %vm9913 = vcmask 261120
  %v9915 = vsel %vm9913, %v9492, %v7774
  %v9917 = vsel %vm9913, %v9495, %v7776
  %v9919 = vsel %vm9913, %v9498, %v7778
  %v9921 = vsel %vm9913, %v9501, %v7780
  %v9923 = vsel %vm9913, %v9504, %v7782
  %v9925 = vsel %vm9913, %v9507, %v7784
  %v9927 = vsel %vm9913, %v9510, %v7786
  %v9929 = vsel %vm9913, %v9513, %v7788
  %v9931 = vsel %vm9913, %v9516, %v7790
  %v9933 = vsel %vm9913, %v9519, %v7792
  %v9935 = vsel %vm9913, %v9522, %v7794
  %v9937 = vsel %vm9913, %v9525, %v7796
  %v9939 = vsel %vm9913, %v9528, %v7798
  %v9941 = vsel %vm9913, %v9531, %v7800
  %v9943 = vsel %vm9913, %v9534, %v7802
  %v9945 = vsel %vm9913, %v9537, %v7804
  %v9947 = vsel %vm9913, %v9540, %v7806
  %v9949 = vsel %vm9913, %v9543, %v7808
  %v9951 = vsel %vm9913, %v9546, %v7810
  %v9953 = vsel %vm9913, %v9549, %v7812
  %v9955 = vsel %vm9913, %v9552, %v7814
  %v9957 = vsel %vm9913, %v9555, %v7816
  %v9959 = vsel %vm9913, %v9558, %v7818
  %v9961 = vsel %vm9913, %v9561, %v7820
  %v9963 = vsel %vm9913, %v9564, %v7822
  %v9965 = vsel %vm9913, %v9567, %v7824
  %v9967 = vsel %vm9913, %v9570, %v7826
  %v9969 = vsel %vm9913, %v9573, %v7828
  %v9971 = vsel %vm9913, %v9576, %v7830
  %v9973 = vsel %vm9913, %v9579, %v7832
  %v9975 = vsel %vm9913, %v9582, %v7834
  %v9977 = vsel %vm9913, %v9585, %v7836
  %v9979 = vsel %vm9913, %v9588, %v7838
  %v9981 = vsel %vm9913, %v9591, %v7840
  %v9983 = vsel %vm9913, %v9594, %v7842
  %v9985 = vsel %vm9913, %v9597, %v7844
  %v9987 = vsel %vm9913, %v9600, %v7846
  %v9989 = vsel %vm9913, %v9603, %v7848
  %v9991 = vsel %vm9913, %v9606, %v7850
  %v9993 = vsel %vm9913, %v9609, %v7852
  %v9995 = vsel %vm9913, %v9612, %v7854
  %v9997 = vsel %vm9913, %v9615, %v7856
  %v9999 = vsel %vm9913, %v9618, %v7858
  %v10001 = vsel %vm9913, %v9621, %v7860
  %v10003 = vsel %vm9913, %v9624, %v7862
  %v10005 = vsel %vm9913, %v9627, %v7864
  %v10007 = vsel %vm9913, %v9630, %v7866
  %v10009 = vsel %vm9913, %v9633, %v7868
  %v10011 = vsel %vm9913, %v9636, %v7870
  %v10013 = vsel %vm9913, %v9639, %v7872
  %v10015 = vsel %vm9913, %v9642, %v7874
  %v10017 = vsel %vm9913, %v9645, %v7876
  %v10019 = vsel %vm9913, %v9648, %v7878
  %v10021 = vsel %vm9913, %v9651, %v7880
  %v10023 = vsel %vm9913, %v9654, %v7882
  %v10025 = vsel %vm9913, %v9657, %v7884
  %v10027 = vsel %vm9913, %v9660, %v7886
  %v10029 = vsel %vm9913, %v9663, %v7888
  %v10031 = vsel %vm9913, %v9666, %v7890
  %v10033 = vsel %vm9913, %v9669, %v7892
  %v10035 = vsel %vm9913, %v9672, %v7894
  %v10037 = vsel %vm9913, %v9675, %v7896
  %v10039 = vsel %vm9913, %v9678, %v7898
  %v10041 = vsel %vm9913, %v9681, %v7900
  %v10043 = vsel %vm9913, %v9684, %v7902
  %v10045 = vsel %vm9913, %v9687, %v7904
  %v10047 = vsel %vm9913, %v9690, %v7906
  %v10049 = vsel %vm9913, %v9693, %v7908
  %v10051 = vsel %vm9913, %v9696, %v7910
  %v10053 = vsel %vm9913, %v9699, %v7912
  %v10055 = vsel %vm9913, %v9702, %v7914
  %v10057 = vsel %vm9913, %v9705, %v7916
  %v10059 = vsel %vm9913, %v9708, %v7918
  %v10061 = vsel %vm9913, %v9711, %v7920
  %v10063 = vsel %vm9913, %v9714, %v7922
  %v10065 = vsel %vm9913, %v9717, %v7924
  %v10067 = vsel %vm9913, %v9720, %v7926
  %v10069 = vsel %vm9913, %v9723, %v7928
  %v10071 = vsel %vm9913, %v9726, %v7930
  %v10073 = vsel %vm9913, %v9729, %v7932
  %v10075 = vsel %vm9913, %v9732, %v7934
  %v10077 = vsel %vm9913, %v9735, %v7936
  %v10079 = vsel %vm9913, %v9738, %v7938
  %v10081 = vsel %vm9913, %v9741, %v7940
  %v10083 = vsel %vm9913, %v9744, %v7942
  %v10085 = vsel %vm9913, %v9747, %v7944
  %v10087 = vsel %vm9913, %v9750, %v7946
  %v10089 = vsel %vm9913, %v9753, %v7948
  %v10091 = vsel %vm9913, %v9756, %v7950
  %v10093 = vsel %vm9913, %v9759, %v7952
  %v10095 = vsel %vm9913, %v9762, %v7954
  %v10097 = vsel %vm9913, %v9765, %v7956
  %v10099 = vsel %vm9913, %v9768, %v7958
  %v10101 = vsel %vm9913, %v9771, %v7960
  %v10103 = vsel %vm9913, %v9774, %v7962
  %v10105 = vsel %vm9913, %v9777, %v7964
  %v10107 = vsel %vm9913, %v9780, %v7966
  %v10109 = vsel %vm9913, %v9783, %v7968
  %v10111 = vsel %vm9913, %v9786, %v7970
  %v10113 = vsel %vm9913, %v9789, %v7972
  %v10115 = vsel %vm9913, %v9792, %v7974
  %v10117 = vsel %vm9913, %v9795, %v7976
  %v10119 = vsel %vm9913, %v9798, %v7978
  %v10121 = vsel %vm9913, %v9801, %v7980
  %v10123 = vsel %vm9913, %v9804, %v7982
  %v10125 = vsel %vm9913, %v9807, %v7984
  %v10127 = vsel %vm9913, %v9810, %v7986
  %v10129 = vsel %vm9913, %v9813, %v7988
  %v10131 = vsel %vm9913, %v9816, %v7990
  %v10133 = vsel %vm9913, %v9819, %v7992
  %v10135 = vsel %vm9913, %v9822, %v7994
  %v10137 = vsel %vm9913, %v9825, %v7996
  %v10139 = vsel %vm9913, %v9828, %v7998
  %v10141 = vsel %vm9913, %v9831, %v8000
  %v10143 = vsel %vm9913, %v9834, %v8002
  %v10145 = vsel %vm9913, %v9837, %v8004
  %v10147 = vsel %vm9913, %v9840, %v8006
  %v10149 = vsel %vm9913, %v9843, %v8008
  %v10151 = vsel %vm9913, %v9846, %v8010
  %v10153 = vsel %vm9913, %v9849, %v8012
  %v10155 = vsel %vm9913, %v9852, %v8014
  %v10157 = vsel %vm9913, %v9855, %v8016
  %v10159 = vsel %vm9913, %v9858, %v8018
  %v10161 = vsel %vm9913, %v9861, %v8020
  %v10163 = vsel %vm9913, %v9864, %v8022
  %v10165 = vsel %vm9913, %v9867, %v8024
  %v10167 = vsel %vm9913, %v9870, %v8026
  %v10169 = vsel %vm9913, %v9873, %v8028
  %v10171 = vsel %vm9913, %v9876, %v8030
  %v10173 = vsel %vm9913, %v9879, %v8032
  %v10175 = vsel %vm9913, %v9882, %v8034
  %v10177 = vsel %vm9913, %v9885, %v8036
  %v10179 = vsel %vm9913, %v9888, %v8038
  %v10181 = vsel %vm9913, %v9891, %v8040
  %v10183 = vsel %vm9913, %v9894, %v8042
  %v10185 = vsel %vm9913, %v9897, %v8044
  %v10187 = vsel %vm9913, %v9900, %v8046
  %v10189 = vsel %vm9913, %v9903, %v8048
  %v10191 = vsel %vm9913, %v9906, %v8050
  %v10193 = vsel %vm9913, %v9909, %v8052
  %v10195 = vsel %vm9913, %v9912, %v8054
  %vm10196 = vcmask 392192
  %v10198 = vsel %vm10196, %v9915, %v8067
  %v10200 = vsel %vm10196, %v9917, %v8069
  %v10202 = vsel %vm10196, %v9919, %v8071
  %v10204 = vsel %vm10196, %v9921, %v8073
  %v10206 = vsel %vm10196, %v9923, %v8075
  %v10208 = vsel %vm10196, %v9925, %v8077
  %v10210 = vsel %vm10196, %v9927, %v8079
  %v10212 = vsel %vm10196, %v9929, %v8081
  %v10214 = vsel %vm10196, %v9931, %v8083
  %v10216 = vsel %vm10196, %v9933, %v8085
  %v10218 = vsel %vm10196, %v9935, %v8087
  %v10220 = vsel %vm10196, %v9937, %v8089
  %v10222 = vsel %vm10196, %v9939, %v8091
  %v10224 = vsel %vm10196, %v9941, %v8093
  %v10226 = vsel %vm10196, %v9943, %v8095
  %v10228 = vsel %vm10196, %v9945, %v8097
  %v10230 = vsel %vm10196, %v9947, %v8099
  %v10232 = vsel %vm10196, %v9949, %v8101
  %v10234 = vsel %vm10196, %v9951, %v8103
  %v10236 = vsel %vm10196, %v9953, %v8105
  %v10238 = vsel %vm10196, %v9955, %v8107
  %v10240 = vsel %vm10196, %v9957, %v8109
  %v10242 = vsel %vm10196, %v9959, %v8111
  %v10244 = vsel %vm10196, %v9961, %v8113
  %v10246 = vsel %vm10196, %v9963, %v8115
  %v10248 = vsel %vm10196, %v9965, %v8117
  %v10250 = vsel %vm10196, %v9967, %v8119
  %v10252 = vsel %vm10196, %v9969, %v8121
  %v10254 = vsel %vm10196, %v9971, %v8123
  %v10256 = vsel %vm10196, %v9973, %v8125
  %v10258 = vsel %vm10196, %v9975, %v8127
  %v10260 = vsel %vm10196, %v9977, %v8129
  %v10262 = vsel %vm10196, %v9979, %v8131
  %v10264 = vsel %vm10196, %v9981, %v8133
  %v10266 = vsel %vm10196, %v9983, %v8135
  %v10268 = vsel %vm10196, %v9985, %v8137
  %v10270 = vsel %vm10196, %v9987, %v8139
  %v10272 = vsel %vm10196, %v9989, %v8141
  %v10274 = vsel %vm10196, %v9991, %v8143
  %v10276 = vsel %vm10196, %v9993, %v8145
  %v10278 = vsel %vm10196, %v9995, %v8147
  %v10280 = vsel %vm10196, %v9997, %v8149
  %v10282 = vsel %vm10196, %v9999, %v8151
  %v10284 = vsel %vm10196, %v10001, %v8153
  %v10286 = vsel %vm10196, %v10003, %v8155
  %v10288 = vsel %vm10196, %v10005, %v8157
  %v10290 = vsel %vm10196, %v10007, %v8159
  %v10292 = vsel %vm10196, %v10009, %v8161
  %v10294 = vsel %vm10196, %v10011, %v8163
  %v10296 = vsel %vm10196, %v10013, %v8165
  %v10298 = vsel %vm10196, %v10015, %v8167
  %v10300 = vsel %vm10196, %v10017, %v8169
  %v10302 = vsel %vm10196, %v10019, %v8171
  %v10304 = vsel %vm10196, %v10021, %v8173
  %v10306 = vsel %vm10196, %v10023, %v8175
  %v10308 = vsel %vm10196, %v10025, %v8177
  %v10310 = vsel %vm10196, %v10027, %v8179
  %v10312 = vsel %vm10196, %v10029, %v8181
  %v10314 = vsel %vm10196, %v10031, %v8183
  %v10316 = vsel %vm10196, %v10033, %v8185
  %v10318 = vsel %vm10196, %v10035, %v8187
  %v10320 = vsel %vm10196, %v10037, %v8189
  %v10322 = vsel %vm10196, %v10039, %v8191
  %v10324 = vsel %vm10196, %v10041, %v8193
  %v10326 = vsel %vm10196, %v10043, %v8195
  %v10328 = vsel %vm10196, %v10045, %v8197
  %v10330 = vsel %vm10196, %v10047, %v8199
  %v10332 = vsel %vm10196, %v10049, %v8201
  %v10334 = vsel %vm10196, %v10051, %v8203
  %v10336 = vsel %vm10196, %v10053, %v8205
  %v10338 = vsel %vm10196, %v10055, %v8207
  %v10340 = vsel %vm10196, %v10057, %v8209
  %v10342 = vsel %vm10196, %v10059, %v8211
  %v10344 = vsel %vm10196, %v10061, %v8213
  %v10346 = vsel %vm10196, %v10063, %v8215
  %v10348 = vsel %vm10196, %v10065, %v8217
  %v10350 = vsel %vm10196, %v10067, %v8219
  %v10352 = vsel %vm10196, %v10069, %v8221
  %v10354 = vsel %vm10196, %v10071, %v8223
  %v10356 = vsel %vm10196, %v10073, %v8225
  %v10358 = vsel %vm10196, %v10075, %v8227
  %v10360 = vsel %vm10196, %v10077, %v8229
  %v10362 = vsel %vm10196, %v10079, %v8231
  %v10364 = vsel %vm10196, %v10081, %v8233
  %v10366 = vsel %vm10196, %v10083, %v8235
  %v10368 = vsel %vm10196, %v10085, %v8237
  %v10370 = vsel %vm10196, %v10087, %v8239
  %v10372 = vsel %vm10196, %v10089, %v8241
  %v10374 = vsel %vm10196, %v10091, %v8243
  %v10376 = vsel %vm10196, %v10093, %v8245
  %v10378 = vsel %vm10196, %v10095, %v8247
  %v10380 = vsel %vm10196, %v10097, %v8249
  %v10382 = vsel %vm10196, %v10099, %v8251
  %v10384 = vsel %vm10196, %v10101, %v8253
  %v10386 = vsel %vm10196, %v10103, %v8255
  %v10388 = vsel %vm10196, %v10105, %v8257
  %v10390 = vsel %vm10196, %v10107, %v8259
  %v10392 = vsel %vm10196, %v10109, %v8261
  %v10394 = vsel %vm10196, %v10111, %v8263
  %v10396 = vsel %vm10196, %v10113, %v8265
  %v10398 = vsel %vm10196, %v10115, %v8267
  %v10400 = vsel %vm10196, %v10117, %v8269
  %v10402 = vsel %vm10196, %v10119, %v8271
  %v10404 = vsel %vm10196, %v10121, %v8273
  %v10406 = vsel %vm10196, %v10123, %v8275
  %v10408 = vsel %vm10196, %v10125, %v8277
  %v10410 = vsel %vm10196, %v10127, %v8279
  %v10412 = vsel %vm10196, %v10129, %v8281
  %v10414 = vsel %vm10196, %v10131, %v8283
  %v10416 = vsel %vm10196, %v10133, %v8285
  %v10418 = vsel %vm10196, %v10135, %v8287
  %v10420 = vsel %vm10196, %v10137, %v8289
  %v10422 = vsel %vm10196, %v10139, %v8291
  %v10424 = vsel %vm10196, %v10141, %v8293
  %v10426 = vsel %vm10196, %v10143, %v8295
  %v10428 = vsel %vm10196, %v10145, %v8297
  %v10430 = vsel %vm10196, %v10147, %v8299
  %v10432 = vsel %vm10196, %v10149, %v8301
  %v10434 = vsel %vm10196, %v10151, %v8303
  %v10436 = vsel %vm10196, %v10153, %v8305
  %v10438 = vsel %vm10196, %v10155, %v8307
  %v10440 = vsel %vm10196, %v10157, %v8309
  %v10442 = vsel %vm10196, %v10159, %v8311
  %v10444 = vsel %vm10196, %v10161, %v8313
  %v10446 = vsel %vm10196, %v10163, %v8315
  %v10448 = vsel %vm10196, %v10165, %v8317
  %v10450 = vsel %vm10196, %v10167, %v8319
  %v10452 = vsel %vm10196, %v10169, %v8321
  %v10454 = vsel %vm10196, %v10171, %v8323
  %v10456 = vsel %vm10196, %v10173, %v8325
  %v10458 = vsel %vm10196, %v10175, %v8327
  %v10460 = vsel %vm10196, %v10177, %v8329
  %v10462 = vsel %vm10196, %v10179, %v8331
  %v10464 = vsel %vm10196, %v10181, %v8333
  %v10466 = vsel %vm10196, %v10183, %v8335
  %v10468 = vsel %vm10196, %v10185, %v8337
  %v10470 = vsel %vm10196, %v10187, %v8339
  %v10472 = vsel %vm10196, %v10189, %v8341
  %v10474 = vsel %vm10196, %v10191, %v8343
  %v10476 = vsel %vm10196, %v10193, %v8345
  %v10478 = vsel %vm10196, %v10195, %v8347
  %vm10479 = vcmask 523264
  %v10481 = vsel %vm10479, %v10198, %v8350
  %v10483 = vsel %vm10479, %v10200, %v8352
  %v10485 = vsel %vm10479, %v10202, %v8354
  %v10487 = vsel %vm10479, %v10204, %v8356
  %v10489 = vsel %vm10479, %v10206, %v8358
  %v10491 = vsel %vm10479, %v10208, %v8360
  %v10493 = vsel %vm10479, %v10210, %v8362
  %v10495 = vsel %vm10479, %v10212, %v8364
  %v10497 = vsel %vm10479, %v10214, %v8366
  %v10499 = vsel %vm10479, %v10216, %v8368
  %v10501 = vsel %vm10479, %v10218, %v8370
  %v10503 = vsel %vm10479, %v10220, %v8372
  %v10505 = vsel %vm10479, %v10222, %v8374
  %v10507 = vsel %vm10479, %v10224, %v8376
  %v10509 = vsel %vm10479, %v10226, %v8378
  %v10511 = vsel %vm10479, %v10228, %v8380
  %v10513 = vsel %vm10479, %v10230, %v8382
  %v10515 = vsel %vm10479, %v10232, %v8384
  %v10517 = vsel %vm10479, %v10234, %v8386
  %v10519 = vsel %vm10479, %v10236, %v8388
  %v10521 = vsel %vm10479, %v10238, %v8390
  %v10523 = vsel %vm10479, %v10240, %v8392
  %v10525 = vsel %vm10479, %v10242, %v8394
  %v10527 = vsel %vm10479, %v10244, %v8396
  %v10529 = vsel %vm10479, %v10246, %v8398
  %v10531 = vsel %vm10479, %v10248, %v8400
  %v10533 = vsel %vm10479, %v10250, %v8402
  %v10535 = vsel %vm10479, %v10252, %v8404
  %v10537 = vsel %vm10479, %v10254, %v8406
  %v10539 = vsel %vm10479, %v10256, %v8408
  %v10541 = vsel %vm10479, %v10258, %v8410
  %v10543 = vsel %vm10479, %v10260, %v8412
  %v10545 = vsel %vm10479, %v10262, %v8414
  %v10547 = vsel %vm10479, %v10264, %v8416
  %v10549 = vsel %vm10479, %v10266, %v8418
  %v10551 = vsel %vm10479, %v10268, %v8420
  %v10553 = vsel %vm10479, %v10270, %v8422
  %v10555 = vsel %vm10479, %v10272, %v8424
  %v10557 = vsel %vm10479, %v10274, %v8426
  %v10559 = vsel %vm10479, %v10276, %v8428
  %v10561 = vsel %vm10479, %v10278, %v8430
  %v10563 = vsel %vm10479, %v10280, %v8432
  %v10565 = vsel %vm10479, %v10282, %v8434
  %v10567 = vsel %vm10479, %v10284, %v8436
  %v10569 = vsel %vm10479, %v10286, %v8438
  %v10571 = vsel %vm10479, %v10288, %v8440
  %v10573 = vsel %vm10479, %v10290, %v8442
  %v10575 = vsel %vm10479, %v10292, %v8444
  %v10577 = vsel %vm10479, %v10294, %v8446
  %v10579 = vsel %vm10479, %v10296, %v8448
  %v10581 = vsel %vm10479, %v10298, %v8450
  %v10583 = vsel %vm10479, %v10300, %v8452
  %v10585 = vsel %vm10479, %v10302, %v8454
  %v10587 = vsel %vm10479, %v10304, %v8456
  %v10589 = vsel %vm10479, %v10306, %v8458
  %v10591 = vsel %vm10479, %v10308, %v8460
  %v10593 = vsel %vm10479, %v10310, %v8462
  %v10595 = vsel %vm10479, %v10312, %v8464
  %v10597 = vsel %vm10479, %v10314, %v8466
  %v10599 = vsel %vm10479, %v10316, %v8468
  %v10601 = vsel %vm10479, %v10318, %v8470
  %v10603 = vsel %vm10479, %v10320, %v8472
  %v10605 = vsel %vm10479, %v10322, %v8474
  %v10607 = vsel %vm10479, %v10324, %v8476
  %v10609 = vsel %vm10479, %v10326, %v8478
  %v10611 = vsel %vm10479, %v10328, %v8480
  %v10613 = vsel %vm10479, %v10330, %v8482
  %v10615 = vsel %vm10479, %v10332, %v8484
  %v10617 = vsel %vm10479, %v10334, %v8486
  %v10619 = vsel %vm10479, %v10336, %v8488
  %v10621 = vsel %vm10479, %v10338, %v8490
  %v10623 = vsel %vm10479, %v10340, %v8492
  %v10625 = vsel %vm10479, %v10342, %v8494
  %v10627 = vsel %vm10479, %v10344, %v8496
  %v10629 = vsel %vm10479, %v10346, %v8498
  %v10631 = vsel %vm10479, %v10348, %v8500
  %v10633 = vsel %vm10479, %v10350, %v8502
  %v10635 = vsel %vm10479, %v10352, %v8504
  %v10637 = vsel %vm10479, %v10354, %v8506
  %v10639 = vsel %vm10479, %v10356, %v8508
  %v10641 = vsel %vm10479, %v10358, %v8510
  %v10643 = vsel %vm10479, %v10360, %v8512
  %v10645 = vsel %vm10479, %v10362, %v8514
  %v10647 = vsel %vm10479, %v10364, %v8516
  %v10649 = vsel %vm10479, %v10366, %v8518
  %v10651 = vsel %vm10479, %v10368, %v8520
  %v10653 = vsel %vm10479, %v10370, %v8522
  %v10655 = vsel %vm10479, %v10372, %v8524
  %v10657 = vsel %vm10479, %v10374, %v8526
  %v10659 = vsel %vm10479, %v10376, %v8528
  %v10661 = vsel %vm10479, %v10378, %v8530
  %v10663 = vsel %vm10479, %v10380, %v8532
  %v10665 = vsel %vm10479, %v10382, %v8534
  %v10667 = vsel %vm10479, %v10384, %v8536
  %v10669 = vsel %vm10479, %v10386, %v8538
  %v10671 = vsel %vm10479, %v10388, %v8540
  %v10673 = vsel %vm10479, %v10390, %v8542
  %v10675 = vsel %vm10479, %v10392, %v8544
  %v10677 = vsel %vm10479, %v10394, %v8546
  %v10679 = vsel %vm10479, %v10396, %v8548
  %v10681 = vsel %vm10479, %v10398, %v8550
  %v10683 = vsel %vm10479, %v10400, %v8552
  %v10685 = vsel %vm10479, %v10402, %v8554
  %v10687 = vsel %vm10479, %v10404, %v8556
  %v10689 = vsel %vm10479, %v10406, %v8558
  %v10691 = vsel %vm10479, %v10408, %v8560
  %v10693 = vsel %vm10479, %v10410, %v8562
  %v10695 = vsel %vm10479, %v10412, %v8564
  %v10697 = vsel %vm10479, %v10414, %v8566
  %v10699 = vsel %vm10479, %v10416, %v8568
  %v10701 = vsel %vm10479, %v10418, %v8570
  %v10703 = vsel %vm10479, %v10420, %v8572
  %v10705 = vsel %vm10479, %v10422, %v8574
  %v10707 = vsel %vm10479, %v10424, %v8576
  %v10709 = vsel %vm10479, %v10426, %v8578
  %v10711 = vsel %vm10479, %v10428, %v8580
  %v10713 = vsel %vm10479, %v10430, %v8582
  %v10715 = vsel %vm10479, %v10432, %v8584
  %v10717 = vsel %vm10479, %v10434, %v8586
  %v10719 = vsel %vm10479, %v10436, %v8588
  %v10721 = vsel %vm10479, %v10438, %v8590
  %v10723 = vsel %vm10479, %v10440, %v8592
  %v10725 = vsel %vm10479, %v10442, %v8594
  %v10727 = vsel %vm10479, %v10444, %v8596
  %v10729 = vsel %vm10479, %v10446, %v8598
  %v10731 = vsel %vm10479, %v10448, %v8600
  %v10733 = vsel %vm10479, %v10450, %v8602
  %v10735 = vsel %vm10479, %v10452, %v8604
  %v10737 = vsel %vm10479, %v10454, %v8606
  %v10739 = vsel %vm10479, %v10456, %v8608
  %v10741 = vsel %vm10479, %v10458, %v8610
  %v10743 = vsel %vm10479, %v10460, %v8612
  %v10745 = vsel %vm10479, %v10462, %v8614
  %v10747 = vsel %vm10479, %v10464, %v8616
  %v10749 = vsel %vm10479, %v10466, %v8618
  %v10751 = vsel %vm10479, %v10468, %v8620
  %v10753 = vsel %vm10479, %v10470, %v8622
  %v10755 = vsel %vm10479, %v10472, %v8624
  %v10757 = vsel %vm10479, %v10474, %v8626
  %v10759 = vsel %vm10479, %v10476, %v8628
  %v10761 = vsel %vm10479, %v10478, %v8630
  %vm10762 = vcmask 654336
  %v10764 = vsel %vm10762, %v10481, %v8633
  %v10766 = vsel %vm10762, %v10483, %v8635
  %v10768 = vsel %vm10762, %v10485, %v8637
  %v10770 = vsel %vm10762, %v10487, %v8639
  %v10772 = vsel %vm10762, %v10489, %v8641
  %v10774 = vsel %vm10762, %v10491, %v8643
  %v10776 = vsel %vm10762, %v10493, %v8645
  %v10778 = vsel %vm10762, %v10495, %v8647
  %v10780 = vsel %vm10762, %v10497, %v8649
  %v10782 = vsel %vm10762, %v10499, %v8651
  %v10784 = vsel %vm10762, %v10501, %v8653
  %v10786 = vsel %vm10762, %v10503, %v8655
  %v10788 = vsel %vm10762, %v10505, %v8657
  %v10790 = vsel %vm10762, %v10507, %v8659
  %v10792 = vsel %vm10762, %v10509, %v8661
  %v10794 = vsel %vm10762, %v10511, %v8663
  %v10796 = vsel %vm10762, %v10513, %v8665
  %v10798 = vsel %vm10762, %v10515, %v8667
  %v10800 = vsel %vm10762, %v10517, %v8669
  %v10802 = vsel %vm10762, %v10519, %v8671
  %v10804 = vsel %vm10762, %v10521, %v8673
  %v10806 = vsel %vm10762, %v10523, %v8675
  %v10808 = vsel %vm10762, %v10525, %v8677
  %v10810 = vsel %vm10762, %v10527, %v8679
  %v10812 = vsel %vm10762, %v10529, %v8681
  %v10814 = vsel %vm10762, %v10531, %v8683
  %v10816 = vsel %vm10762, %v10533, %v8685
  %v10818 = vsel %vm10762, %v10535, %v8687
  %v10820 = vsel %vm10762, %v10537, %v8689
  %v10822 = vsel %vm10762, %v10539, %v8691
  %v10824 = vsel %vm10762, %v10541, %v8693
  %v10826 = vsel %vm10762, %v10543, %v8695
  %v10828 = vsel %vm10762, %v10545, %v8697
  %v10830 = vsel %vm10762, %v10547, %v8699
  %v10832 = vsel %vm10762, %v10549, %v8701
  %v10834 = vsel %vm10762, %v10551, %v8703
  %v10836 = vsel %vm10762, %v10553, %v8705
  %v10838 = vsel %vm10762, %v10555, %v8707
  %v10840 = vsel %vm10762, %v10557, %v8709
  %v10842 = vsel %vm10762, %v10559, %v8711
  %v10844 = vsel %vm10762, %v10561, %v8713
  %v10846 = vsel %vm10762, %v10563, %v8715
  %v10848 = vsel %vm10762, %v10565, %v8717
  %v10850 = vsel %vm10762, %v10567, %v8719
  %v10852 = vsel %vm10762, %v10569, %v8721
  %v10854 = vsel %vm10762, %v10571, %v8723
  %v10856 = vsel %vm10762, %v10573, %v8725
  %v10858 = vsel %vm10762, %v10575, %v8727
  %v10860 = vsel %vm10762, %v10577, %v8729
  %v10862 = vsel %vm10762, %v10579, %v8731
  %v10864 = vsel %vm10762, %v10581, %v8733
  %v10866 = vsel %vm10762, %v10583, %v8735
  %v10868 = vsel %vm10762, %v10585, %v8737
  %v10870 = vsel %vm10762, %v10587, %v8739
  %v10872 = vsel %vm10762, %v10589, %v8741
  %v10874 = vsel %vm10762, %v10591, %v8743
  %v10876 = vsel %vm10762, %v10593, %v8745
  %v10878 = vsel %vm10762, %v10595, %v8747
  %v10880 = vsel %vm10762, %v10597, %v8749
  %v10882 = vsel %vm10762, %v10599, %v8751
  %v10884 = vsel %vm10762, %v10601, %v8753
  %v10886 = vsel %vm10762, %v10603, %v8755
  %v10888 = vsel %vm10762, %v10605, %v8757
  %v10890 = vsel %vm10762, %v10607, %v8759
  %v10892 = vsel %vm10762, %v10609, %v8761
  %v10894 = vsel %vm10762, %v10611, %v8763
  %v10896 = vsel %vm10762, %v10613, %v8765
  %v10898 = vsel %vm10762, %v10615, %v8767
  %v10900 = vsel %vm10762, %v10617, %v8769
  %v10902 = vsel %vm10762, %v10619, %v8771
  %v10904 = vsel %vm10762, %v10621, %v8773
  %v10906 = vsel %vm10762, %v10623, %v8775
  %v10908 = vsel %vm10762, %v10625, %v8777
  %v10910 = vsel %vm10762, %v10627, %v8779
  %v10912 = vsel %vm10762, %v10629, %v8781
  %v10914 = vsel %vm10762, %v10631, %v8783
  %v10916 = vsel %vm10762, %v10633, %v8785
  %v10918 = vsel %vm10762, %v10635, %v8787
  %v10920 = vsel %vm10762, %v10637, %v8789
  %v10922 = vsel %vm10762, %v10639, %v8791
  %v10924 = vsel %vm10762, %v10641, %v8793
  %v10926 = vsel %vm10762, %v10643, %v8795
  %v10928 = vsel %vm10762, %v10645, %v8797
  %v10930 = vsel %vm10762, %v10647, %v8799
  %v10932 = vsel %vm10762, %v10649, %v8801
  %v10934 = vsel %vm10762, %v10651, %v8803
  %v10936 = vsel %vm10762, %v10653, %v8805
  %v10938 = vsel %vm10762, %v10655, %v8807
  %v10940 = vsel %vm10762, %v10657, %v8809
  %v10942 = vsel %vm10762, %v10659, %v8811
  %v10944 = vsel %vm10762, %v10661, %v8813
  %v10946 = vsel %vm10762, %v10663, %v8815
  %v10948 = vsel %vm10762, %v10665, %v8817
  %v10950 = vsel %vm10762, %v10667, %v8819
  %v10952 = vsel %vm10762, %v10669, %v8821
  %v10954 = vsel %vm10762, %v10671, %v8823
  %v10956 = vsel %vm10762, %v10673, %v8825
  %v10958 = vsel %vm10762, %v10675, %v8827
  %v10960 = vsel %vm10762, %v10677, %v8829
  %v10962 = vsel %vm10762, %v10679, %v8831
  %v10964 = vsel %vm10762, %v10681, %v8833
  %v10966 = vsel %vm10762, %v10683, %v8835
  %v10968 = vsel %vm10762, %v10685, %v8837
  %v10970 = vsel %vm10762, %v10687, %v8839
  %v10972 = vsel %vm10762, %v10689, %v8841
  %v10974 = vsel %vm10762, %v10691, %v8843
  %v10976 = vsel %vm10762, %v10693, %v8845
  %v10978 = vsel %vm10762, %v10695, %v8847
  %v10980 = vsel %vm10762, %v10697, %v8849
  %v10982 = vsel %vm10762, %v10699, %v8851
  %v10984 = vsel %vm10762, %v10701, %v8853
  %v10986 = vsel %vm10762, %v10703, %v8855
  %v10988 = vsel %vm10762, %v10705, %v8857
  %v10990 = vsel %vm10762, %v10707, %v8859
  %v10992 = vsel %vm10762, %v10709, %v8861
  %v10994 = vsel %vm10762, %v10711, %v8863
  %v10996 = vsel %vm10762, %v10713, %v8865
  %v10998 = vsel %vm10762, %v10715, %v8867
  %v11000 = vsel %vm10762, %v10717, %v8869
  %v11002 = vsel %vm10762, %v10719, %v8871
  %v11004 = vsel %vm10762, %v10721, %v8873
  %v11006 = vsel %vm10762, %v10723, %v8875
  %v11008 = vsel %vm10762, %v10725, %v8877
  %v11010 = vsel %vm10762, %v10727, %v8879
  %v11012 = vsel %vm10762, %v10729, %v8881
  %v11014 = vsel %vm10762, %v10731, %v8883
  %v11016 = vsel %vm10762, %v10733, %v8885
  %v11018 = vsel %vm10762, %v10735, %v8887
  %v11020 = vsel %vm10762, %v10737, %v8889
  %v11022 = vsel %vm10762, %v10739, %v8891
  %v11024 = vsel %vm10762, %v10741, %v8893
  %v11026 = vsel %vm10762, %v10743, %v8895
  %v11028 = vsel %vm10762, %v10745, %v8897
  %v11030 = vsel %vm10762, %v10747, %v8899
  %v11032 = vsel %vm10762, %v10749, %v8901
  %v11034 = vsel %vm10762, %v10751, %v8903
  %v11036 = vsel %vm10762, %v10753, %v8905
  %v11038 = vsel %vm10762, %v10755, %v8907
  %v11040 = vsel %vm10762, %v10757, %v8909
  %v11042 = vsel %vm10762, %v10759, %v8911
  %v11044 = vsel %vm10762, %v10761, %v8913
  %vm11045 = vcmask 785408
  %v11047 = vsel %vm11045, %v10764, %v8926
  %v11049 = vsel %vm11045, %v10766, %v8928
  %v11051 = vsel %vm11045, %v10768, %v8930
  %v11053 = vsel %vm11045, %v10770, %v8932
  %v11055 = vsel %vm11045, %v10772, %v8934
  %v11057 = vsel %vm11045, %v10774, %v8936
  %v11059 = vsel %vm11045, %v10776, %v8938
  %v11061 = vsel %vm11045, %v10778, %v8940
  %v11063 = vsel %vm11045, %v10780, %v8942
  %v11065 = vsel %vm11045, %v10782, %v8944
  %v11067 = vsel %vm11045, %v10784, %v8946
  %v11069 = vsel %vm11045, %v10786, %v8948
  %v11071 = vsel %vm11045, %v10788, %v8950
  %v11073 = vsel %vm11045, %v10790, %v8952
  %v11075 = vsel %vm11045, %v10792, %v8954
  %v11077 = vsel %vm11045, %v10794, %v8956
  %v11079 = vsel %vm11045, %v10796, %v8958
  %v11081 = vsel %vm11045, %v10798, %v8960
  %v11083 = vsel %vm11045, %v10800, %v8962
  %v11085 = vsel %vm11045, %v10802, %v8964
  %v11087 = vsel %vm11045, %v10804, %v8966
  %v11089 = vsel %vm11045, %v10806, %v8968
  %v11091 = vsel %vm11045, %v10808, %v8970
  %v11093 = vsel %vm11045, %v10810, %v8972
  %v11095 = vsel %vm11045, %v10812, %v8974
  %v11097 = vsel %vm11045, %v10814, %v8976
  %v11099 = vsel %vm11045, %v10816, %v8978
  %v11101 = vsel %vm11045, %v10818, %v8980
  %v11103 = vsel %vm11045, %v10820, %v8982
  %v11105 = vsel %vm11045, %v10822, %v8984
  %v11107 = vsel %vm11045, %v10824, %v8986
  %v11109 = vsel %vm11045, %v10826, %v8988
  %v11111 = vsel %vm11045, %v10828, %v8990
  %v11113 = vsel %vm11045, %v10830, %v8992
  %v11115 = vsel %vm11045, %v10832, %v8994
  %v11117 = vsel %vm11045, %v10834, %v8996
  %v11119 = vsel %vm11045, %v10836, %v8998
  %v11121 = vsel %vm11045, %v10838, %v9000
  %v11123 = vsel %vm11045, %v10840, %v9002
  %v11125 = vsel %vm11045, %v10842, %v9004
  %v11127 = vsel %vm11045, %v10844, %v9006
  %v11129 = vsel %vm11045, %v10846, %v9008
  %v11131 = vsel %vm11045, %v10848, %v9010
  %v11133 = vsel %vm11045, %v10850, %v9012
  %v11135 = vsel %vm11045, %v10852, %v9014
  %v11137 = vsel %vm11045, %v10854, %v9016
  %v11139 = vsel %vm11045, %v10856, %v9018
  %v11141 = vsel %vm11045, %v10858, %v9020
  %v11143 = vsel %vm11045, %v10860, %v9022
  %v11145 = vsel %vm11045, %v10862, %v9024
  %v11147 = vsel %vm11045, %v10864, %v9026
  %v11149 = vsel %vm11045, %v10866, %v9028
  %v11151 = vsel %vm11045, %v10868, %v9030
  %v11153 = vsel %vm11045, %v10870, %v9032
  %v11155 = vsel %vm11045, %v10872, %v9034
  %v11157 = vsel %vm11045, %v10874, %v9036
  %v11159 = vsel %vm11045, %v10876, %v9038
  %v11161 = vsel %vm11045, %v10878, %v9040
  %v11163 = vsel %vm11045, %v10880, %v9042
  %v11165 = vsel %vm11045, %v10882, %v9044
  %v11167 = vsel %vm11045, %v10884, %v9046
  %v11169 = vsel %vm11045, %v10886, %v9048
  %v11171 = vsel %vm11045, %v10888, %v9050
  %v11173 = vsel %vm11045, %v10890, %v9052
  %v11175 = vsel %vm11045, %v10892, %v9054
  %v11177 = vsel %vm11045, %v10894, %v9056
  %v11179 = vsel %vm11045, %v10896, %v9058
  %v11181 = vsel %vm11045, %v10898, %v9060
  %v11183 = vsel %vm11045, %v10900, %v9062
  %v11185 = vsel %vm11045, %v10902, %v9064
  %v11187 = vsel %vm11045, %v10904, %v9066
  %v11189 = vsel %vm11045, %v10906, %v9068
  %v11191 = vsel %vm11045, %v10908, %v9070
  %v11193 = vsel %vm11045, %v10910, %v9072
  %v11195 = vsel %vm11045, %v10912, %v9074
  %v11197 = vsel %vm11045, %v10914, %v9076
  %v11199 = vsel %vm11045, %v10916, %v9078
  %v11201 = vsel %vm11045, %v10918, %v9080
  %v11203 = vsel %vm11045, %v10920, %v9082
  %v11205 = vsel %vm11045, %v10922, %v9084
  %v11207 = vsel %vm11045, %v10924, %v9086
  %v11209 = vsel %vm11045, %v10926, %v9088
  %v11211 = vsel %vm11045, %v10928, %v9090
  %v11213 = vsel %vm11045, %v10930, %v9092
  %v11215 = vsel %vm11045, %v10932, %v9094
  %v11217 = vsel %vm11045, %v10934, %v9096
  %v11219 = vsel %vm11045, %v10936, %v9098
  %v11221 = vsel %vm11045, %v10938, %v9100
  %v11223 = vsel %vm11045, %v10940, %v9102
  %v11225 = vsel %vm11045, %v10942, %v9104
  %v11227 = vsel %vm11045, %v10944, %v9106
  %v11229 = vsel %vm11045, %v10946, %v9108
  %v11231 = vsel %vm11045, %v10948, %v9110
  %v11233 = vsel %vm11045, %v10950, %v9112
  %v11235 = vsel %vm11045, %v10952, %v9114
  %v11237 = vsel %vm11045, %v10954, %v9116
  %v11239 = vsel %vm11045, %v10956, %v9118
  %v11241 = vsel %vm11045, %v10958, %v9120
  %v11243 = vsel %vm11045, %v10960, %v9122
  %v11245 = vsel %vm11045, %v10962, %v9124
  %v11247 = vsel %vm11045, %v10964, %v9126
  %v11249 = vsel %vm11045, %v10966, %v9128
  %v11251 = vsel %vm11045, %v10968, %v9130
  %v11253 = vsel %vm11045, %v10970, %v9132
  %v11255 = vsel %vm11045, %v10972, %v9134
  %v11257 = vsel %vm11045, %v10974, %v9136
  %v11259 = vsel %vm11045, %v10976, %v9138
  %v11261 = vsel %vm11045, %v10978, %v9140
  %v11263 = vsel %vm11045, %v10980, %v9142
  %v11265 = vsel %vm11045, %v10982, %v9144
  %v11267 = vsel %vm11045, %v10984, %v9146
  %v11269 = vsel %vm11045, %v10986, %v9148
  %v11271 = vsel %vm11045, %v10988, %v9150
  %v11273 = vsel %vm11045, %v10990, %v9152
  %v11275 = vsel %vm11045, %v10992, %v9154
  %v11277 = vsel %vm11045, %v10994, %v9156
  %v11279 = vsel %vm11045, %v10996, %v9158
  %v11281 = vsel %vm11045, %v10998, %v9160
  %v11283 = vsel %vm11045, %v11000, %v9162
  %v11285 = vsel %vm11045, %v11002, %v9164
  %v11287 = vsel %vm11045, %v11004, %v9166
  %v11289 = vsel %vm11045, %v11006, %v9168
  %v11291 = vsel %vm11045, %v11008, %v9170
  %v11293 = vsel %vm11045, %v11010, %v9172
  %v11295 = vsel %vm11045, %v11012, %v9174
  %v11297 = vsel %vm11045, %v11014, %v9176
  %v11299 = vsel %vm11045, %v11016, %v9178
  %v11301 = vsel %vm11045, %v11018, %v9180
  %v11303 = vsel %vm11045, %v11020, %v9182
  %v11305 = vsel %vm11045, %v11022, %v9184
  %v11307 = vsel %vm11045, %v11024, %v9186
  %v11309 = vsel %vm11045, %v11026, %v9188
  %v11311 = vsel %vm11045, %v11028, %v9190
  %v11313 = vsel %vm11045, %v11030, %v9192
  %v11315 = vsel %vm11045, %v11032, %v9194
  %v11317 = vsel %vm11045, %v11034, %v9196
  %v11319 = vsel %vm11045, %v11036, %v9198
  %v11321 = vsel %vm11045, %v11038, %v9200
  %v11323 = vsel %vm11045, %v11040, %v9202
  %v11325 = vsel %vm11045, %v11042, %v9204
  %v11327 = vsel %vm11045, %v11044, %v9206
  %vm11328 = vcmask 916480
  %v11330 = vsel %vm11328, %v11047, %v9209
  %v11333 = vsel %vm11328, %v11049, %v9211
  %v11336 = vsel %vm11328, %v11051, %v9213
  %v11339 = vsel %vm11328, %v11053, %v9215
  %v11342 = vsel %vm11328, %v11055, %v9217
  %v11345 = vsel %vm11328, %v11057, %v9219
  %v11348 = vsel %vm11328, %v11059, %v9221
  %v11351 = vsel %vm11328, %v11061, %v9223
  %v11354 = vsel %vm11328, %v11063, %v9225
  %v11357 = vsel %vm11328, %v11065, %v9227
  %v11360 = vsel %vm11328, %v11067, %v9229
  %v11363 = vsel %vm11328, %v11069, %v9231
  %v11366 = vsel %vm11328, %v11071, %v9233
  %v11369 = vsel %vm11328, %v11073, %v9235
  %v11372 = vsel %vm11328, %v11075, %v9237
  %v11375 = vsel %vm11328, %v11077, %v9239
  %v11378 = vsel %vm11328, %v11079, %v9241
  %v11381 = vsel %vm11328, %v11081, %v9243
  %v11384 = vsel %vm11328, %v11083, %v9245
  %v11387 = vsel %vm11328, %v11085, %v9247
  %v11390 = vsel %vm11328, %v11087, %v9249
  %v11393 = vsel %vm11328, %v11089, %v9251
  %v11396 = vsel %vm11328, %v11091, %v9253
  %v11399 = vsel %vm11328, %v11093, %v9255
  %v11402 = vsel %vm11328, %v11095, %v9257
  %v11405 = vsel %vm11328, %v11097, %v9259
  %v11408 = vsel %vm11328, %v11099, %v9261
  %v11411 = vsel %vm11328, %v11101, %v9263
  %v11414 = vsel %vm11328, %v11103, %v9265
  %v11417 = vsel %vm11328, %v11105, %v9267
  %v11420 = vsel %vm11328, %v11107, %v9269
  %v11423 = vsel %vm11328, %v11109, %v9271
  %v11426 = vsel %vm11328, %v11111, %v9273
  %v11429 = vsel %vm11328, %v11113, %v9275
  %v11432 = vsel %vm11328, %v11115, %v9277
  %v11435 = vsel %vm11328, %v11117, %v9279
  %v11438 = vsel %vm11328, %v11119, %v9281
  %v11441 = vsel %vm11328, %v11121, %v9283
  %v11444 = vsel %vm11328, %v11123, %v9285
  %v11447 = vsel %vm11328, %v11125, %v9287
  %v11450 = vsel %vm11328, %v11127, %v9289
  %v11453 = vsel %vm11328, %v11129, %v9291
  %v11456 = vsel %vm11328, %v11131, %v9293
  %v11459 = vsel %vm11328, %v11133, %v9295
  %v11462 = vsel %vm11328, %v11135, %v9297
  %v11465 = vsel %vm11328, %v11137, %v9299
  %v11468 = vsel %vm11328, %v11139, %v9301
  %v11471 = vsel %vm11328, %v11141, %v9303
  %v11474 = vsel %vm11328, %v11143, %v9305
  %v11477 = vsel %vm11328, %v11145, %v9307
  %v11480 = vsel %vm11328, %v11147, %v9309
  %v11483 = vsel %vm11328, %v11149, %v9311
  %v11486 = vsel %vm11328, %v11151, %v9313
  %v11489 = vsel %vm11328, %v11153, %v9315
  %v11492 = vsel %vm11328, %v11155, %v9317
  %v11495 = vsel %vm11328, %v11157, %v9319
  %v11498 = vsel %vm11328, %v11159, %v9321
  %v11501 = vsel %vm11328, %v11161, %v9323
  %v11504 = vsel %vm11328, %v11163, %v9325
  %v11507 = vsel %vm11328, %v11165, %v9327
  %v11510 = vsel %vm11328, %v11167, %v9329
  %v11513 = vsel %vm11328, %v11169, %v9331
  %v11516 = vsel %vm11328, %v11171, %v9333
  %v11519 = vsel %vm11328, %v11173, %v9335
  %v11522 = vsel %vm11328, %v11175, %v9337
  %v11525 = vsel %vm11328, %v11177, %v9339
  %v11528 = vsel %vm11328, %v11179, %v9341
  %v11531 = vsel %vm11328, %v11181, %v9343
  %v11534 = vsel %vm11328, %v11183, %v9345
  %v11537 = vsel %vm11328, %v11185, %v9347
  %v11540 = vsel %vm11328, %v11187, %v9349
  %v11543 = vsel %vm11328, %v11189, %v9351
  %v11546 = vsel %vm11328, %v11191, %v9353
  %v11549 = vsel %vm11328, %v11193, %v9355
  %v11552 = vsel %vm11328, %v11195, %v9357
  %v11555 = vsel %vm11328, %v11197, %v9359
  %v11558 = vsel %vm11328, %v11199, %v9361
  %v11561 = vsel %vm11328, %v11201, %v9363
  %v11564 = vsel %vm11328, %v11203, %v9365
  %v11567 = vsel %vm11328, %v11205, %v9367
  %v11570 = vsel %vm11328, %v11207, %v9369
  %v11573 = vsel %vm11328, %v11209, %v9371
  %v11576 = vsel %vm11328, %v11211, %v9373
  %v11579 = vsel %vm11328, %v11213, %v9375
  %v11582 = vsel %vm11328, %v11215, %v9377
  %v11585 = vsel %vm11328, %v11217, %v9379
  %v11588 = vsel %vm11328, %v11219, %v9381
  %v11591 = vsel %vm11328, %v11221, %v9383
  %v11594 = vsel %vm11328, %v11223, %v9385
  %v11597 = vsel %vm11328, %v11225, %v9387
  %v11600 = vsel %vm11328, %v11227, %v9389
  %v11603 = vsel %vm11328, %v11229, %v9391
  %v11606 = vsel %vm11328, %v11231, %v9393
  %v11609 = vsel %vm11328, %v11233, %v9395
  %v11612 = vsel %vm11328, %v11235, %v9397
  %v11615 = vsel %vm11328, %v11237, %v9399
  %v11618 = vsel %vm11328, %v11239, %v9401
  %v11621 = vsel %vm11328, %v11241, %v9403
  %v11624 = vsel %vm11328, %v11243, %v9405
  %v11627 = vsel %vm11328, %v11245, %v9407
  %v11630 = vsel %vm11328, %v11247, %v9409
  %v11633 = vsel %vm11328, %v11249, %v9411
  %v11636 = vsel %vm11328, %v11251, %v9413
  %v11639 = vsel %vm11328, %v11253, %v9415
  %v11642 = vsel %vm11328, %v11255, %v9417
  %v11645 = vsel %vm11328, %v11257, %v9419
  %v11648 = vsel %vm11328, %v11259, %v9421
  %v11651 = vsel %vm11328, %v11261, %v9423
  %v11654 = vsel %vm11328, %v11263, %v9425
  %v11657 = vsel %vm11328, %v11265, %v9427
  %v11660 = vsel %vm11328, %v11267, %v9429
  %v11663 = vsel %vm11328, %v11269, %v9431
  %v11666 = vsel %vm11328, %v11271, %v9433
  %v11669 = vsel %vm11328, %v11273, %v9435
  %v11672 = vsel %vm11328, %v11275, %v9437
  %v11675 = vsel %vm11328, %v11277, %v9439
  %v11678 = vsel %vm11328, %v11279, %v9441
  %v11681 = vsel %vm11328, %v11281, %v9443
  %v11684 = vsel %vm11328, %v11283, %v9445
  %v11687 = vsel %vm11328, %v11285, %v9447
  %v11690 = vsel %vm11328, %v11287, %v9449
  %v11693 = vsel %vm11328, %v11289, %v9451
  %v11696 = vsel %vm11328, %v11291, %v9453
  %v11699 = vsel %vm11328, %v11293, %v9455
  %v11702 = vsel %vm11328, %v11295, %v9457
  %v11705 = vsel %vm11328, %v11297, %v9459
  %v11708 = vsel %vm11328, %v11299, %v9461
  %v11711 = vsel %vm11328, %v11301, %v9463
  %v11714 = vsel %vm11328, %v11303, %v9465
  %v11717 = vsel %vm11328, %v11305, %v9467
  %v11720 = vsel %vm11328, %v11307, %v9469
  %v11723 = vsel %vm11328, %v11309, %v9471
  %v11726 = vsel %vm11328, %v11311, %v9473
  %v11729 = vsel %vm11328, %v11313, %v9475
  %v11732 = vsel %vm11328, %v11315, %v9477
  %v11735 = vsel %vm11328, %v11317, %v9479
  %v11738 = vsel %vm11328, %v11319, %v9481
  %v11741 = vsel %vm11328, %v11321, %v9483
  %v11744 = vsel %vm11328, %v11323, %v9485
  %v11747 = vsel %vm11328, %v11325, %v9487
  %v11750 = vsel %vm11328, %v11327, %v9489
  %v11752 = vld [vmem:[%s3] sm:$0xf]
  %v11753 = vld [vmem:[%s3 + $0x4] sm:$0xf]
  %v11754 = vld [vmem:[%s3 + $0x8] sm:$0xf]
  %v11755 = vld [vmem:[%s3 + $0xc] sm:$0xf]
  %v11756 = vld [vmem:[%s3 + $0x10] sm:$0xf]
  %v11757 = vld [vmem:[%s3 + $0x14] sm:$0xf]
  %v11758 = vld [vmem:[%s3 + $0x18] sm:$0xf]
  %v11759 = vld [vmem:[%s3 + $0x1c] sm:$0xf]
  %v11760 = vld [vmem:[%s3 + $0x20] sm:$0xf]
  %v11761 = vld [vmem:[%s3 + $0x24] sm:$0xf]
  %v11762 = vld [vmem:[%s3 + $0x28] sm:$0xf]
  %v11763 = vld [vmem:[%s3 + $0x2c] sm:$0xf]
  %v11764 = vld [vmem:[%s3 + $0x30] sm:$0xf]
  %v11765 = vld [vmem:[%s3 + $0x34] sm:$0xf]
  %v11766 = vld [vmem:[%s3 + $0x38] sm:$0xf]
  %v11767 = vld [vmem:[%s3 + $0x3c] sm:$0xf]
  %v11768 = vld [vmem:[%s3 + $0x40] sm:$0xf]
  %v11769 = vld [vmem:[%s3 + $0x44] sm:$0xf]
  %v11770 = vld [vmem:[%s4] sm:$0x1]
  %v11772 = vlaneseq
  %v11773 = vshrl.u32 %v11772, 7
  %v11774 = vsub.s32 0, %v11773
  %v11775 = vrot.slane %v11770, %v11774
  %v11795 = vunpack.c.l.b16 %v11752
  %v11796 = vunpack.c.l.b16 %v11753
  %v11797 = vunpack.c.l.b16 %v11754
  %v11798 = vunpack.c.l.b16 %v11755
  %v11799 = vunpack.c.l.b16 %v11756
  %v11800 = vunpack.c.l.b16 %v11757
  %v11801 = vunpack.c.l.b16 %v11758
  %v11802 = vunpack.c.l.b16 %v11759
  %v11803 = vunpack.c.l.b16 %v11760
  %v11804 = vunpack.c.l.b16 %v11761
  %v11805 = vunpack.c.l.b16 %v11762
  %v11806 = vunpack.c.l.b16 %v11763
  %v11807 = vunpack.c.l.b16 %v11764
  %v11808 = vunpack.c.l.b16 %v11765
  %v11809 = vunpack.c.l.b16 %v11766
  %v11810 = vunpack.c.l.b16 %v11767
  %v11811 = vunpack.c.l.b16 %v11768
  %v11812 = vunpack.c.l.b16 %v11769
  %v11813 = vpack.c.b16 %v11796, %v11795
  %v11814 = vpack.c.b16 %v11798, %v11797
  %v11815 = vpack.c.b16 %v11800, %v11799
  %v11816 = vpack.c.b16 %v11802, %v11801
  %v11817 = vpack.c.b16 %v11804, %v11803
  %v11818 = vpack.c.b16 %v11806, %v11805
  %v11819 = vpack.c.b16 %v11808, %v11807
  %v11820 = vpack.c.b16 %v11810, %v11809
  %v11821 = vpack.c.b16 %v11812, %v11811
  %v11831 = vsel %vm1224, %v7208, 0
  %v11833 = vsel %vm1224, %v7209, 0
  %v11835 = vsel %vm1224, %v7210, 0
  %v11837 = vsel %vm1224, %v7211, 0
  %v11839 = vsel %vm1224, %v7212, 0
  %v11841 = vsel %vm1224, %v7213, 0
  %v11843 = vsel %vm1224, %v7214, 0
  %v11845 = vsel %vm1224, %v7215, 0
  %v11847 = vsel %vm1224, %v7216, 0
  %v11849 = vsel %vm1224, %v7217, 0
  %v11851 = vsel %vm1224, %v7218, 0
  %v11853 = vsel %vm1224, %v7219, 0
  %v11855 = vsel %vm1224, %v7220, 0
  %v11857 = vsel %vm1224, %v7221, 0
  %v11859 = vsel %vm1224, %v7222, 0
  %v11861 = vsel %vm1224, %v7223, 0
  %v11863 = vsel %vm1224, %v7224, 0
  %v11865 = vsel %vm1224, %v7225, 0
  %v11867 = vsel %vm1224, %v7226, 0
  %v11869 = vsel %vm1224, %v7227, 0
  %v11871 = vsel %vm1224, %v7228, 0
  %v11873 = vsel %vm1224, %v7229, 0
  %v11875 = vsel %vm1224, %v7230, 0
  %v11877 = vsel %vm1224, %v7231, 0
  %v11879 = vsel %vm1224, %v7232, 0
  %v11881 = vsel %vm1224, %v7233, 0
  %v11883 = vsel %vm1224, %v7234, 0
  %v11885 = vsel %vm1224, %v7235, 0
  %v11887 = vsel %vm1224, %v7236, 0
  %v11889 = vsel %vm1224, %v7237, 0
  %v11891 = vsel %vm1224, %v7238, 0
  %v11893 = vsel %vm1224, %v7239, 0
  %v11895 = vsel %vm1224, %v7240, 0
  %v11897 = vsel %vm1224, %v7241, 0
  %v11899 = vsel %vm1224, %v7242, 0
  %v11901 = vsel %vm1224, %v7243, 0
  %v11903 = vsel %vm1224, %v7244, 0
  %v11905 = vsel %vm1224, %v7245, 0
  %v11907 = vsel %vm1224, %v7246, 0
  %v11909 = vsel %vm1224, %v7247, 0
  %v11911 = vsel %vm1224, %v7248, 0
  %v11913 = vsel %vm1224, %v7249, 0
  %v11915 = vsel %vm1224, %v7250, 0
  %v11917 = vsel %vm1224, %v7251, 0
  %v11919 = vsel %vm1224, %v7252, 0
  %v11921 = vsel %vm1224, %v7253, 0
  %v11923 = vsel %vm1224, %v7254, 0
  %v11925 = vsel %vm1224, %v7255, 0
  %v11927 = vsel %vm1224, %v7256, 0
  %v11929 = vsel %vm1224, %v7257, 0
  %v11931 = vsel %vm1224, %v7258, 0
  %v11933 = vsel %vm1224, %v7259, 0
  %v11935 = vsel %vm1224, %v7260, 0
  %v11937 = vsel %vm1224, %v7261, 0
  %v11939 = vsel %vm1224, %v7262, 0
  %v11941 = vsel %vm1224, %v7263, 0
  %v11943 = vsel %vm1224, %v7264, 0
  %v11945 = vsel %vm1224, %v7265, 0
  %v11947 = vsel %vm1224, %v7266, 0
  %v11949 = vsel %vm1224, %v7267, 0
  %v11951 = vsel %vm1224, %v7268, 0
  %v11953 = vsel %vm1224, %v7269, 0
  %v11955 = vsel %vm1224, %v7270, 0
  %v11957 = vsel %vm1224, %v7271, 0
  %v11959 = vsel %vm1224, %v7272, 0
  %v11961 = vsel %vm1224, %v7273, 0
  %v11963 = vsel %vm1224, %v7274, 0
  %v11965 = vsel %vm1224, %v7275, 0
  %v11967 = vsel %vm1224, %v7276, 0
  %v11969 = vsel %vm1224, %v7277, 0
  %v11971 = vsel %vm1224, %v7278, 0
  %v11973 = vsel %vm1224, %v7279, 0
  %v11975 = vsel %vm1224, %v7280, 0
  %v11977 = vsel %vm1224, %v7281, 0
  %v11979 = vsel %vm1224, %v7282, 0
  %v11981 = vsel %vm1224, %v7283, 0
  %v11983 = vsel %vm1224, %v7284, 0
  %v11985 = vsel %vm1224, %v7285, 0
  %v11987 = vsel %vm1224, %v7286, 0
  %v11989 = vsel %vm1224, %v7287, 0
  %v11991 = vsel %vm1224, %v7288, 0
  %v11993 = vsel %vm1224, %v7289, 0
  %v11995 = vsel %vm1224, %v7290, 0
  %v11997 = vsel %vm1224, %v7291, 0
  %v11999 = vsel %vm1224, %v7292, 0
  %v12001 = vsel %vm1224, %v7293, 0
  %v12003 = vsel %vm1224, %v7294, 0
  %v12005 = vsel %vm1224, %v7295, 0
  %v12007 = vsel %vm1224, %v7296, 0
  %v12009 = vsel %vm1224, %v7297, 0
  %v12011 = vsel %vm1224, %v7298, 0
  %v12013 = vsel %vm1224, %v7299, 0
  %v12015 = vsel %vm1224, %v7300, 0
  %v12017 = vsel %vm1224, %v7301, 0
  %v12019 = vsel %vm1224, %v7302, 0
  %v12021 = vsel %vm1224, %v7303, 0
  %v12023 = vsel %vm1224, %v7304, 0
  %v12025 = vsel %vm1224, %v7305, 0
  %v12027 = vsel %vm1224, %v7306, 0
  %v12029 = vsel %vm1224, %v7307, 0
  %v12031 = vsel %vm1224, %v7308, 0
  %v12033 = vsel %vm1224, %v7309, 0
  %v12035 = vsel %vm1224, %v7310, 0
  %v12037 = vsel %vm1224, %v7311, 0
  %v12039 = vsel %vm1224, %v7312, 0
  %v12041 = vsel %vm1224, %v7313, 0
  %v12043 = vsel %vm1224, %v7314, 0
  %v12045 = vsel %vm1224, %v7315, 0
  %v12047 = vsel %vm1224, %v7316, 0
  %v12049 = vsel %vm1224, %v7317, 0
  %v12051 = vsel %vm1224, %v7318, 0
  %v12053 = vsel %vm1224, %v7319, 0
  %v12055 = vsel %vm1224, %v7320, 0
  %v12058 = vsel %vm1224, %v7321, 0
  %v12061 = vsel %vm1224, %v7322, 0
  %v12064 = vsel %vm1224, %v7323, 0
  %v12067 = vsel %vm1224, %v7324, 0
  %v12070 = vsel %vm1224, %v7325, 0
  %v12073 = vsel %vm1224, %v7326, 0
  %v12076 = vsel %vm1224, %v7327, 0
  %v12079 = vsel %vm1224, %v7328, 0
  %v12082 = vsel %vm1224, %v7329, 0
  %v12085 = vsel %vm1224, %v7330, 0
  %v12088 = vsel %vm1224, %v7331, 0
  %v12091 = vsel %vm1224, %v7332, 0
  %v12094 = vsel %vm1224, %v7333, 0
  %v12097 = vsel %vm1224, %v7334, 0
  %v12100 = vsel %vm1224, %v7335, 0
  %v12103 = vsel %vm1224, %v7336, 0
  %v12106 = vsel %vm1224, %v7337, 0
  %v12109 = vsel %vm1224, %v7338, 0
  %v12112 = vsel %vm1224, %v7339, 0
  %v12115 = vsel %vm1224, %v7340, 0
  %v12118 = vsel %vm1224, %v7341, 0
  %v12121 = vsel %vm1224, %v7342, 0
  %v12124 = vsel %vm1224, %v7343, 0
  %v12127 = vsel %vm1224, %v7344, 0
  %v12130 = vsel %vm1224, %v7345, 0
  %v12133 = vsel %vm1224, %v7346, 0
  %v12136 = vsel %vm1224, %v7347, 0
  %v12139 = vsel %vm1224, %v7348, 0
  %12141 = vmatprep.subr.bf16.mxu0 0
  %12142 = vmatpush1.bf16.msra.mxu0 %v11820
  %12143 = vmatprep.subr.bf16.mxu0 0
  %12144 = vmatpush1.bf16.msra.mxu0 %v11819
  %12145 = vmatprep.subr.bf16.mxu0 0
  %12146 = vmatpush1.bf16.msra.mxu0 %v11818
  %12147 = vmatprep.subr.bf16.mxu0 0
  %12148 = vmatpush1.bf16.msra.mxu0 %v11817
  %12149 = vmatprep.subr.bf16.mxu0 0
  %12150 = vmatpush1.bf16.msra.mxu0 %v11816
  %12151 = vmatprep.subr.bf16.mxu0 0
  %12152 = vmatpush1.bf16.msra.mxu0 %v11815
  %12153 = vmatprep.subr.bf16.mxu0 0
  %12154 = vmatpush1.bf16.msra.mxu0 %v11814
  %12155 = vmatprep.subr.bf16.mxu0 0
  %12156 = vmatpush1.bf16.msra.mxu0 %v11813
  %12157 = vmatprep.subr.bf16.mxu0 0
  %12158 = vmatpush2.bf16.msra.mxu0 0
  %12159 = vmatprep.subr.bf16.mxu0 0
  %12160 = vmatpush2.bf16.msra.mxu0 0
  %12161 = vmatprep.subr.bf16.mxu0 0
  %12162 = vmatpush2.bf16.msra.mxu0 0
  %12163 = vmatprep.subr.bf16.mxu0 0
  %12164 = vmatpush2.bf16.msra.mxu0 0
  %12165 = vmatprep.subr.bf16.mxu0 0
  %12166 = vmatpush2.bf16.msra.mxu0 0
  %12167 = vmatprep.subr.bf16.mxu0 0
  %12168 = vmatpush2.bf16.msra.mxu0 0
  %12169 = vmatprep.subr.bf16.mxu0 0
  %12170 = vmatpush2.bf16.msra.mxu0 0
  %12171 = vmatprep.subr.bf16.mxu0 0
  %12172 = vmatpush2.bf16.msra.mxu0 %v11821
  %12173 = vmatprep.mubr.bf16.mxu0 %v11831
  %12174 = vmatmul.mubr.bf16.gmra.mxu0 %v11330
  %v12175 = vpop.f32.mrf.mxu0
  %v12176 = vadd.f32 %v11775, %v12175
  %v12177 = vpop.f32.mrf.mxu0
  %v12178 = vpop.f32.mrf.mxu0
  %v12179 = vadd.f32 %v11775, %v12178
  %v12180 = vpop.f32.mrf.mxu0
  %12181 = vmatprep.mubr.bf16.mxu0 %v11833
  %12182 = vmatmul.mubr.bf16.gmra.mxu0 %v11333
  %v12183 = vpop.f32.mrf.mxu0
  %v12184 = vadd.f32 %v11775, %v12183
  %v12185 = vpop.f32.mrf.mxu0
  %v12186 = vpop.f32.mrf.mxu0
  %v12187 = vadd.f32 %v11775, %v12186
  %v12188 = vpop.f32.mrf.mxu0
  %12189 = vmatprep.mubr.bf16.mxu0 %v11835
  %12190 = vmatmul.mubr.bf16.gmra.mxu0 %v11336
  %v12191 = vpop.f32.mrf.mxu0
  %v12192 = vadd.f32 %v11775, %v12191
  %v12193 = vpop.f32.mrf.mxu0
  %v12194 = vpop.f32.mrf.mxu0
  %v12195 = vadd.f32 %v11775, %v12194
  %v12196 = vpop.f32.mrf.mxu0
  %12197 = vmatprep.mubr.bf16.mxu0 %v11837
  %12198 = vmatmul.mubr.bf16.gmra.mxu0 %v11339
  %v12199 = vpop.f32.mrf.mxu0
  %v12200 = vadd.f32 %v11775, %v12199
  %v12201 = vpop.f32.mrf.mxu0
  %v12202 = vpop.f32.mrf.mxu0
  %v12203 = vadd.f32 %v11775, %v12202
  %v12204 = vpop.f32.mrf.mxu0
  %12205 = vmatprep.mubr.bf16.mxu0 %v11839
  %12206 = vmatmul.mubr.bf16.gmra.mxu0 %v11342
  %v12207 = vpop.f32.mrf.mxu0
  %v12208 = vadd.f32 %v11775, %v12207
  %v12209 = vpop.f32.mrf.mxu0
  %v12210 = vpop.f32.mrf.mxu0
  %v12211 = vadd.f32 %v11775, %v12210
  %v12212 = vpop.f32.mrf.mxu0
  %12213 = vmatprep.mubr.bf16.mxu0 %v11841
  %12214 = vmatmul.mubr.bf16.gmra.mxu0 %v11345
  %v12215 = vpop.f32.mrf.mxu0
  %v12216 = vadd.f32 %v11775, %v12215
  %v12217 = vpop.f32.mrf.mxu0
  %v12218 = vpop.f32.mrf.mxu0
  %v12219 = vadd.f32 %v11775, %v12218
  %v12220 = vpop.f32.mrf.mxu0
  %12221 = vmatprep.mubr.bf16.mxu0 %v11843
  %12222 = vmatmul.mubr.bf16.gmra.mxu0 %v11348
  %v12223 = vpop.f32.mrf.mxu0
  %v12224 = vadd.f32 %v11775, %v12223
  %v12225 = vpop.f32.mrf.mxu0
  %v12226 = vpop.f32.mrf.mxu0
  %v12227 = vadd.f32 %v11775, %v12226
  %v12228 = vpop.f32.mrf.mxu0
  %12229 = vmatprep.mubr.bf16.mxu0 %v11845
  %12230 = vmatmul.mubr.bf16.gmra.mxu0 %v11351
  %v12231 = vpop.f32.mrf.mxu0
  %v12232 = vadd.f32 %v11775, %v12231
  %v12233 = vpop.f32.mrf.mxu0
  %v12234 = vpop.f32.mrf.mxu0
  %v12235 = vadd.f32 %v11775, %v12234
  %v12236 = vpop.f32.mrf.mxu0
  %12237 = vmatprep.mubr.bf16.mxu0 %v11847
  %12238 = vmatmul.mubr.bf16.gmra.mxu0 %v11354
  %v12239 = vpop.f32.mrf.mxu0
  %v12240 = vadd.f32 %v11775, %v12239
  %v12241 = vpop.f32.mrf.mxu0
  %v12242 = vpop.f32.mrf.mxu0
  %v12243 = vadd.f32 %v11775, %v12242
  %v12244 = vpop.f32.mrf.mxu0
  %12245 = vmatprep.mubr.bf16.mxu0 %v11849
  %12246 = vmatmul.mubr.bf16.gmra.mxu0 %v11357
  %v12247 = vpop.f32.mrf.mxu0
  %v12248 = vadd.f32 %v11775, %v12247
  %v12249 = vpop.f32.mrf.mxu0
  %v12250 = vpop.f32.mrf.mxu0
  %v12251 = vadd.f32 %v11775, %v12250
  %v12252 = vpop.f32.mrf.mxu0
  %12253 = vmatprep.mubr.bf16.mxu0 %v11851
  %12254 = vmatmul.mubr.bf16.gmra.mxu0 %v11360
  %v12255 = vpop.f32.mrf.mxu0
  %v12256 = vpop.f32.mrf.mxu0
  %v12257 = vpop.f32.mrf.mxu0
  %v12258 = vpop.f32.mrf.mxu0
  %12259 = vmatprep.mubr.bf16.mxu0 %v11853
  %12260 = vmatmul.mubr.bf16.gmra.mxu0 %v11363
  %v12261 = vpop.f32.mrf.mxu0
  %v12262 = vpop.f32.mrf.mxu0
  %v12263 = vpop.f32.mrf.mxu0
  %v12264 = vpop.f32.mrf.mxu0
  %12265 = vmatprep.mubr.bf16.mxu0 %v11855
  %12266 = vmatmul.mubr.bf16.gmra.mxu0 %v11366
  %v12267 = vpop.f32.mrf.mxu0
  %v12268 = vpop.f32.mrf.mxu0
  %v12269 = vpop.f32.mrf.mxu0
  %v12270 = vpop.f32.mrf.mxu0
  %12271 = vmatprep.mubr.bf16.mxu0 %v11857
  %12272 = vmatmul.mubr.bf16.gmra.mxu0 %v11369
  %v12273 = vpop.f32.mrf.mxu0
  %v12274 = vadd.f32 %v11775, %v12273
  %v12275 = vpop.f32.mrf.mxu0
  %v12276 = vpop.f32.mrf.mxu0
  %v12277 = vadd.f32 %v11775, %v12276
  %v12278 = vpop.f32.mrf.mxu0
  %12279 = vmatprep.mubr.bf16.mxu0 %v11859
  %12280 = vmatmul.mubr.bf16.gmra.mxu0 %v11372
  %v12281 = vpop.f32.mrf.mxu0
  %v12282 = vadd.f32 %v11775, %v12281
  %v12283 = vpop.f32.mrf.mxu0
  %v12284 = vpop.f32.mrf.mxu0
  %v12285 = vadd.f32 %v11775, %v12284
  %v12286 = vpop.f32.mrf.mxu0
  %12287 = vmatprep.mubr.bf16.mxu0 %v11861
  %12288 = vmatmul.mubr.bf16.gmra.mxu0 %v11375
  %v12289 = vpop.f32.mrf.mxu0
  %v12290 = vadd.f32 %v11775, %v12289
  %v12291 = vpop.f32.mrf.mxu0
  %v12292 = vpop.f32.mrf.mxu0
  %v12293 = vadd.f32 %v11775, %v12292
  %v12294 = vpop.f32.mrf.mxu0
  %12295 = vmatprep.mubr.bf16.mxu0 %v11863
  %12296 = vmatmul.mubr.bf16.gmra.mxu0 %v11378
  %v12297 = vpop.f32.mrf.mxu0
  %v12298 = vadd.f32 %v11775, %v12297
  %v12299 = vpop.f32.mrf.mxu0
  %v12300 = vpop.f32.mrf.mxu0
  %v12301 = vadd.f32 %v11775, %v12300
  %v12302 = vpop.f32.mrf.mxu0
  %12303 = vmatprep.mubr.bf16.mxu0 %v11865
  %12304 = vmatmul.mubr.bf16.gmra.mxu0 %v11381
  %v12305 = vpop.f32.mrf.mxu0
  %v12306 = vadd.f32 %v11775, %v12305
  %v12307 = vpop.f32.mrf.mxu0
  %v12308 = vpop.f32.mrf.mxu0
  %v12309 = vadd.f32 %v11775, %v12308
  %v12310 = vpop.f32.mrf.mxu0
  %12311 = vmatprep.mubr.bf16.mxu0 %v11867
  %12312 = vmatmul.mubr.bf16.gmra.mxu0 %v11384
  %v12313 = vpop.f32.mrf.mxu0
  %v12314 = vadd.f32 %v11775, %v12313
  %v12315 = vpop.f32.mrf.mxu0
  %v12316 = vpop.f32.mrf.mxu0
  %v12317 = vadd.f32 %v11775, %v12316
  %v12318 = vpop.f32.mrf.mxu0
  %12319 = vmatprep.mubr.bf16.mxu0 %v11869
  %12320 = vmatmul.mubr.bf16.gmra.mxu0 %v11387
  %v12321 = vpop.f32.mrf.mxu0
  %v12322 = vadd.f32 %v11775, %v12321
  %v12323 = vpop.f32.mrf.mxu0
  %v12324 = vpop.f32.mrf.mxu0
  %v12325 = vadd.f32 %v11775, %v12324
  %v12326 = vpop.f32.mrf.mxu0
  %12327 = vmatprep.mubr.bf16.mxu0 %v11871
  %12328 = vmatmul.mubr.bf16.gmra.mxu0 %v11390
  %v12329 = vpop.f32.mrf.mxu0
  %v12330 = vadd.f32 %v11775, %v12329
  %v12331 = vpop.f32.mrf.mxu0
  %v12332 = vpop.f32.mrf.mxu0
  %v12333 = vadd.f32 %v11775, %v12332
  %v12334 = vpop.f32.mrf.mxu0
  %12335 = vmatprep.mubr.bf16.mxu0 %v11873
  %12336 = vmatmul.mubr.bf16.gmra.mxu0 %v11393
  %v12337 = vpop.f32.mrf.mxu0
  %v12338 = vadd.f32 %v11775, %v12337
  %v12339 = vpop.f32.mrf.mxu0
  %v12340 = vpop.f32.mrf.mxu0
  %v12341 = vadd.f32 %v11775, %v12340
  %v12342 = vpop.f32.mrf.mxu0
  %12343 = vmatprep.mubr.bf16.mxu0 %v11875
  %12344 = vmatmul.mubr.bf16.gmra.mxu0 %v11396
  %v12345 = vpop.f32.mrf.mxu0
  %v12346 = vadd.f32 %v11775, %v12345
  %v12347 = vpop.f32.mrf.mxu0
  %v12348 = vpop.f32.mrf.mxu0
  %v12349 = vadd.f32 %v11775, %v12348
  %v12350 = vpop.f32.mrf.mxu0
  %12351 = vmatprep.mubr.bf16.mxu0 %v11877
  %12352 = vmatmul.mubr.bf16.gmra.mxu0 %v11399
  %v12353 = vpop.f32.mrf.mxu0
  %v12354 = vpop.f32.mrf.mxu0
  %v12355 = vpop.f32.mrf.mxu0
  %v12356 = vpop.f32.mrf.mxu0
  %12357 = vmatprep.mubr.bf16.mxu0 %v11879
  %12358 = vmatmul.mubr.bf16.gmra.mxu0 %v11402
  %v12359 = vpop.f32.mrf.mxu0
  %v12360 = vpop.f32.mrf.mxu0
  %v12361 = vpop.f32.mrf.mxu0
  %v12362 = vpop.f32.mrf.mxu0
  %12363 = vmatprep.mubr.bf16.mxu0 %v11881
  %12364 = vmatmul.mubr.bf16.gmra.mxu0 %v11405
  %v12365 = vpop.f32.mrf.mxu0
  %v12366 = vpop.f32.mrf.mxu0
  %v12367 = vpop.f32.mrf.mxu0
  %v12368 = vpop.f32.mrf.mxu0
  %12369 = vmatprep.mubr.bf16.mxu0 %v11883
  %12370 = vmatmul.mubr.bf16.gmra.mxu0 %v11408
  %v12371 = vpop.f32.mrf.mxu0
  %v12372 = vadd.f32 %v11775, %v12371
  %v12373 = vpop.f32.mrf.mxu0
  %v12374 = vpop.f32.mrf.mxu0
  %v12375 = vadd.f32 %v11775, %v12374
  %v12376 = vpop.f32.mrf.mxu0
  %12377 = vmatprep.mubr.bf16.mxu0 %v11885
  %12378 = vmatmul.mubr.bf16.gmra.mxu0 %v11411
  %v12379 = vpop.f32.mrf.mxu0
  %v12380 = vadd.f32 %v11775, %v12379
  %v12381 = vpop.f32.mrf.mxu0
  %v12382 = vpop.f32.mrf.mxu0
  %v12383 = vadd.f32 %v11775, %v12382
  %v12384 = vpop.f32.mrf.mxu0
  %12385 = vmatprep.mubr.bf16.mxu0 %v11887
  %12386 = vmatmul.mubr.bf16.gmra.mxu0 %v11414
  %v12387 = vpop.f32.mrf.mxu0
  %v12388 = vadd.f32 %v11775, %v12387
  %v12389 = vpop.f32.mrf.mxu0
  %v12390 = vpop.f32.mrf.mxu0
  %v12391 = vadd.f32 %v11775, %v12390
  %v12392 = vpop.f32.mrf.mxu0
  %12393 = vmatprep.mubr.bf16.mxu0 %v11889
  %12394 = vmatmul.mubr.bf16.gmra.mxu0 %v11417
  %v12395 = vpop.f32.mrf.mxu0
  %v12396 = vadd.f32 %v11775, %v12395
  %v12397 = vpop.f32.mrf.mxu0
  %v12398 = vpop.f32.mrf.mxu0
  %v12399 = vadd.f32 %v11775, %v12398
  %v12400 = vpop.f32.mrf.mxu0
  %12401 = vmatprep.mubr.bf16.mxu0 %v11891
  %12402 = vmatmul.mubr.bf16.gmra.mxu0 %v11420
  %v12403 = vpop.f32.mrf.mxu0
  %v12404 = vadd.f32 %v11775, %v12403
  %v12405 = vpop.f32.mrf.mxu0
  %v12406 = vpop.f32.mrf.mxu0
  %v12407 = vadd.f32 %v11775, %v12406
  %v12408 = vpop.f32.mrf.mxu0
  %12409 = vmatprep.mubr.bf16.mxu0 %v11893
  %12410 = vmatmul.mubr.bf16.gmra.mxu0 %v11423
  %v12411 = vpop.f32.mrf.mxu0
  %v12412 = vadd.f32 %v11775, %v12411
  %v12413 = vpop.f32.mrf.mxu0
  %v12414 = vpop.f32.mrf.mxu0
  %v12415 = vadd.f32 %v11775, %v12414
  %v12416 = vpop.f32.mrf.mxu0
  %12417 = vmatprep.mubr.bf16.mxu0 %v11895
  %12418 = vmatmul.mubr.bf16.gmra.mxu0 %v11426
  %v12419 = vpop.f32.mrf.mxu0
  %v12420 = vadd.f32 %v11775, %v12419
  %v12421 = vpop.f32.mrf.mxu0
  %v12422 = vpop.f32.mrf.mxu0
  %v12423 = vadd.f32 %v11775, %v12422
  %v12424 = vpop.f32.mrf.mxu0
  %12425 = vmatprep.mubr.bf16.mxu0 %v11897
  %12426 = vmatmul.mubr.bf16.gmra.mxu0 %v11429
  %v12427 = vpop.f32.mrf.mxu0
  %v12428 = vadd.f32 %v11775, %v12427
  %v12429 = vpop.f32.mrf.mxu0
  %v12430 = vpop.f32.mrf.mxu0
  %v12431 = vadd.f32 %v11775, %v12430
  %v12432 = vpop.f32.mrf.mxu0
  %12433 = vmatprep.mubr.bf16.mxu0 %v11899
  %12434 = vmatmul.mubr.bf16.gmra.mxu0 %v11432
  %v12435 = vpop.f32.mrf.mxu0
  %v12436 = vadd.f32 %v11775, %v12435
  %v12437 = vpop.f32.mrf.mxu0
  %v12438 = vpop.f32.mrf.mxu0
  %v12439 = vadd.f32 %v11775, %v12438
  %v12440 = vpop.f32.mrf.mxu0
  %12441 = vmatprep.mubr.bf16.mxu0 %v11901
  %12442 = vmatmul.mubr.bf16.gmra.mxu0 %v11435
  %v12443 = vpop.f32.mrf.mxu0
  %v12444 = vadd.f32 %v11775, %v12443
  %v12445 = vpop.f32.mrf.mxu0
  %v12446 = vpop.f32.mrf.mxu0
  %v12447 = vadd.f32 %v11775, %v12446
  %v12448 = vpop.f32.mrf.mxu0
  %12449 = vmatprep.mubr.bf16.mxu0 %v11903
  %12450 = vmatmul.mubr.bf16.gmra.mxu0 %v11438
  %v12451 = vpop.f32.mrf.mxu0
  %v12452 = vpop.f32.mrf.mxu0
  %v12453 = vpop.f32.mrf.mxu0
  %v12454 = vpop.f32.mrf.mxu0
  %12455 = vmatprep.mubr.bf16.mxu0 %v11905
  %12456 = vmatmul.mubr.bf16.gmra.mxu0 %v11441
  %v12457 = vpop.f32.mrf.mxu0
  %v12458 = vpop.f32.mrf.mxu0
  %v12459 = vpop.f32.mrf.mxu0
  %v12460 = vpop.f32.mrf.mxu0
  %12461 = vmatprep.mubr.bf16.mxu0 %v11907
  %12462 = vmatmul.mubr.bf16.gmra.mxu0 %v11444
  %v12463 = vpop.f32.mrf.mxu0
  %v12464 = vpop.f32.mrf.mxu0
  %v12465 = vpop.f32.mrf.mxu0
  %v12466 = vpop.f32.mrf.mxu0
  %12467 = vmatprep.mubr.bf16.mxu0 %v11909
  %12468 = vmatmul.mubr.bf16.gmra.mxu0 %v11447
  %v12469 = vpop.f32.mrf.mxu0
  %v12470 = vadd.f32 %v11775, %v12469
  %v12471 = vpop.f32.mrf.mxu0
  %v12472 = vpop.f32.mrf.mxu0
  %v12473 = vadd.f32 %v11775, %v12472
  %v12474 = vpop.f32.mrf.mxu0
  %12475 = vmatprep.mubr.bf16.mxu0 %v11911
  %12476 = vmatmul.mubr.bf16.gmra.mxu0 %v11450
  %v12477 = vpop.f32.mrf.mxu0
  %v12478 = vadd.f32 %v11775, %v12477
  %v12479 = vpop.f32.mrf.mxu0
  %v12480 = vpop.f32.mrf.mxu0
  %v12481 = vadd.f32 %v11775, %v12480
  %v12482 = vpop.f32.mrf.mxu0
  %12483 = vmatprep.mubr.bf16.mxu0 %v11913
  %12484 = vmatmul.mubr.bf16.gmra.mxu0 %v11453
  %v12485 = vpop.f32.mrf.mxu0
  %v12486 = vadd.f32 %v11775, %v12485
  %v12487 = vpop.f32.mrf.mxu0
  %v12488 = vpop.f32.mrf.mxu0
  %v12489 = vadd.f32 %v11775, %v12488
  %v12490 = vpop.f32.mrf.mxu0
  %12491 = vmatprep.mubr.bf16.mxu0 %v11915
  %12492 = vmatmul.mubr.bf16.gmra.mxu0 %v11456
  %v12493 = vpop.f32.mrf.mxu0
  %v12494 = vadd.f32 %v11775, %v12493
  %v12495 = vpop.f32.mrf.mxu0
  %v12496 = vpop.f32.mrf.mxu0
  %v12497 = vadd.f32 %v11775, %v12496
  %v12498 = vpop.f32.mrf.mxu0
  %12499 = vmatprep.mubr.bf16.mxu0 %v11917
  %12500 = vmatmul.mubr.bf16.gmra.mxu0 %v11459
  %v12501 = vpop.f32.mrf.mxu0
  %v12502 = vadd.f32 %v11775, %v12501
  %v12503 = vpop.f32.mrf.mxu0
  %v12504 = vpop.f32.mrf.mxu0
  %v12505 = vadd.f32 %v11775, %v12504
  %v12506 = vpop.f32.mrf.mxu0
  %12507 = vmatprep.mubr.bf16.mxu0 %v11919
  %12508 = vmatmul.mubr.bf16.gmra.mxu0 %v11462
  %v12509 = vpop.f32.mrf.mxu0
  %v12510 = vadd.f32 %v11775, %v12509
  %v12511 = vpop.f32.mrf.mxu0
  %v12512 = vpop.f32.mrf.mxu0
  %v12513 = vadd.f32 %v11775, %v12512
  %v12514 = vpop.f32.mrf.mxu0
  %12515 = vmatprep.mubr.bf16.mxu0 %v11921
  %12516 = vmatmul.mubr.bf16.gmra.mxu0 %v11465
  %v12517 = vpop.f32.mrf.mxu0
  %v12518 = vadd.f32 %v11775, %v12517
  %v12519 = vpop.f32.mrf.mxu0
  %v12520 = vpop.f32.mrf.mxu0
  %v12521 = vadd.f32 %v11775, %v12520
  %v12522 = vpop.f32.mrf.mxu0
  %12523 = vmatprep.mubr.bf16.mxu0 %v11923
  %12524 = vmatmul.mubr.bf16.gmra.mxu0 %v11468
  %v12525 = vpop.f32.mrf.mxu0
  %v12526 = vadd.f32 %v11775, %v12525
  %v12527 = vpop.f32.mrf.mxu0
  %v12528 = vpop.f32.mrf.mxu0
  %v12529 = vadd.f32 %v11775, %v12528
  %v12530 = vpop.f32.mrf.mxu0
  %12531 = vmatprep.mubr.bf16.mxu0 %v11925
  %12532 = vmatmul.mubr.bf16.gmra.mxu0 %v11471
  %v12533 = vpop.f32.mrf.mxu0
  %v12534 = vadd.f32 %v11775, %v12533
  %v12535 = vpop.f32.mrf.mxu0
  %v12536 = vpop.f32.mrf.mxu0
  %v12537 = vadd.f32 %v11775, %v12536
  %v12538 = vpop.f32.mrf.mxu0
  %12539 = vmatprep.mubr.bf16.mxu0 %v11927
  %12540 = vmatmul.mubr.bf16.gmra.mxu0 %v11474
  %v12541 = vpop.f32.mrf.mxu0
  %v12542 = vadd.f32 %v11775, %v12541
  %v12543 = vpop.f32.mrf.mxu0
  %v12544 = vpop.f32.mrf.mxu0
  %v12545 = vadd.f32 %v11775, %v12544
  %v12546 = vpop.f32.mrf.mxu0
  %12547 = vmatprep.mubr.bf16.mxu0 %v11929
  %12548 = vmatmul.mubr.bf16.gmra.mxu0 %v11477
  %v12549 = vpop.f32.mrf.mxu0
  %v12550 = vpop.f32.mrf.mxu0
  %v12551 = vpop.f32.mrf.mxu0
  %v12552 = vpop.f32.mrf.mxu0
  %12553 = vmatprep.mubr.bf16.mxu0 %v11931
  %12554 = vmatmul.mubr.bf16.gmra.mxu0 %v11480
  %v12555 = vpop.f32.mrf.mxu0
  %v12556 = vpop.f32.mrf.mxu0
  %v12557 = vpop.f32.mrf.mxu0
  %v12558 = vpop.f32.mrf.mxu0
  %12559 = vmatprep.mubr.bf16.mxu0 %v11933
  %12560 = vmatmul.mubr.bf16.gmra.mxu0 %v11483
  %v12561 = vpop.f32.mrf.mxu0
  %v12562 = vpop.f32.mrf.mxu0
  %v12563 = vpop.f32.mrf.mxu0
  %v12564 = vpop.f32.mrf.mxu0
  %12565 = vmatprep.mubr.bf16.mxu0 %v11935
  %12566 = vmatmul.mubr.bf16.gmra.mxu0 %v11486
  %v12567 = vpop.f32.mrf.mxu0
  %v12568 = vadd.f32 %v11775, %v12567
  %v12569 = vpop.f32.mrf.mxu0
  %v12570 = vpop.f32.mrf.mxu0
  %v12571 = vadd.f32 %v11775, %v12570
  %v12572 = vpop.f32.mrf.mxu0
  %12573 = vmatprep.mubr.bf16.mxu0 %v11937
  %12574 = vmatmul.mubr.bf16.gmra.mxu0 %v11489
  %v12575 = vpop.f32.mrf.mxu0
  %v12576 = vadd.f32 %v11775, %v12575
  %v12577 = vpop.f32.mrf.mxu0
  %v12578 = vpop.f32.mrf.mxu0
  %v12579 = vadd.f32 %v11775, %v12578
  %v12580 = vpop.f32.mrf.mxu0
  %12581 = vmatprep.mubr.bf16.mxu0 %v11939
  %12582 = vmatmul.mubr.bf16.gmra.mxu0 %v11492
  %v12583 = vpop.f32.mrf.mxu0
  %v12584 = vadd.f32 %v11775, %v12583
  %v12585 = vpop.f32.mrf.mxu0
  %v12586 = vpop.f32.mrf.mxu0
  %v12587 = vadd.f32 %v11775, %v12586
  %v12588 = vpop.f32.mrf.mxu0
  %12589 = vmatprep.mubr.bf16.mxu0 %v11941
  %12590 = vmatmul.mubr.bf16.gmra.mxu0 %v11495
  %v12591 = vpop.f32.mrf.mxu0
  %v12592 = vadd.f32 %v11775, %v12591
  %v12593 = vpop.f32.mrf.mxu0
  %v12594 = vpop.f32.mrf.mxu0
  %v12595 = vadd.f32 %v11775, %v12594
  %v12596 = vpop.f32.mrf.mxu0
  %12597 = vmatprep.mubr.bf16.mxu0 %v11943
  %12598 = vmatmul.mubr.bf16.gmra.mxu0 %v11498
  %v12599 = vpop.f32.mrf.mxu0
  %v12600 = vadd.f32 %v11775, %v12599
  %v12601 = vpop.f32.mrf.mxu0
  %v12602 = vpop.f32.mrf.mxu0
  %v12603 = vadd.f32 %v11775, %v12602
  %v12604 = vpop.f32.mrf.mxu0
  %12605 = vmatprep.mubr.bf16.mxu0 %v11945
  %12606 = vmatmul.mubr.bf16.gmra.mxu0 %v11501
  %v12607 = vpop.f32.mrf.mxu0
  %v12608 = vadd.f32 %v11775, %v12607
  %v12609 = vpop.f32.mrf.mxu0
  %v12610 = vpop.f32.mrf.mxu0
  %v12611 = vadd.f32 %v11775, %v12610
  %v12612 = vpop.f32.mrf.mxu0
  %12613 = vmatprep.mubr.bf16.mxu0 %v11947
  %12614 = vmatmul.mubr.bf16.gmra.mxu0 %v11504
  %v12615 = vpop.f32.mrf.mxu0
  %v12616 = vadd.f32 %v11775, %v12615
  %v12617 = vpop.f32.mrf.mxu0
  %v12618 = vpop.f32.mrf.mxu0
  %v12619 = vadd.f32 %v11775, %v12618
  %v12620 = vpop.f32.mrf.mxu0
  %12621 = vmatprep.mubr.bf16.mxu0 %v11949
  %12622 = vmatmul.mubr.bf16.gmra.mxu0 %v11507
  %v12623 = vpop.f32.mrf.mxu0
  %v12624 = vadd.f32 %v11775, %v12623
  %v12625 = vpop.f32.mrf.mxu0
  %v12626 = vpop.f32.mrf.mxu0
  %v12627 = vadd.f32 %v11775, %v12626
  %v12628 = vpop.f32.mrf.mxu0
  %12629 = vmatprep.mubr.bf16.mxu0 %v11951
  %12630 = vmatmul.mubr.bf16.gmra.mxu0 %v11510
  %v12631 = vpop.f32.mrf.mxu0
  %v12632 = vadd.f32 %v11775, %v12631
  %v12633 = vpop.f32.mrf.mxu0
  %v12634 = vpop.f32.mrf.mxu0
  %v12635 = vadd.f32 %v11775, %v12634
  %v12636 = vpop.f32.mrf.mxu0
  %12637 = vmatprep.mubr.bf16.mxu0 %v11953
  %12638 = vmatmul.mubr.bf16.gmra.mxu0 %v11513
  %v12639 = vpop.f32.mrf.mxu0
  %v12640 = vadd.f32 %v11775, %v12639
  %v12641 = vpop.f32.mrf.mxu0
  %v12642 = vpop.f32.mrf.mxu0
  %v12643 = vadd.f32 %v11775, %v12642
  %v12644 = vpop.f32.mrf.mxu0
  %12645 = vmatprep.mubr.bf16.mxu0 %v11955
  %12646 = vmatmul.mubr.bf16.gmra.mxu0 %v11516
  %v12647 = vpop.f32.mrf.mxu0
  %v12648 = vpop.f32.mrf.mxu0
  %v12649 = vpop.f32.mrf.mxu0
  %v12650 = vpop.f32.mrf.mxu0
  %12651 = vmatprep.mubr.bf16.mxu0 %v11957
  %12652 = vmatmul.mubr.bf16.gmra.mxu0 %v11519
  %v12653 = vpop.f32.mrf.mxu0
  %v12654 = vpop.f32.mrf.mxu0
  %v12655 = vpop.f32.mrf.mxu0
  %v12656 = vpop.f32.mrf.mxu0
  %12657 = vmatprep.mubr.bf16.mxu0 %v11959
  %12658 = vmatmul.mubr.bf16.gmra.mxu0 %v11522
  %v12659 = vpop.f32.mrf.mxu0
  %v12660 = vpop.f32.mrf.mxu0
  %v12661 = vpop.f32.mrf.mxu0
  %v12662 = vpop.f32.mrf.mxu0
  %12663 = vmatprep.mubr.bf16.mxu0 %v11961
  %12664 = vmatmul.mubr.bf16.gmra.mxu0 %v11525
  %v12665 = vpop.f32.mrf.mxu0
  %v12666 = vadd.f32 %v11775, %v12665
  %v12667 = vpop.f32.mrf.mxu0
  %v12668 = vpop.f32.mrf.mxu0
  %v12669 = vadd.f32 %v11775, %v12668
  %v12670 = vpop.f32.mrf.mxu0
  %12671 = vmatprep.mubr.bf16.mxu0 %v11963
  %12672 = vmatmul.mubr.bf16.gmra.mxu0 %v11528
  %v12673 = vpop.f32.mrf.mxu0
  %v12674 = vadd.f32 %v11775, %v12673
  %v12675 = vpop.f32.mrf.mxu0
  %v12676 = vpop.f32.mrf.mxu0
  %v12677 = vadd.f32 %v11775, %v12676
  %v12678 = vpop.f32.mrf.mxu0
  %12679 = vmatprep.mubr.bf16.mxu0 %v11965
  %12680 = vmatmul.mubr.bf16.gmra.mxu0 %v11531
  %v12681 = vpop.f32.mrf.mxu0
  %v12682 = vadd.f32 %v11775, %v12681
  %v12683 = vpop.f32.mrf.mxu0
  %v12684 = vpop.f32.mrf.mxu0
  %v12685 = vadd.f32 %v11775, %v12684
  %v12686 = vpop.f32.mrf.mxu0
  %12687 = vmatprep.mubr.bf16.mxu0 %v11967
  %12688 = vmatmul.mubr.bf16.gmra.mxu0 %v11534
  %v12689 = vpop.f32.mrf.mxu0
  %v12690 = vadd.f32 %v11775, %v12689
  %v12691 = vpop.f32.mrf.mxu0
  %v12692 = vpop.f32.mrf.mxu0
  %v12693 = vadd.f32 %v11775, %v12692
  %v12694 = vpop.f32.mrf.mxu0
  %12695 = vmatprep.mubr.bf16.mxu0 %v11969
  %12696 = vmatmul.mubr.bf16.gmra.mxu0 %v11537
  %v12697 = vpop.f32.mrf.mxu0
  %v12698 = vadd.f32 %v11775, %v12697
  %v12699 = vpop.f32.mrf.mxu0
  %v12700 = vpop.f32.mrf.mxu0
  %v12701 = vadd.f32 %v11775, %v12700
  %v12702 = vpop.f32.mrf.mxu0
  %12703 = vmatprep.mubr.bf16.mxu0 %v11971
  %12704 = vmatmul.mubr.bf16.gmra.mxu0 %v11540
  %v12705 = vpop.f32.mrf.mxu0
  %v12706 = vadd.f32 %v11775, %v12705
  %v12707 = vpop.f32.mrf.mxu0
  %v12708 = vpop.f32.mrf.mxu0
  %v12709 = vadd.f32 %v11775, %v12708
  %v12710 = vpop.f32.mrf.mxu0
  %12711 = vmatprep.mubr.bf16.mxu0 %v11973
  %12712 = vmatmul.mubr.bf16.gmra.mxu0 %v11543
  %v12713 = vpop.f32.mrf.mxu0
  %v12714 = vadd.f32 %v11775, %v12713
  %v12715 = vpop.f32.mrf.mxu0
  %v12716 = vpop.f32.mrf.mxu0
  %v12717 = vadd.f32 %v11775, %v12716
  %v12718 = vpop.f32.mrf.mxu0
  %12719 = vmatprep.mubr.bf16.mxu0 %v11975
  %12720 = vmatmul.mubr.bf16.gmra.mxu0 %v11546
  %v12721 = vpop.f32.mrf.mxu0
  %v12722 = vadd.f32 %v11775, %v12721
  %v12723 = vpop.f32.mrf.mxu0
  %v12724 = vpop.f32.mrf.mxu0
  %v12725 = vadd.f32 %v11775, %v12724
  %v12726 = vpop.f32.mrf.mxu0
  %12727 = vmatprep.mubr.bf16.mxu0 %v11977
  %12728 = vmatmul.mubr.bf16.gmra.mxu0 %v11549
  %v12729 = vpop.f32.mrf.mxu0
  %v12730 = vadd.f32 %v11775, %v12729
  %v12731 = vpop.f32.mrf.mxu0
  %v12732 = vpop.f32.mrf.mxu0
  %v12733 = vadd.f32 %v11775, %v12732
  %v12734 = vpop.f32.mrf.mxu0
  %12735 = vmatprep.mubr.bf16.mxu0 %v11979
  %12736 = vmatmul.mubr.bf16.gmra.mxu0 %v11552
  %v12737 = vpop.f32.mrf.mxu0
  %v12738 = vadd.f32 %v11775, %v12737
  %v12739 = vpop.f32.mrf.mxu0
  %v12740 = vpop.f32.mrf.mxu0
  %v12741 = vadd.f32 %v11775, %v12740
  %v12742 = vpop.f32.mrf.mxu0
  %12743 = vmatprep.mubr.bf16.mxu0 %v11981
  %12744 = vmatmul.mubr.bf16.gmra.mxu0 %v11555
  %v12745 = vpop.f32.mrf.mxu0
  %v12746 = vpop.f32.mrf.mxu0
  %v12747 = vpop.f32.mrf.mxu0
  %v12748 = vpop.f32.mrf.mxu0
  %12749 = vmatprep.mubr.bf16.mxu0 %v11983
  %12750 = vmatmul.mubr.bf16.gmra.mxu0 %v11558
  %v12751 = vpop.f32.mrf.mxu0
  %v12752 = vpop.f32.mrf.mxu0
  %v12753 = vpop.f32.mrf.mxu0
  %v12754 = vpop.f32.mrf.mxu0
  %12755 = vmatprep.mubr.bf16.mxu0 %v11985
  %12756 = vmatmul.mubr.bf16.gmra.mxu0 %v11561
  %v12757 = vpop.f32.mrf.mxu0
  %v12758 = vpop.f32.mrf.mxu0
  %v12759 = vpop.f32.mrf.mxu0
  %v12760 = vpop.f32.mrf.mxu0
  %12761 = vmatprep.mubr.bf16.mxu0 %v11987
  %12762 = vmatmul.mubr.bf16.gmra.mxu0 %v11564
  %v12763 = vpop.f32.mrf.mxu0
  %v12764 = vadd.f32 %v11775, %v12763
  %v12765 = vpop.f32.mrf.mxu0
  %v12766 = vpop.f32.mrf.mxu0
  %v12767 = vadd.f32 %v11775, %v12766
  %v12768 = vpop.f32.mrf.mxu0
  %12769 = vmatprep.mubr.bf16.mxu0 %v11989
  %12770 = vmatmul.mubr.bf16.gmra.mxu0 %v11567
  %v12771 = vpop.f32.mrf.mxu0
  %v12772 = vadd.f32 %v11775, %v12771
  %v12773 = vpop.f32.mrf.mxu0
  %v12774 = vpop.f32.mrf.mxu0
  %v12775 = vadd.f32 %v11775, %v12774
  %v12776 = vpop.f32.mrf.mxu0
  %12777 = vmatprep.mubr.bf16.mxu0 %v11991
  %12778 = vmatmul.mubr.bf16.gmra.mxu0 %v11570
  %v12779 = vpop.f32.mrf.mxu0
  %v12780 = vadd.f32 %v11775, %v12779
  %v12781 = vpop.f32.mrf.mxu0
  %v12782 = vpop.f32.mrf.mxu0
  %v12783 = vadd.f32 %v11775, %v12782
  %v12784 = vpop.f32.mrf.mxu0
  %12785 = vmatprep.mubr.bf16.mxu0 %v11993
  %12786 = vmatmul.mubr.bf16.gmra.mxu0 %v11573
  %v12787 = vpop.f32.mrf.mxu0
  %v12788 = vadd.f32 %v11775, %v12787
  %v12789 = vpop.f32.mrf.mxu0
  %v12790 = vpop.f32.mrf.mxu0
  %v12791 = vadd.f32 %v11775, %v12790
  %v12792 = vpop.f32.mrf.mxu0
  %12793 = vmatprep.mubr.bf16.mxu0 %v11995
  %12794 = vmatmul.mubr.bf16.gmra.mxu0 %v11576
  %v12795 = vpop.f32.mrf.mxu0
  %v12796 = vadd.f32 %v11775, %v12795
  %v12797 = vpop.f32.mrf.mxu0
  %v12798 = vpop.f32.mrf.mxu0
  %v12799 = vadd.f32 %v11775, %v12798
  %v12800 = vpop.f32.mrf.mxu0
  %12801 = vmatprep.mubr.bf16.mxu0 %v11997
  %12802 = vmatmul.mubr.bf16.gmra.mxu0 %v11579
  %v12803 = vpop.f32.mrf.mxu0
  %v12804 = vadd.f32 %v11775, %v12803
  %v12805 = vpop.f32.mrf.mxu0
  %v12806 = vpop.f32.mrf.mxu0
  %v12807 = vadd.f32 %v11775, %v12806
  %v12808 = vpop.f32.mrf.mxu0
  %12809 = vmatprep.mubr.bf16.mxu0 %v11999
  %12810 = vmatmul.mubr.bf16.gmra.mxu0 %v11582
  %v12811 = vpop.f32.mrf.mxu0
  %v12812 = vadd.f32 %v11775, %v12811
  %v12813 = vpop.f32.mrf.mxu0
  %v12814 = vpop.f32.mrf.mxu0
  %v12815 = vadd.f32 %v11775, %v12814
  %v12816 = vpop.f32.mrf.mxu0
  %12817 = vmatprep.mubr.bf16.mxu0 %v12001
  %12818 = vmatmul.mubr.bf16.gmra.mxu0 %v11585
  %v12819 = vpop.f32.mrf.mxu0
  %v12820 = vadd.f32 %v11775, %v12819
  %v12821 = vpop.f32.mrf.mxu0
  %v12822 = vpop.f32.mrf.mxu0
  %v12823 = vadd.f32 %v11775, %v12822
  %v12824 = vpop.f32.mrf.mxu0
  %12825 = vmatprep.mubr.bf16.mxu0 %v12003
  %12826 = vmatmul.mubr.bf16.gmra.mxu0 %v11588
  %v12827 = vpop.f32.mrf.mxu0
  %v12828 = vadd.f32 %v11775, %v12827
  %v12829 = vpop.f32.mrf.mxu0
  %v12830 = vpop.f32.mrf.mxu0
  %v12831 = vadd.f32 %v11775, %v12830
  %v12832 = vpop.f32.mrf.mxu0
  %12833 = vmatprep.mubr.bf16.mxu0 %v12005
  %12834 = vmatmul.mubr.bf16.gmra.mxu0 %v11591
  %v12835 = vpop.f32.mrf.mxu0
  %v12836 = vadd.f32 %v11775, %v12835
  %v12837 = vpop.f32.mrf.mxu0
  %v12838 = vpop.f32.mrf.mxu0
  %v12839 = vadd.f32 %v11775, %v12838
  %v12840 = vpop.f32.mrf.mxu0
  %12841 = vmatprep.mubr.bf16.mxu0 %v12007
  %12842 = vmatmul.mubr.bf16.gmra.mxu0 %v11594
  %v12843 = vpop.f32.mrf.mxu0
  %v12844 = vpop.f32.mrf.mxu0
  %v12845 = vpop.f32.mrf.mxu0
  %v12846 = vpop.f32.mrf.mxu0
  %12847 = vmatprep.mubr.bf16.mxu0 %v12009
  %12848 = vmatmul.mubr.bf16.gmra.mxu0 %v11597
  %v12849 = vpop.f32.mrf.mxu0
  %v12850 = vpop.f32.mrf.mxu0
  %v12851 = vpop.f32.mrf.mxu0
  %v12852 = vpop.f32.mrf.mxu0
  %12853 = vmatprep.mubr.bf16.mxu0 %v12011
  %12854 = vmatmul.mubr.bf16.gmra.mxu0 %v11600
  %v12855 = vpop.f32.mrf.mxu0
  %v12856 = vpop.f32.mrf.mxu0
  %v12857 = vpop.f32.mrf.mxu0
  %v12858 = vpop.f32.mrf.mxu0
  %12859 = vmatprep.mubr.bf16.mxu0 %v12013
  %12860 = vmatmul.mubr.bf16.gmra.mxu0 %v11603
  %v12861 = vpop.f32.mrf.mxu0
  %v12862 = vadd.f32 %v11775, %v12861
  %v12863 = vpop.f32.mrf.mxu0
  %v12864 = vpop.f32.mrf.mxu0
  %v12865 = vadd.f32 %v11775, %v12864
  %v12866 = vpop.f32.mrf.mxu0
  %12867 = vmatprep.mubr.bf16.mxu0 %v12015
  %12868 = vmatmul.mubr.bf16.gmra.mxu0 %v11606
  %v12869 = vpop.f32.mrf.mxu0
  %v12870 = vadd.f32 %v11775, %v12869
  %v12871 = vpop.f32.mrf.mxu0
  %v12872 = vpop.f32.mrf.mxu0
  %v12873 = vadd.f32 %v11775, %v12872
  %v12874 = vpop.f32.mrf.mxu0
  %12875 = vmatprep.mubr.bf16.mxu0 %v12017
  %12876 = vmatmul.mubr.bf16.gmra.mxu0 %v11609
  %v12877 = vpop.f32.mrf.mxu0
  %v12878 = vadd.f32 %v11775, %v12877
  %v12879 = vpop.f32.mrf.mxu0
  %v12880 = vpop.f32.mrf.mxu0
  %v12881 = vadd.f32 %v11775, %v12880
  %v12882 = vpop.f32.mrf.mxu0
  %12883 = vmatprep.mubr.bf16.mxu0 %v12019
  %12884 = vmatmul.mubr.bf16.gmra.mxu0 %v11612
  %v12885 = vpop.f32.mrf.mxu0
  %v12886 = vadd.f32 %v11775, %v12885
  %v12887 = vpop.f32.mrf.mxu0
  %v12888 = vpop.f32.mrf.mxu0
  %v12889 = vadd.f32 %v11775, %v12888
  %v12890 = vpop.f32.mrf.mxu0
  %12891 = vmatprep.mubr.bf16.mxu0 %v12021
  %12892 = vmatmul.mubr.bf16.gmra.mxu0 %v11615
  %v12893 = vpop.f32.mrf.mxu0
  %v12894 = vadd.f32 %v11775, %v12893
  %v12895 = vpop.f32.mrf.mxu0
  %v12896 = vpop.f32.mrf.mxu0
  %v12897 = vadd.f32 %v11775, %v12896
  %v12898 = vpop.f32.mrf.mxu0
  %12899 = vmatprep.mubr.bf16.mxu0 %v12023
  %12900 = vmatmul.mubr.bf16.gmra.mxu0 %v11618
  %v12901 = vpop.f32.mrf.mxu0
  %v12902 = vadd.f32 %v11775, %v12901
  %v12903 = vpop.f32.mrf.mxu0
  %v12904 = vpop.f32.mrf.mxu0
  %v12905 = vadd.f32 %v11775, %v12904
  %v12906 = vpop.f32.mrf.mxu0
  %12907 = vmatprep.mubr.bf16.mxu0 %v12025
  %12908 = vmatmul.mubr.bf16.gmra.mxu0 %v11621
  %v12909 = vpop.f32.mrf.mxu0
  %v12910 = vadd.f32 %v11775, %v12909
  %v12911 = vpop.f32.mrf.mxu0
  %v12912 = vpop.f32.mrf.mxu0
  %v12913 = vadd.f32 %v11775, %v12912
  %v12914 = vpop.f32.mrf.mxu0
  %12915 = vmatprep.mubr.bf16.mxu0 %v12027
  %12916 = vmatmul.mubr.bf16.gmra.mxu0 %v11624
  %v12917 = vpop.f32.mrf.mxu0
  %v12918 = vadd.f32 %v11775, %v12917
  %v12919 = vpop.f32.mrf.mxu0
  %v12920 = vpop.f32.mrf.mxu0
  %v12921 = vadd.f32 %v11775, %v12920
  %v12922 = vpop.f32.mrf.mxu0
  %12923 = vmatprep.mubr.bf16.mxu0 %v12029
  %12924 = vmatmul.mubr.bf16.gmra.mxu0 %v11627
  %v12925 = vpop.f32.mrf.mxu0
  %v12926 = vadd.f32 %v11775, %v12925
  %v12927 = vpop.f32.mrf.mxu0
  %v12928 = vpop.f32.mrf.mxu0
  %v12929 = vadd.f32 %v11775, %v12928
  %v12930 = vpop.f32.mrf.mxu0
  %12931 = vmatprep.mubr.bf16.mxu0 %v12031
  %12932 = vmatmul.mubr.bf16.gmra.mxu0 %v11630
  %v12933 = vpop.f32.mrf.mxu0
  %v12934 = vadd.f32 %v11775, %v12933
  %v12935 = vpop.f32.mrf.mxu0
  %v12936 = vpop.f32.mrf.mxu0
  %v12937 = vadd.f32 %v11775, %v12936
  %v12938 = vpop.f32.mrf.mxu0
  %12939 = vmatprep.mubr.bf16.mxu0 %v12033
  %12940 = vmatmul.mubr.bf16.gmra.mxu0 %v11633
  %v12941 = vpop.f32.mrf.mxu0
  %v12942 = vpop.f32.mrf.mxu0
  %v12943 = vpop.f32.mrf.mxu0
  %v12944 = vpop.f32.mrf.mxu0
  %12945 = vmatprep.mubr.bf16.mxu0 %v12035
  %12946 = vmatmul.mubr.bf16.gmra.mxu0 %v11636
  %v12947 = vpop.f32.mrf.mxu0
  %v12948 = vpop.f32.mrf.mxu0
  %v12949 = vpop.f32.mrf.mxu0
  %v12950 = vpop.f32.mrf.mxu0
  %12951 = vmatprep.mubr.bf16.mxu0 %v12037
  %12952 = vmatmul.mubr.bf16.gmra.mxu0 %v11639
  %v12953 = vpop.f32.mrf.mxu0
  %v12954 = vpop.f32.mrf.mxu0
  %v12955 = vpop.f32.mrf.mxu0
  %v12956 = vpop.f32.mrf.mxu0
  %12957 = vmatprep.mubr.bf16.mxu0 %v12039
  %12958 = vmatmul.mubr.bf16.gmra.mxu0 %v11642
  %v12959 = vpop.f32.mrf.mxu0
  %v12960 = vadd.f32 %v11775, %v12959
  %v12961 = vpop.f32.mrf.mxu0
  %v12962 = vpop.f32.mrf.mxu0
  %v12963 = vadd.f32 %v11775, %v12962
  %v12964 = vpop.f32.mrf.mxu0
  %12965 = vmatprep.mubr.bf16.mxu0 %v12041
  %12966 = vmatmul.mubr.bf16.gmra.mxu0 %v11645
  %v12967 = vpop.f32.mrf.mxu0
  %v12968 = vadd.f32 %v11775, %v12967
  %v12969 = vpop.f32.mrf.mxu0
  %v12970 = vpop.f32.mrf.mxu0
  %v12971 = vadd.f32 %v11775, %v12970
  %v12972 = vpop.f32.mrf.mxu0
  %12973 = vmatprep.mubr.bf16.mxu0 %v12043
  %12974 = vmatmul.mubr.bf16.gmra.mxu0 %v11648
  %v12975 = vpop.f32.mrf.mxu0
  %v12976 = vadd.f32 %v11775, %v12975
  %v12977 = vpop.f32.mrf.mxu0
  %v12978 = vpop.f32.mrf.mxu0
  %v12979 = vadd.f32 %v11775, %v12978
  %v12980 = vpop.f32.mrf.mxu0
  %12981 = vmatprep.mubr.bf16.mxu0 %v12045
  %12982 = vmatmul.mubr.bf16.gmra.mxu0 %v11651
  %v12983 = vpop.f32.mrf.mxu0
  %v12984 = vadd.f32 %v11775, %v12983
  %v12985 = vpop.f32.mrf.mxu0
  %v12986 = vpop.f32.mrf.mxu0
  %v12987 = vadd.f32 %v11775, %v12986
  %v12988 = vpop.f32.mrf.mxu0
  %12989 = vmatprep.mubr.bf16.mxu0 %v12047
  %12990 = vmatmul.mubr.bf16.gmra.mxu0 %v11654
  %v12991 = vpop.f32.mrf.mxu0
  %v12992 = vadd.f32 %v11775, %v12991
  %v12993 = vpop.f32.mrf.mxu0
  %v12994 = vpop.f32.mrf.mxu0
  %v12995 = vadd.f32 %v11775, %v12994
  %v12996 = vpop.f32.mrf.mxu0
  %12997 = vmatprep.mubr.bf16.mxu0 %v12049
  %12998 = vmatmul.mubr.bf16.gmra.mxu0 %v11657
  %v12999 = vpop.f32.mrf.mxu0
  %v13000 = vadd.f32 %v11775, %v12999
  %v13001 = vpop.f32.mrf.mxu0
  %v13002 = vpop.f32.mrf.mxu0
  %v13003 = vadd.f32 %v11775, %v13002
  %v13004 = vpop.f32.mrf.mxu0
  %13005 = vmatprep.mubr.bf16.mxu0 %v12051
  %13006 = vmatmul.mubr.bf16.gmra.mxu0 %v11660
  %v13007 = vpop.f32.mrf.mxu0
  %v13008 = vadd.f32 %v11775, %v13007
  %v13009 = vpop.f32.mrf.mxu0
  %v13010 = vpop.f32.mrf.mxu0
  %v13011 = vadd.f32 %v11775, %v13010
  %v13012 = vpop.f32.mrf.mxu0
  %13013 = vmatprep.mubr.bf16.mxu0 %v12053
  %13014 = vmatmul.mubr.bf16.gmra.mxu0 %v11663
  %v13015 = vpop.f32.mrf.mxu0
  %v13016 = vadd.f32 %v11775, %v13015
  %v13017 = vpop.f32.mrf.mxu0
  %v13018 = vpop.f32.mrf.mxu0
  %v13019 = vadd.f32 %v11775, %v13018
  %v13020 = vpop.f32.mrf.mxu0
  %13021 = vmatprep.mubr.bf16.mxu0 %v12055
  %13022 = vmatmul.mubr.bf16.gmra.mxu0 %v11666
  %v13023 = vpop.f32.mrf.mxu0
  %v13024 = vadd.f32 %v11775, %v13023
  %v13025 = vpop.f32.mrf.mxu0
  %v13026 = vpop.f32.mrf.mxu0
  %v13027 = vadd.f32 %v11775, %v13026
  %v13028 = vpop.f32.mrf.mxu0
  %13029 = vmatprep.mubr.bf16.mxu0 %v12058
  %13030 = vmatmul.mubr.bf16.gmra.mxu0 %v11669
  %v13031 = vpop.f32.mrf.mxu0
  %v13032 = vadd.f32 %v11775, %v13031
  %v13033 = vpop.f32.mrf.mxu0
  %v13034 = vpop.f32.mrf.mxu0
  %v13035 = vadd.f32 %v11775, %v13034
  %v13036 = vpop.f32.mrf.mxu0
  %13037 = vmatprep.mubr.bf16.mxu0 %v12061
  %13038 = vmatmul.mubr.bf16.gmra.mxu0 %v11672
  %v13039 = vpop.f32.mrf.mxu0
  %v13040 = vpop.f32.mrf.mxu0
  %v13041 = vpop.f32.mrf.mxu0
  %v13042 = vpop.f32.mrf.mxu0
  %13043 = vmatprep.mubr.bf16.mxu0 %v12064
  %13044 = vmatmul.mubr.bf16.gmra.mxu0 %v11675
  %v13045 = vpop.f32.mrf.mxu0
  %v13046 = vpop.f32.mrf.mxu0
  %v13047 = vpop.f32.mrf.mxu0
  %v13048 = vpop.f32.mrf.mxu0
  %13049 = vmatprep.mubr.bf16.mxu0 %v12067
  %13050 = vmatmul.mubr.bf16.gmra.mxu0 %v11678
  %v13051 = vpop.f32.mrf.mxu0
  %v13052 = vpop.f32.mrf.mxu0
  %v13053 = vpop.f32.mrf.mxu0
  %v13054 = vpop.f32.mrf.mxu0
  %13055 = vmatprep.mubr.bf16.mxu0 %v12070
  %13056 = vmatmul.mubr.bf16.gmra.mxu0 %v11681
  %v13057 = vpop.f32.mrf.mxu0
  %v13058 = vadd.f32 %v11775, %v13057
  %v13059 = vpop.f32.mrf.mxu0
  %v13060 = vpop.f32.mrf.mxu0
  %v13061 = vadd.f32 %v11775, %v13060
  %v13062 = vpop.f32.mrf.mxu0
  %13063 = vmatprep.mubr.bf16.mxu0 %v12073
  %13064 = vmatmul.mubr.bf16.gmra.mxu0 %v11684
  %v13065 = vpop.f32.mrf.mxu0
  %v13066 = vadd.f32 %v11775, %v13065
  %v13067 = vpop.f32.mrf.mxu0
  %v13068 = vpop.f32.mrf.mxu0
  %v13069 = vadd.f32 %v11775, %v13068
  %v13070 = vpop.f32.mrf.mxu0
  %13071 = vmatprep.mubr.bf16.mxu0 %v12076
  %13072 = vmatmul.mubr.bf16.gmra.mxu0 %v11687
  %v13073 = vpop.f32.mrf.mxu0
  %v13074 = vadd.f32 %v11775, %v13073
  %v13075 = vpop.f32.mrf.mxu0
  %v13076 = vpop.f32.mrf.mxu0
  %v13077 = vadd.f32 %v11775, %v13076
  %v13078 = vpop.f32.mrf.mxu0
  %13079 = vmatprep.mubr.bf16.mxu0 %v12079
  %13080 = vmatmul.mubr.bf16.gmra.mxu0 %v11690
  %v13081 = vpop.f32.mrf.mxu0
  %v13082 = vadd.f32 %v11775, %v13081
  %v13083 = vpop.f32.mrf.mxu0
  %v13084 = vpop.f32.mrf.mxu0
  %v13085 = vadd.f32 %v11775, %v13084
  %v13086 = vpop.f32.mrf.mxu0
  %13087 = vmatprep.mubr.bf16.mxu0 %v12082
  %13088 = vmatmul.mubr.bf16.gmra.mxu0 %v11693
  %v13089 = vpop.f32.mrf.mxu0
  %v13090 = vadd.f32 %v11775, %v13089
  %v13091 = vpop.f32.mrf.mxu0
  %v13092 = vpop.f32.mrf.mxu0
  %v13093 = vadd.f32 %v11775, %v13092
  %v13094 = vpop.f32.mrf.mxu0
  %13095 = vmatprep.mubr.bf16.mxu0 %v12085
  %13096 = vmatmul.mubr.bf16.gmra.mxu0 %v11696
  %v13097 = vpop.f32.mrf.mxu0
  %v13098 = vadd.f32 %v11775, %v13097
  %v13099 = vpop.f32.mrf.mxu0
  %v13100 = vpop.f32.mrf.mxu0
  %v13101 = vadd.f32 %v11775, %v13100
  %v13102 = vpop.f32.mrf.mxu0
  %13103 = vmatprep.mubr.bf16.mxu0 %v12088
  %13104 = vmatmul.mubr.bf16.gmra.mxu0 %v11699
  %v13105 = vpop.f32.mrf.mxu0
  %v13106 = vadd.f32 %v11775, %v13105
  %v13107 = vpop.f32.mrf.mxu0
  %v13108 = vpop.f32.mrf.mxu0
  %v13109 = vadd.f32 %v11775, %v13108
  %v13110 = vpop.f32.mrf.mxu0
  %13111 = vmatprep.mubr.bf16.mxu0 %v12091
  %13112 = vmatmul.mubr.bf16.gmra.mxu0 %v11702
  %v13113 = vpop.f32.mrf.mxu0
  %v13114 = vadd.f32 %v11775, %v13113
  %v13115 = vpop.f32.mrf.mxu0
  %v13116 = vpop.f32.mrf.mxu0
  %v13117 = vadd.f32 %v11775, %v13116
  %v13118 = vpop.f32.mrf.mxu0
  %13119 = vmatprep.mubr.bf16.mxu0 %v12094
  %13120 = vmatmul.mubr.bf16.gmra.mxu0 %v11705
  %v13121 = vpop.f32.mrf.mxu0
  %v13122 = vadd.f32 %v11775, %v13121
  %v13123 = vpop.f32.mrf.mxu0
  %v13124 = vpop.f32.mrf.mxu0
  %v13125 = vadd.f32 %v11775, %v13124
  %v13126 = vpop.f32.mrf.mxu0
  %13127 = vmatprep.mubr.bf16.mxu0 %v12097
  %13128 = vmatmul.mubr.bf16.gmra.mxu0 %v11708
  %v13129 = vpop.f32.mrf.mxu0
  %v13130 = vadd.f32 %v11775, %v13129
  %v13131 = vpop.f32.mrf.mxu0
  %v13132 = vpop.f32.mrf.mxu0
  %v13133 = vadd.f32 %v11775, %v13132
  %v13134 = vpop.f32.mrf.mxu0
  %13135 = vmatprep.mubr.bf16.mxu0 %v12100
  %13136 = vmatmul.mubr.bf16.gmra.mxu0 %v11711
  %v13137 = vpop.f32.mrf.mxu0
  %v13138 = vpop.f32.mrf.mxu0
  %v13139 = vpop.f32.mrf.mxu0
  %v13140 = vpop.f32.mrf.mxu0
  %13141 = vmatprep.mubr.bf16.mxu0 %v12103
  %13142 = vmatmul.mubr.bf16.gmra.mxu0 %v11714
  %v13143 = vpop.f32.mrf.mxu0
  %v13144 = vpop.f32.mrf.mxu0
  %v13145 = vpop.f32.mrf.mxu0
  %v13146 = vpop.f32.mrf.mxu0
  %13147 = vmatprep.mubr.bf16.mxu0 %v12106
  %13148 = vmatmul.mubr.bf16.gmra.mxu0 %v11717
  %v13149 = vpop.f32.mrf.mxu0
  %v13150 = vpop.f32.mrf.mxu0
  %v13151 = vpop.f32.mrf.mxu0
  %v13152 = vpop.f32.mrf.mxu0
  %13153 = vmatprep.mubr.bf16.mxu0 %v12109
  %13154 = vmatmul.mubr.bf16.gmra.mxu0 %v11720
  %v13155 = vpop.f32.mrf.mxu0
  %v13156 = vpop.f32.mrf.mxu0
  %v13157 = vpop.f32.mrf.mxu0
  %v13158 = vpop.f32.mrf.mxu0
  %13159 = vmatprep.mubr.bf16.mxu0 %v12112
  %13160 = vmatmul.mubr.bf16.gmra.mxu0 %v11723
  %v13161 = vpop.f32.mrf.mxu0
  %v13162 = vpop.f32.mrf.mxu0
  %v13163 = vpop.f32.mrf.mxu0
  %v13164 = vpop.f32.mrf.mxu0
  %13165 = vmatprep.mubr.bf16.mxu0 %v12115
  %13166 = vmatmul.mubr.bf16.gmra.mxu0 %v11726
  %v13167 = vpop.f32.mrf.mxu0
  %v13168 = vpop.f32.mrf.mxu0
  %v13169 = vpop.f32.mrf.mxu0
  %v13170 = vpop.f32.mrf.mxu0
  %13171 = vmatprep.mubr.bf16.mxu0 %v12118
  %13172 = vmatmul.mubr.bf16.gmra.mxu0 %v11729
  %v13173 = vpop.f32.mrf.mxu0
  %v13174 = vpop.f32.mrf.mxu0
  %v13175 = vpop.f32.mrf.mxu0
  %v13176 = vpop.f32.mrf.mxu0
  %13177 = vmatprep.mubr.bf16.mxu0 %v12121
  %13178 = vmatmul.mubr.bf16.gmra.mxu0 %v11732
  %v13179 = vpop.f32.mrf.mxu0
  %v13180 = vpop.f32.mrf.mxu0
  %v13181 = vpop.f32.mrf.mxu0
  %v13182 = vpop.f32.mrf.mxu0
  %13183 = vmatprep.mubr.bf16.mxu0 %v12124
  %13184 = vmatmul.mubr.bf16.gmra.mxu0 %v11735
  %v13185 = vpop.f32.mrf.mxu0
  %v13186 = vpop.f32.mrf.mxu0
  %v13187 = vpop.f32.mrf.mxu0
  %v13188 = vpop.f32.mrf.mxu0
  %13189 = vmatprep.mubr.bf16.mxu0 %v12127
  %13190 = vmatmul.mubr.bf16.gmra.mxu0 %v11738
  %v13191 = vpop.f32.mrf.mxu0
  %v13192 = vpop.f32.mrf.mxu0
  %v13193 = vpop.f32.mrf.mxu0
  %v13194 = vpop.f32.mrf.mxu0
  %13195 = vmatprep.mubr.bf16.mxu0 %v12130
  %13196 = vmatmul.mubr.bf16.gmra.mxu0 %v11741
  %v13197 = vpop.f32.mrf.mxu0
  %v13198 = vpop.f32.mrf.mxu0
  %v13199 = vpop.f32.mrf.mxu0
  %v13200 = vpop.f32.mrf.mxu0
  %13201 = vmatprep.mubr.bf16.mxu0 %v12133
  %13202 = vmatmul.mubr.bf16.gmra.mxu0 %v11744
  %v13203 = vpop.f32.mrf.mxu0
  %v13204 = vpop.f32.mrf.mxu0
  %v13205 = vpop.f32.mrf.mxu0
  %v13206 = vpop.f32.mrf.mxu0
  %13207 = vmatprep.mubr.bf16.mxu0 %v12136
  %13208 = vmatmul.mubr.bf16.gmra.mxu0 %v11747
  %v13209 = vpop.f32.mrf.mxu0
  %v13210 = vpop.f32.mrf.mxu0
  %v13211 = vpop.f32.mrf.mxu0
  %v13212 = vpop.f32.mrf.mxu0
  %13213 = vmatprep.mubr.bf16.mxu0 %v12139
  %13214 = vmatmul.mubr.bf16.gmra.mxu0 %v11750
  %v13215 = vpop.f32.mrf.mxu0
  %v13216 = vpop.f32.mrf.mxu0
  %v13217 = vpop.f32.mrf.mxu0
  %v13218 = vpop.f32.mrf.mxu0
  %13219 = vdwg.mxu0
  %v13220 = vmax.f32 %v12176, 0.0
  %v13221 = vmax.f32 %v12179, 0.0
  %v13222 = vmax.f32 %v12184, 0.0
  %v13223 = vmax.f32 %v12187, 0.0
  %v13224 = vmax.f32 %v12192, 0.0
  %v13225 = vmax.f32 %v12195, 0.0
  %v13226 = vmax.f32 %v12200, 0.0
  %v13227 = vmax.f32 %v12203, 0.0
  %v13228 = vmax.f32 %v12208, 0.0
  %v13229 = vmax.f32 %v12211, 0.0
  %v13230 = vmax.f32 %v12216, 0.0
  %v13231 = vmax.f32 %v12219, 0.0
  %v13232 = vmax.f32 %v12224, 0.0
  %v13233 = vmax.f32 %v12227, 0.0
  %v13234 = vmax.f32 %v12232, 0.0
  %v13235 = vmax.f32 %v12235, 0.0
  %v13236 = vmax.f32 %v12240, 0.0
  %v13237 = vmax.f32 %v12243, 0.0
  %v13238 = vmax.f32 %v12248, 0.0
  %v13239 = vmax.f32 %v12251, 0.0
  %v13240 = vmax.f32 %v12274, 0.0
  %v13241 = vmax.f32 %v12277, 0.0
  %v13242 = vmax.f32 %v12282, 0.0
  %v13243 = vmax.f32 %v12285, 0.0
  %v13244 = vmax.f32 %v12290, 0.0
  %v13245 = vmax.f32 %v12293, 0.0
  %v13246 = vmax.f32 %v12298, 0.0
  %v13247 = vmax.f32 %v12301, 0.0
  %v13248 = vmax.f32 %v12306, 0.0
  %v13249 = vmax.f32 %v12309, 0.0
  %v13250 = vmax.f32 %v12314, 0.0
  %v13251 = vmax.f32 %v12317, 0.0
  %v13252 = vmax.f32 %v12322, 0.0
  %v13253 = vmax.f32 %v12325, 0.0
  %v13254 = vmax.f32 %v12330, 0.0
  %v13255 = vmax.f32 %v12333, 0.0
  %v13256 = vmax.f32 %v12338, 0.0
  %v13257 = vmax.f32 %v12341, 0.0
  %v13258 = vmax.f32 %v12346, 0.0
  %v13259 = vmax.f32 %v12349, 0.0
  %v13260 = vmax.f32 %v12372, 0.0
  %v13261 = vmax.f32 %v12375, 0.0
  %v13262 = vmax.f32 %v12380, 0.0
  %v13263 = vmax.f32 %v12383, 0.0
  %v13264 = vmax.f32 %v12388, 0.0
  %v13265 = vmax.f32 %v12391, 0.0
  %v13266 = vmax.f32 %v12396, 0.0
  %v13267 = vmax.f32 %v12399, 0.0
  %v13268 = vmax.f32 %v12404, 0.0
  %v13269 = vmax.f32 %v12407, 0.0
  %v13270 = vmax.f32 %v12412, 0.0
  %v13271 = vmax.f32 %v12415, 0.0
  %v13272 = vmax.f32 %v12420, 0.0
  %v13273 = vmax.f32 %v12423, 0.0
  %v13274 = vmax.f32 %v12428, 0.0
  %v13275 = vmax.f32 %v12431, 0.0
  %v13276 = vmax.f32 %v12436, 0.0
  %v13277 = vmax.f32 %v12439, 0.0
  %v13278 = vmax.f32 %v12444, 0.0
  %v13279 = vmax.f32 %v12447, 0.0
  %v13280 = vmax.f32 %v12470, 0.0
  %v13281 = vmax.f32 %v12473, 0.0
  %v13282 = vmax.f32 %v12478, 0.0
  %v13283 = vmax.f32 %v12481, 0.0
  %v13284 = vmax.f32 %v12486, 0.0
  %v13285 = vmax.f32 %v12489, 0.0
  %v13286 = vmax.f32 %v12494, 0.0
  %v13287 = vmax.f32 %v12497, 0.0
  %v13288 = vmax.f32 %v12502, 0.0
  %v13289 = vmax.f32 %v12505, 0.0
  %v13290 = vmax.f32 %v12510, 0.0
  %v13291 = vmax.f32 %v12513, 0.0
  %v13292 = vmax.f32 %v12518, 0.0
  %v13293 = vmax.f32 %v12521, 0.0
  %v13294 = vmax.f32 %v12526, 0.0
  %v13295 = vmax.f32 %v12529, 0.0
  %v13296 = vmax.f32 %v12534, 0.0
  %v13297 = vmax.f32 %v12537, 0.0
  %v13298 = vmax.f32 %v12542, 0.0
  %v13299 = vmax.f32 %v12545, 0.0
  %v13300 = vmax.f32 %v12568, 0.0
  %v13301 = vmax.f32 %v12571, 0.0
  %v13302 = vmax.f32 %v12576, 0.0
  %v13303 = vmax.f32 %v12579, 0.0
  %v13304 = vmax.f32 %v12584, 0.0
  %v13305 = vmax.f32 %v12587, 0.0
  %v13306 = vmax.f32 %v12592, 0.0
  %v13307 = vmax.f32 %v12595, 0.0
  %v13308 = vmax.f32 %v12600, 0.0
  %v13309 = vmax.f32 %v12603, 0.0
  %v13310 = vmax.f32 %v12608, 0.0
  %v13311 = vmax.f32 %v12611, 0.0
  %v13312 = vmax.f32 %v12616, 0.0
  %v13313 = vmax.f32 %v12619, 0.0
  %v13314 = vmax.f32 %v12624, 0.0
  %v13315 = vmax.f32 %v12627, 0.0
  %v13316 = vmax.f32 %v12632, 0.0
  %v13317 = vmax.f32 %v12635, 0.0
  %v13318 = vmax.f32 %v12640, 0.0
  %v13319 = vmax.f32 %v12643, 0.0
  %v13320 = vmax.f32 %v12666, 0.0
  %v13321 = vmax.f32 %v12669, 0.0
  %v13322 = vmax.f32 %v12674, 0.0
  %v13323 = vmax.f32 %v12677, 0.0
  %v13324 = vmax.f32 %v12682, 0.0
  %v13325 = vmax.f32 %v12685, 0.0
  %v13326 = vmax.f32 %v12690, 0.0
  %v13327 = vmax.f32 %v12693, 0.0
  %v13328 = vmax.f32 %v12698, 0.0
  %v13329 = vmax.f32 %v12701, 0.0
  %v13330 = vmax.f32 %v12706, 0.0
  %v13331 = vmax.f32 %v12709, 0.0
  %v13332 = vmax.f32 %v12714, 0.0
  %v13333 = vmax.f32 %v12717, 0.0
  %v13334 = vmax.f32 %v12722, 0.0
  %v13335 = vmax.f32 %v12725, 0.0
  %v13336 = vmax.f32 %v12730, 0.0
  %v13337 = vmax.f32 %v12733, 0.0
  %v13338 = vmax.f32 %v12738, 0.0
  %v13339 = vmax.f32 %v12741, 0.0
  %v13340 = vmax.f32 %v12764, 0.0
  %v13341 = vmax.f32 %v12767, 0.0
  %v13342 = vmax.f32 %v12772, 0.0
  %v13343 = vmax.f32 %v12775, 0.0
  %v13344 = vmax.f32 %v12780, 0.0
  %v13345 = vmax.f32 %v12783, 0.0
  %v13346 = vmax.f32 %v12788, 0.0
  %v13347 = vmax.f32 %v12791, 0.0
  %v13348 = vmax.f32 %v12796, 0.0
  %v13349 = vmax.f32 %v12799, 0.0
  %v13350 = vmax.f32 %v12804, 0.0
  %v13351 = vmax.f32 %v12807, 0.0
  %v13352 = vmax.f32 %v12812, 0.0
  %v13353 = vmax.f32 %v12815, 0.0
  %v13354 = vmax.f32 %v12820, 0.0
  %v13355 = vmax.f32 %v12823, 0.0
  %v13356 = vmax.f32 %v12828, 0.0
  %v13357 = vmax.f32 %v12831, 0.0
  %v13358 = vmax.f32 %v12836, 0.0
  %v13359 = vmax.f32 %v12839, 0.0
  %v13360 = vmax.f32 %v12862, 0.0
  %v13361 = vmax.f32 %v12865, 0.0
  %v13362 = vmax.f32 %v12870, 0.0
  %v13363 = vmax.f32 %v12873, 0.0
  %v13364 = vmax.f32 %v12878, 0.0
  %v13365 = vmax.f32 %v12881, 0.0
  %v13366 = vmax.f32 %v12886, 0.0
  %v13367 = vmax.f32 %v12889, 0.0
  %v13368 = vmax.f32 %v12894, 0.0
  %v13369 = vmax.f32 %v12897, 0.0
  %v13370 = vmax.f32 %v12902, 0.0
  %v13371 = vmax.f32 %v12905, 0.0
  %v13372 = vmax.f32 %v12910, 0.0
  %v13373 = vmax.f32 %v12913, 0.0
  %v13374 = vmax.f32 %v12918, 0.0
  %v13375 = vmax.f32 %v12921, 0.0
  %v13376 = vmax.f32 %v12926, 0.0
  %v13377 = vmax.f32 %v12929, 0.0
  %v13378 = vmax.f32 %v12934, 0.0
  %v13379 = vmax.f32 %v12937, 0.0
  %v13380 = vmax.f32 %v12960, 0.0
  %v13381 = vmax.f32 %v12963, 0.0
  %v13382 = vmax.f32 %v12968, 0.0
  %v13383 = vmax.f32 %v12971, 0.0
  %v13384 = vmax.f32 %v12976, 0.0
  %v13385 = vmax.f32 %v12979, 0.0
  %v13386 = vmax.f32 %v12984, 0.0
  %v13387 = vmax.f32 %v12987, 0.0
  %v13388 = vmax.f32 %v12992, 0.0
  %v13389 = vmax.f32 %v12995, 0.0
  %v13390 = vmax.f32 %v13000, 0.0
  %v13391 = vmax.f32 %v13003, 0.0
  %v13392 = vmax.f32 %v13008, 0.0
  %v13393 = vmax.f32 %v13011, 0.0
  %v13394 = vmax.f32 %v13016, 0.0
  %v13395 = vmax.f32 %v13019, 0.0
  %v13396 = vmax.f32 %v13024, 0.0
  %v13397 = vmax.f32 %v13027, 0.0
  %v13398 = vmax.f32 %v13032, 0.0
  %v13399 = vmax.f32 %v13035, 0.0
  %v13400 = vmax.f32 %v13058, 0.0
  %v13401 = vmax.f32 %v13061, 0.0
  %v13402 = vmax.f32 %v13066, 0.0
  %v13403 = vmax.f32 %v13069, 0.0
  %v13404 = vmax.f32 %v13074, 0.0
  %v13405 = vmax.f32 %v13077, 0.0
  %v13406 = vmax.f32 %v13082, 0.0
  %v13407 = vmax.f32 %v13085, 0.0
  %v13408 = vmax.f32 %v13090, 0.0
  %v13409 = vmax.f32 %v13093, 0.0
  %v13410 = vmax.f32 %v13098, 0.0
  %v13411 = vmax.f32 %v13101, 0.0
  %v13412 = vmax.f32 %v13106, 0.0
  %v13413 = vmax.f32 %v13109, 0.0
  %v13414 = vmax.f32 %v13114, 0.0
  %v13415 = vmax.f32 %v13117, 0.0
  %v13416 = vmax.f32 %v13122, 0.0
  %v13417 = vmax.f32 %v13125, 0.0
  %v13418 = vmax.f32 %v13130, 0.0
  %v13419 = vmax.f32 %v13133, 0.0
  %v13420 = vpack.c.bf16 %v13221, %v13220
  %v13421 = vpack.c.bf16 %v13223, %v13222
  %v13422 = vpack.c.bf16 %v13225, %v13224
  %v13423 = vpack.c.bf16 %v13227, %v13226
  %v13424 = vpack.c.bf16 %v13229, %v13228
  %v13425 = vpack.c.bf16 %v13231, %v13230
  %v13426 = vpack.c.bf16 %v13233, %v13232
  %v13427 = vpack.c.bf16 %v13235, %v13234
  %v13428 = vpack.c.bf16 %v13237, %v13236
  %v13429 = vpack.c.bf16 %v13239, %v13238
  %v13430 = vpack.c.bf16 %v13241, %v13240
  %v13431 = vpack.c.bf16 %v13243, %v13242
  %v13432 = vpack.c.bf16 %v13245, %v13244
  %v13433 = vpack.c.bf16 %v13247, %v13246
  %v13434 = vpack.c.bf16 %v13249, %v13248
  %v13435 = vpack.c.bf16 %v13251, %v13250
  %v13436 = vpack.c.bf16 %v13253, %v13252
  %v13437 = vpack.c.bf16 %v13255, %v13254
  %v13438 = vpack.c.bf16 %v13257, %v13256
  %v13439 = vpack.c.bf16 %v13259, %v13258
  %v13440 = vpack.c.bf16 %v13261, %v13260
  %v13441 = vpack.c.bf16 %v13263, %v13262
  %v13442 = vpack.c.bf16 %v13265, %v13264
  %v13443 = vpack.c.bf16 %v13267, %v13266
  %v13444 = vpack.c.bf16 %v13269, %v13268
  %v13445 = vpack.c.bf16 %v13271, %v13270
  %v13446 = vpack.c.bf16 %v13273, %v13272
  %v13447 = vpack.c.bf16 %v13275, %v13274
  %v13448 = vpack.c.bf16 %v13277, %v13276
  %v13449 = vpack.c.bf16 %v13279, %v13278
  %v13450 = vpack.c.bf16 %v13281, %v13280
  %v13451 = vpack.c.bf16 %v13283, %v13282
  %v13452 = vpack.c.bf16 %v13285, %v13284
  %v13453 = vpack.c.bf16 %v13287, %v13286
  %v13454 = vpack.c.bf16 %v13289, %v13288
  %v13455 = vpack.c.bf16 %v13291, %v13290
  %v13456 = vpack.c.bf16 %v13293, %v13292
  %v13457 = vpack.c.bf16 %v13295, %v13294
  %v13458 = vpack.c.bf16 %v13297, %v13296
  %v13459 = vpack.c.bf16 %v13299, %v13298
  %v13460 = vpack.c.bf16 %v13301, %v13300
  %v13461 = vpack.c.bf16 %v13303, %v13302
  %v13462 = vpack.c.bf16 %v13305, %v13304
  %v13463 = vpack.c.bf16 %v13307, %v13306
  %v13464 = vpack.c.bf16 %v13309, %v13308
  %v13465 = vpack.c.bf16 %v13311, %v13310
  %v13466 = vpack.c.bf16 %v13313, %v13312
  %v13467 = vpack.c.bf16 %v13315, %v13314
  %v13468 = vpack.c.bf16 %v13317, %v13316
  %v13469 = vpack.c.bf16 %v13319, %v13318
  %v13470 = vpack.c.bf16 %v13321, %v13320
  %v13471 = vpack.c.bf16 %v13323, %v13322
  %v13472 = vpack.c.bf16 %v13325, %v13324
  %v13473 = vpack.c.bf16 %v13327, %v13326
  %v13474 = vpack.c.bf16 %v13329, %v13328
  %v13475 = vpack.c.bf16 %v13331, %v13330
  %v13476 = vpack.c.bf16 %v13333, %v13332
  %v13477 = vpack.c.bf16 %v13335, %v13334
  %v13478 = vpack.c.bf16 %v13337, %v13336
  %v13479 = vpack.c.bf16 %v13339, %v13338
  %v13480 = vpack.c.bf16 %v13341, %v13340
  %v13481 = vpack.c.bf16 %v13343, %v13342
  %v13482 = vpack.c.bf16 %v13345, %v13344
  %v13483 = vpack.c.bf16 %v13347, %v13346
  %v13484 = vpack.c.bf16 %v13349, %v13348
  %v13485 = vpack.c.bf16 %v13351, %v13350
  %v13486 = vpack.c.bf16 %v13353, %v13352
  %v13487 = vpack.c.bf16 %v13355, %v13354
  %v13488 = vpack.c.bf16 %v13357, %v13356
  %v13489 = vpack.c.bf16 %v13359, %v13358
  %v13490 = vpack.c.bf16 %v13361, %v13360
  %v13491 = vpack.c.bf16 %v13363, %v13362
  %v13492 = vpack.c.bf16 %v13365, %v13364
  %v13493 = vpack.c.bf16 %v13367, %v13366
  %v13494 = vpack.c.bf16 %v13369, %v13368
  %v13495 = vpack.c.bf16 %v13371, %v13370
  %v13496 = vpack.c.bf16 %v13373, %v13372
  %v13497 = vpack.c.bf16 %v13375, %v13374
  %v13498 = vpack.c.bf16 %v13377, %v13376
  %v13499 = vpack.c.bf16 %v13379, %v13378
  %v13500 = vpack.c.bf16 %v13381, %v13380
  %v13501 = vpack.c.bf16 %v13383, %v13382
  %v13502 = vpack.c.bf16 %v13385, %v13384
  %v13503 = vpack.c.bf16 %v13387, %v13386
  %v13504 = vpack.c.bf16 %v13389, %v13388
  %v13505 = vpack.c.bf16 %v13391, %v13390
  %v13506 = vpack.c.bf16 %v13393, %v13392
  %v13507 = vpack.c.bf16 %v13395, %v13394
  %v13508 = vpack.c.bf16 %v13397, %v13396
  %v13509 = vpack.c.bf16 %v13399, %v13398
  %v13510 = vpack.c.bf16 %v13401, %v13400
  %v13511 = vpack.c.bf16 %v13403, %v13402
  %v13512 = vpack.c.bf16 %v13405, %v13404
  %v13513 = vpack.c.bf16 %v13407, %v13406
  %v13514 = vpack.c.bf16 %v13409, %v13408
  %v13515 = vpack.c.bf16 %v13411, %v13410
  %v13516 = vpack.c.bf16 %v13413, %v13412
  %v13517 = vpack.c.bf16 %v13415, %v13414
  %v13518 = vpack.c.bf16 %v13417, %v13416
  %v13519 = vpack.c.bf16 %v13419, %v13418
  %v13520 = vmax.bf16 %v13420, %v13421
  %v13521 = vmax.bf16 %v13520, %v13430
  %v13522 = vmax.bf16 %v13521, %v13431
  %v13523 = vmax.bf16 %v13422, %v13423
  %v13524 = vmax.bf16 %v13523, %v13432
  %v13525 = vmax.bf16 %v13524, %v13433
  %v13526 = vmax.bf16 %v13424, %v13425
  %v13527 = vmax.bf16 %v13526, %v13434
  %v13528 = vmax.bf16 %v13527, %v13435
  %v13529 = vmax.bf16 %v13426, %v13427
  %v13530 = vmax.bf16 %v13529, %v13436
  %v13531 = vmax.bf16 %v13530, %v13437
  %v13532 = vmax.bf16 %v13428, %v13429
  %v13533 = vmax.bf16 %v13532, %v13438
  %v13534 = vmax.bf16 %v13533, %v13439
  %v13535 = vmax.bf16 %v13440, %v13441
  %v13536 = vmax.bf16 %v13535, %v13450
  %v13537 = vmax.bf16 %v13536, %v13451
  %v13538 = vmax.bf16 %v13442, %v13443
  %v13539 = vmax.bf16 %v13538, %v13452
  %v13540 = vmax.bf16 %v13539, %v13453
  %v13541 = vmax.bf16 %v13444, %v13445
  %v13542 = vmax.bf16 %v13541, %v13454
  %v13543 = vmax.bf16 %v13542, %v13455
  %v13544 = vmax.bf16 %v13446, %v13447
  %v13545 = vmax.bf16 %v13544, %v13456
  %v13546 = vmax.bf16 %v13545, %v13457
  %v13547 = vmax.bf16 %v13448, %v13449
  %v13548 = vmax.bf16 %v13547, %v13458
  %v13549 = vmax.bf16 %v13548, %v13459
  %v13550 = vmax.bf16 %v13460, %v13461
  %v13551 = vmax.bf16 %v13550, %v13470
  %v13552 = vmax.bf16 %v13551, %v13471
  %v13553 = vmax.bf16 %v13462, %v13463
  %v13554 = vmax.bf16 %v13553, %v13472
  %v13555 = vmax.bf16 %v13554, %v13473
  %v13556 = vmax.bf16 %v13464, %v13465
  %v13557 = vmax.bf16 %v13556, %v13474
  %v13558 = vmax.bf16 %v13557, %v13475
  %v13559 = vmax.bf16 %v13466, %v13467
  %v13560 = vmax.bf16 %v13559, %v13476
  %v13561 = vmax.bf16 %v13560, %v13477
  %v13562 = vmax.bf16 %v13468, %v13469
  %v13563 = vmax.bf16 %v13562, %v13478
  %v13564 = vmax.bf16 %v13563, %v13479
  %v13565 = vmax.bf16 %v13480, %v13481
  %v13566 = vmax.bf16 %v13565, %v13490
  %v13567 = vmax.bf16 %v13566, %v13491
  %v13568 = vmax.bf16 %v13482, %v13483
  %v13569 = vmax.bf16 %v13568, %v13492
  %v13570 = vmax.bf16 %v13569, %v13493
  %v13571 = vmax.bf16 %v13484, %v13485
  %v13572 = vmax.bf16 %v13571, %v13494
  %v13573 = vmax.bf16 %v13572, %v13495
  %v13574 = vmax.bf16 %v13486, %v13487
  %v13575 = vmax.bf16 %v13574, %v13496
  %v13576 = vmax.bf16 %v13575, %v13497
  %v13577 = vmax.bf16 %v13488, %v13489
  %v13578 = vmax.bf16 %v13577, %v13498
  %v13579 = vmax.bf16 %v13578, %v13499
  %v13580 = vmax.bf16 %v13500, %v13501
  %v13581 = vmax.bf16 %v13580, %v13510
  %v13582 = vmax.bf16 %v13581, %v13511
  %v13583 = vmax.bf16 %v13502, %v13503
  %v13584 = vmax.bf16 %v13583, %v13512
  %v13585 = vmax.bf16 %v13584, %v13513
  %v13586 = vmax.bf16 %v13504, %v13505
  %v13587 = vmax.bf16 %v13586, %v13514
  %v13588 = vmax.bf16 %v13587, %v13515
  %v13589 = vmax.bf16 %v13506, %v13507
  %v13590 = vmax.bf16 %v13589, %v13516
  %v13591 = vmax.bf16 %v13590, %v13517
  %v13592 = vmax.bf16 %v13508, %v13509
  %v13593 = vmax.bf16 %v13592, %v13518
  %v13594 = vmax.bf16 %v13593, %v13519
  %13596 = vrot.lane.b32.xlu0 %v13525, 32
  %v13597 = vpop.permute.xlu0 %13596
  %13599 = vrot.lane.b32.xlu0 %v13528, 64
  %v13600 = vpop.permute.xlu0 %13599
  %13602 = vrot.lane.b32.xlu0 %v13531, 96
  %v13603 = vpop.permute.xlu0 %13602
  %13605 = vrot.lane.b32.xlu0 %v13537, 32
  %v13606 = vpop.permute.xlu0 %13605
  %13608 = vrot.lane.b32.xlu0 %v13540, 64
  %v13609 = vpop.permute.xlu0 %13608
  %13611 = vrot.lane.b32.xlu0 %v13543, 96
  %v13612 = vpop.permute.xlu0 %13611
  %13614 = vrot.lane.b32.xlu0 %v13549, 32
  %v13615 = vpop.permute.xlu0 %13614
  %13617 = vrot.lane.b32.xlu0 %v13552, 64
  %v13618 = vpop.permute.xlu0 %13617
  %13620 = vrot.lane.b32.xlu0 %v13555, 96
  %v13621 = vpop.permute.xlu0 %13620
  %13623 = vrot.lane.b32.xlu0 %v13561, 32
  %v13624 = vpop.permute.xlu0 %13623
  %13626 = vrot.lane.b32.xlu0 %v13564, 64
  %v13627 = vpop.permute.xlu0 %13626
  %13629 = vrot.lane.b32.xlu0 %v13567, 96
  %v13630 = vpop.permute.xlu0 %13629
  %v13633 = vsel %vm9913, %v13522, %v13597
  %v13635 = vsel %vm10479, %v13633, %v13600
  %v13637 = vsel %vm11045, %v13635, %v13603
  %v13641 = vsel %vm9913, %v13534, %v13606
  %v13643 = vsel %vm10479, %v13641, %v13609
  %v13645 = vsel %vm11045, %v13643, %v13612
  %v13649 = vsel %vm9913, %v13546, %v13615
  %v13651 = vsel %vm10479, %v13649, %v13618
  %v13653 = vsel %vm11045, %v13651, %v13621
  %v13657 = vsel %vm9913, %v13558, %v13624
  %v13659 = vsel %vm10479, %v13657, %v13627
  %v13661 = vsel %vm11045, %v13659, %v13630
  %13664 = vrot.lane.b32.xlu0 %v13573, 32
  %v13665 = vpop.permute.xlu0 %13664
  %13667 = vrot.lane.b32.xlu0 %v13576, 64
  %v13668 = vpop.permute.xlu0 %13667
  %13670 = vrot.lane.b32.xlu0 %v13579, 96
  %v13671 = vpop.permute.xlu0 %13670
  %13673 = vrot.lane.b32.xlu0 %v13585, 32
  %v13674 = vpop.permute.xlu0 %13673
  %13676 = vrot.lane.b32.xlu0 %v13588, 64
  %v13677 = vpop.permute.xlu0 %13676
  %13679 = vrot.lane.b32.xlu0 %v13591, 96
  %v13680 = vpop.permute.xlu0 %13679
  %v13683 = vsel %vm9913, %v13570, %v13665
  %v13685 = vsel %vm10479, %v13683, %v13668
  %v13687 = vsel %vm11045, %v13685, %v13671
  %v13691 = vsel %vm9913, %v13582, %v13674
  %v13693 = vsel %vm10479, %v13691, %v13677
  %v13695 = vsel %vm11045, %v13693, %v13680
  %v13697 = vld [vmem:[%s5] sm:$0xff]
  %v13698 = vld [vmem:[%s5 + $0x8] sm:$0xff]
  %v13699 = vld [vmem:[%s5 + $0x10] sm:$0xff]
  %v13700 = vld [vmem:[%s5 + $0x18] sm:$0xff]
  %v13701 = vld [vmem:[%s5 + $0x20] sm:$0xff]
  %v13702 = vld [vmem:[%s5 + $0x28] sm:$0xff]
  %v13703 = vld [vmem:[%s5 + $0x30] sm:$0xff]
  %v13704 = vld [vmem:[%s5 + $0x38] sm:$0xff]
  %v13705 = vld [vmem:[%s5 + $0x40] sm:$0xff]
  %v13706 = vld [vmem:[%s5 + $0x48] sm:$0xff]
  %v13707 = vld [vmem:[%s5 + $0x50] sm:$0xff]
  %v13708 = vld [vmem:[%s5 + $0x58] sm:$0xff]
  %v13709 = vld [vmem:[%s5 + $0x60] sm:$0xff]
  %v13710 = vld [vmem:[%s5 + $0x68] sm:$0xff]
  %v13711 = vld [vmem:[%s5 + $0x70] sm:$0xff]
  %v13712 = vld [vmem:[%s5 + $0x78] sm:$0xff]
  %v13713 = vld [vmem:[%s5 + $0x80] sm:$0xff]
  %v13714 = vld [vmem:[%s5 + $0x88] sm:$0xff]
  %v13715 = vld [vmem:[%s5 + $0x90] sm:$0xff]
  %v13716 = vld [vmem:[%s5 + $0x98] sm:$0xff]
  %v13717 = vld [vmem:[%s5 + $0xa0] sm:$0xff]
  %v13718 = vld [vmem:[%s5 + $0xa8] sm:$0xff]
  %v13719 = vld [vmem:[%s5 + $0xb0] sm:$0xff]
  %v13720 = vld [vmem:[%s5 + $0xb8] sm:$0xff]
  %v13721 = vld [vmem:[%s5 + $0xc0] sm:$0xff]
  %v13722 = vld [vmem:[%s5 + $0xc8] sm:$0xff]
  %v13723 = vld [vmem:[%s5 + $0xd0] sm:$0xff]
  %v13724 = vld [vmem:[%s5 + $0xd8] sm:$0xff]
  %v13725 = vld [vmem:[%s5 + $0xe0] sm:$0xff]
  %v13726 = vld [vmem:[%s5 + $0xe8] sm:$0xff]
  %v13727 = vld [vmem:[%s5 + $0xf0] sm:$0xff]
  %v13728 = vld [vmem:[%s5 + $0xf8] sm:$0xff]
  %v13729 = vld [vmem:[%s5 + $0x100] sm:$0xff]
  %v13730 = vld [vmem:[%s5 + $0x108] sm:$0xff]
  %v13731 = vld [vmem:[%s5 + $0x110] sm:$0xff]
  %v13732 = vld [vmem:[%s5 + $0x118] sm:$0xff]
  %v13733 = vld [vmem:[%s5 + $0x120] sm:$0xff]
  %v13734 = vld [vmem:[%s5 + $0x128] sm:$0xff]
  %v13735 = vld [vmem:[%s5 + $0x130] sm:$0xff]
  %v13736 = vld [vmem:[%s5 + $0x138] sm:$0xff]
  %v13737 = vld [vmem:[%s5 + $0x140] sm:$0xff]
  %v13738 = vld [vmem:[%s5 + $0x148] sm:$0xff]
  %v13739 = vld [vmem:[%s5 + $0x150] sm:$0xff]
  %v13740 = vld [vmem:[%s5 + $0x158] sm:$0xff]
  %v13741 = vld [vmem:[%s5 + $0x160] sm:$0xff]
  %v13742 = vld [vmem:[%s5 + $0x168] sm:$0xff]
  %v13743 = vld [vmem:[%s5 + $0x170] sm:$0xff]
  %v13744 = vld [vmem:[%s5 + $0x178] sm:$0xff]
  %v13745 = vld [vmem:[%s5 + $0x180] sm:$0xff]
  %v13746 = vld [vmem:[%s5 + $0x188] sm:$0xff]
  %v13747 = vld [vmem:[%s5 + $0x190] sm:$0xff]
  %v13748 = vld [vmem:[%s5 + $0x198] sm:$0xff]
  %v13749 = vld [vmem:[%s5 + $0x1a0] sm:$0xff]
  %v13750 = vld [vmem:[%s5 + $0x1a8] sm:$0xff]
  %v13751 = vld [vmem:[%s5 + $0x1b0] sm:$0xff]
  %v13752 = vld [vmem:[%s5 + $0x1b8] sm:$0xff]
  %v13753 = vld [vmem:[%s5 + $0x1c0] sm:$0xff]
  %v13754 = vld [vmem:[%s5 + $0x1c8] sm:$0xff]
  %v13755 = vld [vmem:[%s5 + $0x1d0] sm:$0xff]
  %v13756 = vld [vmem:[%s5 + $0x1d8] sm:$0xff]
  %v13757 = vld [vmem:[%s5 + $0x1e0] sm:$0xff]
  %v13758 = vld [vmem:[%s5 + $0x1e8] sm:$0xff]
  %v13759 = vld [vmem:[%s5 + $0x1f0] sm:$0xff]
  %v13760 = vld [vmem:[%s5 + $0x1f8] sm:$0xff]
  %v13761 = vld [vmem:[%s5 + $0x200] sm:$0xff]
  %v13762 = vld [vmem:[%s5 + $0x208] sm:$0xff]
  %v13763 = vld [vmem:[%s5 + $0x210] sm:$0xff]
  %v13764 = vld [vmem:[%s5 + $0x218] sm:$0xff]
  %v13765 = vld [vmem:[%s5 + $0x220] sm:$0xff]
  %v13766 = vld [vmem:[%s5 + $0x228] sm:$0xff]
  %v13767 = vld [vmem:[%s5 + $0x230] sm:$0xff]
  %v13768 = vld [vmem:[%s5 + $0x238] sm:$0xff]
  %v13769 = vld [vmem:[%s5 + $0x240] sm:$0xff]
  %v13770 = vld [vmem:[%s5 + $0x248] sm:$0xff]
  %v13771 = vld [vmem:[%s5 + $0x250] sm:$0xff]
  %v13772 = vld [vmem:[%s5 + $0x258] sm:$0xff]
  %v13773 = vld [vmem:[%s5 + $0x260] sm:$0xff]
  %v13774 = vld [vmem:[%s5 + $0x268] sm:$0xff]
  %v13775 = vld [vmem:[%s5 + $0x270] sm:$0xff]
  %v13776 = vld [vmem:[%s5 + $0x278] sm:$0xff]
  %v13777 = vld [vmem:[%s5 + $0x280] sm:$0xff]
  %v13778 = vld [vmem:[%s5 + $0x288] sm:$0xff]
  %v13779 = vld [vmem:[%s5 + $0x290] sm:$0xff]
  %v13780 = vld [vmem:[%s5 + $0x298] sm:$0xff]
  %v13781 = vld [vmem:[%s5 + $0x2a0] sm:$0xff]
  %v13782 = vld [vmem:[%s5 + $0x2a8] sm:$0xff]
  %v13783 = vld [vmem:[%s5 + $0x2b0] sm:$0xff]
  %v13784 = vld [vmem:[%s5 + $0x2b8] sm:$0xff]
  %v13785 = vld [vmem:[%s5 + $0x2c0] sm:$0xff]
  %v13786 = vld [vmem:[%s5 + $0x2c8] sm:$0xff]
  %v13787 = vld [vmem:[%s5 + $0x2d0] sm:$0xff]
  %v13788 = vld [vmem:[%s5 + $0x2d8] sm:$0xff]
  %v13789 = vld [vmem:[%s5 + $0x2e0] sm:$0xff]
  %v13790 = vld [vmem:[%s5 + $0x2e8] sm:$0xff]
  %v13791 = vld [vmem:[%s5 + $0x2f0] sm:$0xff]
  %v13792 = vld [vmem:[%s5 + $0x2f8] sm:$0xff]
  %v13793 = vld [vmem:[%s5 + $0x300] sm:$0xff]
  %v13794 = vld [vmem:[%s5 + $0x308] sm:$0xff]
  %v13795 = vld [vmem:[%s5 + $0x310] sm:$0xff]
  %v13796 = vld [vmem:[%s5 + $0x318] sm:$0xff]
  %v13797 = vld [vmem:[%s5 + $0x320] sm:$0xff]
  %v13798 = vld [vmem:[%s5 + $0x328] sm:$0xff]
  %v13799 = vld [vmem:[%s5 + $0x330] sm:$0xff]
  %v13800 = vld [vmem:[%s5 + $0x338] sm:$0xff]
  %v13801 = vld [vmem:[%s5 + $0x340] sm:$0xff]
  %v13802 = vld [vmem:[%s5 + $0x348] sm:$0xff]
  %v13803 = vld [vmem:[%s5 + $0x350] sm:$0xff]
  %v13804 = vld [vmem:[%s5 + $0x358] sm:$0xff]
  %v13805 = vld [vmem:[%s5 + $0x360] sm:$0xff]
  %v13806 = vld [vmem:[%s5 + $0x368] sm:$0xff]
  %v13807 = vld [vmem:[%s5 + $0x370] sm:$0xff]
  %v13808 = vld [vmem:[%s5 + $0x378] sm:$0xff]
  %v13809 = vld [vmem:[%s5 + $0x380] sm:$0xff]
  %v13810 = vld [vmem:[%s5 + $0x388] sm:$0xff]
  %v13811 = vld [vmem:[%s5 + $0x390] sm:$0xff]
  %v13812 = vld [vmem:[%s5 + $0x398] sm:$0xff]
  %v13813 = vld [vmem:[%s5 + $0x3a0] sm:$0xff]
  %v13814 = vld [vmem:[%s5 + $0x3a8] sm:$0xff]
  %v13815 = vld [vmem:[%s5 + $0x3b0] sm:$0xff]
  %v13816 = vld [vmem:[%s5 + $0x3b8] sm:$0xff]
  %v13817 = vld [vmem:[%s5 + $0x3c0] sm:$0xff]
  %v13818 = vld [vmem:[%s5 + $0x3c8] sm:$0xff]
  %v13819 = vld [vmem:[%s5 + $0x3d0] sm:$0xff]
  %v13820 = vld [vmem:[%s5 + $0x3d8] sm:$0xff]
  %v13821 = vld [vmem:[%s5 + $0x3e0] sm:$0xff]
  %v13822 = vld [vmem:[%s5 + $0x3e8] sm:$0xff]
  %v13823 = vld [vmem:[%s5 + $0x3f0] sm:$0xff]
  %v13824 = vld [vmem:[%s5 + $0x3f8] sm:$0xff]
  %v13825 = vld [vmem:[%s5 + $0x400] sm:$0xff]
  %v13826 = vld [vmem:[%s5 + $0x408] sm:$0xff]
  %v13827 = vld [vmem:[%s5 + $0x410] sm:$0xff]
  %v13828 = vld [vmem:[%s5 + $0x418] sm:$0xff]
  %v13829 = vld [vmem:[%s5 + $0x420] sm:$0xff]
  %v13830 = vld [vmem:[%s5 + $0x428] sm:$0xff]
  %v13831 = vld [vmem:[%s5 + $0x430] sm:$0xff]
  %v13832 = vld [vmem:[%s5 + $0x438] sm:$0xff]
  %v13833 = vld [vmem:[%s5 + $0x440] sm:$0xff]
  %v13834 = vld [vmem:[%s5 + $0x448] sm:$0xff]
  %v13835 = vld [vmem:[%s5 + $0x450] sm:$0xff]
  %v13836 = vld [vmem:[%s5 + $0x458] sm:$0xff]
  %v13837 = vld [vmem:[%s5 + $0x460] sm:$0xff]
  %v13838 = vld [vmem:[%s5 + $0x468] sm:$0xff]
  %v13839 = vld [vmem:[%s5 + $0x470] sm:$0xff]
  %v13840 = vld [vmem:[%s5 + $0x478] sm:$0xff]
  %v13841 = vld [vmem:[%s5 + $0x480] sm:$0xff]
  %v13842 = vld [vmem:[%s5 + $0x488] sm:$0xff]
  %v13843 = vld [vmem:[%s5 + $0x490] sm:$0xff]
  %v13844 = vld [vmem:[%s5 + $0x498] sm:$0xff]
  %v13845 = vld [vmem:[%s5 + $0x4a0] sm:$0xff]
  %v13846 = vld [vmem:[%s5 + $0x4a8] sm:$0xff]
  %v13847 = vld [vmem:[%s5 + $0x4b0] sm:$0xff]
  %v13848 = vld [vmem:[%s5 + $0x4b8] sm:$0xff]
  %v13849 = vld [vmem:[%s5 + $0x4c0] sm:$0xff]
  %v13850 = vld [vmem:[%s5 + $0x4c8] sm:$0xff]
  %v13851 = vld [vmem:[%s5 + $0x4d0] sm:$0xff]
  %v13852 = vld [vmem:[%s5 + $0x4d8] sm:$0xff]
  %v13853 = vld [vmem:[%s5 + $0x4e0] sm:$0xff]
  %v13854 = vld [vmem:[%s5 + $0x4e8] sm:$0xff]
  %v13855 = vld [vmem:[%s5 + $0x4f0] sm:$0xff]
  %v13856 = vld [vmem:[%s5 + $0x4f8] sm:$0xff]
  %v13857 = vld [vmem:[%s5 + $0x500] sm:$0xff]
  %v13858 = vld [vmem:[%s5 + $0x508] sm:$0xff]
  %v13859 = vld [vmem:[%s5 + $0x510] sm:$0xff]
  %v13860 = vld [vmem:[%s5 + $0x518] sm:$0xff]
  %v13861 = vld [vmem:[%s5 + $0x520] sm:$0xff]
  %v13862 = vld [vmem:[%s5 + $0x528] sm:$0xff]
  %v13863 = vld [vmem:[%s5 + $0x530] sm:$0xff]
  %v13864 = vld [vmem:[%s5 + $0x538] sm:$0xff]
  %v13865 = vld [vmem:[%s5 + $0x540] sm:$0xff]
  %v13866 = vld [vmem:[%s5 + $0x548] sm:$0xff]
  %v13867 = vld [vmem:[%s5 + $0x550] sm:$0xff]
  %v13868 = vld [vmem:[%s5 + $0x558] sm:$0xff]
  %v13869 = vld [vmem:[%s5 + $0x560] sm:$0xff]
  %v13870 = vld [vmem:[%s5 + $0x568] sm:$0xff]
  %v13871 = vld [vmem:[%s5 + $0x570] sm:$0xff]
  %v13872 = vld [vmem:[%s5 + $0x578] sm:$0xff]
  %v13873 = vld [vmem:[%s5 + $0x580] sm:$0xff]
  %v13874 = vld [vmem:[%s5 + $0x588] sm:$0xff]
  %v13875 = vld [vmem:[%s5 + $0x590] sm:$0xff]
  %v13876 = vld [vmem:[%s5 + $0x598] sm:$0xff]
  %v13877 = vld [vmem:[%s5 + $0x5a0] sm:$0xff]
  %v13878 = vld [vmem:[%s5 + $0x5a8] sm:$0xff]
  %v13879 = vld [vmem:[%s5 + $0x5b0] sm:$0xff]
  %v13880 = vld [vmem:[%s5 + $0x5b8] sm:$0xff]
  %v13881 = vld [vmem:[%s5 + $0x5c0] sm:$0xff]
  %v13882 = vld [vmem:[%s5 + $0x5c8] sm:$0xff]
  %v13883 = vld [vmem:[%s5 + $0x5d0] sm:$0xff]
  %v13884 = vld [vmem:[%s5 + $0x5d8] sm:$0xff]
  %v13885 = vld [vmem:[%s5 + $0x5e0] sm:$0xff]
  %v13886 = vld [vmem:[%s5 + $0x5e8] sm:$0xff]
  %v13887 = vld [vmem:[%s5 + $0x5f0] sm:$0xff]
  %v13888 = vld [vmem:[%s5 + $0x5f8] sm:$0xff]
  %v13889 = vld [vmem:[%s5 + $0x600] sm:$0xff]
  %v13890 = vld [vmem:[%s5 + $0x608] sm:$0xff]
  %v13891 = vld [vmem:[%s5 + $0x610] sm:$0xff]
  %v13892 = vld [vmem:[%s5 + $0x618] sm:$0xff]
  %v13893 = vld [vmem:[%s5 + $0x620] sm:$0xff]
  %v13894 = vld [vmem:[%s5 + $0x628] sm:$0xff]
  %v13895 = vld [vmem:[%s5 + $0x630] sm:$0xff]
  %v13896 = vld [vmem:[%s5 + $0x638] sm:$0xff]
  %v13897 = vld [vmem:[%s6] sm:$0xf]
  %v13899 = vlaneseq
  %v13900 = vshrl.u32 %v13899, 7
  %v13901 = vsub.s32 0, %v13900
  %v13902 = vrot.slane %v13897, %v13901
  %v13903 = vlaneseq
  %v13904 = vshrl.u32 %v13903, 7
  %v13905 = vsub.s32 1, %v13904
  %v13906 = vrot.slane %v13897, %v13905
  %v13907 = vlaneseq
  %v13908 = vshrl.u32 %v13907, 7
  %v13909 = vsub.s32 2, %v13908
  %v13910 = vrot.slane %v13897, %v13909
  %v13911 = vlaneseq
  %v13912 = vshrl.u32 %v13911, 7
  %v13913 = vsub.s32 3, %v13912
  %v13914 = vrot.slane %v13897, %v13913
  %v14119 = vunpack.c.l.b16 %v13697
  %v14120 = vunpack.c.h.b16 %v13697
  %v14121 = vunpack.c.l.b16 %v13698
  %v14122 = vunpack.c.h.b16 %v13698
  %v14123 = vunpack.c.l.b16 %v13699
  %v14124 = vunpack.c.h.b16 %v13699
  %v14125 = vunpack.c.l.b16 %v13700
  %v14126 = vunpack.c.h.b16 %v13700
  %v14127 = vunpack.c.l.b16 %v13701
  %v14128 = vunpack.c.h.b16 %v13701
  %v14129 = vunpack.c.l.b16 %v13702
  %v14130 = vunpack.c.h.b16 %v13702
  %v14131 = vunpack.c.l.b16 %v13703
  %v14132 = vunpack.c.h.b16 %v13703
  %v14133 = vunpack.c.l.b16 %v13704
  %v14134 = vunpack.c.h.b16 %v13704
  %v14135 = vunpack.c.l.b16 %v13705
  %v14136 = vunpack.c.h.b16 %v13705
  %v14137 = vunpack.c.l.b16 %v13706
  %v14138 = vunpack.c.h.b16 %v13706
  %v14139 = vunpack.c.l.b16 %v13707
  %v14140 = vunpack.c.h.b16 %v13707
  %v14141 = vunpack.c.l.b16 %v13708
  %v14142 = vunpack.c.h.b16 %v13708
  %v14143 = vunpack.c.l.b16 %v13709
  %v14144 = vunpack.c.h.b16 %v13709
  %v14145 = vunpack.c.l.b16 %v13710
  %v14146 = vunpack.c.h.b16 %v13710
  %v14147 = vunpack.c.l.b16 %v13711
  %v14148 = vunpack.c.h.b16 %v13711
  %v14149 = vunpack.c.l.b16 %v13712
  %v14150 = vunpack.c.h.b16 %v13712
  %v14151 = vunpack.c.l.b16 %v13713
  %v14152 = vunpack.c.h.b16 %v13713
  %v14153 = vunpack.c.l.b16 %v13714
  %v14154 = vunpack.c.h.b16 %v13714
  %v14155 = vunpack.c.l.b16 %v13715
  %v14156 = vunpack.c.h.b16 %v13715
  %v14157 = vunpack.c.l.b16 %v13716
  %v14158 = vunpack.c.h.b16 %v13716
  %v14159 = vunpack.c.l.b16 %v13717
  %v14160 = vunpack.c.h.b16 %v13717
  %v14161 = vunpack.c.l.b16 %v13718
  %v14162 = vunpack.c.h.b16 %v13718
  %v14163 = vunpack.c.l.b16 %v13719
  %v14164 = vunpack.c.h.b16 %v13719
  %v14165 = vunpack.c.l.b16 %v13720
  %v14166 = vunpack.c.h.b16 %v13720
  %v14167 = vunpack.c.l.b16 %v13721
  %v14168 = vunpack.c.h.b16 %v13721
  %v14169 = vunpack.c.l.b16 %v13722
  %v14170 = vunpack.c.h.b16 %v13722
  %v14171 = vunpack.c.l.b16 %v13723
  %v14172 = vunpack.c.h.b16 %v13723
  %v14173 = vunpack.c.l.b16 %v13724
  %v14174 = vunpack.c.h.b16 %v13724
  %v14175 = vunpack.c.l.b16 %v13725
  %v14176 = vunpack.c.h.b16 %v13725
  %v14177 = vunpack.c.l.b16 %v13726
  %v14178 = vunpack.c.h.b16 %v13726
  %v14179 = vunpack.c.l.b16 %v13727
  %v14180 = vunpack.c.h.b16 %v13727
  %v14181 = vunpack.c.l.b16 %v13728
  %v14182 = vunpack.c.h.b16 %v13728
  %v14183 = vunpack.c.l.b16 %v13729
  %v14184 = vunpack.c.h.b16 %v13729
  %v14185 = vunpack.c.l.b16 %v13730
  %v14186 = vunpack.c.h.b16 %v13730
  %v14187 = vunpack.c.l.b16 %v13731
  %v14188 = vunpack.c.h.b16 %v13731
  %v14189 = vunpack.c.l.b16 %v13732
  %v14190 = vunpack.c.h.b16 %v13732
  %v14191 = vunpack.c.l.b16 %v13733
  %v14192 = vunpack.c.h.b16 %v13733
  %v14193 = vunpack.c.l.b16 %v13734
  %v14194 = vunpack.c.h.b16 %v13734
  %v14195 = vunpack.c.l.b16 %v13735
  %v14196 = vunpack.c.h.b16 %v13735
  %v14197 = vunpack.c.l.b16 %v13736
  %v14198 = vunpack.c.h.b16 %v13736
  %v14199 = vunpack.c.l.b16 %v13737
  %v14200 = vunpack.c.h.b16 %v13737
  %v14201 = vunpack.c.l.b16 %v13738
  %v14202 = vunpack.c.h.b16 %v13738
  %v14203 = vunpack.c.l.b16 %v13739
  %v14204 = vunpack.c.h.b16 %v13739
  %v14205 = vunpack.c.l.b16 %v13740
  %v14206 = vunpack.c.h.b16 %v13740
  %v14207 = vunpack.c.l.b16 %v13741
  %v14208 = vunpack.c.h.b16 %v13741
  %v14209 = vunpack.c.l.b16 %v13742
  %v14210 = vunpack.c.h.b16 %v13742
  %v14211 = vunpack.c.l.b16 %v13743
  %v14212 = vunpack.c.h.b16 %v13743
  %v14213 = vunpack.c.l.b16 %v13744
  %v14214 = vunpack.c.h.b16 %v13744
  %v14215 = vunpack.c.l.b16 %v13745
  %v14216 = vunpack.c.h.b16 %v13745
  %v14217 = vunpack.c.l.b16 %v13746
  %v14218 = vunpack.c.h.b16 %v13746
  %v14219 = vunpack.c.l.b16 %v13747
  %v14220 = vunpack.c.h.b16 %v13747
  %v14221 = vunpack.c.l.b16 %v13748
  %v14222 = vunpack.c.h.b16 %v13748
  %v14223 = vunpack.c.l.b16 %v13749
  %v14224 = vunpack.c.h.b16 %v13749
  %v14225 = vunpack.c.l.b16 %v13750
  %v14226 = vunpack.c.h.b16 %v13750
  %v14227 = vunpack.c.l.b16 %v13751
  %v14228 = vunpack.c.h.b16 %v13751
  %v14229 = vunpack.c.l.b16 %v13752
  %v14230 = vunpack.c.h.b16 %v13752
  %v14231 = vunpack.c.l.b16 %v13753
  %v14232 = vunpack.c.h.b16 %v13753
  %v14233 = vunpack.c.l.b16 %v13754
  %v14234 = vunpack.c.h.b16 %v13754
  %v14235 = vunpack.c.l.b16 %v13755
  %v14236 = vunpack.c.h.b16 %v13755
  %v14237 = vunpack.c.l.b16 %v13756
  %v14238 = vunpack.c.h.b16 %v13756
  %v14239 = vunpack.c.l.b16 %v13757
  %v14240 = vunpack.c.h.b16 %v13757
  %v14241 = vunpack.c.l.b16 %v13758
  %v14242 = vunpack.c.h.b16 %v13758
  %v14243 = vunpack.c.l.b16 %v13759
  %v14244 = vunpack.c.h.b16 %v13759
  %v14245 = vunpack.c.l.b16 %v13760
  %v14246 = vunpack.c.h.b16 %v13760
  %v14247 = vunpack.c.l.b16 %v13761
  %v14248 = vunpack.c.h.b16 %v13761
  %v14249 = vunpack.c.l.b16 %v13762
  %v14250 = vunpack.c.h.b16 %v13762
  %v14251 = vunpack.c.l.b16 %v13763
  %v14252 = vunpack.c.h.b16 %v13763
  %v14253 = vunpack.c.l.b16 %v13764
  %v14254 = vunpack.c.h.b16 %v13764
  %v14255 = vunpack.c.l.b16 %v13765
  %v14256 = vunpack.c.h.b16 %v13765
  %v14257 = vunpack.c.l.b16 %v13766
  %v14258 = vunpack.c.h.b16 %v13766
  %v14259 = vunpack.c.l.b16 %v13767
  %v14260 = vunpack.c.h.b16 %v13767
  %v14261 = vunpack.c.l.b16 %v13768
  %v14262 = vunpack.c.h.b16 %v13768
  %v14263 = vunpack.c.l.b16 %v13769
  %v14264 = vunpack.c.h.b16 %v13769
  %v14265 = vunpack.c.l.b16 %v13770
  %v14266 = vunpack.c.h.b16 %v13770
  %v14267 = vunpack.c.l.b16 %v13771
  %v14268 = vunpack.c.h.b16 %v13771
  %v14269 = vunpack.c.l.b16 %v13772
  %v14270 = vunpack.c.h.b16 %v13772
  %v14271 = vunpack.c.l.b16 %v13773
  %v14272 = vunpack.c.h.b16 %v13773
  %v14273 = vunpack.c.l.b16 %v13774
  %v14274 = vunpack.c.h.b16 %v13774
  %v14275 = vunpack.c.l.b16 %v13775
  %v14276 = vunpack.c.h.b16 %v13775
  %v14277 = vunpack.c.l.b16 %v13776
  %v14278 = vunpack.c.h.b16 %v13776
  %v14279 = vunpack.c.l.b16 %v13777
  %v14280 = vunpack.c.h.b16 %v13777
  %v14281 = vunpack.c.l.b16 %v13778
  %v14282 = vunpack.c.h.b16 %v13778
  %v14283 = vunpack.c.l.b16 %v13779
  %v14284 = vunpack.c.h.b16 %v13779
  %v14285 = vunpack.c.l.b16 %v13780
  %v14286 = vunpack.c.h.b16 %v13780
  %v14287 = vunpack.c.l.b16 %v13781
  %v14288 = vunpack.c.h.b16 %v13781
  %v14289 = vunpack.c.l.b16 %v13782
  %v14290 = vunpack.c.h.b16 %v13782
  %v14291 = vunpack.c.l.b16 %v13783
  %v14292 = vunpack.c.h.b16 %v13783
  %v14293 = vunpack.c.l.b16 %v13784
  %v14294 = vunpack.c.h.b16 %v13784
  %v14295 = vunpack.c.l.b16 %v13785
  %v14296 = vunpack.c.h.b16 %v13785
  %v14297 = vunpack.c.l.b16 %v13786
  %v14298 = vunpack.c.h.b16 %v13786
  %v14299 = vunpack.c.l.b16 %v13787
  %v14300 = vunpack.c.h.b16 %v13787
  %v14301 = vunpack.c.l.b16 %v13788
  %v14302 = vunpack.c.h.b16 %v13788
  %v14303 = vunpack.c.l.b16 %v13789
  %v14304 = vunpack.c.h.b16 %v13789
  %v14305 = vunpack.c.l.b16 %v13790
  %v14306 = vunpack.c.h.b16 %v13790
  %v14307 = vunpack.c.l.b16 %v13791
  %v14308 = vunpack.c.h.b16 %v13791
  %v14309 = vunpack.c.l.b16 %v13792
  %v14310 = vunpack.c.h.b16 %v13792
  %v14311 = vunpack.c.l.b16 %v13793
  %v14312 = vunpack.c.h.b16 %v13793
  %v14313 = vunpack.c.l.b16 %v13794
  %v14314 = vunpack.c.h.b16 %v13794
  %v14315 = vunpack.c.l.b16 %v13795
  %v14316 = vunpack.c.h.b16 %v13795
  %v14317 = vunpack.c.l.b16 %v13796
  %v14318 = vunpack.c.h.b16 %v13796
  %v14319 = vunpack.c.l.b16 %v13797
  %v14320 = vunpack.c.h.b16 %v13797
  %v14321 = vunpack.c.l.b16 %v13798
  %v14322 = vunpack.c.h.b16 %v13798
  %v14323 = vunpack.c.l.b16 %v13799
  %v14324 = vunpack.c.h.b16 %v13799
  %v14325 = vunpack.c.l.b16 %v13800
  %v14326 = vunpack.c.h.b16 %v13800
  %v14327 = vunpack.c.l.b16 %v13801
  %v14328 = vunpack.c.h.b16 %v13801
  %v14329 = vunpack.c.l.b16 %v13802
  %v14330 = vunpack.c.h.b16 %v13802
  %v14331 = vunpack.c.l.b16 %v13803
  %v14332 = vunpack.c.h.b16 %v13803
  %v14333 = vunpack.c.l.b16 %v13804
  %v14334 = vunpack.c.h.b16 %v13804
  %v14335 = vunpack.c.l.b16 %v13805
  %v14336 = vunpack.c.h.b16 %v13805
  %v14337 = vunpack.c.l.b16 %v13806
  %v14338 = vunpack.c.h.b16 %v13806
  %v14339 = vunpack.c.l.b16 %v13807
  %v14340 = vunpack.c.h.b16 %v13807
  %v14341 = vunpack.c.l.b16 %v13808
  %v14342 = vunpack.c.h.b16 %v13808
  %v14343 = vunpack.c.l.b16 %v13809
  %v14344 = vunpack.c.h.b16 %v13809
  %v14345 = vunpack.c.l.b16 %v13810
  %v14346 = vunpack.c.h.b16 %v13810
  %v14347 = vunpack.c.l.b16 %v13811
  %v14348 = vunpack.c.h.b16 %v13811
  %v14349 = vunpack.c.l.b16 %v13812
  %v14350 = vunpack.c.h.b16 %v13812
  %v14351 = vunpack.c.l.b16 %v13813
  %v14352 = vunpack.c.h.b16 %v13813
  %v14353 = vunpack.c.l.b16 %v13814
  %v14354 = vunpack.c.h.b16 %v13814
  %v14355 = vunpack.c.l.b16 %v13815
  %v14356 = vunpack.c.h.b16 %v13815
  %v14357 = vunpack.c.l.b16 %v13816
  %v14358 = vunpack.c.h.b16 %v13816
  %v14359 = vunpack.c.l.b16 %v13817
  %v14360 = vunpack.c.h.b16 %v13817
  %v14361 = vunpack.c.l.b16 %v13818
  %v14362 = vunpack.c.h.b16 %v13818
  %v14363 = vunpack.c.l.b16 %v13819
  %v14364 = vunpack.c.h.b16 %v13819
  %v14365 = vunpack.c.l.b16 %v13820
  %v14366 = vunpack.c.h.b16 %v13820
  %v14367 = vunpack.c.l.b16 %v13821
  %v14368 = vunpack.c.h.b16 %v13821
  %v14369 = vunpack.c.l.b16 %v13822
  %v14370 = vunpack.c.h.b16 %v13822
  %v14371 = vunpack.c.l.b16 %v13823
  %v14372 = vunpack.c.h.b16 %v13823
  %v14373 = vunpack.c.l.b16 %v13824
  %v14374 = vunpack.c.h.b16 %v13824
  %v14375 = vunpack.c.l.b16 %v13825
  %v14376 = vunpack.c.h.b16 %v13825
  %v14377 = vunpack.c.l.b16 %v13826
  %v14378 = vunpack.c.h.b16 %v13826
  %v14379 = vunpack.c.l.b16 %v13827
  %v14380 = vunpack.c.h.b16 %v13827
  %v14381 = vunpack.c.l.b16 %v13828
  %v14382 = vunpack.c.h.b16 %v13828
  %v14383 = vunpack.c.l.b16 %v13829
  %v14384 = vunpack.c.h.b16 %v13829
  %v14385 = vunpack.c.l.b16 %v13830
  %v14386 = vunpack.c.h.b16 %v13830
  %v14387 = vunpack.c.l.b16 %v13831
  %v14388 = vunpack.c.h.b16 %v13831
  %v14389 = vunpack.c.l.b16 %v13832
  %v14390 = vunpack.c.h.b16 %v13832
  %v14391 = vunpack.c.l.b16 %v13833
  %v14392 = vunpack.c.h.b16 %v13833
  %v14393 = vunpack.c.l.b16 %v13834
  %v14394 = vunpack.c.h.b16 %v13834
  %v14395 = vunpack.c.l.b16 %v13835
  %v14396 = vunpack.c.h.b16 %v13835
  %v14397 = vunpack.c.l.b16 %v13836
  %v14398 = vunpack.c.h.b16 %v13836
  %v14399 = vunpack.c.l.b16 %v13837
  %v14400 = vunpack.c.h.b16 %v13837
  %v14401 = vunpack.c.l.b16 %v13838
  %v14402 = vunpack.c.h.b16 %v13838
  %v14403 = vunpack.c.l.b16 %v13839
  %v14404 = vunpack.c.h.b16 %v13839
  %v14405 = vunpack.c.l.b16 %v13840
  %v14406 = vunpack.c.h.b16 %v13840
  %v14407 = vunpack.c.l.b16 %v13841
  %v14408 = vunpack.c.h.b16 %v13841
  %v14409 = vunpack.c.l.b16 %v13842
  %v14410 = vunpack.c.h.b16 %v13842
  %v14411 = vunpack.c.l.b16 %v13843
  %v14412 = vunpack.c.h.b16 %v13843
  %v14413 = vunpack.c.l.b16 %v13844
  %v14414 = vunpack.c.h.b16 %v13844
  %v14415 = vunpack.c.l.b16 %v13845
  %v14416 = vunpack.c.h.b16 %v13845
  %v14417 = vunpack.c.l.b16 %v13846
  %v14418 = vunpack.c.h.b16 %v13846
  %v14419 = vunpack.c.l.b16 %v13847
  %v14420 = vunpack.c.h.b16 %v13847
  %v14421 = vunpack.c.l.b16 %v13848
  %v14422 = vunpack.c.h.b16 %v13848
  %v14423 = vunpack.c.l.b16 %v13849
  %v14424 = vunpack.c.h.b16 %v13849
  %v14425 = vunpack.c.l.b16 %v13850
  %v14426 = vunpack.c.h.b16 %v13850
  %v14427 = vunpack.c.l.b16 %v13851
  %v14428 = vunpack.c.h.b16 %v13851
  %v14429 = vunpack.c.l.b16 %v13852
  %v14430 = vunpack.c.h.b16 %v13852
  %v14431 = vunpack.c.l.b16 %v13853
  %v14432 = vunpack.c.h.b16 %v13853
  %v14433 = vunpack.c.l.b16 %v13854
  %v14434 = vunpack.c.h.b16 %v13854
  %v14435 = vunpack.c.l.b16 %v13855
  %v14436 = vunpack.c.h.b16 %v13855
  %v14437 = vunpack.c.l.b16 %v13856
  %v14438 = vunpack.c.h.b16 %v13856
  %v14439 = vunpack.c.l.b16 %v13857
  %v14440 = vunpack.c.h.b16 %v13857
  %v14441 = vunpack.c.l.b16 %v13858
  %v14442 = vunpack.c.h.b16 %v13858
  %v14443 = vunpack.c.l.b16 %v13859
  %v14444 = vunpack.c.h.b16 %v13859
  %v14445 = vunpack.c.l.b16 %v13860
  %v14446 = vunpack.c.h.b16 %v13860
  %v14447 = vunpack.c.l.b16 %v13861
  %v14448 = vunpack.c.h.b16 %v13861
  %v14449 = vunpack.c.l.b16 %v13862
  %v14450 = vunpack.c.h.b16 %v13862
  %v14451 = vunpack.c.l.b16 %v13863
  %v14452 = vunpack.c.h.b16 %v13863
  %v14453 = vunpack.c.l.b16 %v13864
  %v14454 = vunpack.c.h.b16 %v13864
  %v14455 = vunpack.c.l.b16 %v13865
  %v14456 = vunpack.c.h.b16 %v13865
  %v14457 = vunpack.c.l.b16 %v13866
  %v14458 = vunpack.c.h.b16 %v13866
  %v14459 = vunpack.c.l.b16 %v13867
  %v14460 = vunpack.c.h.b16 %v13867
  %v14461 = vunpack.c.l.b16 %v13868
  %v14462 = vunpack.c.h.b16 %v13868
  %v14463 = vunpack.c.l.b16 %v13869
  %v14464 = vunpack.c.h.b16 %v13869
  %v14465 = vunpack.c.l.b16 %v13870
  %v14466 = vunpack.c.h.b16 %v13870
  %v14467 = vunpack.c.l.b16 %v13871
  %v14468 = vunpack.c.h.b16 %v13871
  %v14469 = vunpack.c.l.b16 %v13872
  %v14470 = vunpack.c.h.b16 %v13872
  %v14471 = vunpack.c.l.b16 %v13873
  %v14472 = vunpack.c.h.b16 %v13873
  %v14473 = vunpack.c.l.b16 %v13874
  %v14474 = vunpack.c.h.b16 %v13874
  %v14475 = vunpack.c.l.b16 %v13875
  %v14476 = vunpack.c.h.b16 %v13875
  %v14477 = vunpack.c.l.b16 %v13876
  %v14478 = vunpack.c.h.b16 %v13876
  %v14479 = vunpack.c.l.b16 %v13877
  %v14480 = vunpack.c.h.b16 %v13877
  %v14481 = vunpack.c.l.b16 %v13878
  %v14482 = vunpack.c.h.b16 %v13878
  %v14483 = vunpack.c.l.b16 %v13879
  %v14484 = vunpack.c.h.b16 %v13879
  %v14485 = vunpack.c.l.b16 %v13880
  %v14486 = vunpack.c.h.b16 %v13880
  %v14487 = vunpack.c.l.b16 %v13881
  %v14488 = vunpack.c.h.b16 %v13881
  %v14489 = vunpack.c.l.b16 %v13882
  %v14490 = vunpack.c.h.b16 %v13882
  %v14491 = vunpack.c.l.b16 %v13883
  %v14492 = vunpack.c.h.b16 %v13883
  %v14493 = vunpack.c.l.b16 %v13884
  %v14494 = vunpack.c.h.b16 %v13884
  %v14495 = vunpack.c.l.b16 %v13885
  %v14496 = vunpack.c.h.b16 %v13885
  %v14497 = vunpack.c.l.b16 %v13886
  %v14498 = vunpack.c.h.b16 %v13886
  %v14499 = vunpack.c.l.b16 %v13887
  %v14500 = vunpack.c.h.b16 %v13887
  %v14501 = vunpack.c.l.b16 %v13888
  %v14502 = vunpack.c.h.b16 %v13888
  %v14503 = vunpack.c.l.b16 %v13889
  %v14504 = vunpack.c.h.b16 %v13889
  %v14505 = vunpack.c.l.b16 %v13890
  %v14506 = vunpack.c.h.b16 %v13890
  %v14507 = vunpack.c.l.b16 %v13891
  %v14508 = vunpack.c.h.b16 %v13891
  %v14509 = vunpack.c.l.b16 %v13892
  %v14510 = vunpack.c.h.b16 %v13892
  %v14511 = vunpack.c.l.b16 %v13893
  %v14512 = vunpack.c.h.b16 %v13893
  %v14513 = vunpack.c.l.b16 %v13894
  %v14514 = vunpack.c.h.b16 %v13894
  %v14515 = vunpack.c.l.b16 %v13895
  %v14516 = vunpack.c.h.b16 %v13895
  %v14517 = vunpack.c.l.b16 %v13896
  %v14518 = vunpack.c.h.b16 %v13896
  %v14519 = vpack.c.b16 %v14123, %v14119
  %v14520 = vpack.c.b16 %v14124, %v14120
  %v14521 = vpack.c.b16 %v14125, %v14121
  %v14522 = vpack.c.b16 %v14126, %v14122
  %v14523 = vpack.c.b16 %v14131, %v14127
  %v14524 = vpack.c.b16 %v14132, %v14128
  %v14525 = vpack.c.b16 %v14133, %v14129
  %v14526 = vpack.c.b16 %v14134, %v14130
  %v14527 = vpack.c.b16 %v14139, %v14135
  %v14528 = vpack.c.b16 %v14140, %v14136
  %v14529 = vpack.c.b16 %v14141, %v14137
  %v14530 = vpack.c.b16 %v14142, %v14138
  %v14531 = vpack.c.b16 %v14147, %v14143
  %v14532 = vpack.c.b16 %v14148, %v14144
  %v14533 = vpack.c.b16 %v14149, %v14145
  %v14534 = vpack.c.b16 %v14150, %v14146
  %v14535 = vpack.c.b16 %v14155, %v14151
  %v14536 = vpack.c.b16 %v14156, %v14152
  %v14537 = vpack.c.b16 %v14157, %v14153
  %v14538 = vpack.c.b16 %v14158, %v14154
  %v14539 = vpack.c.b16 %v14163, %v14159
  %v14540 = vpack.c.b16 %v14164, %v14160
  %v14541 = vpack.c.b16 %v14165, %v14161
  %v14542 = vpack.c.b16 %v14166, %v14162
  %v14543 = vpack.c.b16 %v14171, %v14167
  %v14544 = vpack.c.b16 %v14172, %v14168
  %v14545 = vpack.c.b16 %v14173, %v14169
  %v14546 = vpack.c.b16 %v14174, %v14170
  %v14547 = vpack.c.b16 %v14179, %v14175
  %v14548 = vpack.c.b16 %v14180, %v14176
  %v14549 = vpack.c.b16 %v14181, %v14177
  %v14550 = vpack.c.b16 %v14182, %v14178
  %v14551 = vpack.c.b16 %v14187, %v14183
  %v14552 = vpack.c.b16 %v14188, %v14184
  %v14553 = vpack.c.b16 %v14189, %v14185
  %v14554 = vpack.c.b16 %v14190, %v14186
  %v14555 = vpack.c.b16 %v14195, %v14191
  %v14556 = vpack.c.b16 %v14196, %v14192
  %v14557 = vpack.c.b16 %v14197, %v14193
  %v14558 = vpack.c.b16 %v14198, %v14194
  %v14559 = vpack.c.b16 %v14203, %v14199
  %v14560 = vpack.c.b16 %v14204, %v14200
  %v14561 = vpack.c.b16 %v14205, %v14201
  %v14562 = vpack.c.b16 %v14206, %v14202
  %v14563 = vpack.c.b16 %v14211, %v14207
  %v14564 = vpack.c.b16 %v14212, %v14208
  %v14565 = vpack.c.b16 %v14213, %v14209
  %v14566 = vpack.c.b16 %v14214, %v14210
  %v14567 = vpack.c.b16 %v14219, %v14215
  %v14568 = vpack.c.b16 %v14220, %v14216
  %v14569 = vpack.c.b16 %v14221, %v14217
  %v14570 = vpack.c.b16 %v14222, %v14218
  %v14571 = vpack.c.b16 %v14227, %v14223
  %v14572 = vpack.c.b16 %v14228, %v14224
  %v14573 = vpack.c.b16 %v14229, %v14225
  %v14574 = vpack.c.b16 %v14230, %v14226
  %v14575 = vpack.c.b16 %v14235, %v14231
  %v14576 = vpack.c.b16 %v14236, %v14232
  %v14577 = vpack.c.b16 %v14237, %v14233
  %v14578 = vpack.c.b16 %v14238, %v14234
  %v14579 = vpack.c.b16 %v14243, %v14239
  %v14580 = vpack.c.b16 %v14244, %v14240
  %v14581 = vpack.c.b16 %v14245, %v14241
  %v14582 = vpack.c.b16 %v14246, %v14242
  %v14583 = vpack.c.b16 %v14251, %v14247
  %v14584 = vpack.c.b16 %v14252, %v14248
  %v14585 = vpack.c.b16 %v14253, %v14249
  %v14586 = vpack.c.b16 %v14254, %v14250
  %v14587 = vpack.c.b16 %v14259, %v14255
  %v14588 = vpack.c.b16 %v14260, %v14256
  %v14589 = vpack.c.b16 %v14261, %v14257
  %v14590 = vpack.c.b16 %v14262, %v14258
  %v14591 = vpack.c.b16 %v14267, %v14263
  %v14592 = vpack.c.b16 %v14268, %v14264
  %v14593 = vpack.c.b16 %v14269, %v14265
  %v14594 = vpack.c.b16 %v14270, %v14266
  %v14595 = vpack.c.b16 %v14275, %v14271
  %v14596 = vpack.c.b16 %v14276, %v14272
  %v14597 = vpack.c.b16 %v14277, %v14273
  %v14598 = vpack.c.b16 %v14278, %v14274
  %v14599 = vpack.c.b16 %v14283, %v14279
  %v14600 = vpack.c.b16 %v14284, %v14280
  %v14601 = vpack.c.b16 %v14285, %v14281
  %v14602 = vpack.c.b16 %v14286, %v14282
  %v14603 = vpack.c.b16 %v14291, %v14287
  %v14604 = vpack.c.b16 %v14292, %v14288
  %v14605 = vpack.c.b16 %v14293, %v14289
  %v14606 = vpack.c.b16 %v14294, %v14290
  %v14607 = vpack.c.b16 %v14299, %v14295
  %v14608 = vpack.c.b16 %v14300, %v14296
  %v14609 = vpack.c.b16 %v14301, %v14297
  %v14610 = vpack.c.b16 %v14302, %v14298
  %v14611 = vpack.c.b16 %v14307, %v14303
  %v14612 = vpack.c.b16 %v14308, %v14304
  %v14613 = vpack.c.b16 %v14309, %v14305
  %v14614 = vpack.c.b16 %v14310, %v14306
  %v14615 = vpack.c.b16 %v14315, %v14311
  %v14616 = vpack.c.b16 %v14316, %v14312
  %v14617 = vpack.c.b16 %v14317, %v14313
  %v14618 = vpack.c.b16 %v14318, %v14314
  %v14619 = vpack.c.b16 %v14323, %v14319
  %v14620 = vpack.c.b16 %v14324, %v14320
  %v14621 = vpack.c.b16 %v14325, %v14321
  %v14622 = vpack.c.b16 %v14326, %v14322
  %v14623 = vpack.c.b16 %v14331, %v14327
  %v14624 = vpack.c.b16 %v14332, %v14328
  %v14625 = vpack.c.b16 %v14333, %v14329
  %v14626 = vpack.c.b16 %v14334, %v14330
  %v14627 = vpack.c.b16 %v14339, %v14335
  %v14628 = vpack.c.b16 %v14340, %v14336
  %v14629 = vpack.c.b16 %v14341, %v14337
  %v14630 = vpack.c.b16 %v14342, %v14338
  %v14631 = vpack.c.b16 %v14347, %v14343
  %v14632 = vpack.c.b16 %v14348, %v14344
  %v14633 = vpack.c.b16 %v14349, %v14345
  %v14634 = vpack.c.b16 %v14350, %v14346
  %v14635 = vpack.c.b16 %v14355, %v14351
  %v14636 = vpack.c.b16 %v14356, %v14352
  %v14637 = vpack.c.b16 %v14357, %v14353
  %v14638 = vpack.c.b16 %v14358, %v14354
  %v14639 = vpack.c.b16 %v14363, %v14359
  %v14640 = vpack.c.b16 %v14364, %v14360
  %v14641 = vpack.c.b16 %v14365, %v14361
  %v14642 = vpack.c.b16 %v14366, %v14362
  %v14643 = vpack.c.b16 %v14371, %v14367
  %v14644 = vpack.c.b16 %v14372, %v14368
  %v14645 = vpack.c.b16 %v14373, %v14369
  %v14646 = vpack.c.b16 %v14374, %v14370
  %v14647 = vpack.c.b16 %v14379, %v14375
  %v14648 = vpack.c.b16 %v14380, %v14376
  %v14649 = vpack.c.b16 %v14381, %v14377
  %v14650 = vpack.c.b16 %v14382, %v14378
  %v14651 = vpack.c.b16 %v14387, %v14383
  %v14652 = vpack.c.b16 %v14388, %v14384
  %v14653 = vpack.c.b16 %v14389, %v14385
  %v14654 = vpack.c.b16 %v14390, %v14386
  %v14655 = vpack.c.b16 %v14395, %v14391
  %v14656 = vpack.c.b16 %v14396, %v14392
  %v14657 = vpack.c.b16 %v14397, %v14393
  %v14658 = vpack.c.b16 %v14398, %v14394
  %v14659 = vpack.c.b16 %v14403, %v14399
  %v14660 = vpack.c.b16 %v14404, %v14400
  %v14661 = vpack.c.b16 %v14405, %v14401
  %v14662 = vpack.c.b16 %v14406, %v14402
  %v14663 = vpack.c.b16 %v14411, %v14407
  %v14664 = vpack.c.b16 %v14412, %v14408
  %v14665 = vpack.c.b16 %v14413, %v14409
  %v14666 = vpack.c.b16 %v14414, %v14410
  %v14667 = vpack.c.b16 %v14419, %v14415
  %v14668 = vpack.c.b16 %v14420, %v14416
  %v14669 = vpack.c.b16 %v14421, %v14417
  %v14670 = vpack.c.b16 %v14422, %v14418
  %v14671 = vpack.c.b16 %v14427, %v14423
  %v14672 = vpack.c.b16 %v14428, %v14424
  %v14673 = vpack.c.b16 %v14429, %v14425
  %v14674 = vpack.c.b16 %v14430, %v14426
  %v14675 = vpack.c.b16 %v14435, %v14431
  %v14676 = vpack.c.b16 %v14436, %v14432
  %v14677 = vpack.c.b16 %v14437, %v14433
  %v14678 = vpack.c.b16 %v14438, %v14434
  %v14679 = vpack.c.b16 %v14443, %v14439
  %v14680 = vpack.c.b16 %v14444, %v14440
  %v14681 = vpack.c.b16 %v14445, %v14441
  %v14682 = vpack.c.b16 %v14446, %v14442
  %v14683 = vpack.c.b16 %v14451, %v14447
  %v14684 = vpack.c.b16 %v14452, %v14448
  %v14685 = vpack.c.b16 %v14453, %v14449
  %v14686 = vpack.c.b16 %v14454, %v14450
  %v14687 = vpack.c.b16 %v14459, %v14455
  %v14688 = vpack.c.b16 %v14460, %v14456
  %v14689 = vpack.c.b16 %v14461, %v14457
  %v14690 = vpack.c.b16 %v14462, %v14458
  %v14691 = vpack.c.b16 %v14467, %v14463
  %v14692 = vpack.c.b16 %v14468, %v14464
  %v14693 = vpack.c.b16 %v14469, %v14465
  %v14694 = vpack.c.b16 %v14470, %v14466
  %v14695 = vpack.c.b16 %v14475, %v14471
  %v14696 = vpack.c.b16 %v14476, %v14472
  %v14697 = vpack.c.b16 %v14477, %v14473
  %v14698 = vpack.c.b16 %v14478, %v14474
  %v14699 = vpack.c.b16 %v14483, %v14479
  %v14700 = vpack.c.b16 %v14484, %v14480
  %v14701 = vpack.c.b16 %v14485, %v14481
  %v14702 = vpack.c.b16 %v14486, %v14482
  %v14703 = vpack.c.b16 %v14491, %v14487
  %v14704 = vpack.c.b16 %v14492, %v14488
  %v14705 = vpack.c.b16 %v14493, %v14489
  %v14706 = vpack.c.b16 %v14494, %v14490
  %v14707 = vpack.c.b16 %v14499, %v14495
  %v14708 = vpack.c.b16 %v14500, %v14496
  %v14709 = vpack.c.b16 %v14501, %v14497
  %v14710 = vpack.c.b16 %v14502, %v14498
  %v14711 = vpack.c.b16 %v14507, %v14503
  %v14712 = vpack.c.b16 %v14508, %v14504
  %v14713 = vpack.c.b16 %v14509, %v14505
  %v14714 = vpack.c.b16 %v14510, %v14506
  %v14715 = vpack.c.b16 %v14515, %v14511
  %v14716 = vpack.c.b16 %v14516, %v14512
  %v14717 = vpack.c.b16 %v14517, %v14513
  %v14718 = vpack.c.b16 %v14518, %v14514
  %v14920 = vsel %vm9913, %v13594, 0
  %14922 = vmatprep.subr.bf16.mxu0 %v14548
  %14923 = vmatpush1.bf16.msra.mxu0 %v14547
  %14924 = vmatprep.subr.bf16.mxu0 %v14544
  %14925 = vmatpush1.bf16.msra.mxu0 %v14543
  %14926 = vmatprep.subr.bf16.mxu0 %v14540
  %14927 = vmatpush1.bf16.msra.mxu0 %v14539
  %14928 = vmatprep.subr.bf16.mxu0 %v14536
  %14929 = vmatpush1.bf16.msra.mxu0 %v14535
  %14930 = vmatprep.subr.bf16.mxu0 %v14532
  %14931 = vmatpush1.bf16.msra.mxu0 %v14531
  %14932 = vmatprep.subr.bf16.mxu0 %v14528
  %14933 = vmatpush1.bf16.msra.mxu0 %v14527
  %14934 = vmatprep.subr.bf16.mxu0 %v14524
  %14935 = vmatpush1.bf16.msra.mxu0 %v14523
  %14936 = vmatprep.subr.bf16.mxu0 %v14520
  %14937 = vmatpush1.bf16.msra.mxu0 %v14519
  %14938 = vmatprep.subr.bf16.mxu0 %v14580
  %14939 = vmatpush2.bf16.msra.mxu0 %v14579
  %14940 = vmatprep.subr.bf16.mxu0 %v14576
  %14941 = vmatpush2.bf16.msra.mxu0 %v14575
  %14942 = vmatprep.subr.bf16.mxu0 %v14572
  %14943 = vmatpush2.bf16.msra.mxu0 %v14571
  %14944 = vmatprep.subr.bf16.mxu0 %v14568
  %14945 = vmatpush2.bf16.msra.mxu0 %v14567
  %14946 = vmatprep.subr.bf16.mxu0 %v14564
  %14947 = vmatpush2.bf16.msra.mxu0 %v14563
  %14948 = vmatprep.subr.bf16.mxu0 %v14560
  %14949 = vmatpush2.bf16.msra.mxu0 %v14559
  %14950 = vmatprep.subr.bf16.mxu0 %v14556
  %14951 = vmatpush2.bf16.msra.mxu0 %v14555
  %14952 = vmatprep.subr.bf16.mxu0 %v14552
  %14953 = vmatpush2.bf16.msra.mxu0 %v14551
  %14954 = vmatprep.mubr.bf16.mxu0 %v13645
  %14955 = vmatmul.mubr.bf16.gmra.mxu0 %v13637
  %v14956 = vpop.f32.mrf.mxu0
  %v14957 = vadd.f32 %v13902, %v14956
  %v14958 = vpop.f32.mrf.mxu0
  %v14959 = vadd.f32 %v13906, %v14958
  %v14960 = vpop.f32.mrf.mxu0
  %v14961 = vadd.f32 %v13902, %v14960
  %v14962 = vpop.f32.mrf.mxu0
  %v14963 = vadd.f32 %v13906, %v14962
  %14964 = vdwg.mxu0
  %14965 = vmatprep.subr.bf16.mxu0 %v14612
  %14966 = vmatpush1.bf16.msra.mxu0 %v14611
  %14967 = vmatprep.subr.bf16.mxu0 %v14608
  %14968 = vmatpush1.bf16.msra.mxu0 %v14607
  %14969 = vmatprep.subr.bf16.mxu0 %v14604
  %14970 = vmatpush1.bf16.msra.mxu0 %v14603
  %14971 = vmatprep.subr.bf16.mxu0 %v14600
  %14972 = vmatpush1.bf16.msra.mxu0 %v14599
  %14973 = vmatprep.subr.bf16.mxu0 %v14596
  %14974 = vmatpush1.bf16.msra.mxu0 %v14595
  %14975 = vmatprep.subr.bf16.mxu0 %v14592
  %14976 = vmatpush1.bf16.msra.mxu0 %v14591
  %14977 = vmatprep.subr.bf16.mxu0 %v14588
  %14978 = vmatpush1.bf16.msra.mxu0 %v14587
  %14979 = vmatprep.subr.bf16.mxu0 %v14584
  %14980 = vmatpush1.bf16.msra.mxu0 %v14583
  %14981 = vmatprep.subr.bf16.mxu0 %v14644
  %14982 = vmatpush2.bf16.msra.mxu0 %v14643
  %14983 = vmatprep.subr.bf16.mxu0 %v14640
  %14984 = vmatpush2.bf16.msra.mxu0 %v14639
  %14985 = vmatprep.subr.bf16.mxu0 %v14636
  %14986 = vmatpush2.bf16.msra.mxu0 %v14635
  %14987 = vmatprep.subr.bf16.mxu0 %v14632
  %14988 = vmatpush2.bf16.msra.mxu0 %v14631
  %14989 = vmatprep.subr.bf16.mxu0 %v14628
  %14990 = vmatpush2.bf16.msra.mxu0 %v14627
  %14991 = vmatprep.subr.bf16.mxu0 %v14624
  %14992 = vmatpush2.bf16.msra.mxu0 %v14623
  %14993 = vmatprep.subr.bf16.mxu0 %v14620
  %14994 = vmatpush2.bf16.msra.mxu0 %v14619
  %14995 = vmatprep.subr.bf16.mxu0 %v14616
  %14996 = vmatpush2.bf16.msra.mxu0 %v14615
  %14997 = vmatprep.mubr.bf16.mxu0 %v13661
  %14998 = vmatmul.mubr.bf16.gmra.mxu0 %v13653
  %v14999 = vpop.f32.mrf.mxu0
  %v15000 = vadd.f32 %v14957, %v14999
  %v15001 = vpop.f32.mrf.mxu0
  %v15002 = vadd.f32 %v14959, %v15001
  %v15003 = vpop.f32.mrf.mxu0
  %v15004 = vadd.f32 %v14961, %v15003
  %v15005 = vpop.f32.mrf.mxu0
  %v15006 = vadd.f32 %v14963, %v15005
  %15007 = vdwg.mxu0
  %15008 = vmatprep.subr.bf16.mxu0 %v14676
  %15009 = vmatpush1.bf16.msra.mxu0 %v14675
  %15010 = vmatprep.subr.bf16.mxu0 %v14672
  %15011 = vmatpush1.bf16.msra.mxu0 %v14671
  %15012 = vmatprep.subr.bf16.mxu0 %v14668
  %15013 = vmatpush1.bf16.msra.mxu0 %v14667
  %15014 = vmatprep.subr.bf16.mxu0 %v14664
  %15015 = vmatpush1.bf16.msra.mxu0 %v14663
  %15016 = vmatprep.subr.bf16.mxu0 %v14660
  %15017 = vmatpush1.bf16.msra.mxu0 %v14659
  %15018 = vmatprep.subr.bf16.mxu0 %v14656
  %15019 = vmatpush1.bf16.msra.mxu0 %v14655
  %15020 = vmatprep.subr.bf16.mxu0 %v14652
  %15021 = vmatpush1.bf16.msra.mxu0 %v14651
  %15022 = vmatprep.subr.bf16.mxu0 %v14648
  %15023 = vmatpush1.bf16.msra.mxu0 %v14647
  %15024 = vmatprep.subr.bf16.mxu0 %v14708
  %15025 = vmatpush2.bf16.msra.mxu0 %v14707
  %15026 = vmatprep.subr.bf16.mxu0 %v14704
  %15027 = vmatpush2.bf16.msra.mxu0 %v14703
  %15028 = vmatprep.subr.bf16.mxu0 %v14700
  %15029 = vmatpush2.bf16.msra.mxu0 %v14699
  %15030 = vmatprep.subr.bf16.mxu0 %v14696
  %15031 = vmatpush2.bf16.msra.mxu0 %v14695
  %15032 = vmatprep.subr.bf16.mxu0 %v14692
  %15033 = vmatpush2.bf16.msra.mxu0 %v14691
  %15034 = vmatprep.subr.bf16.mxu0 %v14688
  %15035 = vmatpush2.bf16.msra.mxu0 %v14687
  %15036 = vmatprep.subr.bf16.mxu0 %v14684
  %15037 = vmatpush2.bf16.msra.mxu0 %v14683
  %15038 = vmatprep.subr.bf16.mxu0 %v14680
  %15039 = vmatpush2.bf16.msra.mxu0 %v14679
  %15040 = vmatprep.mubr.bf16.mxu0 %v13695
  %15041 = vmatmul.mubr.bf16.gmra.mxu0 %v13687
  %v15042 = vpop.f32.mrf.mxu0
  %v15043 = vadd.f32 %v15000, %v15042
  %v15044 = vpop.f32.mrf.mxu0
  %v15045 = vadd.f32 %v15002, %v15044
  %v15046 = vpop.f32.mrf.mxu0
  %v15047 = vadd.f32 %v15004, %v15046
  %v15048 = vpop.f32.mrf.mxu0
  %v15049 = vadd.f32 %v15006, %v15048
  %15050 = vdwg.mxu0
  %15051 = vmatprep.subr.bf16.mxu0 0
  %15052 = vmatpush1.bf16.msra.mxu0 0
  %15053 = vmatprep.subr.bf16.mxu0 0
  %15054 = vmatpush1.bf16.msra.mxu0 0
  %15055 = vmatprep.subr.bf16.mxu0 0
  %15056 = vmatpush1.bf16.msra.mxu0 0
  %15057 = vmatprep.subr.bf16.mxu0 0
  %15058 = vmatpush1.bf16.msra.mxu0 0
  %15059 = vmatprep.subr.bf16.mxu0 0
  %15060 = vmatpush1.bf16.msra.mxu0 0
  %15061 = vmatprep.subr.bf16.mxu0 0
  %15062 = vmatpush1.bf16.msra.mxu0 0
  %15063 = vmatprep.subr.bf16.mxu0 %v14716
  %15064 = vmatpush1.bf16.msra.mxu0 %v14715
  %15065 = vmatprep.subr.bf16.mxu0 %v14712
  %15066 = vmatpush1.bf16.msra.mxu0 %v14711
  %15067 = vmatprep.subr.bf16.mxu0 0
  %15068 = vmatpush2.bf16.msra.mxu0 0
  %15069 = vmatprep.subr.bf16.mxu0 0
  %15070 = vmatpush2.bf16.msra.mxu0 0
  %15071 = vmatprep.subr.bf16.mxu0 0
  %15072 = vmatpush2.bf16.msra.mxu0 0
  %15073 = vmatprep.subr.bf16.mxu0 0
  %15074 = vmatpush2.bf16.msra.mxu0 0
  %15075 = vmatprep.subr.bf16.mxu0 0
  %15076 = vmatpush2.bf16.msra.mxu0 0
  %15077 = vmatprep.subr.bf16.mxu0 0
  %15078 = vmatpush2.bf16.msra.mxu0 0
  %15079 = vmatprep.subr.bf16.mxu0 0
  %15080 = vmatpush2.bf16.msra.mxu0 0
  %15081 = vmatprep.subr.bf16.mxu0 0
  %15082 = vmatpush2.bf16.msra.mxu0 0
  %15083 = vmatprep.mubr.bf16.mxu0 0
  %15084 = vmatmul.mubr.bf16.gmra.mxu0 %v14920
  %v15085 = vpop.f32.mrf.mxu0
  %v15086 = vadd.f32 %v15043, %v15085
  %v15087 = vpop.f32.mrf.mxu0
  %v15088 = vadd.f32 %v15045, %v15087
  %v15089 = vpop.f32.mrf.mxu0
  %v15090 = vadd.f32 %v15047, %v15089
  %v15091 = vpop.f32.mrf.mxu0
  %v15092 = vadd.f32 %v15049, %v15091
  %15093 = vdwg.mxu0
  %15094 = vmatprep.subr.bf16.mxu0 %v14550
  %15095 = vmatpush1.bf16.msra.mxu0 %v14549
  %15096 = vmatprep.subr.bf16.mxu0 %v14546
  %15097 = vmatpush1.bf16.msra.mxu0 %v14545
  %15098 = vmatprep.subr.bf16.mxu0 %v14542
  %15099 = vmatpush1.bf16.msra.mxu0 %v14541
  %15100 = vmatprep.subr.bf16.mxu0 %v14538
  %15101 = vmatpush1.bf16.msra.mxu0 %v14537
  %15102 = vmatprep.subr.bf16.mxu0 %v14534
  %15103 = vmatpush1.bf16.msra.mxu0 %v14533
  %15104 = vmatprep.subr.bf16.mxu0 %v14530
  %15105 = vmatpush1.bf16.msra.mxu0 %v14529
  %15106 = vmatprep.subr.bf16.mxu0 %v14526
  %15107 = vmatpush1.bf16.msra.mxu0 %v14525
  %15108 = vmatprep.subr.bf16.mxu0 %v14522
  %15109 = vmatpush1.bf16.msra.mxu0 %v14521
  %15110 = vmatprep.subr.bf16.mxu0 %v14582
  %15111 = vmatpush2.bf16.msra.mxu0 %v14581
  %15112 = vmatprep.subr.bf16.mxu0 %v14578
  %15113 = vmatpush2.bf16.msra.mxu0 %v14577
  %15114 = vmatprep.subr.bf16.mxu0 %v14574
  %15115 = vmatpush2.bf16.msra.mxu0 %v14573
  %15116 = vmatprep.subr.bf16.mxu0 %v14570
  %15117 = vmatpush2.bf16.msra.mxu0 %v14569
  %15118 = vmatprep.subr.bf16.mxu0 %v14566
  %15119 = vmatpush2.bf16.msra.mxu0 %v14565
  %15120 = vmatprep.subr.bf16.mxu0 %v14562
  %15121 = vmatpush2.bf16.msra.mxu0 %v14561
  %15122 = vmatprep.subr.bf16.mxu0 %v14558
  %15123 = vmatpush2.bf16.msra.mxu0 %v14557
  %15124 = vmatprep.subr.bf16.mxu0 %v14554
  %15125 = vmatpush2.bf16.msra.mxu0 %v14553
  %15126 = vmatprep.mubr.bf16.mxu0 %v13645
  %15127 = vmatmul.mubr.bf16.gmra.mxu0 %v13637
  %v15128 = vpop.f32.mrf.mxu0
  %v15129 = vadd.f32 %v13910, %v15128
  %v15130 = vpop.f32.mrf.mxu0
  %v15131 = vadd.f32 %v13914, %v15130
  %v15132 = vpop.f32.mrf.mxu0
  %v15133 = vadd.f32 %v13910, %v15132
  %v15134 = vpop.f32.mrf.mxu0
  %v15135 = vadd.f32 %v13914, %v15134
  %15136 = vdwg.mxu0
  %15137 = vmatprep.subr.bf16.mxu0 %v14614
  %15138 = vmatpush1.bf16.msra.mxu0 %v14613
  %15139 = vmatprep.subr.bf16.mxu0 %v14610
  %15140 = vmatpush1.bf16.msra.mxu0 %v14609
  %15141 = vmatprep.subr.bf16.mxu0 %v14606
  %15142 = vmatpush1.bf16.msra.mxu0 %v14605
  %15143 = vmatprep.subr.bf16.mxu0 %v14602
  %15144 = vmatpush1.bf16.msra.mxu0 %v14601
  %15145 = vmatprep.subr.bf16.mxu0 %v14598
  %15146 = vmatpush1.bf16.msra.mxu0 %v14597
  %15147 = vmatprep.subr.bf16.mxu0 %v14594
  %15148 = vmatpush1.bf16.msra.mxu0 %v14593
  %15149 = vmatprep.subr.bf16.mxu0 %v14590
  %15150 = vmatpush1.bf16.msra.mxu0 %v14589
  %15151 = vmatprep.subr.bf16.mxu0 %v14586
  %15152 = vmatpush1.bf16.msra.mxu0 %v14585
  %15153 = vmatprep.subr.bf16.mxu0 %v14646
  %15154 = vmatpush2.bf16.msra.mxu0 %v14645
  %15155 = vmatprep.subr.bf16.mxu0 %v14642
  %15156 = vmatpush2.bf16.msra.mxu0 %v14641
  %15157 = vmatprep.subr.bf16.mxu0 %v14638
  %15158 = vmatpush2.bf16.msra.mxu0 %v14637
  %15159 = vmatprep.subr.bf16.mxu0 %v14634
  %15160 = vmatpush2.bf16.msra.mxu0 %v14633
  %15161 = vmatprep.subr.bf16.mxu0 %v14630
  %15162 = vmatpush2.bf16.msra.mxu0 %v14629
  %15163 = vmatprep.subr.bf16.mxu0 %v14626
  %15164 = vmatpush2.bf16.msra.mxu0 %v14625
  %15165 = vmatprep.subr.bf16.mxu0 %v14622
  %15166 = vmatpush2.bf16.msra.mxu0 %v14621
  %15167 = vmatprep.subr.bf16.mxu0 %v14618
  %15168 = vmatpush2.bf16.msra.mxu0 %v14617
  %15169 = vmatprep.mubr.bf16.mxu0 %v13661
  %15170 = vmatmul.mubr.bf16.gmra.mxu0 %v13653
  %v15171 = vpop.f32.mrf.mxu0
  %v15172 = vadd.f32 %v15129, %v15171
  %v15173 = vpop.f32.mrf.mxu0
  %v15174 = vadd.f32 %v15131, %v15173
  %v15175 = vpop.f32.mrf.mxu0
  %v15176 = vadd.f32 %v15133, %v15175
  %v15177 = vpop.f32.mrf.mxu0
  %v15178 = vadd.f32 %v15135, %v15177
  %15179 = vdwg.mxu0
  %15180 = vmatprep.subr.bf16.mxu0 %v14678
  %15181 = vmatpush1.bf16.msra.mxu0 %v14677
  %15182 = vmatprep.subr.bf16.mxu0 %v14674
  %15183 = vmatpush1.bf16.msra.mxu0 %v14673
  %15184 = vmatprep.subr.bf16.mxu0 %v14670
  %15185 = vmatpush1.bf16.msra.mxu0 %v14669
  %15186 = vmatprep.subr.bf16.mxu0 %v14666
  %15187 = vmatpush1.bf16.msra.mxu0 %v14665
  %15188 = vmatprep.subr.bf16.mxu0 %v14662
  %15189 = vmatpush1.bf16.msra.mxu0 %v14661
  %15190 = vmatprep.subr.bf16.mxu0 %v14658
  %15191 = vmatpush1.bf16.msra.mxu0 %v14657
  %15192 = vmatprep.subr.bf16.mxu0 %v14654
  %15193 = vmatpush1.bf16.msra.mxu0 %v14653
  %15194 = vmatprep.subr.bf16.mxu0 %v14650
  %15195 = vmatpush1.bf16.msra.mxu0 %v14649
  %15196 = vmatprep.subr.bf16.mxu0 %v14710
  %15197 = vmatpush2.bf16.msra.mxu0 %v14709
  %15198 = vmatprep.subr.bf16.mxu0 %v14706
  %15199 = vmatpush2.bf16.msra.mxu0 %v14705
  %15200 = vmatprep.subr.bf16.mxu0 %v14702
  %15201 = vmatpush2.bf16.msra.mxu0 %v14701
  %15202 = vmatprep.subr.bf16.mxu0 %v14698
  %15203 = vmatpush2.bf16.msra.mxu0 %v14697
  %15204 = vmatprep.subr.bf16.mxu0 %v14694
  %15205 = vmatpush2.bf16.msra.mxu0 %v14693
  %15206 = vmatprep.subr.bf16.mxu0 %v14690
  %15207 = vmatpush2.bf16.msra.mxu0 %v14689
  %15208 = vmatprep.subr.bf16.mxu0 %v14686
  %15209 = vmatpush2.bf16.msra.mxu0 %v14685
  %15210 = vmatprep.subr.bf16.mxu0 %v14682
  %15211 = vmatpush2.bf16.msra.mxu0 %v14681
  %15212 = vmatprep.mubr.bf16.mxu0 %v13695
  %15213 = vmatmul.mubr.bf16.gmra.mxu0 %v13687
  %v15214 = vpop.f32.mrf.mxu0
  %v15215 = vadd.f32 %v15172, %v15214
  %v15216 = vpop.f32.mrf.mxu0
  %v15217 = vadd.f32 %v15174, %v15216
  %v15218 = vpop.f32.mrf.mxu0
  %v15219 = vadd.f32 %v15176, %v15218
  %v15220 = vpop.f32.mrf.mxu0
  %v15221 = vadd.f32 %v15178, %v15220
  %15222 = vdwg.mxu0
  %15223 = vmatprep.subr.bf16.mxu0 0
  %15224 = vmatpush1.bf16.msra.mxu0 0
  %15225 = vmatprep.subr.bf16.mxu0 0
  %15226 = vmatpush1.bf16.msra.mxu0 0
  %15227 = vmatprep.subr.bf16.mxu0 0
  %15228 = vmatpush1.bf16.msra.mxu0 0
  %15229 = vmatprep.subr.bf16.mxu0 0
  %15230 = vmatpush1.bf16.msra.mxu0 0
  %15231 = vmatprep.subr.bf16.mxu0 0
  %15232 = vmatpush1.bf16.msra.mxu0 0
  %15233 = vmatprep.subr.bf16.mxu0 0
  %15234 = vmatpush1.bf16.msra.mxu0 0
  %15235 = vmatprep.subr.bf16.mxu0 %v14718
  %15236 = vmatpush1.bf16.msra.mxu0 %v14717
  %15237 = vmatprep.subr.bf16.mxu0 %v14714
  %15238 = vmatpush1.bf16.msra.mxu0 %v14713
  %15239 = vmatprep.subr.bf16.mxu0 0
  %15240 = vmatpush2.bf16.msra.mxu0 0
  %15241 = vmatprep.subr.bf16.mxu0 0
  %15242 = vmatpush2.bf16.msra.mxu0 0
  %15243 = vmatprep.subr.bf16.mxu0 0
  %15244 = vmatpush2.bf16.msra.mxu0 0
  %15245 = vmatprep.subr.bf16.mxu0 0
  %15246 = vmatpush2.bf16.msra.mxu0 0
  %15247 = vmatprep.subr.bf16.mxu0 0
  %15248 = vmatpush2.bf16.msra.mxu0 0
  %15249 = vmatprep.subr.bf16.mxu0 0
  %15250 = vmatpush2.bf16.msra.mxu0 0
  %15251 = vmatprep.subr.bf16.mxu0 0
  %15252 = vmatpush2.bf16.msra.mxu0 0
  %15253 = vmatprep.subr.bf16.mxu0 0
  %15254 = vmatpush2.bf16.msra.mxu0 0
  %15255 = vmatprep.mubr.bf16.mxu0 0
  %15256 = vmatmul.mubr.bf16.gmra.mxu0 %v14920
  %v15257 = vpop.f32.mrf.mxu0
  %v15258 = vadd.f32 %v15215, %v15257
  %v15259 = vpop.f32.mrf.mxu0
  %v15260 = vadd.f32 %v15217, %v15259
  %v15261 = vpop.f32.mrf.mxu0
  %v15262 = vadd.f32 %v15219, %v15261
  %v15263 = vpop.f32.mrf.mxu0
  %v15264 = vadd.f32 %v15221, %v15263
  %15265 = vdwg.mxu0
  %v15266 = vmax.f32 %v15086, 0.0
  %v15267 = vmax.f32 %v15088, 0.0
  %v15268 = vmax.f32 %v15258, 0.0
  %v15269 = vmax.f32 %v15260, 0.0
  %v15270 = vmax.f32 %v15090, 0.0
  %v15271 = vmax.f32 %v15092, 0.0
  %v15272 = vmax.f32 %v15262, 0.0
  %v15273 = vmax.f32 %v15264, 0.0
  %v15274 = vpack.c.bf16 %v15270, %v15266
  %v15275 = vpack.c.bf16 %v15271, %v15267
  %v15276 = vpack.c.bf16 %v15272, %v15268
  %v15277 = vpack.c.bf16 %v15273, %v15269
  %v15278 = vld [vmem:[%s7] sm:$0xf]
  %v15279 = vld [vmem:[%s7 + $0x4] sm:$0xf]
  %v15280 = vld [vmem:[%s7 + $0x8] sm:$0xf]
  %v15281 = vld [vmem:[%s7 + $0xc] sm:$0xf]
  %v15282 = vld [vmem:[%s7 + $0x10] sm:$0xf]
  %v15283 = vld [vmem:[%s7 + $0x14] sm:$0xf]
  %v15284 = vld [vmem:[%s7 + $0x18] sm:$0xf]
  %v15285 = vld [vmem:[%s7 + $0x1c] sm:$0xf]
  %v15286 = vld [vmem:[%s7 + $0x20] sm:$0xf]
  %v15287 = vld [vmem:[%s7 + $0x24] sm:$0xf]
  %v15288 = vld [vmem:[%s7 + $0x28] sm:$0xf]
  %v15289 = vld [vmem:[%s7 + $0x2c] sm:$0xf]
  %v15290 = vld [vmem:[%s7 + $0x30] sm:$0xf]
  %v15291 = vld [vmem:[%s7 + $0x34] sm:$0xf]
  %v15292 = vld [vmem:[%s7 + $0x38] sm:$0xf]
  %v15293 = vld [vmem:[%s7 + $0x3c] sm:$0xf]
  %v15294 = vld [vmem:[%s7 + $0x40] sm:$0xf]
  %v15295 = vld [vmem:[%s7 + $0x44] sm:$0xf]
  %v15296 = vld [vmem:[%s7 + $0x48] sm:$0xf]
  %v15297 = vld [vmem:[%s7 + $0x4c] sm:$0xf]
  %v15298 = vld [vmem:[%s7 + $0x50] sm:$0xf]
  %v15299 = vld [vmem:[%s7 + $0x54] sm:$0xf]
  %v15300 = vld [vmem:[%s7 + $0x58] sm:$0xf]
  %v15301 = vld [vmem:[%s7 + $0x5c] sm:$0xf]
  %v15302 = vld [vmem:[%s7 + $0x60] sm:$0xf]
  %v15303 = vld [vmem:[%s7 + $0x64] sm:$0xf]
  %v15304 = vld [vmem:[%s7 + $0x68] sm:$0xf]
  %v15305 = vld [vmem:[%s7 + $0x6c] sm:$0xf]
  %v15306 = vld [vmem:[%s7 + $0x70] sm:$0xf]
  %v15307 = vld [vmem:[%s7 + $0x74] sm:$0xf]
  %v15308 = vld [vmem:[%s7 + $0x78] sm:$0xf]
  %v15309 = vld [vmem:[%s7 + $0x7c] sm:$0xf]
  %v15310 = vld [vmem:[%s7 + $0x80] sm:$0xf]
  %v15311 = vld [vmem:[%s7 + $0x84] sm:$0xf]
  %v15312 = vld [vmem:[%s7 + $0x88] sm:$0xf]
  %v15313 = vld [vmem:[%s7 + $0x8c] sm:$0xf]
  %v15314 = vld [vmem:[%s7 + $0x90] sm:$0xf]
  %v15315 = vld [vmem:[%s7 + $0x94] sm:$0xf]
  %v15316 = vld [vmem:[%s7 + $0x98] sm:$0xf]
  %v15317 = vld [vmem:[%s7 + $0x9c] sm:$0xf]
  %v15318 = vld [vmem:[%s7 + $0xa0] sm:$0xf]
  %v15319 = vld [vmem:[%s7 + $0xa4] sm:$0xf]
  %v15320 = vld [vmem:[%s7 + $0xa8] sm:$0xf]
  %v15321 = vld [vmem:[%s7 + $0xac] sm:$0xf]
  %v15322 = vld [vmem:[%s7 + $0xb0] sm:$0xf]
  %v15323 = vld [vmem:[%s7 + $0xb4] sm:$0xf]
  %v15324 = vld [vmem:[%s7 + $0xb8] sm:$0xf]
  %v15325 = vld [vmem:[%s7 + $0xbc] sm:$0xf]
  %v15326 = vld [vmem:[%s7 + $0xc0] sm:$0xf]
  %v15327 = vld [vmem:[%s7 + $0xc4] sm:$0xf]
  %v15328 = vld [vmem:[%s7 + $0xc8] sm:$0xf]
  %v15329 = vld [vmem:[%s7 + $0xcc] sm:$0xf]
  %v15330 = vld [vmem:[%s7 + $0xd0] sm:$0xf]
  %v15331 = vld [vmem:[%s7 + $0xd4] sm:$0xf]
  %v15332 = vld [vmem:[%s7 + $0xd8] sm:$0xf]
  %v15333 = vld [vmem:[%s7 + $0xdc] sm:$0xf]
  %v15334 = vld [vmem:[%s7 + $0xe0] sm:$0xf]
  %v15335 = vld [vmem:[%s7 + $0xe4] sm:$0xf]
  %v15336 = vld [vmem:[%s7 + $0xe8] sm:$0xf]
  %v15337 = vld [vmem:[%s7 + $0xec] sm:$0xf]
  %v15338 = vld [vmem:[%s7 + $0xf0] sm:$0xf]
  %v15339 = vld [vmem:[%s7 + $0xf4] sm:$0xf]
  %v15340 = vld [vmem:[%s7 + $0xf8] sm:$0xf]
  %v15341 = vld [vmem:[%s7 + $0xfc] sm:$0xf]
  %v15342 = vld [vmem:[%s8] sm:$0x1]
  %v15344 = vlaneseq
  %v15345 = vshrl.u32 %v15344, 7
  %v15346 = vsub.s32 0, %v15345
  %v15347 = vrot.slane %v15342, %v15346
  %v15413 = vunpack.c.l.b16 %v15278
  %v15414 = vunpack.c.l.b16 %v15279
  %v15415 = vunpack.c.l.b16 %v15280
  %v15416 = vunpack.c.l.b16 %v15281
  %v15417 = vunpack.c.l.b16 %v15282
  %v15418 = vunpack.c.l.b16 %v15283
  %v15419 = vunpack.c.l.b16 %v15284
  %v15420 = vunpack.c.l.b16 %v15285
  %v15421 = vunpack.c.l.b16 %v15286
  %v15422 = vunpack.c.l.b16 %v15287
  %v15423 = vunpack.c.l.b16 %v15288
  %v15424 = vunpack.c.l.b16 %v15289
  %v15425 = vunpack.c.l.b16 %v15290
  %v15426 = vunpack.c.l.b16 %v15291
  %v15427 = vunpack.c.l.b16 %v15292
  %v15428 = vunpack.c.l.b16 %v15293
  %v15429 = vunpack.c.l.b16 %v15294
  %v15430 = vunpack.c.l.b16 %v15295
  %v15431 = vunpack.c.l.b16 %v15296
  %v15432 = vunpack.c.l.b16 %v15297
  %v15433 = vunpack.c.l.b16 %v15298
  %v15434 = vunpack.c.l.b16 %v15299
  %v15435 = vunpack.c.l.b16 %v15300
  %v15436 = vunpack.c.l.b16 %v15301
  %v15437 = vunpack.c.l.b16 %v15302
  %v15438 = vunpack.c.l.b16 %v15303
  %v15439 = vunpack.c.l.b16 %v15304
  %v15440 = vunpack.c.l.b16 %v15305
  %v15441 = vunpack.c.l.b16 %v15306
  %v15442 = vunpack.c.l.b16 %v15307
  %v15443 = vunpack.c.l.b16 %v15308
  %v15444 = vunpack.c.l.b16 %v15309
  %v15445 = vunpack.c.l.b16 %v15310
  %v15446 = vunpack.c.l.b16 %v15311
  %v15447 = vunpack.c.l.b16 %v15312
  %v15448 = vunpack.c.l.b16 %v15313
  %v15449 = vunpack.c.l.b16 %v15314
  %v15450 = vunpack.c.l.b16 %v15315
  %v15451 = vunpack.c.l.b16 %v15316
  %v15452 = vunpack.c.l.b16 %v15317
  %v15453 = vunpack.c.l.b16 %v15318
  %v15454 = vunpack.c.l.b16 %v15319
  %v15455 = vunpack.c.l.b16 %v15320
  %v15456 = vunpack.c.l.b16 %v15321
  %v15457 = vunpack.c.l.b16 %v15322
  %v15458 = vunpack.c.l.b16 %v15323
  %v15459 = vunpack.c.l.b16 %v15324
  %v15460 = vunpack.c.l.b16 %v15325
  %v15461 = vunpack.c.l.b16 %v15326
  %v15462 = vunpack.c.l.b16 %v15327
  %v15463 = vunpack.c.l.b16 %v15328
  %v15464 = vunpack.c.l.b16 %v15329
  %v15465 = vunpack.c.l.b16 %v15330
  %v15466 = vunpack.c.l.b16 %v15331
  %v15467 = vunpack.c.l.b16 %v15332
  %v15468 = vunpack.c.l.b16 %v15333
  %v15469 = vunpack.c.l.b16 %v15334
  %v15470 = vunpack.c.l.b16 %v15335
  %v15471 = vunpack.c.l.b16 %v15336
  %v15472 = vunpack.c.l.b16 %v15337
  %v15473 = vunpack.c.l.b16 %v15338
  %v15474 = vunpack.c.l.b16 %v15339
  %v15475 = vunpack.c.l.b16 %v15340
  %v15476 = vunpack.c.l.b16 %v15341
  %v15477 = vpack.c.b16 %v15414, %v15413
  %v15478 = vpack.c.b16 %v15416, %v15415
  %v15479 = vpack.c.b16 %v15418, %v15417
  %v15480 = vpack.c.b16 %v15420, %v15419
  %v15481 = vpack.c.b16 %v15422, %v15421
  %v15482 = vpack.c.b16 %v15424, %v15423
  %v15483 = vpack.c.b16 %v15426, %v15425
  %v15484 = vpack.c.b16 %v15428, %v15427
  %v15485 = vpack.c.b16 %v15430, %v15429
  %v15486 = vpack.c.b16 %v15432, %v15431
  %v15487 = vpack.c.b16 %v15434, %v15433
  %v15488 = vpack.c.b16 %v15436, %v15435
  %v15489 = vpack.c.b16 %v15438, %v15437
  %v15490 = vpack.c.b16 %v15440, %v15439
  %v15491 = vpack.c.b16 %v15442, %v15441
  %v15492 = vpack.c.b16 %v15444, %v15443
  %v15493 = vpack.c.b16 %v15446, %v15445
  %v15494 = vpack.c.b16 %v15448, %v15447
  %v15495 = vpack.c.b16 %v15450, %v15449
  %v15496 = vpack.c.b16 %v15452, %v15451
  %v15497 = vpack.c.b16 %v15454, %v15453
  %v15498 = vpack.c.b16 %v15456, %v15455
  %v15499 = vpack.c.b16 %v15458, %v15457
  %v15500 = vpack.c.b16 %v15460, %v15459
  %v15501 = vpack.c.b16 %v15462, %v15461
  %v15502 = vpack.c.b16 %v15464, %v15463
  %v15503 = vpack.c.b16 %v15466, %v15465
  %v15504 = vpack.c.b16 %v15468, %v15467
  %v15505 = vpack.c.b16 %v15470, %v15469
  %v15506 = vpack.c.b16 %v15472, %v15471
  %v15507 = vpack.c.b16 %v15474, %v15473
  %v15508 = vpack.c.b16 %v15476, %v15475
  %15541 = vmatprep.subr.bf16.mxu0 0
  %15542 = vmatpush1.bf16.msra.mxu0 %v15484
  %15543 = vmatprep.subr.bf16.mxu0 0
  %15544 = vmatpush1.bf16.msra.mxu0 %v15483
  %15545 = vmatprep.subr.bf16.mxu0 0
  %15546 = vmatpush1.bf16.msra.mxu0 %v15482
  %15547 = vmatprep.subr.bf16.mxu0 0
  %15548 = vmatpush1.bf16.msra.mxu0 %v15481
  %15549 = vmatprep.subr.bf16.mxu0 0
  %15550 = vmatpush1.bf16.msra.mxu0 %v15480
  %15551 = vmatprep.subr.bf16.mxu0 0
  %15552 = vmatpush1.bf16.msra.mxu0 %v15479
  %15553 = vmatprep.subr.bf16.mxu0 0
  %15554 = vmatpush1.bf16.msra.mxu0 %v15478
  %15555 = vmatprep.subr.bf16.mxu0 0
  %15556 = vmatpush1.bf16.msra.mxu0 %v15477
  %15557 = vmatprep.subr.bf16.mxu0 0
  %15558 = vmatpush2.bf16.msra.mxu0 %v15492
  %15559 = vmatprep.subr.bf16.mxu0 0
  %15560 = vmatpush2.bf16.msra.mxu0 %v15491
  %15561 = vmatprep.subr.bf16.mxu0 0
  %15562 = vmatpush2.bf16.msra.mxu0 %v15490
  %15563 = vmatprep.subr.bf16.mxu0 0
  %15564 = vmatpush2.bf16.msra.mxu0 %v15489
  %15565 = vmatprep.subr.bf16.mxu0 0
  %15566 = vmatpush2.bf16.msra.mxu0 %v15488
  %15567 = vmatprep.subr.bf16.mxu0 0
  %15568 = vmatpush2.bf16.msra.mxu0 %v15487
  %15569 = vmatprep.subr.bf16.mxu0 0
  %15570 = vmatpush2.bf16.msra.mxu0 %v15486
  %15571 = vmatprep.subr.bf16.mxu0 0
  %15572 = vmatpush2.bf16.msra.mxu0 %v15485
  %15573 = vmatprep.mubr.bf16.mxu0 %v15275
  %15574 = vmatmul.mubr.bf16.gmra.mxu0 %v15274
  %v15575 = vpop.f32.mrf.mxu0
  %v15576 = vadd.f32 %v15347, %v15575
  %v15577 = vpop.f32.mrf.mxu0
  %v15578 = vpop.f32.mrf.mxu0
  %v15579 = vadd.f32 %v15347, %v15578
  %v15580 = vpop.f32.mrf.mxu0
  %15581 = vdwg.mxu0
  %15582 = vmatprep.subr.bf16.mxu0 0
  %15583 = vmatpush1.bf16.msra.mxu0 %v15500
  %15584 = vmatprep.subr.bf16.mxu0 0
  %15585 = vmatpush1.bf16.msra.mxu0 %v15499
  %15586 = vmatprep.subr.bf16.mxu0 0
  %15587 = vmatpush1.bf16.msra.mxu0 %v15498
  %15588 = vmatprep.subr.bf16.mxu0 0
  %15589 = vmatpush1.bf16.msra.mxu0 %v15497
  %15590 = vmatprep.subr.bf16.mxu0 0
  %15591 = vmatpush1.bf16.msra.mxu0 %v15496
  %15592 = vmatprep.subr.bf16.mxu0 0
  %15593 = vmatpush1.bf16.msra.mxu0 %v15495
  %15594 = vmatprep.subr.bf16.mxu0 0
  %15595 = vmatpush1.bf16.msra.mxu0 %v15494
  %15596 = vmatprep.subr.bf16.mxu0 0
  %15597 = vmatpush1.bf16.msra.mxu0 %v15493
  %15598 = vmatprep.subr.bf16.mxu0 0
  %15599 = vmatpush2.bf16.msra.mxu0 %v15508
  %15600 = vmatprep.subr.bf16.mxu0 0
  %15601 = vmatpush2.bf16.msra.mxu0 %v15507
  %15602 = vmatprep.subr.bf16.mxu0 0
  %15603 = vmatpush2.bf16.msra.mxu0 %v15506
  %15604 = vmatprep.subr.bf16.mxu0 0
  %15605 = vmatpush2.bf16.msra.mxu0 %v15505
  %15606 = vmatprep.subr.bf16.mxu0 0
  %15607 = vmatpush2.bf16.msra.mxu0 %v15504
  %15608 = vmatprep.subr.bf16.mxu0 0
  %15609 = vmatpush2.bf16.msra.mxu0 %v15503
  %15610 = vmatprep.subr.bf16.mxu0 0
  %15611 = vmatpush2.bf16.msra.mxu0 %v15502
  %15612 = vmatprep.subr.bf16.mxu0 0
  %15613 = vmatpush2.bf16.msra.mxu0 %v15501
  %15614 = vmatprep.mubr.bf16.mxu0 %v15277
  %15615 = vmatmul.mubr.bf16.gmra.mxu0 %v15276
  %v15616 = vpop.f32.mrf.mxu0
  %v15617 = vadd.f32 %v15576, %v15616
  %v15618 = vpop.f32.mrf.mxu0
  %v15619 = vpop.f32.mrf.mxu0
  %v15620 = vadd.f32 %v15579, %v15619
  %v15621 = vpop.f32.mrf.mxu0
  %15622 = vdwg.mxu0
  %v15623 = vmax.f32 %v15617, 0.0
  %v15624 = vmax.f32 %v15620, 0.0
  %15625 = vst [vmem:[%s9] sm:$0xff] %v15623
  %15626 = vst [vmem:[%s9 + $0x8] sm:$0xff] %v15624
  // Predicated region
  $region38: #{clasificador_forward.1} parent=0 // pred_check
    _
  $region39: #{clasificador_forward.1} parent=0 // pred_check_branch
    %15628 = sbr.rel (0) target = $region41
  $region40: #{clasificador_forward.1} parent=0 // pred_region
    _
  $region41: #{clasificador_forward.1} parent=0 // pred_fallthru
    _
  // Predicated region
  $region42: #{clasificador_forward.1} parent=0 // pred_check
    _
  $region43: #{clasificador_forward.1} parent=0 // pred_check_branch
    %15630 = sbr.rel (0) target = $region45
  $region44: #{clasificador_forward.1} parent=0 // pred_region
    _
  $region45: #{clasificador_forward.1} parent=0 // pred_fallthru
    _

</llo_original>
